<compile_context>
chip_gen: v5e
topology: v5e:2x2
jax: 0.10.0
libtpu: 0.0.40
codegen_flags: <defaults>
</compile_context>

<pallas_src>
import jax
import jax.numpy as jnp
from jax import lax
from jax.experimental import pallas as pl
from jax.experimental.pallas import tpu as pltpu


# ----------------------------------------------------------------------------
# In-kernel conv layer: 4x4 / stride 2 / pad 1 + ReLU on de-interleaved input.
# ----------------------------------------------------------------------------
def _conv_layer(xb_ref, w_ref, b_ref, xbn_ref, OH, OW):
    """xb_ref : (2*OH+2, 2, OW+1, C)    de-interleaved padded input
       w_ref  : (4, 2, 2, C, OCp)       per-tap weight matrices
       b_ref  : (1, OCp)                padded bias
       xbn_ref: (OH+2, 2, OW//2+1, OCp) de-interleaved padded output"""
    OW2 = OW // 2
    ocp = w_ref.shape[-1]

    # Zero-fill provides the spatial zero padding seen by the *next* layer.
    xbn_ref[...] = jnp.zeros(xbn_ref.shape, xbn_ref.dtype)

    # Even / odd column selection matrices (applied on the MXU).
    r = lax.broadcasted_iota(jnp.int32, (OW2, OW), 0)
    c = lax.broadcasted_iota(jnp.int32, (OW2, OW), 1)
    s_even = (c == 2 * r).astype(jnp.float32)
    s_odd = (c == 2 * r + 1).astype(jnp.float32)
    bias = b_ref[...]

    def row_body(i, carry):
        acc = jnp.zeros((OW, ocp), jnp.float32)
        for di in range(4):            # kernel row
            for tj in range(2):        # kernel col // 2
                for bj in range(2):    # kernel col % 2
                    xs = xb_ref[2 * i + di, bj, tj:tj + OW, :]       # (OW, C)
                    acc = acc + jnp.dot(xs, w_ref[di, tj, bj],
                                        preferred_element_type=jnp.float32)
        act = jnp.maximum(acc + bias, 0.0)                            # (OW, OCp)
        even = jnp.dot(s_even, act, preferred_element_type=jnp.float32)
        odd = jnp.dot(s_odd, act, preferred_element_type=jnp.float32)
        xbn_ref[i + 1, 1, 0:OW2, :] = even       # output cols 0,2,4,...
        xbn_ref[i + 1, 0, 1:1 + OW2, :] = odd    # output cols 1,3,5,...
        return carry

    lax.fori_loop(0, OH, row_body, 0)


# ----------------------------------------------------------------------------
# Fused DP2 kernel: conv1..conv3 -> conv4 + Linear epilogue.
# ----------------------------------------------------------------------------
def _dp2_kernel(xb1_ref, w1_ref, b1_ref, w2_ref, b2_ref, w3_ref, b3_ref,
                w4_ref, b4_ref, wl_ref, bl_ref, out_ref,
                xb2_ref, xb3_ref, xb4_ref):
    _conv_layer(xb1_ref, w1_ref, b1_ref, xb2_ref, 40, 40)   # conv1: 80 -> 40
    _conv_layer(xb2_ref, w2_ref, b2_ref, xb3_ref, 20, 20)   # conv2: 40 -> 20
    _conv_layer(xb3_ref, w3_ref, b3_ref, xb4_ref, 10, 10)   # conv3: 20 -> 10

    # conv4 (10 -> 5) fused with the Linear: reduce each 5x256 output row
    # against the re-laid-out Linear weight, accumulate the two logits.
    bias4 = b4_ref[...]

    def row4(i, carry):
        y0, y1 = carry
        acc = jnp.zeros((5, 256), jnp.float32)
        for di in range(4):
            for tj in range(2):
                for bj in range(2):
                    xs = xb4_ref[2 * i + di, bj, tj:tj + 5, :]        # (5, 128)
                    acc = acc + jnp.dot(xs, w4_ref[di, tj, bj],
                                        preferred_element_type=jnp.float32)
        act = jnp.maximum(acc + bias4, 0.0)                           # (5, 256)
        y0 = y0 + jnp.sum(act * wl_ref[0, i])
        y1 = y1 + jnp.sum(act * wl_ref[1, i])
        return (y0, y1)

    y0, y1 = lax.fori_loop(
        0, 5, row4, (jnp.zeros((), jnp.float32), jnp.zeros((), jnp.float32)))

    # Lane-dense 128-wide output row; the 2 real logits live in lanes 0..1.
    col = lax.broadcasted_iota(jnp.int32, (1, 128), 1)
    out_row = (jnp.where(col == 0, y0, 0.0)
               + jnp.where(col == 1, y1, 0.0)
               + bl_ref[...])
    out_ref[0] = out_row


# ----------------------------------------------------------------------------
# One-time parameter re-layout (hoisted out of the forward path).
# ----------------------------------------------------------------------------
def prepare_params(params):
    def conv_w(w, icp, ocp):
        oc, ic, kh, kw = w.shape
        # (OC,IC,4,4) -> (di, dj, IC, OC) -> (di, tj, bj, IC, OC), zero-padded.
        a = jnp.transpose(w, (2, 3, 1, 0)).reshape(kh, 2, 2, ic, oc)
        return jnp.pad(a, ((0, 0), (0, 0), (0, 0),
                           (0, icp - ic), (0, ocp - oc)))

    def conv_b(b, ocp):
        return jnp.pad(b, (0, ocp - b.shape[0])).reshape(1, ocp)

    # Linear weight (2, 6400) -> (2, 5, 5, 256): wl[o,i,j,c] = W[o, c*25+i*5+j]
    wl = jnp.transpose(params["out_w"].reshape(2, 256, 5, 5), (0, 2, 3, 1))
    return {
        "w1": conv_w(params["conv1_w"], 4, 128),
        "b1": conv_b(params["conv1_b"], 128),
        "w2": conv_w(params["conv2_w"], 128, 128),
        "b2": conv_b(params["conv2_b"], 128),
        "w3": conv_w(params["conv3_w"], 128, 128),
        "b3": conv_b(params["conv3_b"], 128),
        "w4": conv_w(params["conv4_w"], 128, 256),
        "b4": conv_b(params["conv4_b"], 256),
        "wl": wl,
        "bl": conv_b(params["out_b"], 128),
    }


# ----------------------------------------------------------------------------
# Forward: input prep (few tiny XLA ops) + one fused pallas_call.
# ----------------------------------------------------------------------------
@jax.jit
def dp2_forward(x_nchw, prep):
    N = x_nchw.shape[0]
    # NCHW -> padded NHWC, column-pair de-interleaved:
    #   xb1[n*82 + p, bj, l, c] = x_pad[n, p, 2*l + bj, c]
    x = jnp.transpose(x_nchw, (0, 2, 3, 1))                     # (N,80,80,4)
    x = jnp.pad(x, ((0, 0), (1, 1), (1, 1), (0, 0)))            # (N,82,82,4)
    xb1 = jnp.transpose(x.reshape(N, 82, 41, 2, 4),
                        (0, 1, 3, 2, 4)).reshape(N * 82, 2, 41, 4)

    def full(a):
        return pl.BlockSpec(a.shape, lambda b, nd=a.ndim: (0,) * nd)

    out = pl.pallas_call(
        _dp2_kernel,
        out_shape=jax.ShapeDtypeStruct((N, 1, 128), jnp.float32),
        grid=(N,),
        in_specs=[
            pl.BlockSpec((82, 2, 41, 4), lambda b: (b, 0, 0, 0)),
            full(prep["w1"]), full(prep["b1"]),
            full(prep["w2"]), full(prep["b2"]),
            full(prep["w3"]), full(prep["b3"]),
            full(prep["w4"]), full(prep["b4"]),
            full(prep["wl"]), full(prep["bl"]),
        ],
        out_specs=pl.BlockSpec((1, 1, 128), lambda b: (b, 0, 0)),
        scratch_shapes=[
            pltpu.VMEM((42, 2, 21, 128), jnp.float32),   # conv2 input
            pltpu.VMEM((22, 2, 11, 128), jnp.float32),   # conv3 input
            pltpu.VMEM((12, 2, 6, 128), jnp.float32),    # conv4 input
        ],
        compiler_params=pltpu.CompilerParams(
            dimension_semantics=("parallel",),
            vmem_limit_bytes=32 * 1024 * 1024,
        ),
    )(xb1, prep["w1"], prep["b1"], prep["w2"], prep["b2"],
      prep["w3"], prep["b3"], prep["w4"], prep["b4"],
      prep["wl"], prep["bl"])
    return out[:, 0, :2]


def init_params(key):
    shapes = {
        "conv1_w": (32, 4, 4, 4),    "conv1_b": (32,),
        "conv2_w": (64, 32, 4, 4),   "conv2_b": (64,),
        "conv3_w": (128, 64, 4, 4),  "conv3_b": (128,),
        "conv4_w": (256, 128, 4, 4), "conv4_b": (256,),
        "out_w": (2, 5 * 5 * 256),   "out_b": (2,),
    }
    params = {}
    keys = jax.random.split(key, len(shapes))
    for (name, shp), k in zip(shapes.items(), keys):
        params[name] = (0.02 * jax.random.normal(k, shp)).astype(jnp.float32)
    return params


if __name__ == "__main__":
    key = jax.random.PRNGKey(0)
    pkey, xkey = jax.random.split(key)
    params = init_params(pkey)
    prep = prepare_params(params)   # one-time weight re-layout (hoisted)

    # Spatial size must be 80 so the conv stack ends at 5x5x256 as required
    # by Linear(5*5*256, 2): 80 -> 40 -> 20 -> 10 -> 5.
    x = jax.random.normal(xkey, (2, 4, 80, 80), dtype=jnp.float32)  # NCHW

    out = dp2_forward(x, prep)
    jax.block_until_ready(out)
    assert out.shape == (2, 2), out.shape
    print("KERNEL_OK")
</pallas_src>

<mosaic_0001>
module attributes {stable_mosaic.version = 11 : i64} {
  func.func @_dp2_kernel(%arg0: i32, %arg1: memref<82x2x41x4xf32, #tpu.memory_space<vmem>>, %arg2: memref<4x2x2x4x128xf32, #tpu.memory_space<vmem>>, %arg3: memref<1x128xf32, #tpu.memory_space<vmem>>, %arg4: memref<4x2x2x128x128xf32, #tpu.memory_space<vmem>>, %arg5: memref<1x128xf32, #tpu.memory_space<vmem>>, %arg6: memref<4x2x2x128x128xf32, #tpu.memory_space<vmem>>, %arg7: memref<1x128xf32, #tpu.memory_space<vmem>>, %arg8: memref<4x2x2x128x256xf32, #tpu.memory_space<vmem>>, %arg9: memref<1x256xf32, #tpu.memory_space<vmem>>, %arg10: memref<2x5x5x256xf32, #tpu.memory_space<vmem>>, %arg11: memref<1x128xf32, #tpu.memory_space<vmem>>, %arg12: memref<1x1x128xf32, #tpu.memory_space<vmem>>, %arg13: memref<42x2x21x128xf32, #tpu.memory_space<vmem>>, %arg14: memref<22x2x11x128xf32, #tpu.memory_space<vmem>>, %arg15: memref<12x2x6x128xf32, #tpu.memory_space<vmem>>) attributes {dimension_semantics = [#tpu.dimension_semantics<parallel>], iteration_bounds = array<i64: 2>, scalar_prefetch = 0 : i64, scratch_operands = 3 : i64, tpu.core_type = #tpu.core_type<tc>, window_params = [{transform_indices = @transform_0, window_bounds = array<i64: 82, 2, 41, 4>}, {pipeline_mode = #tpu.pipeline_mode<synchronous>, transform_indices = @transform_1, window_bounds = array<i64: 4, 2, 2, 4, 128>}, {pipeline_mode = #tpu.pipeline_mode<synchronous>, transform_indices = @transform_2, window_bounds = array<i64: 1, 128>}, {pipeline_mode = #tpu.pipeline_mode<synchronous>, transform_indices = @transform_3, window_bounds = array<i64: 4, 2, 2, 128, 128>}, {pipeline_mode = #tpu.pipeline_mode<synchronous>, transform_indices = @transform_4, window_bounds = array<i64: 1, 128>}, {pipeline_mode = #tpu.pipeline_mode<synchronous>, transform_indices = @transform_5, window_bounds = array<i64: 4, 2, 2, 128, 128>}, {pipeline_mode = #tpu.pipeline_mode<synchronous>, transform_indices = @transform_6, window_bounds = array<i64: 1, 128>}, {pipeline_mode = #tpu.pipeline_mode<synchronous>, transform_indices = @transform_7, window_bounds = array<i64: 4, 2, 2, 128, 256>}, {pipeline_mode = #tpu.pipeline_mode<synchronous>, transform_indices = @transform_8, window_bounds = array<i64: 1, 256>}, {pipeline_mode = #tpu.pipeline_mode<synchronous>, transform_indices = @transform_9, window_bounds = array<i64: 2, 5, 5, 256>}, {pipeline_mode = #tpu.pipeline_mode<synchronous>, transform_indices = @transform_10, window_bounds = array<i64: 1, 128>}, {transform_indices = @transform_11, window_bounds = array<i64: 1, 1, 128>}]} {
    %cst = arith.constant 0.000000e+00 : f32
    %0 = vector.broadcast %cst : f32 to vector<42x2x21x128xf32>
    %c0 = arith.constant 0 : index
    %c0_0 = arith.constant 0 : index
    %c0_1 = arith.constant 0 : index
    %c0_2 = arith.constant 0 : index
    %1 = vector.load %arg13[%c0, %c0_0, %c0_1, %c0_2] : memref<42x2x21x128xf32, #tpu.memory_space<vmem>>, vector<42x2x21x128xf32>
    tpu.vector_store %arg13[%c0, %c0_0, %c0_1, %c0_2], %0 {strides = array<i32>} : memref<42x2x21x128xf32, #tpu.memory_space<vmem>>, vector<42x2x21x128xf32>,
    %2 = tpu.iota {dimensions = array<i32: 0>} : vector<20x40xi32>
    %3 = tpu.iota {dimensions = array<i32: 1>} : vector<20x40xi32>
    %c2_i32 = arith.constant 2 : i32
    %4 = vector.broadcast %c2_i32 : i32 to vector<20x40xi32>
    %5 = arith.muli %4, %2 : vector<20x40xi32>
    %6 = arith.cmpi eq, %3, %5 : vector<20x40xi32>
    %7 = arith.extui %6 : vector<20x40xi1> to vector<20x40xi32>
    %8 = arith.sitofp %7 : vector<20x40xi32> to vector<20x40xf32>
    %c2_i32_3 = arith.constant 2 : i32
    %9 = vector.broadcast %c2_i32_3 : i32 to vector<20x40xi32>
    %10 = arith.muli %9, %2 : vector<20x40xi32>
    %c1_i32 = arith.constant 1 : i32
    %11 = vector.broadcast %c1_i32 : i32 to vector<20x40xi32>
    %12 = arith.addi %10, %11 : vector<20x40xi32>
    %13 = arith.cmpi eq, %3, %12 : vector<20x40xi32>
    %14 = arith.extui %13 : vector<20x40xi1> to vector<20x40xi32>
    %15 = arith.sitofp %14 : vector<20x40xi32> to vector<20x40xf32>
    %c0_4 = arith.constant 0 : index
    %c0_5 = arith.constant 0 : index
    %16 = vector.load %arg3[%c0_4, %c0_5] : memref<1x128xf32, #tpu.memory_space<vmem>>, vector<1x128xf32>
    %c0_i32 = arith.constant 0 : i32
    %c40_i32 = arith.constant 40 : i32
    %17 = arith.addi %c0_i32, %c40_i32 : i32
    %c1_i32_6 = arith.constant 1 : i32
    scf.for %arg16 = %c0_i32 to %17 step %c1_i32_6  : i32 {
      %cst_50 = arith.constant 0.000000e+00 : f32
      %74 = vector.broadcast %cst_50 : f32 to vector<40x128xf32>
      %c2_i32_51 = arith.constant 2 : i32
      %75 = arith.muli %c2_i32_51, %arg16 : i32
      %c0_i32_52 = arith.constant 0 : i32
      %76 = arith.addi %75, %c0_i32_52 : i32
      %77 = arith.index_cast %76 : i32 to index
      %c0_53 = arith.constant 0 : index
      %c0_54 = arith.constant 0 : index
      %c0_55 = arith.constant 0 : index
      %78 = vector.load %arg1[%77, %c0_53, %c0_54, %c0_55] : memref<82x2x41x4xf32, #tpu.memory_space<vmem>>, vector<1x1x40x4xf32>
      %79 = vector.shape_cast %78 : vector<1x1x40x4xf32> to vector<40x4xf32>
      %c0_56 = arith.constant 0 : index
      %c0_57 = arith.constant 0 : index
      %c0_58 = arith.constant 0 : index
      %c0_59 = arith.constant 0 : index
      %c0_60 = arith.constant 0 : index
      %80 = vector.load %arg2[%c0_56, %c0_57, %c0_58, %c0_59, %c0_60] : memref<4x2x2x4x128xf32, #tpu.memory_space<vmem>>, vector<1x1x1x4x128xf32>
      %81 = vector.shape_cast %80 : vector<1x1x1x4x128xf32> to vector<4x128xf32>
      %cst_61 = arith.constant dense<0.000000e+00> : vector<40x128xf32>
      %82 = tpu.matmul %79, %81, %cst_61 {dimension_numbers = #tpu.dot_dimension_numbers<[1], [0], [0], [1], [0, 0, 1, 1], [], []>} : vector<40x4xf32>, vector<4x128xf32>, vector<40x128xf32> -> vector<40x128xf32>
      %83 = arith.addf %74, %82 : vector<40x128xf32>
      %c2_i32_62 = arith.constant 2 : i32
      %84 = arith.muli %c2_i32_62, %arg16 : i32
      %c0_i32_63 = arith.constant 0 : i32
      %85 = arith.addi %84, %c0_i32_63 : i32
      %86 = arith.index_cast %85 : i32 to index
      %c1 = arith.constant 1 : index
      %c0_64 = arith.constant 0 : index
      %c0_65 = arith.constant 0 : index
      %87 = vector.load %arg1[%86, %c1, %c0_64, %c0_65] : memref<82x2x41x4xf32, #tpu.memory_space<vmem>>, vector<1x1x40x4xf32>
      %88 = vector.shape_cast %87 : vector<1x1x40x4xf32> to vector<40x4xf32>
      %c0_66 = arith.constant 0 : index
      %c0_67 = arith.constant 0 : index
      %c1_68 = arith.constant 1 : index
      %c0_69 = arith.constant 0 : index
      %c0_70 = arith.constant 0 : index
      %89 = vector.load %arg2[%c0_66, %c0_67, %c1_68, %c0_69, %c0_70] : memref<4x2x2x4x128xf32, #tpu.memory_space<vmem>>, vector<1x1x1x4x128xf32>
      %90 = vector.shape_cast %89 : vector<1x1x1x4x128xf32> to vector<4x128xf32>
      %cst_71 = arith.constant dense<0.000000e+00> : vector<40x128xf32>
      %91 = tpu.matmul %88, %90, %cst_71 {dimension_numbers = #tpu.dot_dimension_numbers<[1], [0], [0], [1], [0, 0, 1, 1], [], []>} : vector<40x4xf32>, vector<4x128xf32>, vector<40x128xf32> -> vector<40x128xf32>
      %92 = arith.addf %83, %91 : vector<40x128xf32>
      %c2_i32_72 = arith.constant 2 : i32
      %93 = arith.muli %c2_i32_72, %arg16 : i32
      %c0_i32_73 = arith.constant 0 : i32
      %94 = arith.addi %93, %c0_i32_73 : i32
      %95 = arith.index_cast %94 : i32 to index
      %c0_74 = arith.constant 0 : index
      %c1_75 = arith.constant 1 : index
      %c0_76 = arith.constant 0 : index
      %96 = vector.load %arg1[%95, %c0_74, %c1_75, %c0_76] : memref<82x2x41x4xf32, #tpu.memory_space<vmem>>, vector<1x1x40x4xf32>
      %97 = vector.shape_cast %96 : vector<1x1x40x4xf32> to vector<40x4xf32>
      %c0_77 = arith.constant 0 : index
      %c1_78 = arith.constant 1 : index
      %c0_79 = arith.constant 0 : index
      %c0_80 = arith.constant 0 : index
      %c0_81 = arith.constant 0 : index
      %98 = vector.load %arg2[%c0_77, %c1_78, %c0_79, %c0_80, %c0_81] : memref<4x2x2x4x128xf32, #tpu.memory_space<vmem>>, vector<1x1x1x4x128xf32>
      %99 = vector.shape_cast %98 : vector<1x1x1x4x128xf32> to vector<4x128xf32>
      %cst_82 = arith.constant dense<0.000000e+00> : vector<40x128xf32>
      %100 = tpu.matmul %97, %99, %cst_82 {dimension_numbers = #tpu.dot_dimension_numbers<[1], [0], [0], [1], [0, 0, 1, 1], [], []>} : vector<40x4xf32>, vector<4x128xf32>, vector<40x128xf32> -> vector<40x128xf32>
      %101 = arith.addf %92, %100 : vector<40x128xf32>
      %c2_i32_83 = arith.constant 2 : i32
      %102 = arith.muli %c2_i32_83, %arg16 : i32
      %c0_i32_84 = arith.constant 0 : i32
      %103 = arith.addi %102, %c0_i32_84 : i32
      %104 = arith.index_cast %103 : i32 to index
      %c1_85 = arith.constant 1 : index
      %c1_86 = arith.constant 1 : index
      %c0_87 = arith.constant 0 : index
      %105 = vector.load %arg1[%104, %c1_85, %c1_86, %c0_87] : memref<82x2x41x4xf32, #tpu.memory_space<vmem>>, vector<1x1x40x4xf32>
      %106 = vector.shape_cast %105 : vector<1x1x40x4xf32> to vector<40x4xf32>
      %c0_88 = arith.constant 0 : index
      %c1_89 = arith.constant 1 : index
      %c1_90 = arith.constant 1 : index
      %c0_91 = arith.constant 0 : index
      %c0_92 = arith.constant 0 : index
      %107 = vector.load %arg2[%c0_88, %c1_89, %c1_90, %c0_91, %c0_92] : memref<4x2x2x4x128xf32, #tpu.memory_space<vmem>>, vector<1x1x1x4x128xf32>
      %108 = vector.shape_cast %107 : vector<1x1x1x4x128xf32> to vector<4x128xf32>
      %cst_93 = arith.constant dense<0.000000e+00> : vector<40x128xf32>
      %109 = tpu.matmul %106, %108, %cst_93 {dimension_numbers = #tpu.dot_dimension_numbers<[1], [0], [0], [1], [0, 0, 1, 1], [], []>} : vector<40x4xf32>, vector<4x128xf32>, vector<40x128xf32> -> vector<40x128xf32>
      %110 = arith.addf %101, %109 : vector<40x128xf32>
      %c2_i32_94 = arith.constant 2 : i32
      %111 = arith.muli %c2_i32_94, %arg16 : i32
      %c1_i32_95 = arith.constant 1 : i32
      %112 = arith.addi %111, %c1_i32_95 : i32
      %113 = arith.index_cast %112 : i32 to index
      %c0_96 = arith.constant 0 : index
      %c0_97 = arith.constant 0 : index
      %c0_98 = arith.constant 0 : index
      %114 = vector.load %arg1[%113, %c0_96, %c0_97, %c0_98] : memref<82x2x41x4xf32, #tpu.memory_space<vmem>>, vector<1x1x40x4xf32>
      %115 = vector.shape_cast %114 : vector<1x1x40x4xf32> to vector<40x4xf32>
      %c1_99 = arith.constant 1 : index
      %c0_100 = arith.constant 0 : index
      %c0_101 = arith.constant 0 : index
      %c0_102 = arith.constant 0 : index
      %c0_103 = arith.constant 0 : index
      %116 = vector.load %arg2[%c1_99, %c0_100, %c0_101, %c0_102, %c0_103] : memref<4x2x2x4x128xf32, #tpu.memory_space<vmem>>, vector<1x1x1x4x128xf32>
      %117 = vector.shape_cast %116 : vector<1x1x1x4x128xf32> to vector<4x128xf32>
      %cst_104 = arith.constant dense<0.000000e+00> : vector<40x128xf32>
      %118 = tpu.matmul %115, %117, %cst_104 {dimension_numbers = #tpu.dot_dimension_numbers<[1], [0], [0], [1], [0, 0, 1, 1], [], []>} : vector<40x4xf32>, vector<4x128xf32>, vector<40x128xf32> -> vector<40x128xf32>
      %119 = arith.addf %110, %118 : vector<40x128xf32>
      %c2_i32_105 = arith.constant 2 : i32
      %120 = arith.muli %c2_i32_105, %arg16 : i32
      %c1_i32_106 = arith.constant 1 : i32
      %121 = arith.addi %120, %c1_i32_106 : i32
      %122 = arith.index_cast %121 : i32 to index
      %c1_107 = arith.constant 1 : index
      %c0_108 = arith.constant 0 : index
      %c0_109 = arith.constant 0 : index
      %123 = vector.load %arg1[%122, %c1_107, %c0_108, %c0_109] : memref<82x2x41x4xf32, #tpu.memory_space<vmem>>, vector<1x1x40x4xf32>
      %124 = vector.shape_cast %123 : vector<1x1x40x4xf32> to vector<40x4xf32>
      %c1_110 = arith.constant 1 : index
      %c0_111 = arith.constant 0 : index
      %c1_112 = arith.constant 1 : index
      %c0_113 = arith.constant 0 : index
      %c0_114 = arith.constant 0 : index
      %125 = vector.load %arg2[%c1_110, %c0_111, %c1_112, %c0_113, %c0_114] : memref<4x2x2x4x128xf32, #tpu.memory_space<vmem>>, vector<1x1x1x4x128xf32>
      %126 = vector.shape_cast %125 : vector<1x1x1x4x128xf32> to vector<4x128xf32>
      %cst_115 = arith.constant dense<0.000000e+00> : vector<40x128xf32>
      %127 = tpu.matmul %124, %126, %cst_115 {dimension_numbers = #tpu.dot_dimension_numbers<[1], [0], [0], [1], [0, 0, 1, 1], [], []>} : vector<40x4xf32>, vector<4x128xf32>, vector<40x128xf32> -> vector<40x128xf32>
      %128 = arith.addf %119, %127 : vector<40x128xf32>
      %c2_i32_116 = arith.constant 2 : i32
      %129 = arith.muli %c2_i32_116, %arg16 : i32
      %c1_i32_117 = arith.constant 1 : i32
      %130 = arith.addi %129, %c1_i32_117 : i32
      %131 = arith.index_cast %130 : i32 to index
      %c0_118 = arith.constant 0 : index
      %c1_119 = arith.constant 1 : index
      %c0_120 = arith.constant 0 : index
      %132 = vector.load %arg1[%131, %c0_118, %c1_119, %c0_120] : memref<82x2x41x4xf32, #tpu.memory_space<vmem>>, vector<1x1x40x4xf32>
      %133 = vector.shape_cast %132 : vector<1x1x40x4xf32> to vector<40x4xf32>
      %c1_121 = arith.constant 1 : index
      %c1_122 = arith.constant 1 : index
      %c0_123 = arith.constant 0 : index
      %c0_124 = arith.constant 0 : index
      %c0_125 = arith.constant 0 : index
      %134 = vector.load %arg2[%c1_121, %c1_122, %c0_123, %c0_124, %c0_125] : memref<4x2x2x4x128xf32, #tpu.memory_space<vmem>>, vector<1x1x1x4x128xf32>
      %135 = vector.shape_cast %134 : vector<1x1x1x4x128xf32> to vector<4x128xf32>
      %cst_126 = arith.constant dense<0.000000e+00> : vector<40x128xf32>
      %136 = tpu.matmul %133, %135, %cst_126 {dimension_numbers = #tpu.dot_dimension_numbers<[1], [0], [0], [1], [0, 0, 1, 1], [], []>} : vector<40x4xf32>, vector<4x128xf32>, vector<40x128xf32> -> vector<40x128xf32>
      %137 = arith.addf %128, %136 : vector<40x128xf32>
      %c2_i32_127 = arith.constant 2 : i32
      %138 = arith.muli %c2_i32_127, %arg16 : i32
      %c1_i32_128 = arith.constant 1 : i32
      %139 = arith.addi %138, %c1_i32_128 : i32
      %140 = arith.index_cast %139 : i32 to index
      %c1_129 = arith.constant 1 : index
      %c1_130 = arith.constant 1 : index
      %c0_131 = arith.constant 0 : index
      %141 = vector.load %arg1[%140, %c1_129, %c1_130, %c0_131] : memref<82x2x41x4xf32, #tpu.memory_space<vmem>>, vector<1x1x40x4xf32>
      %142 = vector.shape_cast %141 : vector<1x1x40x4xf32> to vector<40x4xf32>
      %c1_132 = arith.constant 1 : index
      %c1_133 = arith.constant 1 : index
      %c1_134 = arith.constant 1 : index
      %c0_135 = arith.constant 0 : index
      %c0_136 = arith.constant 0 : index
      %143 = vector.load %arg2[%c1_132, %c1_133, %c1_134, %c0_135, %c0_136] : memref<4x2x2x4x128xf32, #tpu.memory_space<vmem>>, vector<1x1x1x4x128xf32>
      %144 = vector.shape_cast %143 : vector<1x1x1x4x128xf32> to vector<4x128xf32>
      %cst_137 = arith.constant dense<0.000000e+00> : vector<40x128xf32>
      %145 = tpu.matmul %142, %144, %cst_137 {dimension_numbers = #tpu.dot_dimension_numbers<[1], [0], [0], [1], [0, 0, 1, 1], [], []>} : vector<40x4xf32>, vector<4x128xf32>, vector<40x128xf32> -> vector<40x128xf32>
      %146 = arith.addf %137, %145 : vector<40x128xf32>
      %c2_i32_138 = arith.constant 2 : i32
      %147 = arith.muli %c2_i32_138, %arg16 : i32
      %c2_i32_139 = arith.constant 2 : i32
      %148 = arith.addi %147, %c2_i32_139 : i32
      %149 = arith.index_cast %148 : i32 to index
      %c0_140 = arith.constant 0 : index
      %c0_141 = arith.constant 0 : index
      %c0_142 = arith.constant 0 : index
      %150 = vector.load %arg1[%149, %c0_140, %c0_141, %c0_142] : memref<82x2x41x4xf32, #tpu.memory_space<vmem>>, vector<1x1x40x4xf32>
      %151 = vector.shape_cast %150 : vector<1x1x40x4xf32> to vector<40x4xf32>
      %c2 = arith.constant 2 : index
      %c0_143 = arith.constant 0 : index
      %c0_144 = arith.constant 0 : index
      %c0_145 = arith.constant 0 : index
      %c0_146 = arith.constant 0 : index
      %152 = vector.load %arg2[%c2, %c0_143, %c0_144, %c0_145, %c0_146] : memref<4x2x2x4x128xf32, #tpu.memory_space<vmem>>, vector<1x1x1x4x128xf32>
      %153 = vector.shape_cast %152 : vector<1x1x1x4x128xf32> to vector<4x128xf32>
      %cst_147 = arith.constant dense<0.000000e+00> : vector<40x128xf32>
      %154 = tpu.matmul %151, %153, %cst_147 {dimension_numbers = #tpu.dot_dimension_numbers<[1], [0], [0], [1], [0, 0, 1, 1], [], []>} : vector<40x4xf32>, vector<4x128xf32>, vector<40x128xf32> -> vector<40x128xf32>
      %155 = arith.addf %146, %154 : vector<40x128xf32>
      %c2_i32_148 = arith.constant 2 : i32
      %156 = arith.muli %c2_i32_148, %arg16 : i32
      %c2_i32_149 = arith.constant 2 : i32
      %157 = arith.addi %156, %c2_i32_149 : i32
      %158 = arith.index_cast %157 : i32 to index
      %c1_150 = arith.constant 1 : index
      %c0_151 = arith.constant 0 : index
      %c0_152 = arith.constant 0 : index
      %159 = vector.load %arg1[%158, %c1_150, %c0_151, %c0_152] : memref<82x2x41x4xf32, #tpu.memory_space<vmem>>, vector<1x1x40x4xf32>
      %160 = vector.shape_cast %159 : vector<1x1x40x4xf32> to vector<40x4xf32>
      %c2_153 = arith.constant 2 : index
      %c0_154 = arith.constant 0 : index
      %c1_155 = arith.constant 1 : index
      %c0_156 = arith.constant 0 : index
      %c0_157 = arith.constant 0 : index
      %161 = vector.load %arg2[%c2_153, %c0_154, %c1_155, %c0_156, %c0_157] : memref<4x2x2x4x128xf32, #tpu.memory_space<vmem>>, vector<1x1x1x4x128xf32>
      %162 = vector.shape_cast %161 : vector<1x1x1x4x128xf32> to vector<4x128xf32>
      %cst_158 = arith.constant dense<0.000000e+00> : vector<40x128xf32>
      %163 = tpu.matmul %160, %162, %cst_158 {dimension_numbers = #tpu.dot_dimension_numbers<[1], [0], [0], [1], [0, 0, 1, 1], [], []>} : vector<40x4xf32>, vector<4x128xf32>, vector<40x128xf32> -> vector<40x128xf32>
      %164 = arith.addf %155, %163 : vector<40x128xf32>
      %c2_i32_159 = arith.constant 2 : i32
      %165 = arith.muli %c2_i32_159, %arg16 : i32
      %c2_i32_160 = arith.constant 2 : i32
      %166 = arith.addi %165, %c2_i32_160 : i32
      %167 = arith.index_cast %166 : i32 to index
      %c0_161 = arith.constant 0 : index
      %c1_162 = arith.constant 1 : index
      %c0_163 = arith.constant 0 : index
      %168 = vector.load %arg1[%167, %c0_161, %c1_162, %c0_163] : memref<82x2x41x4xf32, #tpu.memory_space<vmem>>, vector<1x1x40x4xf32>
      %169 = vector.shape_cast %168 : vector<1x1x40x4xf32> to vector<40x4xf32>
      %c2_164 = arith.constant 2 : index
      %c1_165 = arith.constant 1 : index
      %c0_166 = arith.constant 0 : index
      %c0_167 = arith.constant 0 : index
      %c0_168 = arith.constant 0 : index
      %170 = vector.load %arg2[%c2_164, %c1_165, %c0_166, %c0_167, %c0_168] : memref<4x2x2x4x128xf32, #tpu.memory_space<vmem>>, vector<1x1x1x4x128xf32>
      %171 = vector.shape_cast %170 : vector<1x1x1x4x128xf32> to vector<4x128xf32>
      %cst_169 = arith.constant dense<0.000000e+00> : vector<40x128xf32>
      %172 = tpu.matmul %169, %171, %cst_169 {dimension_numbers = #tpu.dot_dimension_numbers<[1], [0], [0], [1], [0, 0, 1, 1], [], []>} : vector<40x4xf32>, vector<4x128xf32>, vector<40x128xf32> -> vector<40x128xf32>
      %173 = arith.addf %164, %172 : vector<40x128xf32>
      %c2_i32_170 = arith.constant 2 : i32
      %174 = arith.muli %c2_i32_170, %arg16 : i32
      %c2_i32_171 = arith.constant 2 : i32
      %175 = arith.addi %174, %c2_i32_171 : i32
      %176 = arith.index_cast %175 : i32 to index
      %c1_172 = arith.constant 1 : index
      %c1_173 = arith.constant 1 : index
      %c0_174 = arith.constant 0 : index
      %177 = vector.load %arg1[%176, %c1_172, %c1_173, %c0_174] : memref<82x2x41x4xf32, #tpu.memory_space<vmem>>, vector<1x1x40x4xf32>
      %178 = vector.shape_cast %177 : vector<1x1x40x4xf32> to vector<40x4xf32>
      %c2_175 = arith.constant 2 : index
      %c1_176 = arith.constant 1 : index
      %c1_177 = arith.constant 1 : index
      %c0_178 = arith.constant 0 : index
      %c0_179 = arith.constant 0 : index
      %179 = vector.load %arg2[%c2_175, %c1_176, %c1_177, %c0_178, %c0_179] : memref<4x2x2x4x128xf32, #tpu.memory_space<vmem>>, vector<1x1x1x4x128xf32>
      %180 = vector.shape_cast %179 : vector<1x1x1x4x128xf32> to vector<4x128xf32>
      %cst_180 = arith.constant dense<0.000000e+00> : vector<40x128xf32>
      %181 = tpu.matmul %178, %180, %cst_180 {dimension_numbers = #tpu.dot_dimension_numbers<[1], [0], [0], [1], [0, 0, 1, 1], [], []>} : vector<40x4xf32>, vector<4x128xf32>, vector<40x128xf32> -> vector<40x128xf32>
      %182 = arith.addf %173, %181 : vector<40x128xf32>
      %c2_i32_181 = arith.constant 2 : i32
      %183 = arith.muli %c2_i32_181, %arg16 : i32
      %c3_i32 = arith.constant 3 : i32
      %184 = arith.addi %183, %c3_i32 : i32
      %185 = arith.index_cast %184 : i32 to index
      %c0_182 = arith.constant 0 : index
      %c0_183 = arith.constant 0 : index
      %c0_184 = arith.constant 0 : index
      %186 = vector.load %arg1[%185, %c0_182, %c0_183, %c0_184] : memref<82x2x41x4xf32, #tpu.memory_space<vmem>>, vector<1x1x40x4xf32>
      %187 = vector.shape_cast %186 : vector<1x1x40x4xf32> to vector<40x4xf32>
      %c3 = arith.constant 3 : index
      %c0_185 = arith.constant 0 : index
      %c0_186 = arith.constant 0 : index
      %c0_187 = arith.constant 0 : index
      %c0_188 = arith.constant 0 : index
      %188 = vector.load %arg2[%c3, %c0_185, %c0_186, %c0_187, %c0_188] : memref<4x2x2x4x128xf32, #tpu.memory_space<vmem>>, vector<1x1x1x4x128xf32>
      %189 = vector.shape_cast %188 : vector<1x1x1x4x128xf32> to vector<4x128xf32>
      %cst_189 = arith.constant dense<0.000000e+00> : vector<40x128xf32>
      %190 = tpu.matmul %187, %189, %cst_189 {dimension_numbers = #tpu.dot_dimension_numbers<[1], [0], [0], [1], [0, 0, 1, 1], [], []>} : vector<40x4xf32>, vector<4x128xf32>, vector<40x128xf32> -> vector<40x128xf32>
      %191 = arith.addf %182, %190 : vector<40x128xf32>
      %c2_i32_190 = arith.constant 2 : i32
      %192 = arith.muli %c2_i32_190, %arg16 : i32
      %c3_i32_191 = arith.constant 3 : i32
      %193 = arith.addi %192, %c3_i32_191 : i32
      %194 = arith.index_cast %193 : i32 to index
      %c1_192 = arith.constant 1 : index
      %c0_193 = arith.constant 0 : index
      %c0_194 = arith.constant 0 : index
      %195 = vector.load %arg1[%194, %c1_192, %c0_193, %c0_194] : memref<82x2x41x4xf32, #tpu.memory_space<vmem>>, vector<1x1x40x4xf32>
      %196 = vector.shape_cast %195 : vector<1x1x40x4xf32> to vector<40x4xf32>
      %c3_195 = arith.constant 3 : index
      %c0_196 = arith.constant 0 : index
      %c1_197 = arith.constant 1 : index
      %c0_198 = arith.constant 0 : index
      %c0_199 = arith.constant 0 : index
      %197 = vector.load %arg2[%c3_195, %c0_196, %c1_197, %c0_198, %c0_199] : memref<4x2x2x4x128xf32, #tpu.memory_space<vmem>>, vector<1x1x1x4x128xf32>
      %198 = vector.shape_cast %197 : vector<1x1x1x4x128xf32> to vector<4x128xf32>
      %cst_200 = arith.constant dense<0.000000e+00> : vector<40x128xf32>
      %199 = tpu.matmul %196, %198, %cst_200 {dimension_numbers = #tpu.dot_dimension_numbers<[1], [0], [0], [1], [0, 0, 1, 1], [], []>} : vector<40x4xf32>, vector<4x128xf32>, vector<40x128xf32> -> vector<40x128xf32>
      %200 = arith.addf %191, %199 : vector<40x128xf32>
      %c2_i32_201 = arith.constant 2 : i32
      %201 = arith.muli %c2_i32_201, %arg16 : i32
      %c3_i32_202 = arith.constant 3 : i32
      %202 = arith.addi %201, %c3_i32_202 : i32
      %203 = arith.index_cast %202 : i32 to index
      %c0_203 = arith.constant 0 : index
      %c1_204 = arith.constant 1 : index
      %c0_205 = arith.constant 0 : index
      %204 = vector.load %arg1[%203, %c0_203, %c1_204, %c0_205] : memref<82x2x41x4xf32, #tpu.memory_space<vmem>>, vector<1x1x40x4xf32>
      %205 = vector.shape_cast %204 : vector<1x1x40x4xf32> to vector<40x4xf32>
      %c3_206 = arith.constant 3 : index
      %c1_207 = arith.constant 1 : index
      %c0_208 = arith.constant 0 : index
      %c0_209 = arith.constant 0 : index
      %c0_210 = arith.constant 0 : index
      %206 = vector.load %arg2[%c3_206, %c1_207, %c0_208, %c0_209, %c0_210] : memref<4x2x2x4x128xf32, #tpu.memory_space<vmem>>, vector<1x1x1x4x128xf32>
      %207 = vector.shape_cast %206 : vector<1x1x1x4x128xf32> to vector<4x128xf32>
      %cst_211 = arith.constant dense<0.000000e+00> : vector<40x128xf32>
      %208 = tpu.matmul %205, %207, %cst_211 {dimension_numbers = #tpu.dot_dimension_numbers<[1], [0], [0], [1], [0, 0, 1, 1], [], []>} : vector<40x4xf32>, vector<4x128xf32>, vector<40x128xf32> -> vector<40x128xf32>
      %209 = arith.addf %200, %208 : vector<40x128xf32>
      %c2_i32_212 = arith.constant 2 : i32
      %210 = arith.muli %c2_i32_212, %arg16 : i32
      %c3_i32_213 = arith.constant 3 : i32
      %211 = arith.addi %210, %c3_i32_213 : i32
      %212 = arith.index_cast %211 : i32 to index
      %c1_214 = arith.constant 1 : index
      %c1_215 = arith.constant 1 : index
      %c0_216 = arith.constant 0 : index
      %213 = vector.load %arg1[%212, %c1_214, %c1_215, %c0_216] : memref<82x2x41x4xf32, #tpu.memory_space<vmem>>, vector<1x1x40x4xf32>
      %214 = vector.shape_cast %213 : vector<1x1x40x4xf32> to vector<40x4xf32>
      %c3_217 = arith.constant 3 : index
      %c1_218 = arith.constant 1 : index
      %c1_219 = arith.constant 1 : index
      %c0_220 = arith.constant 0 : index
      %c0_221 = arith.constant 0 : index
      %215 = vector.load %arg2[%c3_217, %c1_218, %c1_219, %c0_220, %c0_221] : memref<4x2x2x4x128xf32, #tpu.memory_space<vmem>>, vector<1x1x1x4x128xf32>
      %216 = vector.shape_cast %215 : vector<1x1x1x4x128xf32> to vector<4x128xf32>
      %cst_222 = arith.constant dense<0.000000e+00> : vector<40x128xf32>
      %217 = tpu.matmul %214, %216, %cst_222 {dimension_numbers = #tpu.dot_dimension_numbers<[1], [0], [0], [1], [0, 0, 1, 1], [], []>} : vector<40x4xf32>, vector<4x128xf32>, vector<40x128xf32> -> vector<40x128xf32>
      %218 = arith.addf %209, %217 : vector<40x128xf32>
      %219 = vector.broadcast %16 : vector<1x128xf32> to vector<40x128xf32>
      %220 = arith.addf %218, %219 : vector<40x128xf32>
      %cst_223 = arith.constant 0.000000e+00 : f32
      %221 = vector.broadcast %cst_223 : f32 to vector<40x128xf32>
      %222 = arith.maximumf %220, %221 : vector<40x128xf32>
      %cst_224 = arith.constant dense<0.000000e+00> : vector<20x128xf32>
      %223 = tpu.matmul %8, %222, %cst_224 {dimension_numbers = #tpu.dot_dimension_numbers<[1], [0], [0], [1], [0, 0, 1, 1], [], []>} : vector<20x40xf32>, vector<40x128xf32>, vector<20x128xf32> -> vector<20x128xf32>
      %cst_225 = arith.constant dense<0.000000e+00> : vector<20x128xf32>
      %224 = tpu.matmul %15, %222, %cst_225 {dimension_numbers = #tpu.dot_dimension_numbers<[1], [0], [0], [1], [0, 0, 1, 1], [], []>} : vector<20x40xf32>, vector<40x128xf32>, vector<20x128xf32> -> vector<20x128xf32>
      %c1_i32_226 = arith.constant 1 : i32
      %225 = arith.addi %arg16, %c1_i32_226 : i32
      %226 = arith.index_cast %225 : i32 to index
      %c1_227 = arith.constant 1 : index
      %c0_228 = arith.constant 0 : index
      %c0_229 = arith.constant 0 : index
      %227 = vector.load %arg13[%226, %c1_227, %c0_228, %c0_229] : memref<42x2x21x128xf32, #tpu.memory_space<vmem>>, vector<1x1x20x128xf32>
      %228 = vector.shape_cast %227 : vector<1x1x20x128xf32> to vector<20x128xf32>
      %229 = vector.shape_cast %223 : vector<20x128xf32> to vector<1x1x20x128xf32>
      tpu.vector_store %arg13[%226, %c1_227, %c0_228, %c0_229], %229 {strides = array<i32>} : memref<42x2x21x128xf32, #tpu.memory_space<vmem>>, vector<1x1x20x128xf32>,
      %c1_i32_230 = arith.constant 1 : i32
      %230 = arith.addi %arg16, %c1_i32_230 : i32
      %231 = arith.index_cast %230 : i32 to index
      %c0_231 = arith.constant 0 : index
      %c1_232 = arith.constant 1 : index
      %c0_233 = arith.constant 0 : index
      %232 = vector.load %arg13[%231, %c0_231, %c1_232, %c0_233] : memref<42x2x21x128xf32, #tpu.memory_space<vmem>>, vector<1x1x20x128xf32>
      %233 = vector.shape_cast %232 : vector<1x1x20x128xf32> to vector<20x128xf32>
      %234 = vector.shape_cast %224 : vector<20x128xf32> to vector<1x1x20x128xf32>
      tpu.vector_store %arg13[%231, %c0_231, %c1_232, %c0_233], %234 {strides = array<i32>} : memref<42x2x21x128xf32, #tpu.memory_space<vmem>>, vector<1x1x20x128xf32>,
    }
    %c40_i32_7 = arith.constant 40 : i32
    %cst_8 = arith.constant 0.000000e+00 : f32
    %18 = vector.broadcast %cst_8 : f32 to vector<22x2x11x128xf32>
    %c0_9 = arith.constant 0 : index
    %c0_10 = arith.constant 0 : index
    %c0_11 = arith.constant 0 : index
    %c0_12 = arith.constant 0 : index
    %19 = vector.load %arg14[%c0_9, %c0_10, %c0_11, %c0_12] : memref<22x2x11x128xf32, #tpu.memory_space<vmem>>, vector<22x2x11x128xf32>
    tpu.vector_store %arg14[%c0_9, %c0_10, %c0_11, %c0_12], %18 {strides = array<i32>} : memref<22x2x11x128xf32, #tpu.memory_space<vmem>>, vector<22x2x11x128xf32>,
    %20 = tpu.iota {dimensions = array<i32: 0>} : vector<10x20xi32>
    %21 = tpu.iota {dimensions = array<i32: 1>} : vector<10x20xi32>
    %c2_i32_13 = arith.constant 2 : i32
    %22 = vector.broadcast %c2_i32_13 : i32 to vector<10x20xi32>
    %23 = arith.muli %22, %20 : vector<10x20xi32>
    %24 = arith.cmpi eq, %21, %23 : vector<10x20xi32>
    %25 = arith.extui %24 : vector<10x20xi1> to vector<10x20xi32>
    %26 = arith.sitofp %25 : vector<10x20xi32> to vector<10x20xf32>
    %c2_i32_14 = arith.constant 2 : i32
    %27 = vector.broadcast %c2_i32_14 : i32 to vector<10x20xi32>
    %28 = arith.muli %27, %20 : vector<10x20xi32>
    %c1_i32_15 = arith.constant 1 : i32
    %29 = vector.broadcast %c1_i32_15 : i32 to vector<10x20xi32>
    %30 = arith.addi %28, %29 : vector<10x20xi32>
    %31 = arith.cmpi eq, %21, %30 : vector<10x20xi32>
    %32 = arith.extui %31 : vector<10x20xi1> to vector<10x20xi32>
    %33 = arith.sitofp %32 : vector<10x20xi32> to vector<10x20xf32>
    %c0_16 = arith.constant 0 : index
    %c0_17 = arith.constant 0 : index
    %34 = vector.load %arg5[%c0_16, %c0_17] : memref<1x128xf32, #tpu.memory_space<vmem>>, vector<1x128xf32>
    %c0_i32_18 = arith.constant 0 : i32
    %c20_i32 = arith.constant 20 : i32
    %35 = arith.addi %c0_i32_18, %c20_i32 : i32
    %c1_i32_19 = arith.constant 1 : i32
    scf.for %arg16 = %c0_i32_18 to %35 step %c1_i32_19  : i32 {
      %cst_50 = arith.constant 0.000000e+00 : f32
      %74 = vector.broadcast %cst_50 : f32 to vector<20x128xf32>
      %c2_i32_51 = arith.constant 2 : i32
      %75 = arith.muli %c2_i32_51, %arg16 : i32
      %c0_i32_52 = arith.constant 0 : i32
      %76 = arith.addi %75, %c0_i32_52 : i32
      %77 = arith.index_cast %76 : i32 to index
      %c0_53 = arith.constant 0 : index
      %c0_54 = arith.constant 0 : index
      %c0_55 = arith.constant 0 : index
      %78 = vector.load %arg13[%77, %c0_53, %c0_54, %c0_55] : memref<42x2x21x128xf32, #tpu.memory_space<vmem>>, vector<1x1x20x128xf32>
      %79 = vector.shape_cast %78 : vector<1x1x20x128xf32> to vector<20x128xf32>
      %c0_56 = arith.constant 0 : index
      %c0_57 = arith.constant 0 : index
      %c0_58 = arith.constant 0 : index
      %c0_59 = arith.constant 0 : index
      %c0_60 = arith.constant 0 : index
      %80 = vector.load %arg4[%c0_56, %c0_57, %c0_58, %c0_59, %c0_60] : memref<4x2x2x128x128xf32, #tpu.memory_space<vmem>>, vector<1x1x1x128x128xf32>
      %81 = vector.shape_cast %80 : vector<1x1x1x128x128xf32> to vector<128x128xf32>
      %cst_61 = arith.constant dense<0.000000e+00> : vector<20x128xf32>
      %82 = tpu.matmul %79, %81, %cst_61 {dimension_numbers = #tpu.dot_dimension_numbers<[1], [0], [0], [1], [0, 0, 1, 1], [], []>} : vector<20x128xf32>, vector<128x128xf32>, vector<20x128xf32> -> vector<20x128xf32>
      %83 = arith.addf %74, %82 : vector<20x128xf32>
      %c2_i32_62 = arith.constant 2 : i32
      %84 = arith.muli %c2_i32_62, %arg16 : i32
      %c0_i32_63 = arith.constant 0 : i32
      %85 = arith.addi %84, %c0_i32_63 : i32
      %86 = arith.index_cast %85 : i32 to index
      %c1 = arith.constant 1 : index
      %c0_64 = arith.constant 0 : index
      %c0_65 = arith.constant 0 : index
      %87 = vector.load %arg13[%86, %c1, %c0_64, %c0_65] : memref<42x2x21x128xf32, #tpu.memory_space<vmem>>, vector<1x1x20x128xf32>
      %88 = vector.shape_cast %87 : vector<1x1x20x128xf32> to vector<20x128xf32>
      %c0_66 = arith.constant 0 : index
      %c0_67 = arith.constant 0 : index
      %c1_68 = arith.constant 1 : index
      %c0_69 = arith.constant 0 : index
      %c0_70 = arith.constant 0 : index
      %89 = vector.load %arg4[%c0_66, %c0_67, %c1_68, %c0_69, %c0_70] : memref<4x2x2x128x128xf32, #tpu.memory_space<vmem>>, vector<1x1x1x128x128xf32>
      %90 = vector.shape_cast %89 : vector<1x1x1x128x128xf32> to vector<128x128xf32>
      %cst_71 = arith.constant dense<0.000000e+00> : vector<20x128xf32>
      %91 = tpu.matmul %88, %90, %cst_71 {dimension_numbers = #tpu.dot_dimension_numbers<[1], [0], [0], [1], [0, 0, 1, 1], [], []>} : vector<20x128xf32>, vector<128x128xf32>, vector<20x128xf32> -> vector<20x128xf32>
      %92 = arith.addf %83, %91 : vector<20x128xf32>
      %c2_i32_72 = arith.constant 2 : i32
      %93 = arith.muli %c2_i32_72, %arg16 : i32
      %c0_i32_73 = arith.constant 0 : i32
      %94 = arith.addi %93, %c0_i32_73 : i32
      %95 = arith.index_cast %94 : i32 to index
      %c0_74 = arith.constant 0 : index
      %c1_75 = arith.constant 1 : index
      %c0_76 = arith.constant 0 : index
      %96 = vector.load %arg13[%95, %c0_74, %c1_75, %c0_76] : memref<42x2x21x128xf32, #tpu.memory_space<vmem>>, vector<1x1x20x128xf32>
      %97 = vector.shape_cast %96 : vector<1x1x20x128xf32> to vector<20x128xf32>
      %c0_77 = arith.constant 0 : index
      %c1_78 = arith.constant 1 : index
      %c0_79 = arith.constant 0 : index
      %c0_80 = arith.constant 0 : index
      %c0_81 = arith.constant 0 : index
      %98 = vector.load %arg4[%c0_77, %c1_78, %c0_79, %c0_80, %c0_81] : memref<4x2x2x128x128xf32, #tpu.memory_space<vmem>>, vector<1x1x1x128x128xf32>
      %99 = vector.shape_cast %98 : vector<1x1x1x128x128xf32> to vector<128x128xf32>
      %cst_82 = arith.constant dense<0.000000e+00> : vector<20x128xf32>
      %100 = tpu.matmul %97, %99, %cst_82 {dimension_numbers = #tpu.dot_dimension_numbers<[1], [0], [0], [1], [0, 0, 1, 1], [], []>} : vector<20x128xf32>, vector<128x128xf32>, vector<20x128xf32> -> vector<20x128xf32>
      %101 = arith.addf %92, %100 : vector<20x128xf32>
      %c2_i32_83 = arith.constant 2 : i32
      %102 = arith.muli %c2_i32_83, %arg16 : i32
      %c0_i32_84 = arith.constant 0 : i32
      %103 = arith.addi %102, %c0_i32_84 : i32
      %104 = arith.index_cast %103 : i32 to index
      %c1_85 = arith.constant 1 : index
      %c1_86 = arith.constant 1 : index
      %c0_87 = arith.constant 0 : index
      %105 = vector.load %arg13[%104, %c1_85, %c1_86, %c0_87] : memref<42x2x21x128xf32, #tpu.memory_space<vmem>>, vector<1x1x20x128xf32>
      %106 = vector.shape_cast %105 : vector<1x1x20x128xf32> to vector<20x128xf32>
      %c0_88 = arith.constant 0 : index
      %c1_89 = arith.constant 1 : index
      %c1_90 = arith.constant 1 : index
      %c0_91 = arith.constant 0 : index
      %c0_92 = arith.constant 0 : index
      %107 = vector.load %arg4[%c0_88, %c1_89, %c1_90, %c0_91, %c0_92] : memref<4x2x2x128x128xf32, #tpu.memory_space<vmem>>, vector<1x1x1x128x128xf32>
      %108 = vector.shape_cast %107 : vector<1x1x1x128x128xf32> to vector<128x128xf32>
      %cst_93 = arith.constant dense<0.000000e+00> : vector<20x128xf32>
      %109 = tpu.matmul %106, %108, %cst_93 {dimension_numbers = #tpu.dot_dimension_numbers<[1], [0], [0], [1], [0, 0, 1, 1], [], []>} : vector<20x128xf32>, vector<128x128xf32>, vector<20x128xf32> -> vector<20x128xf32>
      %110 = arith.addf %101, %109 : vector<20x128xf32>
      %c2_i32_94 = arith.constant 2 : i32
      %111 = arith.muli %c2_i32_94, %arg16 : i32
      %c1_i32_95 = arith.constant 1 : i32
      %112 = arith.addi %111, %c1_i32_95 : i32
      %113 = arith.index_cast %112 : i32 to index
      %c0_96 = arith.constant 0 : index
      %c0_97 = arith.constant 0 : index
      %c0_98 = arith.constant 0 : index
      %114 = vector.load %arg13[%113, %c0_96, %c0_97, %c0_98] : memref<42x2x21x128xf32, #tpu.memory_space<vmem>>, vector<1x1x20x128xf32>
      %115 = vector.shape_cast %114 : vector<1x1x20x128xf32> to vector<20x128xf32>
      %c1_99 = arith.constant 1 : index
      %c0_100 = arith.constant 0 : index
      %c0_101 = arith.constant 0 : index
      %c0_102 = arith.constant 0 : index
      %c0_103 = arith.constant 0 : index
      %116 = vector.load %arg4[%c1_99, %c0_100, %c0_101, %c0_102, %c0_103] : memref<4x2x2x128x128xf32, #tpu.memory_space<vmem>>, vector<1x1x1x128x128xf32>
      %117 = vector.shape_cast %116 : vector<1x1x1x128x128xf32> to vector<128x128xf32>
      %cst_104 = arith.constant dense<0.000000e+00> : vector<20x128xf32>
      %118 = tpu.matmul %115, %117, %cst_104 {dimension_numbers = #tpu.dot_dimension_numbers<[1], [0], [0], [1], [0, 0, 1, 1], [], []>} : vector<20x128xf32>, vector<128x128xf32>, vector<20x128xf32> -> vector<20x128xf32>
      %119 = arith.addf %110, %118 : vector<20x128xf32>
      %c2_i32_105 = arith.constant 2 : i32
      %120 = arith.muli %c2_i32_105, %arg16 : i32
      %c1_i32_106 = arith.constant 1 : i32
      %121 = arith.addi %120, %c1_i32_106 : i32
      %122 = arith.index_cast %121 : i32 to index
      %c1_107 = arith.constant 1 : index
      %c0_108 = arith.constant 0 : index
      %c0_109 = arith.constant 0 : index
      %123 = vector.load %arg13[%122, %c1_107, %c0_108, %c0_109] : memref<42x2x21x128xf32, #tpu.memory_space<vmem>>, vector<1x1x20x128xf32>
      %124 = vector.shape_cast %123 : vector<1x1x20x128xf32> to vector<20x128xf32>
      %c1_110 = arith.constant 1 : index
      %c0_111 = arith.constant 0 : index
      %c1_112 = arith.constant 1 : index
      %c0_113 = arith.constant 0 : index
      %c0_114 = arith.constant 0 : index
      %125 = vector.load %arg4[%c1_110, %c0_111, %c1_112, %c0_113, %c0_114] : memref<4x2x2x128x128xf32, #tpu.memory_space<vmem>>, vector<1x1x1x128x128xf32>
      %126 = vector.shape_cast %125 : vector<1x1x1x128x128xf32> to vector<128x128xf32>
      %cst_115 = arith.constant dense<0.000000e+00> : vector<20x128xf32>
      %127 = tpu.matmul %124, %126, %cst_115 {dimension_numbers = #tpu.dot_dimension_numbers<[1], [0], [0], [1], [0, 0, 1, 1], [], []>} : vector<20x128xf32>, vector<128x128xf32>, vector<20x128xf32> -> vector<20x128xf32>
      %128 = arith.addf %119, %127 : vector<20x128xf32>
      %c2_i32_116 = arith.constant 2 : i32
      %129 = arith.muli %c2_i32_116, %arg16 : i32
      %c1_i32_117 = arith.constant 1 : i32
      %130 = arith.addi %129, %c1_i32_117 : i32
      %131 = arith.index_cast %130 : i32 to index
      %c0_118 = arith.constant 0 : index
      %c1_119 = arith.constant 1 : index
      %c0_120 = arith.constant 0 : index
      %132 = vector.load %arg13[%131, %c0_118, %c1_119, %c0_120] : memref<42x2x21x128xf32, #tpu.memory_space<vmem>>, vector<1x1x20x128xf32>
      %133 = vector.shape_cast %132 : vector<1x1x20x128xf32> to vector<20x128xf32>
      %c1_121 = arith.constant 1 : index
      %c1_122 = arith.constant 1 : index
      %c0_123 = arith.constant 0 : index
      %c0_124 = arith.constant 0 : index
      %c0_125 = arith.constant 0 : index
      %134 = vector.load %arg4[%c1_121, %c1_122, %c0_123, %c0_124, %c0_125] : memref<4x2x2x128x128xf32, #tpu.memory_space<vmem>>, vector<1x1x1x128x128xf32>
      %135 = vector.shape_cast %134 : vector<1x1x1x128x128xf32> to vector<128x128xf32>
      %cst_126 = arith.constant dense<0.000000e+00> : vector<20x128xf32>
      %136 = tpu.matmul %133, %135, %cst_126 {dimension_numbers = #tpu.dot_dimension_numbers<[1], [0], [0], [1], [0, 0, 1, 1], [], []>} : vector<20x128xf32>, vector<128x128xf32>, vector<20x128xf32> -> vector<20x128xf32>
      %137 = arith.addf %128, %136 : vector<20x128xf32>
      %c2_i32_127 = arith.constant 2 : i32
      %138 = arith.muli %c2_i32_127, %arg16 : i32
      %c1_i32_128 = arith.constant 1 : i32
      %139 = arith.addi %138, %c1_i32_128 : i32
      %140 = arith.index_cast %139 : i32 to index
      %c1_129 = arith.constant 1 : index
      %c1_130 = arith.constant 1 : index
      %c0_131 = arith.constant 0 : index
      %141 = vector.load %arg13[%140, %c1_129, %c1_130, %c0_131] : memref<42x2x21x128xf32, #tpu.memory_space<vmem>>, vector<1x1x20x128xf32>
      %142 = vector.shape_cast %141 : vector<1x1x20x128xf32> to vector<20x128xf32>
      %c1_132 = arith.constant 1 : index
      %c1_133 = arith.constant 1 : index
      %c1_134 = arith.constant 1 : index
      %c0_135 = arith.constant 0 : index
      %c0_136 = arith.constant 0 : index
      %143 = vector.load %arg4[%c1_132, %c1_133, %c1_134, %c0_135, %c0_136] : memref<4x2x2x128x128xf32, #tpu.memory_space<vmem>>, vector<1x1x1x128x128xf32>
      %144 = vector.shape_cast %143 : vector<1x1x1x128x128xf32> to vector<128x128xf32>
      %cst_137 = arith.constant dense<0.000000e+00> : vector<20x128xf32>
      %145 = tpu.matmul %142, %144, %cst_137 {dimension_numbers = #tpu.dot_dimension_numbers<[1], [0], [0], [1], [0, 0, 1, 1], [], []>} : vector<20x128xf32>, vector<128x128xf32>, vector<20x128xf32> -> vector<20x128xf32>
      %146 = arith.addf %137, %145 : vector<20x128xf32>
      %c2_i32_138 = arith.constant 2 : i32
      %147 = arith.muli %c2_i32_138, %arg16 : i32
      %c2_i32_139 = arith.constant 2 : i32
      %148 = arith.addi %147, %c2_i32_139 : i32
      %149 = arith.index_cast %148 : i32 to index
      %c0_140 = arith.constant 0 : index
      %c0_141 = arith.constant 0 : index
      %c0_142 = arith.constant 0 : index
      %150 = vector.load %arg13[%149, %c0_140, %c0_141, %c0_142] : memref<42x2x21x128xf32, #tpu.memory_space<vmem>>, vector<1x1x20x128xf32>
      %151 = vector.shape_cast %150 : vector<1x1x20x128xf32> to vector<20x128xf32>
      %c2 = arith.constant 2 : index
      %c0_143 = arith.constant 0 : index
      %c0_144 = arith.constant 0 : index
      %c0_145 = arith.constant 0 : index
      %c0_146 = arith.constant 0 : index
      %152 = vector.load %arg4[%c2, %c0_143, %c0_144, %c0_145, %c0_146] : memref<4x2x2x128x128xf32, #tpu.memory_space<vmem>>, vector<1x1x1x128x128xf32>
      %153 = vector.shape_cast %152 : vector<1x1x1x128x128xf32> to vector<128x128xf32>
      %cst_147 = arith.constant dense<0.000000e+00> : vector<20x128xf32>
      %154 = tpu.matmul %151, %153, %cst_147 {dimension_numbers = #tpu.dot_dimension_numbers<[1], [0], [0], [1], [0, 0, 1, 1], [], []>} : vector<20x128xf32>, vector<128x128xf32>, vector<20x128xf32> -> vector<20x128xf32>
      %155 = arith.addf %146, %154 : vector<20x128xf32>
      %c2_i32_148 = arith.constant 2 : i32
      %156 = arith.muli %c2_i32_148, %arg16 : i32
      %c2_i32_149 = arith.constant 2 : i32
      %157 = arith.addi %156, %c2_i32_149 : i32
      %158 = arith.index_cast %157 : i32 to index
      %c1_150 = arith.constant 1 : index
      %c0_151 = arith.constant 0 : index
      %c0_152 = arith.constant 0 : index
      %159 = vector.load %arg13[%158, %c1_150, %c0_151, %c0_152] : memref<42x2x21x128xf32, #tpu.memory_space<vmem>>, vector<1x1x20x128xf32>
      %160 = vector.shape_cast %159 : vector<1x1x20x128xf32> to vector<20x128xf32>
      %c2_153 = arith.constant 2 : index
      %c0_154 = arith.constant 0 : index
      %c1_155 = arith.constant 1 : index
      %c0_156 = arith.constant 0 : index
      %c0_157 = arith.constant 0 : index
      %161 = vector.load %arg4[%c2_153, %c0_154, %c1_155, %c0_156, %c0_157] : memref<4x2x2x128x128xf32, #tpu.memory_space<vmem>>, vector<1x1x1x128x128xf32>
      %162 = vector.shape_cast %161 : vector<1x1x1x128x128xf32> to vector<128x128xf32>
      %cst_158 = arith.constant dense<0.000000e+00> : vector<20x128xf32>
      %163 = tpu.matmul %160, %162, %cst_158 {dimension_numbers = #tpu.dot_dimension_numbers<[1], [0], [0], [1], [0, 0, 1, 1], [], []>} : vector<20x128xf32>, vector<128x128xf32>, vector<20x128xf32> -> vector<20x128xf32>
      %164 = arith.addf %155, %163 : vector<20x128xf32>
      %c2_i32_159 = arith.constant 2 : i32
      %165 = arith.muli %c2_i32_159, %arg16 : i32
      %c2_i32_160 = arith.constant 2 : i32
      %166 = arith.addi %165, %c2_i32_160 : i32
      %167 = arith.index_cast %166 : i32 to index
      %c0_161 = arith.constant 0 : index
      %c1_162 = arith.constant 1 : index
      %c0_163 = arith.constant 0 : index
      %168 = vector.load %arg13[%167, %c0_161, %c1_162, %c0_163] : memref<42x2x21x128xf32, #tpu.memory_space<vmem>>, vector<1x1x20x128xf32>
      %169 = vector.shape_cast %168 : vector<1x1x20x128xf32> to vector<20x128xf32>
      %c2_164 = arith.constant 2 : index
      %c1_165 = arith.constant 1 : index
      %c0_166 = arith.constant 0 : index
      %c0_167 = arith.constant 0 : index
      %c0_168 = arith.constant 0 : index
      %170 = vector.load %arg4[%c2_164, %c1_165, %c0_166, %c0_167, %c0_168] : memref<4x2x2x128x128xf32, #tpu.memory_space<vmem>>, vector<1x1x1x128x128xf32>
      %171 = vector.shape_cast %170 : vector<1x1x1x128x128xf32> to vector<128x128xf32>
      %cst_169 = arith.constant dense<0.000000e+00> : vector<20x128xf32>
      %172 = tpu.matmul %169, %171, %cst_169 {dimension_numbers = #tpu.dot_dimension_numbers<[1], [0], [0], [1], [0, 0, 1, 1], [], []>} : vector<20x128xf32>, vector<128x128xf32>, vector<20x128xf32> -> vector<20x128xf32>
      %173 = arith.addf %164, %172 : vector<20x128xf32>
      %c2_i32_170 = arith.constant 2 : i32
      %174 = arith.muli %c2_i32_170, %arg16 : i32
      %c2_i32_171 = arith.constant 2 : i32
      %175 = arith.addi %174, %c2_i32_171 : i32
      %176 = arith.index_cast %175 : i32 to index
      %c1_172 = arith.constant 1 : index
      %c1_173 = arith.constant 1 : index
      %c0_174 = arith.constant 0 : index
      %177 = vector.load %arg13[%176, %c1_172, %c1_173, %c0_174] : memref<42x2x21x128xf32, #tpu.memory_space<vmem>>, vector<1x1x20x128xf32>
      %178 = vector.shape_cast %177 : vector<1x1x20x128xf32> to vector<20x128xf32>
      %c2_175 = arith.constant 2 : index
      %c1_176 = arith.constant 1 : index
      %c1_177 = arith.constant 1 : index
      %c0_178 = arith.constant 0 : index
      %c0_179 = arith.constant 0 : index
      %179 = vector.load %arg4[%c2_175, %c1_176, %c1_177, %c0_178, %c0_179] : memref<4x2x2x128x128xf32, #tpu.memory_space<vmem>>, vector<1x1x1x128x128xf32>
      %180 = vector.shape_cast %179 : vector<1x1x1x128x128xf32> to vector<128x128xf32>
      %cst_180 = arith.constant dense<0.000000e+00> : vector<20x128xf32>
      %181 = tpu.matmul %178, %180, %cst_180 {dimension_numbers = #tpu.dot_dimension_numbers<[1], [0], [0], [1], [0, 0, 1, 1], [], []>} : vector<20x128xf32>, vector<128x128xf32>, vector<20x128xf32> -> vector<20x128xf32>
      %182 = arith.addf %173, %181 : vector<20x128xf32>
      %c2_i32_181 = arith.constant 2 : i32
      %183 = arith.muli %c2_i32_181, %arg16 : i32
      %c3_i32 = arith.constant 3 : i32
      %184 = arith.addi %183, %c3_i32 : i32
      %185 = arith.index_cast %184 : i32 to index
      %c0_182 = arith.constant 0 : index
      %c0_183 = arith.constant 0 : index
      %c0_184 = arith.constant 0 : index
      %186 = vector.load %arg13[%185, %c0_182, %c0_183, %c0_184] : memref<42x2x21x128xf32, #tpu.memory_space<vmem>>, vector<1x1x20x128xf32>
      %187 = vector.shape_cast %186 : vector<1x1x20x128xf32> to vector<20x128xf32>
      %c3 = arith.constant 3 : index
      %c0_185 = arith.constant 0 : index
      %c0_186 = arith.constant 0 : index
      %c0_187 = arith.constant 0 : index
      %c0_188 = arith.constant 0 : index
      %188 = vector.load %arg4[%c3, %c0_185, %c0_186, %c0_187, %c0_188] : memref<4x2x2x128x128xf32, #tpu.memory_space<vmem>>, vector<1x1x1x128x128xf32>
      %189 = vector.shape_cast %188 : vector<1x1x1x128x128xf32> to vector<128x128xf32>
      %cst_189 = arith.constant dense<0.000000e+00> : vector<20x128xf32>
      %190 = tpu.matmul %187, %189, %cst_189 {dimension_numbers = #tpu.dot_dimension_numbers<[1], [0], [0], [1], [0, 0, 1, 1], [], []>} : vector<20x128xf32>, vector<128x128xf32>, vector<20x128xf32> -> vector<20x128xf32>
      %191 = arith.addf %182, %190 : vector<20x128xf32>
      %c2_i32_190 = arith.constant 2 : i32
      %192 = arith.muli %c2_i32_190, %arg16 : i32
      %c3_i32_191 = arith.constant 3 : i32
      %193 = arith.addi %192, %c3_i32_191 : i32
      %194 = arith.index_cast %193 : i32 to index
      %c1_192 = arith.constant 1 : index
      %c0_193 = arith.constant 0 : index
      %c0_194 = arith.constant 0 : index
      %195 = vector.load %arg13[%194, %c1_192, %c0_193, %c0_194] : memref<42x2x21x128xf32, #tpu.memory_space<vmem>>, vector<1x1x20x128xf32>
      %196 = vector.shape_cast %195 : vector<1x1x20x128xf32> to vector<20x128xf32>
      %c3_195 = arith.constant 3 : index
      %c0_196 = arith.constant 0 : index
      %c1_197 = arith.constant 1 : index
      %c0_198 = arith.constant 0 : index
      %c0_199 = arith.constant 0 : index
      %197 = vector.load %arg4[%c3_195, %c0_196, %c1_197, %c0_198, %c0_199] : memref<4x2x2x128x128xf32, #tpu.memory_space<vmem>>, vector<1x1x1x128x128xf32>
      %198 = vector.shape_cast %197 : vector<1x1x1x128x128xf32> to vector<128x128xf32>
      %cst_200 = arith.constant dense<0.000000e+00> : vector<20x128xf32>
      %199 = tpu.matmul %196, %198, %cst_200 {dimension_numbers = #tpu.dot_dimension_numbers<[1], [0], [0], [1], [0, 0, 1, 1], [], []>} : vector<20x128xf32>, vector<128x128xf32>, vector<20x128xf32> -> vector<20x128xf32>
      %200 = arith.addf %191, %199 : vector<20x128xf32>
      %c2_i32_201 = arith.constant 2 : i32
      %201 = arith.muli %c2_i32_201, %arg16 : i32
      %c3_i32_202 = arith.constant 3 : i32
      %202 = arith.addi %201, %c3_i32_202 : i32
      %203 = arith.index_cast %202 : i32 to index
      %c0_203 = arith.constant 0 : index
      %c1_204 = arith.constant 1 : index
      %c0_205 = arith.constant 0 : index
      %204 = vector.load %arg13[%203, %c0_203, %c1_204, %c0_205] : memref<42x2x21x128xf32, #tpu.memory_space<vmem>>, vector<1x1x20x128xf32>
      %205 = vector.shape_cast %204 : vector<1x1x20x128xf32> to vector<20x128xf32>
      %c3_206 = arith.constant 3 : index
      %c1_207 = arith.constant 1 : index
      %c0_208 = arith.constant 0 : index
      %c0_209 = arith.constant 0 : index
      %c0_210 = arith.constant 0 : index
      %206 = vector.load %arg4[%c3_206, %c1_207, %c0_208, %c0_209, %c0_210] : memref<4x2x2x128x128xf32, #tpu.memory_space<vmem>>, vector<1x1x1x128x128xf32>
      %207 = vector.shape_cast %206 : vector<1x1x1x128x128xf32> to vector<128x128xf32>
      %cst_211 = arith.constant dense<0.000000e+00> : vector<20x128xf32>
      %208 = tpu.matmul %205, %207, %cst_211 {dimension_numbers = #tpu.dot_dimension_numbers<[1], [0], [0], [1], [0, 0, 1, 1], [], []>} : vector<20x128xf32>, vector<128x128xf32>, vector<20x128xf32> -> vector<20x128xf32>
      %209 = arith.addf %200, %208 : vector<20x128xf32>
      %c2_i32_212 = arith.constant 2 : i32
      %210 = arith.muli %c2_i32_212, %arg16 : i32
      %c3_i32_213 = arith.constant 3 : i32
      %211 = arith.addi %210, %c3_i32_213 : i32
      %212 = arith.index_cast %211 : i32 to index
      %c1_214 = arith.constant 1 : index
      %c1_215 = arith.constant 1 : index
      %c0_216 = arith.constant 0 : index
      %213 = vector.load %arg13[%212, %c1_214, %c1_215, %c0_216] : memref<42x2x21x128xf32, #tpu.memory_space<vmem>>, vector<1x1x20x128xf32>
      %214 = vector.shape_cast %213 : vector<1x1x20x128xf32> to vector<20x128xf32>
      %c3_217 = arith.constant 3 : index
      %c1_218 = arith.constant 1 : index
      %c1_219 = arith.constant 1 : index
      %c0_220 = arith.constant 0 : index
      %c0_221 = arith.constant 0 : index
      %215 = vector.load %arg4[%c3_217, %c1_218, %c1_219, %c0_220, %c0_221] : memref<4x2x2x128x128xf32, #tpu.memory_space<vmem>>, vector<1x1x1x128x128xf32>
      %216 = vector.shape_cast %215 : vector<1x1x1x128x128xf32> to vector<128x128xf32>
      %cst_222 = arith.constant dense<0.000000e+00> : vector<20x128xf32>
      %217 = tpu.matmul %214, %216, %cst_222 {dimension_numbers = #tpu.dot_dimension_numbers<[1], [0], [0], [1], [0, 0, 1, 1], [], []>} : vector<20x128xf32>, vector<128x128xf32>, vector<20x128xf32> -> vector<20x128xf32>
      %218 = arith.addf %209, %217 : vector<20x128xf32>
      %219 = vector.broadcast %34 : vector<1x128xf32> to vector<20x128xf32>
      %220 = arith.addf %218, %219 : vector<20x128xf32>
      %cst_223 = arith.constant 0.000000e+00 : f32
      %221 = vector.broadcast %cst_223 : f32 to vector<20x128xf32>
      %222 = arith.maximumf %220, %221 : vector<20x128xf32>
      %cst_224 = arith.constant dense<0.000000e+00> : vector<10x128xf32>
      %223 = tpu.matmul %26, %222, %cst_224 {dimension_numbers = #tpu.dot_dimension_numbers<[1], [0], [0], [1], [0, 0, 1, 1], [], []>} : vector<10x20xf32>, vector<20x128xf32>, vector<10x128xf32> -> vector<10x128xf32>
      %cst_225 = arith.constant dense<0.000000e+00> : vector<10x128xf32>
      %224 = tpu.matmul %33, %222, %cst_225 {dimension_numbers = #tpu.dot_dimension_numbers<[1], [0], [0], [1], [0, 0, 1, 1], [], []>} : vector<10x20xf32>, vector<20x128xf32>, vector<10x128xf32> -> vector<10x128xf32>
      %c1_i32_226 = arith.constant 1 : i32
      %225 = arith.addi %arg16, %c1_i32_226 : i32
      %226 = arith.index_cast %225 : i32 to index
      %c1_227 = arith.constant 1 : index
      %c0_228 = arith.constant 0 : index
      %c0_229 = arith.constant 0 : index
      %227 = vector.load %arg14[%226, %c1_227, %c0_228, %c0_229] : memref<22x2x11x128xf32, #tpu.memory_space<vmem>>, vector<1x1x10x128xf32>
      %228 = vector.shape_cast %227 : vector<1x1x10x128xf32> to vector<10x128xf32>
      %229 = vector.shape_cast %223 : vector<10x128xf32> to vector<1x1x10x128xf32>
      tpu.vector_store %arg14[%226, %c1_227, %c0_228, %c0_229], %229 {strides = array<i32>} : memref<22x2x11x128xf32, #tpu.memory_space<vmem>>, vector<1x1x10x128xf32>,
      %c1_i32_230 = arith.constant 1 : i32
      %230 = arith.addi %arg16, %c1_i32_230 : i32
      %231 = arith.index_cast %230 : i32 to index
      %c0_231 = arith.constant 0 : index
      %c1_232 = arith.constant 1 : index
      %c0_233 = arith.constant 0 : index
      %232 = vector.load %arg14[%231, %c0_231, %c1_232, %c0_233] : memref<22x2x11x128xf32, #tpu.memory_space<vmem>>, vector<1x1x10x128xf32>
      %233 = vector.shape_cast %232 : vector<1x1x10x128xf32> to vector<10x128xf32>
      %234 = vector.shape_cast %224 : vector<10x128xf32> to vector<1x1x10x128xf32>
      tpu.vector_store %arg14[%231, %c0_231, %c1_232, %c0_233], %234 {strides = array<i32>} : memref<22x2x11x128xf32, #tpu.memory_space<vmem>>, vector<1x1x10x128xf32>,
    }
    %c20_i32_20 = arith.constant 20 : i32
    %cst_21 = arith.constant 0.000000e+00 : f32
    %36 = vector.broadcast %cst_21 : f32 to vector<12x2x6x128xf32>
    %c0_22 = arith.constant 0 : index
    %c0_23 = arith.constant 0 : index
    %c0_24 = arith.constant 0 : index
    %c0_25 = arith.constant 0 : index
    %37 = vector.load %arg15[%c0_22, %c0_23, %c0_24, %c0_25] : memref<12x2x6x128xf32, #tpu.memory_space<vmem>>, vector<12x2x6x128xf32>
    tpu.vector_store %arg15[%c0_22, %c0_23, %c0_24, %c0_25], %36 {strides = array<i32>} : memref<12x2x6x128xf32, #tpu.memory_space<vmem>>, vector<12x2x6x128xf32>,
    %38 = tpu.iota {dimensions = array<i32: 0>} : vector<5x10xi32>
    %39 = tpu.iota {dimensions = array<i32: 1>} : vector<5x10xi32>
    %c2_i32_26 = arith.constant 2 : i32
    %40 = vector.broadcast %c2_i32_26 : i32 to vector<5x10xi32>
    %41 = arith.muli %40, %38 : vector<5x10xi32>
    %42 = arith.cmpi eq, %39, %41 : vector<5x10xi32>
    %43 = arith.extui %42 : vector<5x10xi1> to vector<5x10xi32>
    %44 = arith.sitofp %43 : vector<5x10xi32> to vector<5x10xf32>
    %c2_i32_27 = arith.constant 2 : i32
    %45 = vector.broadcast %c2_i32_27 : i32 to vector<5x10xi32>
    %46 = arith.muli %45, %38 : vector<5x10xi32>
    %c1_i32_28 = arith.constant 1 : i32
    %47 = vector.broadcast %c1_i32_28 : i32 to vector<5x10xi32>
    %48 = arith.addi %46, %47 : vector<5x10xi32>
    %49 = arith.cmpi eq, %39, %48 : vector<5x10xi32>
    %50 = arith.extui %49 : vector<5x10xi1> to vector<5x10xi32>
    %51 = arith.sitofp %50 : vector<5x10xi32> to vector<5x10xf32>
    %c0_29 = arith.constant 0 : index
    %c0_30 = arith.constant 0 : index
    %52 = vector.load %arg7[%c0_29, %c0_30] : memref<1x128xf32, #tpu.memory_space<vmem>>, vector<1x128xf32>
    %c0_i32_31 = arith.constant 0 : i32
    %c10_i32 = arith.constant 10 : i32
    %53 = arith.addi %c0_i32_31, %c10_i32 : i32
    %c1_i32_32 = arith.constant 1 : i32
    scf.for %arg16 = %c0_i32_31 to %53 step %c1_i32_32  : i32 {
      %cst_50 = arith.constant 0.000000e+00 : f32
      %74 = vector.broadcast %cst_50 : f32 to vector<10x128xf32>
      %c2_i32_51 = arith.constant 2 : i32
      %75 = arith.muli %c2_i32_51, %arg16 : i32
      %c0_i32_52 = arith.constant 0 : i32
      %76 = arith.addi %75, %c0_i32_52 : i32
      %77 = arith.index_cast %76 : i32 to index
      %c0_53 = arith.constant 0 : index
      %c0_54 = arith.constant 0 : index
      %c0_55 = arith.constant 0 : index
      %78 = vector.load %arg14[%77, %c0_53, %c0_54, %c0_55] : memref<22x2x11x128xf32, #tpu.memory_space<vmem>>, vector<1x1x10x128xf32>
      %79 = vector.shape_cast %78 : vector<1x1x10x128xf32> to vector<10x128xf32>
      %c0_56 = arith.constant 0 : index
      %c0_57 = arith.constant 0 : index
      %c0_58 = arith.constant 0 : index
      %c0_59 = arith.constant 0 : index
      %c0_60 = arith.constant 0 : index
      %80 = vector.load %arg6[%c0_56, %c0_57, %c0_58, %c0_59, %c0_60] : memref<4x2x2x128x128xf32, #tpu.memory_space<vmem>>, vector<1x1x1x128x128xf32>
      %81 = vector.shape_cast %80 : vector<1x1x1x128x128xf32> to vector<128x128xf32>
      %cst_61 = arith.constant dense<0.000000e+00> : vector<10x128xf32>
      %82 = tpu.matmul %79, %81, %cst_61 {dimension_numbers = #tpu.dot_dimension_numbers<[1], [0], [0], [1], [0, 0, 1, 1], [], []>} : vector<10x128xf32>, vector<128x128xf32>, vector<10x128xf32> -> vector<10x128xf32>
      %83 = arith.addf %74, %82 : vector<10x128xf32>
      %c2_i32_62 = arith.constant 2 : i32
      %84 = arith.muli %c2_i32_62, %arg16 : i32
      %c0_i32_63 = arith.constant 0 : i32
      %85 = arith.addi %84, %c0_i32_63 : i32
      %86 = arith.index_cast %85 : i32 to index
      %c1 = arith.constant 1 : index
      %c0_64 = arith.constant 0 : index
      %c0_65 = arith.constant 0 : index
      %87 = vector.load %arg14[%86, %c1, %c0_64, %c0_65] : memref<22x2x11x128xf32, #tpu.memory_space<vmem>>, vector<1x1x10x128xf32>
      %88 = vector.shape_cast %87 : vector<1x1x10x128xf32> to vector<10x128xf32>
      %c0_66 = arith.constant 0 : index
      %c0_67 = arith.constant 0 : index
      %c1_68 = arith.constant 1 : index
      %c0_69 = arith.constant 0 : index
      %c0_70 = arith.constant 0 : index
      %89 = vector.load %arg6[%c0_66, %c0_67, %c1_68, %c0_69, %c0_70] : memref<4x2x2x128x128xf32, #tpu.memory_space<vmem>>, vector<1x1x1x128x128xf32>
      %90 = vector.shape_cast %89 : vector<1x1x1x128x128xf32> to vector<128x128xf32>
      %cst_71 = arith.constant dense<0.000000e+00> : vector<10x128xf32>
      %91 = tpu.matmul %88, %90, %cst_71 {dimension_numbers = #tpu.dot_dimension_numbers<[1], [0], [0], [1], [0, 0, 1, 1], [], []>} : vector<10x128xf32>, vector<128x128xf32>, vector<10x128xf32> -> vector<10x128xf32>
      %92 = arith.addf %83, %91 : vector<10x128xf32>
      %c2_i32_72 = arith.constant 2 : i32
      %93 = arith.muli %c2_i32_72, %arg16 : i32
      %c0_i32_73 = arith.constant 0 : i32
      %94 = arith.addi %93, %c0_i32_73 : i32
      %95 = arith.index_cast %94 : i32 to index
      %c0_74 = arith.constant 0 : index
      %c1_75 = arith.constant 1 : index
      %c0_76 = arith.constant 0 : index
      %96 = vector.load %arg14[%95, %c0_74, %c1_75, %c0_76] : memref<22x2x11x128xf32, #tpu.memory_space<vmem>>, vector<1x1x10x128xf32>
      %97 = vector.shape_cast %96 : vector<1x1x10x128xf32> to vector<10x128xf32>
      %c0_77 = arith.constant 0 : index
      %c1_78 = arith.constant 1 : index
      %c0_79 = arith.constant 0 : index
      %c0_80 = arith.constant 0 : index
      %c0_81 = arith.constant 0 : index
      %98 = vector.load %arg6[%c0_77, %c1_78, %c0_79, %c0_80, %c0_81] : memref<4x2x2x128x128xf32, #tpu.memory_space<vmem>>, vector<1x1x1x128x128xf32>
      %99 = vector.shape_cast %98 : vector<1x1x1x128x128xf32> to vector<128x128xf32>
      %cst_82 = arith.constant dense<0.000000e+00> : vector<10x128xf32>
      %100 = tpu.matmul %97, %99, %cst_82 {dimension_numbers = #tpu.dot_dimension_numbers<[1], [0], [0], [1], [0, 0, 1, 1], [], []>} : vector<10x128xf32>, vector<128x128xf32>, vector<10x128xf32> -> vector<10x128xf32>
      %101 = arith.addf %92, %100 : vector<10x128xf32>
      %c2_i32_83 = arith.constant 2 : i32
      %102 = arith.muli %c2_i32_83, %arg16 : i32
      %c0_i32_84 = arith.constant 0 : i32
      %103 = arith.addi %102, %c0_i32_84 : i32
      %104 = arith.index_cast %103 : i32 to index
      %c1_85 = arith.constant 1 : index
      %c1_86 = arith.constant 1 : index
      %c0_87 = arith.constant 0 : index
      %105 = vector.load %arg14[%104, %c1_85, %c1_86, %c0_87] : memref<22x2x11x128xf32, #tpu.memory_space<vmem>>, vector<1x1x10x128xf32>
      %106 = vector.shape_cast %105 : vector<1x1x10x128xf32> to vector<10x128xf32>
      %c0_88 = arith.constant 0 : index
      %c1_89 = arith.constant 1 : index
      %c1_90 = arith.constant 1 : index
      %c0_91 = arith.constant 0 : index
      %c0_92 = arith.constant 0 : index
      %107 = vector.load %arg6[%c0_88, %c1_89, %c1_90, %c0_91, %c0_92] : memref<4x2x2x128x128xf32, #tpu.memory_space<vmem>>, vector<1x1x1x128x128xf32>
      %108 = vector.shape_cast %107 : vector<1x1x1x128x128xf32> to vector<128x128xf32>
      %cst_93 = arith.constant dense<0.000000e+00> : vector<10x128xf32>
      %109 = tpu.matmul %106, %108, %cst_93 {dimension_numbers = #tpu.dot_dimension_numbers<[1], [0], [0], [1], [0, 0, 1, 1], [], []>} : vector<10x128xf32>, vector<128x128xf32>, vector<10x128xf32> -> vector<10x128xf32>
      %110 = arith.addf %101, %109 : vector<10x128xf32>
      %c2_i32_94 = arith.constant 2 : i32
      %111 = arith.muli %c2_i32_94, %arg16 : i32
      %c1_i32_95 = arith.constant 1 : i32
      %112 = arith.addi %111, %c1_i32_95 : i32
      %113 = arith.index_cast %112 : i32 to index
      %c0_96 = arith.constant 0 : index
      %c0_97 = arith.constant 0 : index
      %c0_98 = arith.constant 0 : index
      %114 = vector.load %arg14[%113, %c0_96, %c0_97, %c0_98] : memref<22x2x11x128xf32, #tpu.memory_space<vmem>>, vector<1x1x10x128xf32>
      %115 = vector.shape_cast %114 : vector<1x1x10x128xf32> to vector<10x128xf32>
      %c1_99 = arith.constant 1 : index
      %c0_100 = arith.constant 0 : index
      %c0_101 = arith.constant 0 : index
      %c0_102 = arith.constant 0 : index
      %c0_103 = arith.constant 0 : index
      %116 = vector.load %arg6[%c1_99, %c0_100, %c0_101, %c0_102, %c0_103] : memref<4x2x2x128x128xf32, #tpu.memory_space<vmem>>, vector<1x1x1x128x128xf32>
      %117 = vector.shape_cast %116 : vector<1x1x1x128x128xf32> to vector<128x128xf32>
      %cst_104 = arith.constant dense<0.000000e+00> : vector<10x128xf32>
      %118 = tpu.matmul %115, %117, %cst_104 {dimension_numbers = #tpu.dot_dimension_numbers<[1], [0], [0], [1], [0, 0, 1, 1], [], []>} : vector<10x128xf32>, vector<128x128xf32>, vector<10x128xf32> -> vector<10x128xf32>
      %119 = arith.addf %110, %118 : vector<10x128xf32>
      %c2_i32_105 = arith.constant 2 : i32
      %120 = arith.muli %c2_i32_105, %arg16 : i32
      %c1_i32_106 = arith.constant 1 : i32
      %121 = arith.addi %120, %c1_i32_106 : i32
      %122 = arith.index_cast %121 : i32 to index
      %c1_107 = arith.constant 1 : index
      %c0_108 = arith.constant 0 : index
      %c0_109 = arith.constant 0 : index
      %123 = vector.load %arg14[%122, %c1_107, %c0_108, %c0_109] : memref<22x2x11x128xf32, #tpu.memory_space<vmem>>, vector<1x1x10x128xf32>
      %124 = vector.shape_cast %123 : vector<1x1x10x128xf32> to vector<10x128xf32>
      %c1_110 = arith.constant 1 : index
      %c0_111 = arith.constant 0 : index
      %c1_112 = arith.constant 1 : index
      %c0_113 = arith.constant 0 : index
      %c0_114 = arith.constant 0 : index
      %125 = vector.load %arg6[%c1_110, %c0_111, %c1_112, %c0_113, %c0_114] : memref<4x2x2x128x128xf32, #tpu.memory_space<vmem>>, vector<1x1x1x128x128xf32>
      %126 = vector.shape_cast %125 : vector<1x1x1x128x128xf32> to vector<128x128xf32>
      %cst_115 = arith.constant dense<0.000000e+00> : vector<10x128xf32>
      %127 = tpu.matmul %124, %126, %cst_115 {dimension_numbers = #tpu.dot_dimension_numbers<[1], [0], [0], [1], [0, 0, 1, 1], [], []>} : vector<10x128xf32>, vector<128x128xf32>, vector<10x128xf32> -> vector<10x128xf32>
      %128 = arith.addf %119, %127 : vector<10x128xf32>
      %c2_i32_116 = arith.constant 2 : i32
      %129 = arith.muli %c2_i32_116, %arg16 : i32
      %c1_i32_117 = arith.constant 1 : i32
      %130 = arith.addi %129, %c1_i32_117 : i32
      %131 = arith.index_cast %130 : i32 to index
      %c0_118 = arith.constant 0 : index
      %c1_119 = arith.constant 1 : index
      %c0_120 = arith.constant 0 : index
      %132 = vector.load %arg14[%131, %c0_118, %c1_119, %c0_120] : memref<22x2x11x128xf32, #tpu.memory_space<vmem>>, vector<1x1x10x128xf32>
      %133 = vector.shape_cast %132 : vector<1x1x10x128xf32> to vector<10x128xf32>
      %c1_121 = arith.constant 1 : index
      %c1_122 = arith.constant 1 : index
      %c0_123 = arith.constant 0 : index
      %c0_124 = arith.constant 0 : index
      %c0_125 = arith.constant 0 : index
      %134 = vector.load %arg6[%c1_121, %c1_122, %c0_123, %c0_124, %c0_125] : memref<4x2x2x128x128xf32, #tpu.memory_space<vmem>>, vector<1x1x1x128x128xf32>
      %135 = vector.shape_cast %134 : vector<1x1x1x128x128xf32> to vector<128x128xf32>
      %cst_126 = arith.constant dense<0.000000e+00> : vector<10x128xf32>
      %136 = tpu.matmul %133, %135, %cst_126 {dimension_numbers = #tpu.dot_dimension_numbers<[1], [0], [0], [1], [0, 0, 1, 1], [], []>} : vector<10x128xf32>, vector<128x128xf32>, vector<10x128xf32> -> vector<10x128xf32>
      %137 = arith.addf %128, %136 : vector<10x128xf32>
      %c2_i32_127 = arith.constant 2 : i32
      %138 = arith.muli %c2_i32_127, %arg16 : i32
      %c1_i32_128 = arith.constant 1 : i32
      %139 = arith.addi %138, %c1_i32_128 : i32
      %140 = arith.index_cast %139 : i32 to index
      %c1_129 = arith.constant 1 : index
      %c1_130 = arith.constant 1 : index
      %c0_131 = arith.constant 0 : index
      %141 = vector.load %arg14[%140, %c1_129, %c1_130, %c0_131] : memref<22x2x11x128xf32, #tpu.memory_space<vmem>>, vector<1x1x10x128xf32>
      %142 = vector.shape_cast %141 : vector<1x1x10x128xf32> to vector<10x128xf32>
      %c1_132 = arith.constant 1 : index
      %c1_133 = arith.constant 1 : index
      %c1_134 = arith.constant 1 : index
      %c0_135 = arith.constant 0 : index
      %c0_136 = arith.constant 0 : index
      %143 = vector.load %arg6[%c1_132, %c1_133, %c1_134, %c0_135, %c0_136] : memref<4x2x2x128x128xf32, #tpu.memory_space<vmem>>, vector<1x1x1x128x128xf32>
      %144 = vector.shape_cast %143 : vector<1x1x1x128x128xf32> to vector<128x128xf32>
      %cst_137 = arith.constant dense<0.000000e+00> : vector<10x128xf32>
      %145 = tpu.matmul %142, %144, %cst_137 {dimension_numbers = #tpu.dot_dimension_numbers<[1], [0], [0], [1], [0, 0, 1, 1], [], []>} : vector<10x128xf32>, vector<128x128xf32>, vector<10x128xf32> -> vector<10x128xf32>
      %146 = arith.addf %137, %145 : vector<10x128xf32>
      %c2_i32_138 = arith.constant 2 : i32
      %147 = arith.muli %c2_i32_138, %arg16 : i32
      %c2_i32_139 = arith.constant 2 : i32
      %148 = arith.addi %147, %c2_i32_139 : i32
      %149 = arith.index_cast %148 : i32 to index
      %c0_140 = arith.constant 0 : index
      %c0_141 = arith.constant 0 : index
      %c0_142 = arith.constant 0 : index
      %150 = vector.load %arg14[%149, %c0_140, %c0_141, %c0_142] : memref<22x2x11x128xf32, #tpu.memory_space<vmem>>, vector<1x1x10x128xf32>
      %151 = vector.shape_cast %150 : vector<1x1x10x128xf32> to vector<10x128xf32>
      %c2 = arith.constant 2 : index
      %c0_143 = arith.constant 0 : index
      %c0_144 = arith.constant 0 : index
      %c0_145 = arith.constant 0 : index
      %c0_146 = arith.constant 0 : index
      %152 = vector.load %arg6[%c2, %c0_143, %c0_144, %c0_145, %c0_146] : memref<4x2x2x128x128xf32, #tpu.memory_space<vmem>>, vector<1x1x1x128x128xf32>
      %153 = vector.shape_cast %152 : vector<1x1x1x128x128xf32> to vector<128x128xf32>
      %cst_147 = arith.constant dense<0.000000e+00> : vector<10x128xf32>
      %154 = tpu.matmul %151, %153, %cst_147 {dimension_numbers = #tpu.dot_dimension_numbers<[1], [0], [0], [1], [0, 0, 1, 1], [], []>} : vector<10x128xf32>, vector<128x128xf32>, vector<10x128xf32> -> vector<10x128xf32>
      %155 = arith.addf %146, %154 : vector<10x128xf32>
      %c2_i32_148 = arith.constant 2 : i32
      %156 = arith.muli %c2_i32_148, %arg16 : i32
      %c2_i32_149 = arith.constant 2 : i32
      %157 = arith.addi %156, %c2_i32_149 : i32
      %158 = arith.index_cast %157 : i32 to index
      %c1_150 = arith.constant 1 : index
      %c0_151 = arith.constant 0 : index
      %c0_152 = arith.constant 0 : index
      %159 = vector.load %arg14[%158, %c1_150, %c0_151, %c0_152] : memref<22x2x11x128xf32, #tpu.memory_space<vmem>>, vector<1x1x10x128xf32>
      %160 = vector.shape_cast %159 : vector<1x1x10x128xf32> to vector<10x128xf32>
      %c2_153 = arith.constant 2 : index
      %c0_154 = arith.constant 0 : index
      %c1_155 = arith.constant 1 : index
      %c0_156 = arith.constant 0 : index
      %c0_157 = arith.constant 0 : index
      %161 = vector.load %arg6[%c2_153, %c0_154, %c1_155, %c0_156, %c0_157] : memref<4x2x2x128x128xf32, #tpu.memory_space<vmem>>, vector<1x1x1x128x128xf32>
      %162 = vector.shape_cast %161 : vector<1x1x1x128x128xf32> to vector<128x128xf32>
      %cst_158 = arith.constant dense<0.000000e+00> : vector<10x128xf32>
      %163 = tpu.matmul %160, %162, %cst_158 {dimension_numbers = #tpu.dot_dimension_numbers<[1], [0], [0], [1], [0, 0, 1, 1], [], []>} : vector<10x128xf32>, vector<128x128xf32>, vector<10x128xf32> -> vector<10x128xf32>
      %164 = arith.addf %155, %163 : vector<10x128xf32>
      %c2_i32_159 = arith.constant 2 : i32
      %165 = arith.muli %c2_i32_159, %arg16 : i32
      %c2_i32_160 = arith.constant 2 : i32
      %166 = arith.addi %165, %c2_i32_160 : i32
      %167 = arith.index_cast %166 : i32 to index
      %c0_161 = arith.constant 0 : index
      %c1_162 = arith.constant 1 : index
      %c0_163 = arith.constant 0 : index
      %168 = vector.load %arg14[%167, %c0_161, %c1_162, %c0_163] : memref<22x2x11x128xf32, #tpu.memory_space<vmem>>, vector<1x1x10x128xf32>
      %169 = vector.shape_cast %168 : vector<1x1x10x128xf32> to vector<10x128xf32>
      %c2_164 = arith.constant 2 : index
      %c1_165 = arith.constant 1 : index
      %c0_166 = arith.constant 0 : index
      %c0_167 = arith.constant 0 : index
      %c0_168 = arith.constant 0 : index
      %170 = vector.load %arg6[%c2_164, %c1_165, %c0_166, %c0_167, %c0_168] : memref<4x2x2x128x128xf32, #tpu.memory_space<vmem>>, vector<1x1x1x128x128xf32>
      %171 = vector.shape_cast %170 : vector<1x1x1x128x128xf32> to vector<128x128xf32>
      %cst_169 = arith.constant dense<0.000000e+00> : vector<10x128xf32>
      %172 = tpu.matmul %169, %171, %cst_169 {dimension_numbers = #tpu.dot_dimension_numbers<[1], [0], [0], [1], [0, 0, 1, 1], [], []>} : vector<10x128xf32>, vector<128x128xf32>, vector<10x128xf32> -> vector<10x128xf32>
      %173 = arith.addf %164, %172 : vector<10x128xf32>
      %c2_i32_170 = arith.constant 2 : i32
      %174 = arith.muli %c2_i32_170, %arg16 : i32
      %c2_i32_171 = arith.constant 2 : i32
      %175 = arith.addi %174, %c2_i32_171 : i32
      %176 = arith.index_cast %175 : i32 to index
      %c1_172 = arith.constant 1 : index
      %c1_173 = arith.constant 1 : index
      %c0_174 = arith.constant 0 : index
      %177 = vector.load %arg14[%176, %c1_172, %c1_173, %c0_174] : memref<22x2x11x128xf32, #tpu.memory_space<vmem>>, vector<1x1x10x128xf32>
      %178 = vector.shape_cast %177 : vector<1x1x10x128xf32> to vector<10x128xf32>
      %c2_175 = arith.constant 2 : index
      %c1_176 = arith.constant 1 : index
      %c1_177 = arith.constant 1 : index
      %c0_178 = arith.constant 0 : index
      %c0_179 = arith.constant 0 : index
      %179 = vector.load %arg6[%c2_175, %c1_176, %c1_177, %c0_178, %c0_179] : memref<4x2x2x128x128xf32, #tpu.memory_space<vmem>>, vector<1x1x1x128x128xf32>
      %180 = vector.shape_cast %179 : vector<1x1x1x128x128xf32> to vector<128x128xf32>
      %cst_180 = arith.constant dense<0.000000e+00> : vector<10x128xf32>
      %181 = tpu.matmul %178, %180, %cst_180 {dimension_numbers = #tpu.dot_dimension_numbers<[1], [0], [0], [1], [0, 0, 1, 1], [], []>} : vector<10x128xf32>, vector<128x128xf32>, vector<10x128xf32> -> vector<10x128xf32>
      %182 = arith.addf %173, %181 : vector<10x128xf32>
      %c2_i32_181 = arith.constant 2 : i32
      %183 = arith.muli %c2_i32_181, %arg16 : i32
      %c3_i32 = arith.constant 3 : i32
      %184 = arith.addi %183, %c3_i32 : i32
      %185 = arith.index_cast %184 : i32 to index
      %c0_182 = arith.constant 0 : index
      %c0_183 = arith.constant 0 : index
      %c0_184 = arith.constant 0 : index
      %186 = vector.load %arg14[%185, %c0_182, %c0_183, %c0_184] : memref<22x2x11x128xf32, #tpu.memory_space<vmem>>, vector<1x1x10x128xf32>
      %187 = vector.shape_cast %186 : vector<1x1x10x128xf32> to vector<10x128xf32>
      %c3 = arith.constant 3 : index
      %c0_185 = arith.constant 0 : index
      %c0_186 = arith.constant 0 : index
      %c0_187 = arith.constant 0 : index
      %c0_188 = arith.constant 0 : index
      %188 = vector.load %arg6[%c3, %c0_185, %c0_186, %c0_187, %c0_188] : memref<4x2x2x128x128xf32, #tpu.memory_space<vmem>>, vector<1x1x1x128x128xf32>
      %189 = vector.shape_cast %188 : vector<1x1x1x128x128xf32> to vector<128x128xf32>
      %cst_189 = arith.constant dense<0.000000e+00> : vector<10x128xf32>
      %190 = tpu.matmul %187, %189, %cst_189 {dimension_numbers = #tpu.dot_dimension_numbers<[1], [0], [0], [1], [0, 0, 1, 1], [], []>} : vector<10x128xf32>, vector<128x128xf32>, vector<10x128xf32> -> vector<10x128xf32>
      %191 = arith.addf %182, %190 : vector<10x128xf32>
      %c2_i32_190 = arith.constant 2 : i32
      %192 = arith.muli %c2_i32_190, %arg16 : i32
      %c3_i32_191 = arith.constant 3 : i32
      %193 = arith.addi %192, %c3_i32_191 : i32
      %194 = arith.index_cast %193 : i32 to index
      %c1_192 = arith.constant 1 : index
      %c0_193 = arith.constant 0 : index
      %c0_194 = arith.constant 0 : index
      %195 = vector.load %arg14[%194, %c1_192, %c0_193, %c0_194] : memref<22x2x11x128xf32, #tpu.memory_space<vmem>>, vector<1x1x10x128xf32>
      %196 = vector.shape_cast %195 : vector<1x1x10x128xf32> to vector<10x128xf32>
      %c3_195 = arith.constant 3 : index
      %c0_196 = arith.constant 0 : index
      %c1_197 = arith.constant 1 : index
      %c0_198 = arith.constant 0 : index
      %c0_199 = arith.constant 0 : index
      %197 = vector.load %arg6[%c3_195, %c0_196, %c1_197, %c0_198, %c0_199] : memref<4x2x2x128x128xf32, #tpu.memory_space<vmem>>, vector<1x1x1x128x128xf32>
      %198 = vector.shape_cast %197 : vector<1x1x1x128x128xf32> to vector<128x128xf32>
      %cst_200 = arith.constant dense<0.000000e+00> : vector<10x128xf32>
      %199 = tpu.matmul %196, %198, %cst_200 {dimension_numbers = #tpu.dot_dimension_numbers<[1], [0], [0], [1], [0, 0, 1, 1], [], []>} : vector<10x128xf32>, vector<128x128xf32>, vector<10x128xf32> -> vector<10x128xf32>
      %200 = arith.addf %191, %199 : vector<10x128xf32>
      %c2_i32_201 = arith.constant 2 : i32
      %201 = arith.muli %c2_i32_201, %arg16 : i32
      %c3_i32_202 = arith.constant 3 : i32
      %202 = arith.addi %201, %c3_i32_202 : i32
      %203 = arith.index_cast %202 : i32 to index
      %c0_203 = arith.constant 0 : index
      %c1_204 = arith.constant 1 : index
      %c0_205 = arith.constant 0 : index
      %204 = vector.load %arg14[%203, %c0_203, %c1_204, %c0_205] : memref<22x2x11x128xf32, #tpu.memory_space<vmem>>, vector<1x1x10x128xf32>
      %205 = vector.shape_cast %204 : vector<1x1x10x128xf32> to vector<10x128xf32>
      %c3_206 = arith.constant 3 : index
      %c1_207 = arith.constant 1 : index
      %c0_208 = arith.constant 0 : index
      %c0_209 = arith.constant 0 : index
      %c0_210 = arith.constant 0 : index
      %206 = vector.load %arg6[%c3_206, %c1_207, %c0_208, %c0_209, %c0_210] : memref<4x2x2x128x128xf32, #tpu.memory_space<vmem>>, vector<1x1x1x128x128xf32>
      %207 = vector.shape_cast %206 : vector<1x1x1x128x128xf32> to vector<128x128xf32>
      %cst_211 = arith.constant dense<0.000000e+00> : vector<10x128xf32>
      %208 = tpu.matmul %205, %207, %cst_211 {dimension_numbers = #tpu.dot_dimension_numbers<[1], [0], [0], [1], [0, 0, 1, 1], [], []>} : vector<10x128xf32>, vector<128x128xf32>, vector<10x128xf32> -> vector<10x128xf32>
      %209 = arith.addf %200, %208 : vector<10x128xf32>
      %c2_i32_212 = arith.constant 2 : i32
      %210 = arith.muli %c2_i32_212, %arg16 : i32
      %c3_i32_213 = arith.constant 3 : i32
      %211 = arith.addi %210, %c3_i32_213 : i32
      %212 = arith.index_cast %211 : i32 to index
      %c1_214 = arith.constant 1 : index
      %c1_215 = arith.constant 1 : index
      %c0_216 = arith.constant 0 : index
      %213 = vector.load %arg14[%212, %c1_214, %c1_215, %c0_216] : memref<22x2x11x128xf32, #tpu.memory_space<vmem>>, vector<1x1x10x128xf32>
      %214 = vector.shape_cast %213 : vector<1x1x10x128xf32> to vector<10x128xf32>
      %c3_217 = arith.constant 3 : index
      %c1_218 = arith.constant 1 : index
      %c1_219 = arith.constant 1 : index
      %c0_220 = arith.constant 0 : index
      %c0_221 = arith.constant 0 : index
      %215 = vector.load %arg6[%c3_217, %c1_218, %c1_219, %c0_220, %c0_221] : memref<4x2x2x128x128xf32, #tpu.memory_space<vmem>>, vector<1x1x1x128x128xf32>
      %216 = vector.shape_cast %215 : vector<1x1x1x128x128xf32> to vector<128x128xf32>
      %cst_222 = arith.constant dense<0.000000e+00> : vector<10x128xf32>
      %217 = tpu.matmul %214, %216, %cst_222 {dimension_numbers = #tpu.dot_dimension_numbers<[1], [0], [0], [1], [0, 0, 1, 1], [], []>} : vector<10x128xf32>, vector<128x128xf32>, vector<10x128xf32> -> vector<10x128xf32>
      %218 = arith.addf %209, %217 : vector<10x128xf32>
      %219 = vector.broadcast %52 : vector<1x128xf32> to vector<10x128xf32>
      %220 = arith.addf %218, %219 : vector<10x128xf32>
      %cst_223 = arith.constant 0.000000e+00 : f32
      %221 = vector.broadcast %cst_223 : f32 to vector<10x128xf32>
      %222 = arith.maximumf %220, %221 : vector<10x128xf32>
      %cst_224 = arith.constant dense<0.000000e+00> : vector<5x128xf32>
      %223 = tpu.matmul %44, %222, %cst_224 {dimension_numbers = #tpu.dot_dimension_numbers<[1], [0], [0], [1], [0, 0, 1, 1], [], []>} : vector<5x10xf32>, vector<10x128xf32>, vector<5x128xf32> -> vector<5x128xf32>
      %cst_225 = arith.constant dense<0.000000e+00> : vector<5x128xf32>
      %224 = tpu.matmul %51, %222, %cst_225 {dimension_numbers = #tpu.dot_dimension_numbers<[1], [0], [0], [1], [0, 0, 1, 1], [], []>} : vector<5x10xf32>, vector<10x128xf32>, vector<5x128xf32> -> vector<5x128xf32>
      %c1_i32_226 = arith.constant 1 : i32
      %225 = arith.addi %arg16, %c1_i32_226 : i32
      %226 = arith.index_cast %225 : i32 to index
      %c1_227 = arith.constant 1 : index
      %c0_228 = arith.constant 0 : index
      %c0_229 = arith.constant 0 : index
      %227 = vector.load %arg15[%226, %c1_227, %c0_228, %c0_229] : memref<12x2x6x128xf32, #tpu.memory_space<vmem>>, vector<1x1x5x128xf32>
      %228 = vector.shape_cast %227 : vector<1x1x5x128xf32> to vector<5x128xf32>
      %229 = vector.shape_cast %223 : vector<5x128xf32> to vector<1x1x5x128xf32>
      tpu.vector_store %arg15[%226, %c1_227, %c0_228, %c0_229], %229 {strides = array<i32>} : memref<12x2x6x128xf32, #tpu.memory_space<vmem>>, vector<1x1x5x128xf32>,
      %c1_i32_230 = arith.constant 1 : i32
      %230 = arith.addi %arg16, %c1_i32_230 : i32
      %231 = arith.index_cast %230 : i32 to index
      %c0_231 = arith.constant 0 : index
      %c1_232 = arith.constant 1 : index
      %c0_233 = arith.constant 0 : index
      %232 = vector.load %arg15[%231, %c0_231, %c1_232, %c0_233] : memref<12x2x6x128xf32, #tpu.memory_space<vmem>>, vector<1x1x5x128xf32>
      %233 = vector.shape_cast %232 : vector<1x1x5x128xf32> to vector<5x128xf32>
      %234 = vector.shape_cast %224 : vector<5x128xf32> to vector<1x1x5x128xf32>
      tpu.vector_store %arg15[%231, %c0_231, %c1_232, %c0_233], %234 {strides = array<i32>} : memref<12x2x6x128xf32, #tpu.memory_space<vmem>>, vector<1x1x5x128xf32>,
    }
    %c10_i32_33 = arith.constant 10 : i32
    %c0_34 = arith.constant 0 : index
    %c0_35 = arith.constant 0 : index
    %54 = vector.load %arg9[%c0_34, %c0_35] : memref<1x256xf32, #tpu.memory_space<vmem>>, vector<1x256xf32>
    %cst_36 = arith.constant 0.000000e+00 : f32
    %cst_37 = arith.constant 0.000000e+00 : f32
    %c0_i32_38 = arith.constant 0 : i32
    %c5_i32 = arith.constant 5 : i32
    %55 = arith.addi %c0_i32_38, %c5_i32 : i32
    %c1_i32_39 = arith.constant 1 : i32
    %56:2 = scf.for %arg16 = %c0_i32_38 to %55 step %c1_i32_39 iter_args(%arg17 = %cst_36, %arg18 = %cst_37) -> (f32, f32)  : i32 {
      %cst_50 = arith.constant 0.000000e+00 : f32
      %74 = vector.broadcast %cst_50 : f32 to vector<5x256xf32>
      %c2_i32_51 = arith.constant 2 : i32
      %75 = arith.muli %c2_i32_51, %arg16 : i32
      %c0_i32_52 = arith.constant 0 : i32
      %76 = arith.addi %75, %c0_i32_52 : i32
      %77 = arith.index_cast %76 : i32 to index
      %c0_53 = arith.constant 0 : index
      %c0_54 = arith.constant 0 : index
      %c0_55 = arith.constant 0 : index
      %78 = vector.load %arg15[%77, %c0_53, %c0_54, %c0_55] : memref<12x2x6x128xf32, #tpu.memory_space<vmem>>, vector<1x1x5x128xf32>
      %79 = vector.shape_cast %78 : vector<1x1x5x128xf32> to vector<5x128xf32>
      %c0_56 = arith.constant 0 : index
      %c0_57 = arith.constant 0 : index
      %c0_58 = arith.constant 0 : index
      %c0_59 = arith.constant 0 : index
      %c0_60 = arith.constant 0 : index
      %80 = vector.load %arg8[%c0_56, %c0_57, %c0_58, %c0_59, %c0_60] : memref<4x2x2x128x256xf32, #tpu.memory_space<vmem>>, vector<1x1x1x128x256xf32>
      %81 = vector.shape_cast %80 : vector<1x1x1x128x256xf32> to vector<128x256xf32>
      %cst_61 = arith.constant dense<0.000000e+00> : vector<5x256xf32>
      %82 = tpu.matmul %79, %81, %cst_61 {dimension_numbers = #tpu.dot_dimension_numbers<[1], [0], [0], [1], [0, 0, 1, 1], [], []>} : vector<5x128xf32>, vector<128x256xf32>, vector<5x256xf32> -> vector<5x256xf32>
      %83 = arith.addf %74, %82 : vector<5x256xf32>
      %c2_i32_62 = arith.constant 2 : i32
      %84 = arith.muli %c2_i32_62, %arg16 : i32
      %c0_i32_63 = arith.constant 0 : i32
      %85 = arith.addi %84, %c0_i32_63 : i32
      %86 = arith.index_cast %85 : i32 to index
      %c1 = arith.constant 1 : index
      %c0_64 = arith.constant 0 : index
      %c0_65 = arith.constant 0 : index
      %87 = vector.load %arg15[%86, %c1, %c0_64, %c0_65] : memref<12x2x6x128xf32, #tpu.memory_space<vmem>>, vector<1x1x5x128xf32>
      %88 = vector.shape_cast %87 : vector<1x1x5x128xf32> to vector<5x128xf32>
      %c0_66 = arith.constant 0 : index
      %c0_67 = arith.constant 0 : index
      %c1_68 = arith.constant 1 : index
      %c0_69 = arith.constant 0 : index
      %c0_70 = arith.constant 0 : index
      %89 = vector.load %arg8[%c0_66, %c0_67, %c1_68, %c0_69, %c0_70] : memref<4x2x2x128x256xf32, #tpu.memory_space<vmem>>, vector<1x1x1x128x256xf32>
      %90 = vector.shape_cast %89 : vector<1x1x1x128x256xf32> to vector<128x256xf32>
      %cst_71 = arith.constant dense<0.000000e+00> : vector<5x256xf32>
      %91 = tpu.matmul %88, %90, %cst_71 {dimension_numbers = #tpu.dot_dimension_numbers<[1], [0], [0], [1], [0, 0, 1, 1], [], []>} : vector<5x128xf32>, vector<128x256xf32>, vector<5x256xf32> -> vector<5x256xf32>
      %92 = arith.addf %83, %91 : vector<5x256xf32>
      %c2_i32_72 = arith.constant 2 : i32
      %93 = arith.muli %c2_i32_72, %arg16 : i32
      %c0_i32_73 = arith.constant 0 : i32
      %94 = arith.addi %93, %c0_i32_73 : i32
      %95 = arith.index_cast %94 : i32 to index
      %c0_74 = arith.constant 0 : index
      %c1_75 = arith.constant 1 : index
      %c0_76 = arith.constant 0 : index
      %96 = vector.load %arg15[%95, %c0_74, %c1_75, %c0_76] : memref<12x2x6x128xf32, #tpu.memory_space<vmem>>, vector<1x1x5x128xf32>
      %97 = vector.shape_cast %96 : vector<1x1x5x128xf32> to vector<5x128xf32>
      %c0_77 = arith.constant 0 : index
      %c1_78 = arith.constant 1 : index
      %c0_79 = arith.constant 0 : index
      %c0_80 = arith.constant 0 : index
      %c0_81 = arith.constant 0 : index
      %98 = vector.load %arg8[%c0_77, %c1_78, %c0_79, %c0_80, %c0_81] : memref<4x2x2x128x256xf32, #tpu.memory_space<vmem>>, vector<1x1x1x128x256xf32>
      %99 = vector.shape_cast %98 : vector<1x1x1x128x256xf32> to vector<128x256xf32>
      %cst_82 = arith.constant dense<0.000000e+00> : vector<5x256xf32>
      %100 = tpu.matmul %97, %99, %cst_82 {dimension_numbers = #tpu.dot_dimension_numbers<[1], [0], [0], [1], [0, 0, 1, 1], [], []>} : vector<5x128xf32>, vector<128x256xf32>, vector<5x256xf32> -> vector<5x256xf32>
      %101 = arith.addf %92, %100 : vector<5x256xf32>
      %c2_i32_83 = arith.constant 2 : i32
      %102 = arith.muli %c2_i32_83, %arg16 : i32
      %c0_i32_84 = arith.constant 0 : i32
      %103 = arith.addi %102, %c0_i32_84 : i32
      %104 = arith.index_cast %103 : i32 to index
      %c1_85 = arith.constant 1 : index
      %c1_86 = arith.constant 1 : index
      %c0_87 = arith.constant 0 : index
      %105 = vector.load %arg15[%104, %c1_85, %c1_86, %c0_87] : memref<12x2x6x128xf32, #tpu.memory_space<vmem>>, vector<1x1x5x128xf32>
      %106 = vector.shape_cast %105 : vector<1x1x5x128xf32> to vector<5x128xf32>
      %c0_88 = arith.constant 0 : index
      %c1_89 = arith.constant 1 : index
      %c1_90 = arith.constant 1 : index
      %c0_91 = arith.constant 0 : index
      %c0_92 = arith.constant 0 : index
      %107 = vector.load %arg8[%c0_88, %c1_89, %c1_90, %c0_91, %c0_92] : memref<4x2x2x128x256xf32, #tpu.memory_space<vmem>>, vector<1x1x1x128x256xf32>
      %108 = vector.shape_cast %107 : vector<1x1x1x128x256xf32> to vector<128x256xf32>
      %cst_93 = arith.constant dense<0.000000e+00> : vector<5x256xf32>
      %109 = tpu.matmul %106, %108, %cst_93 {dimension_numbers = #tpu.dot_dimension_numbers<[1], [0], [0], [1], [0, 0, 1, 1], [], []>} : vector<5x128xf32>, vector<128x256xf32>, vector<5x256xf32> -> vector<5x256xf32>
      %110 = arith.addf %101, %109 : vector<5x256xf32>
      %c2_i32_94 = arith.constant 2 : i32
      %111 = arith.muli %c2_i32_94, %arg16 : i32
      %c1_i32_95 = arith.constant 1 : i32
      %112 = arith.addi %111, %c1_i32_95 : i32
      %113 = arith.index_cast %112 : i32 to index
      %c0_96 = arith.constant 0 : index
      %c0_97 = arith.constant 0 : index
      %c0_98 = arith.constant 0 : index
      %114 = vector.load %arg15[%113, %c0_96, %c0_97, %c0_98] : memref<12x2x6x128xf32, #tpu.memory_space<vmem>>, vector<1x1x5x128xf32>
      %115 = vector.shape_cast %114 : vector<1x1x5x128xf32> to vector<5x128xf32>
      %c1_99 = arith.constant 1 : index
      %c0_100 = arith.constant 0 : index
      %c0_101 = arith.constant 0 : index
      %c0_102 = arith.constant 0 : index
      %c0_103 = arith.constant 0 : index
      %116 = vector.load %arg8[%c1_99, %c0_100, %c0_101, %c0_102, %c0_103] : memref<4x2x2x128x256xf32, #tpu.memory_space<vmem>>, vector<1x1x1x128x256xf32>
      %117 = vector.shape_cast %116 : vector<1x1x1x128x256xf32> to vector<128x256xf32>
      %cst_104 = arith.constant dense<0.000000e+00> : vector<5x256xf32>
      %118 = tpu.matmul %115, %117, %cst_104 {dimension_numbers = #tpu.dot_dimension_numbers<[1], [0], [0], [1], [0, 0, 1, 1], [], []>} : vector<5x128xf32>, vector<128x256xf32>, vector<5x256xf32> -> vector<5x256xf32>
      %119 = arith.addf %110, %118 : vector<5x256xf32>
      %c2_i32_105 = arith.constant 2 : i32
      %120 = arith.muli %c2_i32_105, %arg16 : i32
      %c1_i32_106 = arith.constant 1 : i32
      %121 = arith.addi %120, %c1_i32_106 : i32
      %122 = arith.index_cast %121 : i32 to index
      %c1_107 = arith.constant 1 : index
      %c0_108 = arith.constant 0 : index
      %c0_109 = arith.constant 0 : index
      %123 = vector.load %arg15[%122, %c1_107, %c0_108, %c0_109] : memref<12x2x6x128xf32, #tpu.memory_space<vmem>>, vector<1x1x5x128xf32>
      %124 = vector.shape_cast %123 : vector<1x1x5x128xf32> to vector<5x128xf32>
      %c1_110 = arith.constant 1 : index
      %c0_111 = arith.constant 0 : index
      %c1_112 = arith.constant 1 : index
      %c0_113 = arith.constant 0 : index
      %c0_114 = arith.constant 0 : index
      %125 = vector.load %arg8[%c1_110, %c0_111, %c1_112, %c0_113, %c0_114] : memref<4x2x2x128x256xf32, #tpu.memory_space<vmem>>, vector<1x1x1x128x256xf32>
      %126 = vector.shape_cast %125 : vector<1x1x1x128x256xf32> to vector<128x256xf32>
      %cst_115 = arith.constant dense<0.000000e+00> : vector<5x256xf32>
      %127 = tpu.matmul %124, %126, %cst_115 {dimension_numbers = #tpu.dot_dimension_numbers<[1], [0], [0], [1], [0, 0, 1, 1], [], []>} : vector<5x128xf32>, vector<128x256xf32>, vector<5x256xf32> -> vector<5x256xf32>
      %128 = arith.addf %119, %127 : vector<5x256xf32>
      %c2_i32_116 = arith.constant 2 : i32
      %129 = arith.muli %c2_i32_116, %arg16 : i32
      %c1_i32_117 = arith.constant 1 : i32
      %130 = arith.addi %129, %c1_i32_117 : i32
      %131 = arith.index_cast %130 : i32 to index
      %c0_118 = arith.constant 0 : index
      %c1_119 = arith.constant 1 : index
      %c0_120 = arith.constant 0 : index
      %132 = vector.load %arg15[%131, %c0_118, %c1_119, %c0_120] : memref<12x2x6x128xf32, #tpu.memory_space<vmem>>, vector<1x1x5x128xf32>
      %133 = vector.shape_cast %132 : vector<1x1x5x128xf32> to vector<5x128xf32>
      %c1_121 = arith.constant 1 : index
      %c1_122 = arith.constant 1 : index
      %c0_123 = arith.constant 0 : index
      %c0_124 = arith.constant 0 : index
      %c0_125 = arith.constant 0 : index
      %134 = vector.load %arg8[%c1_121, %c1_122, %c0_123, %c0_124, %c0_125] : memref<4x2x2x128x256xf32, #tpu.memory_space<vmem>>, vector<1x1x1x128x256xf32>
      %135 = vector.shape_cast %134 : vector<1x1x1x128x256xf32> to vector<128x256xf32>
      %cst_126 = arith.constant dense<0.000000e+00> : vector<5x256xf32>
      %136 = tpu.matmul %133, %135, %cst_126 {dimension_numbers = #tpu.dot_dimension_numbers<[1], [0], [0], [1], [0, 0, 1, 1], [], []>} : vector<5x128xf32>, vector<128x256xf32>, vector<5x256xf32> -> vector<5x256xf32>
      %137 = arith.addf %128, %136 : vector<5x256xf32>
      %c2_i32_127 = arith.constant 2 : i32
      %138 = arith.muli %c2_i32_127, %arg16 : i32
      %c1_i32_128 = arith.constant 1 : i32
      %139 = arith.addi %138, %c1_i32_128 : i32
      %140 = arith.index_cast %139 : i32 to index
      %c1_129 = arith.constant 1 : index
      %c1_130 = arith.constant 1 : index
      %c0_131 = arith.constant 0 : index
      %141 = vector.load %arg15[%140, %c1_129, %c1_130, %c0_131] : memref<12x2x6x128xf32, #tpu.memory_space<vmem>>, vector<1x1x5x128xf32>
      %142 = vector.shape_cast %141 : vector<1x1x5x128xf32> to vector<5x128xf32>
      %c1_132 = arith.constant 1 : index
      %c1_133 = arith.constant 1 : index
      %c1_134 = arith.constant 1 : index
      %c0_135 = arith.constant 0 : index
      %c0_136 = arith.constant 0 : index
      %143 = vector.load %arg8[%c1_132, %c1_133, %c1_134, %c0_135, %c0_136] : memref<4x2x2x128x256xf32, #tpu.memory_space<vmem>>, vector<1x1x1x128x256xf32>
      %144 = vector.shape_cast %143 : vector<1x1x1x128x256xf32> to vector<128x256xf32>
      %cst_137 = arith.constant dense<0.000000e+00> : vector<5x256xf32>
      %145 = tpu.matmul %142, %144, %cst_137 {dimension_numbers = #tpu.dot_dimension_numbers<[1], [0], [0], [1], [0, 0, 1, 1], [], []>} : vector<5x128xf32>, vector<128x256xf32>, vector<5x256xf32> -> vector<5x256xf32>
      %146 = arith.addf %137, %145 : vector<5x256xf32>
      %c2_i32_138 = arith.constant 2 : i32
      %147 = arith.muli %c2_i32_138, %arg16 : i32
      %c2_i32_139 = arith.constant 2 : i32
      %148 = arith.addi %147, %c2_i32_139 : i32
      %149 = arith.index_cast %148 : i32 to index
      %c0_140 = arith.constant 0 : index
      %c0_141 = arith.constant 0 : index
      %c0_142 = arith.constant 0 : index
      %150 = vector.load %arg15[%149, %c0_140, %c0_141, %c0_142] : memref<12x2x6x128xf32, #tpu.memory_space<vmem>>, vector<1x1x5x128xf32>
      %151 = vector.shape_cast %150 : vector<1x1x5x128xf32> to vector<5x128xf32>
      %c2 = arith.constant 2 : index
      %c0_143 = arith.constant 0 : index
      %c0_144 = arith.constant 0 : index
      %c0_145 = arith.constant 0 : index
      %c0_146 = arith.constant 0 : index
      %152 = vector.load %arg8[%c2, %c0_143, %c0_144, %c0_145, %c0_146] : memref<4x2x2x128x256xf32, #tpu.memory_space<vmem>>, vector<1x1x1x128x256xf32>
      %153 = vector.shape_cast %152 : vector<1x1x1x128x256xf32> to vector<128x256xf32>
      %cst_147 = arith.constant dense<0.000000e+00> : vector<5x256xf32>
      %154 = tpu.matmul %151, %153, %cst_147 {dimension_numbers = #tpu.dot_dimension_numbers<[1], [0], [0], [1], [0, 0, 1, 1], [], []>} : vector<5x128xf32>, vector<128x256xf32>, vector<5x256xf32> -> vector<5x256xf32>
      %155 = arith.addf %146, %154 : vector<5x256xf32>
      %c2_i32_148 = arith.constant 2 : i32
      %156 = arith.muli %c2_i32_148, %arg16 : i32
      %c2_i32_149 = arith.constant 2 : i32
      %157 = arith.addi %156, %c2_i32_149 : i32
      %158 = arith.index_cast %157 : i32 to index
      %c1_150 = arith.constant 1 : index
      %c0_151 = arith.constant 0 : index
      %c0_152 = arith.constant 0 : index
      %159 = vector.load %arg15[%158, %c1_150, %c0_151, %c0_152] : memref<12x2x6x128xf32, #tpu.memory_space<vmem>>, vector<1x1x5x128xf32>
      %160 = vector.shape_cast %159 : vector<1x1x5x128xf32> to vector<5x128xf32>
      %c2_153 = arith.constant 2 : index
      %c0_154 = arith.constant 0 : index
      %c1_155 = arith.constant 1 : index
      %c0_156 = arith.constant 0 : index
      %c0_157 = arith.constant 0 : index
      %161 = vector.load %arg8[%c2_153, %c0_154, %c1_155, %c0_156, %c0_157] : memref<4x2x2x128x256xf32, #tpu.memory_space<vmem>>, vector<1x1x1x128x256xf32>
      %162 = vector.shape_cast %161 : vector<1x1x1x128x256xf32> to vector<128x256xf32>
      %cst_158 = arith.constant dense<0.000000e+00> : vector<5x256xf32>
      %163 = tpu.matmul %160, %162, %cst_158 {dimension_numbers = #tpu.dot_dimension_numbers<[1], [0], [0], [1], [0, 0, 1, 1], [], []>} : vector<5x128xf32>, vector<128x256xf32>, vector<5x256xf32> -> vector<5x256xf32>
      %164 = arith.addf %155, %163 : vector<5x256xf32>
      %c2_i32_159 = arith.constant 2 : i32
      %165 = arith.muli %c2_i32_159, %arg16 : i32
      %c2_i32_160 = arith.constant 2 : i32
      %166 = arith.addi %165, %c2_i32_160 : i32
      %167 = arith.index_cast %166 : i32 to index
      %c0_161 = arith.constant 0 : index
      %c1_162 = arith.constant 1 : index
      %c0_163 = arith.constant 0 : index
      %168 = vector.load %arg15[%167, %c0_161, %c1_162, %c0_163] : memref<12x2x6x128xf32, #tpu.memory_space<vmem>>, vector<1x1x5x128xf32>
      %169 = vector.shape_cast %168 : vector<1x1x5x128xf32> to vector<5x128xf32>
      %c2_164 = arith.constant 2 : index
      %c1_165 = arith.constant 1 : index
      %c0_166 = arith.constant 0 : index
      %c0_167 = arith.constant 0 : index
      %c0_168 = arith.constant 0 : index
      %170 = vector.load %arg8[%c2_164, %c1_165, %c0_166, %c0_167, %c0_168] : memref<4x2x2x128x256xf32, #tpu.memory_space<vmem>>, vector<1x1x1x128x256xf32>
      %171 = vector.shape_cast %170 : vector<1x1x1x128x256xf32> to vector<128x256xf32>
      %cst_169 = arith.constant dense<0.000000e+00> : vector<5x256xf32>
      %172 = tpu.matmul %169, %171, %cst_169 {dimension_numbers = #tpu.dot_dimension_numbers<[1], [0], [0], [1], [0, 0, 1, 1], [], []>} : vector<5x128xf32>, vector<128x256xf32>, vector<5x256xf32> -> vector<5x256xf32>
      %173 = arith.addf %164, %172 : vector<5x256xf32>
      %c2_i32_170 = arith.constant 2 : i32
      %174 = arith.muli %c2_i32_170, %arg16 : i32
      %c2_i32_171 = arith.constant 2 : i32
      %175 = arith.addi %174, %c2_i32_171 : i32
      %176 = arith.index_cast %175 : i32 to index
      %c1_172 = arith.constant 1 : index
      %c1_173 = arith.constant 1 : index
      %c0_174 = arith.constant 0 : index
      %177 = vector.load %arg15[%176, %c1_172, %c1_173, %c0_174] : memref<12x2x6x128xf32, #tpu.memory_space<vmem>>, vector<1x1x5x128xf32>
      %178 = vector.shape_cast %177 : vector<1x1x5x128xf32> to vector<5x128xf32>
      %c2_175 = arith.constant 2 : index
      %c1_176 = arith.constant 1 : index
      %c1_177 = arith.constant 1 : index
      %c0_178 = arith.constant 0 : index
      %c0_179 = arith.constant 0 : index
      %179 = vector.load %arg8[%c2_175, %c1_176, %c1_177, %c0_178, %c0_179] : memref<4x2x2x128x256xf32, #tpu.memory_space<vmem>>, vector<1x1x1x128x256xf32>
      %180 = vector.shape_cast %179 : vector<1x1x1x128x256xf32> to vector<128x256xf32>
      %cst_180 = arith.constant dense<0.000000e+00> : vector<5x256xf32>
      %181 = tpu.matmul %178, %180, %cst_180 {dimension_numbers = #tpu.dot_dimension_numbers<[1], [0], [0], [1], [0, 0, 1, 1], [], []>} : vector<5x128xf32>, vector<128x256xf32>, vector<5x256xf32> -> vector<5x256xf32>
      %182 = arith.addf %173, %181 : vector<5x256xf32>
      %c2_i32_181 = arith.constant 2 : i32
      %183 = arith.muli %c2_i32_181, %arg16 : i32
      %c3_i32 = arith.constant 3 : i32
      %184 = arith.addi %183, %c3_i32 : i32
      %185 = arith.index_cast %184 : i32 to index
      %c0_182 = arith.constant 0 : index
      %c0_183 = arith.constant 0 : index
      %c0_184 = arith.constant 0 : index
      %186 = vector.load %arg15[%185, %c0_182, %c0_183, %c0_184] : memref<12x2x6x128xf32, #tpu.memory_space<vmem>>, vector<1x1x5x128xf32>
      %187 = vector.shape_cast %186 : vector<1x1x5x128xf32> to vector<5x128xf32>
      %c3 = arith.constant 3 : index
      %c0_185 = arith.constant 0 : index
      %c0_186 = arith.constant 0 : index
      %c0_187 = arith.constant 0 : index
      %c0_188 = arith.constant 0 : index
      %188 = vector.load %arg8[%c3, %c0_185, %c0_186, %c0_187, %c0_188] : memref<4x2x2x128x256xf32, #tpu.memory_space<vmem>>, vector<1x1x1x128x256xf32>
      %189 = vector.shape_cast %188 : vector<1x1x1x128x256xf32> to vector<128x256xf32>
      %cst_189 = arith.constant dense<0.000000e+00> : vector<5x256xf32>
      %190 = tpu.matmul %187, %189, %cst_189 {dimension_numbers = #tpu.dot_dimension_numbers<[1], [0], [0], [1], [0, 0, 1, 1], [], []>} : vector<5x128xf32>, vector<128x256xf32>, vector<5x256xf32> -> vector<5x256xf32>
      %191 = arith.addf %182, %190 : vector<5x256xf32>
      %c2_i32_190 = arith.constant 2 : i32
      %192 = arith.muli %c2_i32_190, %arg16 : i32
      %c3_i32_191 = arith.constant 3 : i32
      %193 = arith.addi %192, %c3_i32_191 : i32
      %194 = arith.index_cast %193 : i32 to index
      %c1_192 = arith.constant 1 : index
      %c0_193 = arith.constant 0 : index
      %c0_194 = arith.constant 0 : index
      %195 = vector.load %arg15[%194, %c1_192, %c0_193, %c0_194] : memref<12x2x6x128xf32, #tpu.memory_space<vmem>>, vector<1x1x5x128xf32>
      %196 = vector.shape_cast %195 : vector<1x1x5x128xf32> to vector<5x128xf32>
      %c3_195 = arith.constant 3 : index
      %c0_196 = arith.constant 0 : index
      %c1_197 = arith.constant 1 : index
      %c0_198 = arith.constant 0 : index
      %c0_199 = arith.constant 0 : index
      %197 = vector.load %arg8[%c3_195, %c0_196, %c1_197, %c0_198, %c0_199] : memref<4x2x2x128x256xf32, #tpu.memory_space<vmem>>, vector<1x1x1x128x256xf32>
      %198 = vector.shape_cast %197 : vector<1x1x1x128x256xf32> to vector<128x256xf32>
      %cst_200 = arith.constant dense<0.000000e+00> : vector<5x256xf32>
      %199 = tpu.matmul %196, %198, %cst_200 {dimension_numbers = #tpu.dot_dimension_numbers<[1], [0], [0], [1], [0, 0, 1, 1], [], []>} : vector<5x128xf32>, vector<128x256xf32>, vector<5x256xf32> -> vector<5x256xf32>
      %200 = arith.addf %191, %199 : vector<5x256xf32>
      %c2_i32_201 = arith.constant 2 : i32
      %201 = arith.muli %c2_i32_201, %arg16 : i32
      %c3_i32_202 = arith.constant 3 : i32
      %202 = arith.addi %201, %c3_i32_202 : i32
      %203 = arith.index_cast %202 : i32 to index
      %c0_203 = arith.constant 0 : index
      %c1_204 = arith.constant 1 : index
      %c0_205 = arith.constant 0 : index
      %204 = vector.load %arg15[%203, %c0_203, %c1_204, %c0_205] : memref<12x2x6x128xf32, #tpu.memory_space<vmem>>, vector<1x1x5x128xf32>
      %205 = vector.shape_cast %204 : vector<1x1x5x128xf32> to vector<5x128xf32>
      %c3_206 = arith.constant 3 : index
      %c1_207 = arith.constant 1 : index
      %c0_208 = arith.constant 0 : index
      %c0_209 = arith.constant 0 : index
      %c0_210 = arith.constant 0 : index
      %206 = vector.load %arg8[%c3_206, %c1_207, %c0_208, %c0_209, %c0_210] : memref<4x2x2x128x256xf32, #tpu.memory_space<vmem>>, vector<1x1x1x128x256xf32>
      %207 = vector.shape_cast %206 : vector<1x1x1x128x256xf32> to vector<128x256xf32>
      %cst_211 = arith.constant dense<0.000000e+00> : vector<5x256xf32>
      %208 = tpu.matmul %205, %207, %cst_211 {dimension_numbers = #tpu.dot_dimension_numbers<[1], [0], [0], [1], [0, 0, 1, 1], [], []>} : vector<5x128xf32>, vector<128x256xf32>, vector<5x256xf32> -> vector<5x256xf32>
      %209 = arith.addf %200, %208 : vector<5x256xf32>
      %c2_i32_212 = arith.constant 2 : i32
      %210 = arith.muli %c2_i32_212, %arg16 : i32
      %c3_i32_213 = arith.constant 3 : i32
      %211 = arith.addi %210, %c3_i32_213 : i32
      %212 = arith.index_cast %211 : i32 to index
      %c1_214 = arith.constant 1 : index
      %c1_215 = arith.constant 1 : index
      %c0_216 = arith.constant 0 : index
      %213 = vector.load %arg15[%212, %c1_214, %c1_215, %c0_216] : memref<12x2x6x128xf32, #tpu.memory_space<vmem>>, vector<1x1x5x128xf32>
      %214 = vector.shape_cast %213 : vector<1x1x5x128xf32> to vector<5x128xf32>
      %c3_217 = arith.constant 3 : index
      %c1_218 = arith.constant 1 : index
      %c1_219 = arith.constant 1 : index
      %c0_220 = arith.constant 0 : index
      %c0_221 = arith.constant 0 : index
      %215 = vector.load %arg8[%c3_217, %c1_218, %c1_219, %c0_220, %c0_221] : memref<4x2x2x128x256xf32, #tpu.memory_space<vmem>>, vector<1x1x1x128x256xf32>
      %216 = vector.shape_cast %215 : vector<1x1x1x128x256xf32> to vector<128x256xf32>
      %cst_222 = arith.constant dense<0.000000e+00> : vector<5x256xf32>
      %217 = tpu.matmul %214, %216, %cst_222 {dimension_numbers = #tpu.dot_dimension_numbers<[1], [0], [0], [1], [0, 0, 1, 1], [], []>} : vector<5x128xf32>, vector<128x256xf32>, vector<5x256xf32> -> vector<5x256xf32>
      %218 = arith.addf %209, %217 : vector<5x256xf32>
      %219 = vector.broadcast %54 : vector<1x256xf32> to vector<5x256xf32>
      %220 = arith.addf %218, %219 : vector<5x256xf32>
      %cst_223 = arith.constant 0.000000e+00 : f32
      %221 = vector.broadcast %cst_223 : f32 to vector<5x256xf32>
      %222 = arith.maximumf %220, %221 : vector<5x256xf32>
      %c0_224 = arith.constant 0 : index
      %223 = arith.index_cast %arg16 : i32 to index
      %c0_225 = arith.constant 0 : index
      %c0_226 = arith.constant 0 : index
      %224 = vector.load %arg10[%c0_224, %223, %c0_225, %c0_226] : memref<2x5x5x256xf32, #tpu.memory_space<vmem>>, vector<1x1x5x256xf32>
      %225 = vector.shape_cast %224 : vector<1x1x5x256xf32> to vector<5x256xf32>
      %226 = arith.mulf %222, %225 : vector<5x256xf32>
      %227 = vector.shape_cast %226 : vector<5x256xf32> to vector<1x5x256xf32>
      %cst_227 = arith.constant dense<0.000000e+00> : vector<1xf32>
      %228 = vector.multi_reduction <add>, %227, %cst_227 [1, 2] : vector<1x5x256xf32> to vector<1xf32>
      %229 = vector.shape_cast %228 : vector<1xf32> to vector<1x1x1xf32>
      %230 = vector.extract %229[0, 0, 0] : f32 from vector<1x1x1xf32>
      %231 = arith.addf %arg17, %230 : f32
      %c1_228 = arith.constant 1 : index
      %232 = arith.index_cast %arg16 : i32 to index
      %c0_229 = arith.constant 0 : index
      %c0_230 = arith.constant 0 : index
      %233 = vector.load %arg10[%c1_228, %232, %c0_229, %c0_230] : memref<2x5x5x256xf32, #tpu.memory_space<vmem>>, vector<1x1x5x256xf32>
      %234 = vector.shape_cast %233 : vector<1x1x5x256xf32> to vector<5x256xf32>
      %235 = arith.mulf %222, %234 : vector<5x256xf32>
      %236 = vector.shape_cast %235 : vector<5x256xf32> to vector<1x5x256xf32>
      %cst_231 = arith.constant dense<0.000000e+00> : vector<1xf32>
      %237 = vector.multi_reduction <add>, %236, %cst_231 [1, 2] : vector<1x5x256xf32> to vector<1xf32>
      %238 = vector.shape_cast %237 : vector<1xf32> to vector<1x1x1xf32>
      %239 = vector.extract %238[0, 0, 0] : f32 from vector<1x1x1xf32>
      %240 = arith.addf %arg18, %239 : f32
      scf.yield %231, %240 : f32, f32
    }
    %c5_i32_40 = arith.constant 5 : i32
    %57 = tpu.iota {dimensions = array<i32: 1>} : vector<1x128xi32>
    %c0_i32_41 = arith.constant 0 : i32
    %58 = vector.broadcast %c0_i32_41 : i32 to vector<1x128xi32>
    %59 = arith.cmpi eq, %57, %58 : vector<1x128xi32>
    %cst_42 = arith.constant 0.000000e+00 : f32
    %60 = vector.broadcast %56#0 : f32 to vector<1x128xf32>
    %61 = vector.broadcast %cst_42 : f32 to vector<1x128xf32>
    %62 = arith.select %59, %60, %61 : vector<1x128xi1>, vector<1x128xf32>
    %c1_i32_43 = arith.constant 1 : i32
    %63 = vector.broadcast %c1_i32_43 : i32 to vector<1x128xi32>
    %64 = arith.cmpi eq, %57, %63 : vector<1x128xi32>
    %cst_44 = arith.constant 0.000000e+00 : f32
    %65 = vector.broadcast %56#1 : f32 to vector<1x128xf32>
    %66 = vector.broadcast %cst_44 : f32 to vector<1x128xf32>
    %67 = arith.select %64, %65, %66 : vector<1x128xi1>, vector<1x128xf32>
    %68 = arith.addf %62, %67 : vector<1x128xf32>
    %c0_45 = arith.constant 0 : index
    %c0_46 = arith.constant 0 : index
    %69 = vector.load %arg11[%c0_45, %c0_46] : memref<1x128xf32, #tpu.memory_space<vmem>>, vector<1x128xf32>
    %70 = arith.addf %68, %69 : vector<1x128xf32>
    %c0_47 = arith.constant 0 : index
    %c0_48 = arith.constant 0 : index
    %c0_49 = arith.constant 0 : index
    %71 = vector.load %arg12[%c0_47, %c0_48, %c0_49] : memref<1x1x128xf32, #tpu.memory_space<vmem>>, vector<1x1x128xf32>
    %72 = vector.shape_cast %71 : vector<1x1x128xf32> to vector<1x128xf32>
    %73 = vector.shape_cast %70 : vector<1x128xf32> to vector<1x1x128xf32>
    tpu.vector_store %arg12[%c0_47, %c0_48, %c0_49], %73 {strides = array<i32>} : memref<1x1x128xf32, #tpu.memory_space<vmem>>, vector<1x1x128xf32>,
    return
  }
  func.func @transform_0(%arg0: i32) -> (i32, i32, i32, i32) {
    %c0_i32 = arith.constant 0 : i32
    %c0_i32_0 = arith.constant 0 : i32
    %c0_i32_1 = arith.constant 0 : i32
    %c0_i32_2 = arith.constant 0 : i32
    return %arg0, %c0_i32, %c0_i32_0, %c0_i32_1 : i32, i32, i32, i32
  }
  func.func @transform_1(%arg0: i32) -> (i32, i32, i32, i32, i32) {
    %c0_i32 = arith.constant 0 : i32
    %c0_i32_0 = arith.constant 0 : i32
    %c0_i32_1 = arith.constant 0 : i32
    %c0_i32_2 = arith.constant 0 : i32
    %c0_i32_3 = arith.constant 0 : i32
    %c0_i32_4 = arith.constant 0 : i32
    return %c0_i32, %c0_i32_0, %c0_i32_1, %c0_i32_2, %c0_i32_3 : i32, i32, i32, i32, i32
  }
  func.func @transform_2(%arg0: i32) -> (i32, i32) {
    %c0_i32 = arith.constant 0 : i32
    %c0_i32_0 = arith.constant 0 : i32
    %c0_i32_1 = arith.constant 0 : i32
    return %c0_i32, %c0_i32_0 : i32, i32
  }
  func.func @transform_3(%arg0: i32) -> (i32, i32, i32, i32, i32) {
    %c0_i32 = arith.constant 0 : i32
    %c0_i32_0 = arith.constant 0 : i32
    %c0_i32_1 = arith.constant 0 : i32
    %c0_i32_2 = arith.constant 0 : i32
    %c0_i32_3 = arith.constant 0 : i32
    %c0_i32_4 = arith.constant 0 : i32
    return %c0_i32, %c0_i32_0, %c0_i32_1, %c0_i32_2, %c0_i32_3 : i32, i32, i32, i32, i32
  }
  func.func @transform_4(%arg0: i32) -> (i32, i32) {
    %c0_i32 = arith.constant 0 : i32
    %c0_i32_0 = arith.constant 0 : i32
    %c0_i32_1 = arith.constant 0 : i32
    return %c0_i32, %c0_i32_0 : i32, i32
  }
  func.func @transform_5(%arg0: i32) -> (i32, i32, i32, i32, i32) {
    %c0_i32 = arith.constant 0 : i32
    %c0_i32_0 = arith.constant 0 : i32
    %c0_i32_1 = arith.constant 0 : i32
    %c0_i32_2 = arith.constant 0 : i32
    %c0_i32_3 = arith.constant 0 : i32
    %c0_i32_4 = arith.constant 0 : i32
    return %c0_i32, %c0_i32_0, %c0_i32_1, %c0_i32_2, %c0_i32_3 : i32, i32, i32, i32, i32
  }
  func.func @transform_6(%arg0: i32) -> (i32, i32) {
    %c0_i32 = arith.constant 0 : i32
    %c0_i32_0 = arith.constant 0 : i32
    %c0_i32_1 = arith.constant 0 : i32
    return %c0_i32, %c0_i32_0 : i32, i32
  }
  func.func @transform_7(%arg0: i32) -> (i32, i32, i32, i32, i32) {
    %c0_i32 = arith.constant 0 : i32
    %c0_i32_0 = arith.constant 0 : i32
    %c0_i32_1 = arith.constant 0 : i32
    %c0_i32_2 = arith.constant 0 : i32
    %c0_i32_3 = arith.constant 0 : i32
    %c0_i32_4 = arith.constant 0 : i32
    return %c0_i32, %c0_i32_0, %c0_i32_1, %c0_i32_2, %c0_i32_3 : i32, i32, i32, i32, i32
  }
  func.func @transform_8(%arg0: i32) -> (i32, i32) {
    %c0_i32 = arith.constant 0 : i32
    %c0_i32_0 = arith.constant 0 : i32
    %c0_i32_1 = arith.constant 0 : i32
    return %c0_i32, %c0_i32_0 : i32, i32
  }
  func.func @transform_9(%arg0: i32) -> (i32, i32, i32, i32) {
    %c0_i32 = arith.constant 0 : i32
    %c0_i32_0 = arith.constant 0 : i32
    %c0_i32_1 = arith.constant 0 : i32
    %c0_i32_2 = arith.constant 0 : i32
    %c0_i32_3 = arith.constant 0 : i32
    return %c0_i32, %c0_i32_0, %c0_i32_1, %c0_i32_2 : i32, i32, i32, i32
  }
  func.func @transform_10(%arg0: i32) -> (i32, i32) {
    %c0_i32 = arith.constant 0 : i32
    %c0_i32_0 = arith.constant 0 : i32
    %c0_i32_1 = arith.constant 0 : i32
    return %c0_i32, %c0_i32_0 : i32, i32
  }
  func.func @transform_11(%arg0: i32) -> (i32, i32, i32) {
    %c0_i32 = arith.constant 0 : i32
    %c0_i32_0 = arith.constant 0 : i32
    %c0_i32_1 = arith.constant 0 : i32
    return %arg0, %c0_i32, %c0_i32_0 : i32, i32, i32
  }
}

</mosaic_0001>

<llo_original>
// kernel: dp2_forward.1
$region0: #{dp2_forward.1}
  #allocation0 [shape = 'u32[]', space=smem, size = 0x4, offset = 0x4, fixed_abs, tag = 'smem constant byte address 0x4 - core index']
  #allocation1 [shape = 'u32[72,128]{1,0:T(1,128)}', space=vmem, size = 0x9000, scoped, tag = 'internal scratch']
  #allocation2 [shape = 'f32[42,2,21,128]{3,2,1,0:T(8,128)}', space=vmem, size = 0xfc000, scoped, tag = 'scratch operand']
  #allocation3 [shape = 'f32[22,2,11,128]{3,2,1,0:T(8,128)}', space=vmem, size = 0x58000, scoped, tag = 'scratch operand']
  #allocation4 [shape = 'f32[12,2,6,128]{3,2,1,0:T(8,128)}', space=vmem, size = 0x18000, scoped, tag = 'scratch operand']
  %s0 = inlined_call_operand.vmem [shape: f32[164,2,41,4], index: 0, kind: input, shape index: {}]
  %s1 = inlined_call_operand.vmem [shape: f32[4,2,2,4,128], index: 1, kind: input, shape index: {}]
  %s2 = inlined_call_operand.vmem [shape: f32[1,128], index: 2, kind: input, shape index: {}]
  %s3 = inlined_call_operand.vmem [shape: f32[4,2,2,128,128], index: 3, kind: input, shape index: {}]
  %s4 = inlined_call_operand.vmem [shape: f32[1,128], index: 4, kind: input, shape index: {}]
  %s5 = inlined_call_operand.vmem [shape: f32[4,2,2,128,128], index: 5, kind: input, shape index: {}]
  %s6 = inlined_call_operand.vmem [shape: f32[1,128], index: 6, kind: input, shape index: {}]
  %s7 = inlined_call_operand.vmem [shape: f32[4,2,2,128,256], index: 7, kind: input, shape index: {}]
  %s8 = inlined_call_operand.vmem [shape: f32[1,256], index: 8, kind: input, shape index: {}]
  %s9 = inlined_call_operand.vmem [shape: f32[2,5,5,256], index: 9, kind: input, shape index: {}]
  %s10 = inlined_call_operand.vmem [shape: f32[1,128], index: 10, kind: input, shape index: {}]
  %s11 = inlined_call_operand.hbm [shape: f32[2,1,128], index: 11, kind: output, shape index: {}]
  %s12 = sld [smem:[#allocation0]]
  $region105: #{dp2_forward.1} parent=0
    _
  %s14 = ssub.s32 1, %s12
  %s15 = scalar_select 0, %s14, %s12
  $region1: #{dp2_forward.1} parent=0
    #allocation5 [shape = 'u8[1024]{0}', space=vmem, size = 0x400, scoped, tag = 'output window, operand 0']
    #allocation6 [shape = 's32[2]{0}', space=sflag, size = 0x8, scoped, tag = 'scoped memory for dp2_forward.1']
    %16 = vsyncpa [#allocation6], 0
    %s17 = scalar_lea.sflag [#allocation6], 1
    %18 = vsyncpa %s17, 0
    loop: start=0, step=1, limit=4
    $region2: #{dp2_forward.1} parent=1 // loop_pre_header
      _
    $region3: #{dp2_forward.1} parent=1 // loop_header
      %s20 = sphi 0, %s24
      %p21 = scmp.ge.s32.totalorder %s20, 4
      %s30 = sphi 0, %s32
      %s33 = sphi 0, %s30
      %s34 = sphi 0, %s33
      %s50 = sphi 0, %s34
      %s54 = sphi 0, %s54
      %s56 = sphi 0, %s54
      %s57 = sphi 0, %s56
      %s71 = sphi 0, %s57
      %s75 = sphi 0, %s75
      %s77 = sphi 0, %s75
      %s78 = sphi 0, %s77
      %s92 = sphi 0, %s78
      %s96 = sphi 0, %s96
      %s98 = sphi 0, %s96
      %s99 = sphi 0, %s98
      %s113 = sphi 0, %s99
      %s117 = sphi 0, %s117
      %s119 = sphi 0, %s117
      %s120 = sphi 0, %s119
      %s134 = sphi 0, %s120
      %s138 = sphi 0, %s138
      %s140 = sphi 0, %s138
      %s141 = sphi 0, %s140
      %s155 = sphi 0, %s141
      %s159 = sphi 0, %s159
      %s161 = sphi 0, %s159
      %s162 = sphi 0, %s161
      %s176 = sphi 0, %s162
      %s180 = sphi 0, %s180
      %s182 = sphi 0, %s180
      %s183 = sphi 0, %s182
      %s197 = sphi 0, %s183
      %s201 = sphi 0, %s201
      %s203 = sphi 0, %s201
      %s204 = sphi 0, %s203
      %s218 = sphi 0, %s204
      %s222 = sphi 0, %s222
      %s224 = sphi 0, %s222
      %s225 = sphi 0, %s224
      %s239 = sphi 0, %s225
      %s243 = sphi 0, %s243
      %s245 = sphi 0, %s243
      %s246 = sphi 0, %s245
      %s260 = sphi 0, %s246
      %s266 = sphi 0, %s268
      %s269 = sphi 0, %s266
      %s270 = sphi 0, %s269
      %s286 = sphi 0, %s270
    $region4: #{dp2_forward.1} parent=1 // loop_header_branch
      %23 = sbr.rel (%p21) target = $region8
    $region5: #{dp2_forward.1} parent=1 // loop_body
      %s25 = ssub.s32 %s20, 1
      %s26 = ssub.s32 %s20, 2
      %s27 = sadd.s32 %s20, 1
      %s28 = ssub.s32 %s20, %s27
      %p29 = scmp.eq.s32.totalorder %s28, 0
      %s31 = sadd.s32 %s30, 1
      %s32 = scalar_select %p29, %s30, %s31
      %p35 = pneg %p29
      %p36 = scmp.eq.s32.totalorder %s20, 1
      %p37 = por %p35, %p36
      %p38 = scmp.ne.s32.totalorder %s30, %s33
      %p39 = scmp.eq.s32.totalorder %s20, 0
      %p40 = por %p38, %p39
      %p41 = scmp.ne.s32.totalorder %s30, %s33
      %p42 = scmp.eq.s32.totalorder %s25, 1
      %p43 = por %p41, %p42
      %p44 = scmp.ne.s32.totalorder %s33, %s34
      %p45 = scmp.eq.s32.totalorder %s25, 0
      %p46 = por %p44, %p45
      %p47 = scmp.ne.s32.totalorder %s33, %s34
      %p48 = scmp.eq.s32.totalorder %s26, 1
      %p49 = por %p47, %p48
      %p51 = scmp.ne.s32.totalorder %s34, %s50
      %p52 = scmp.eq.s32.totalorder %s26, 0
      %p53 = por %p51, %p52
      %s55 = sadd.s32 %s54, 1
      %p58 = scmp.eq.s32.totalorder %s20, 1
      %p59 = scmp.ne.s32.totalorder %s54, %s56
      %p60 = scmp.eq.s32.totalorder %s20, 0
      %p61 = por %p59, %p60
      %p62 = scmp.ne.s32.totalorder %s54, %s56
      %p63 = scmp.eq.s32.totalorder %s25, 1
      %p64 = por %p62, %p63
      %p65 = scmp.ne.s32.totalorder %s56, %s57
      %p66 = scmp.eq.s32.totalorder %s25, 0
      %p67 = por %p65, %p66
      %p68 = scmp.ne.s32.totalorder %s56, %s57
      %p69 = scmp.eq.s32.totalorder %s26, 1
      %p70 = por %p68, %p69
      %p72 = scmp.ne.s32.totalorder %s57, %s71
      %p73 = scmp.eq.s32.totalorder %s26, 0
      %p74 = por %p72, %p73
      %s76 = sadd.s32 %s75, 1
      %p79 = scmp.eq.s32.totalorder %s20, 1
      %p80 = scmp.ne.s32.totalorder %s75, %s77
      %p81 = scmp.eq.s32.totalorder %s20, 0
      %p82 = por %p80, %p81
      %p83 = scmp.ne.s32.totalorder %s75, %s77
      %p84 = scmp.eq.s32.totalorder %s25, 1
      %p85 = por %p83, %p84
      %p86 = scmp.ne.s32.totalorder %s77, %s78
      %p87 = scmp.eq.s32.totalorder %s25, 0
      %p88 = por %p86, %p87
      %p89 = scmp.ne.s32.totalorder %s77, %s78
      %p90 = scmp.eq.s32.totalorder %s26, 1
      %p91 = por %p89, %p90
      %p93 = scmp.ne.s32.totalorder %s78, %s92
      %p94 = scmp.eq.s32.totalorder %s26, 0
      %p95 = por %p93, %p94
      %s97 = sadd.s32 %s96, 1
      %p100 = scmp.eq.s32.totalorder %s20, 1
      %p101 = scmp.ne.s32.totalorder %s96, %s98
      %p102 = scmp.eq.s32.totalorder %s20, 0
      %p103 = por %p101, %p102
      %p104 = scmp.ne.s32.totalorder %s96, %s98
      %p105 = scmp.eq.s32.totalorder %s25, 1
      %p106 = por %p104, %p105
      %p107 = scmp.ne.s32.totalorder %s98, %s99
      %p108 = scmp.eq.s32.totalorder %s25, 0
      %p109 = por %p107, %p108
      %p110 = scmp.ne.s32.totalorder %s98, %s99
      %p111 = scmp.eq.s32.totalorder %s26, 1
      %p112 = por %p110, %p111
      %p114 = scmp.ne.s32.totalorder %s99, %s113
      %p115 = scmp.eq.s32.totalorder %s26, 0
      %p116 = por %p114, %p115
      %s118 = sadd.s32 %s117, 1
      %p121 = scmp.eq.s32.totalorder %s20, 1
      %p122 = scmp.ne.s32.totalorder %s117, %s119
      %p123 = scmp.eq.s32.totalorder %s20, 0
      %p124 = por %p122, %p123
      %p125 = scmp.ne.s32.totalorder %s117, %s119
      %p126 = scmp.eq.s32.totalorder %s25, 1
      %p127 = por %p125, %p126
      %p128 = scmp.ne.s32.totalorder %s119, %s120
      %p129 = scmp.eq.s32.totalorder %s25, 0
      %p130 = por %p128, %p129
      %p131 = scmp.ne.s32.totalorder %s119, %s120
      %p132 = scmp.eq.s32.totalorder %s26, 1
      %p133 = por %p131, %p132
      %p135 = scmp.ne.s32.totalorder %s120, %s134
      %p136 = scmp.eq.s32.totalorder %s26, 0
      %p137 = por %p135, %p136
      %s139 = sadd.s32 %s138, 1
      %p142 = scmp.eq.s32.totalorder %s20, 1
      %p143 = scmp.ne.s32.totalorder %s138, %s140
      %p144 = scmp.eq.s32.totalorder %s20, 0
      %p145 = por %p143, %p144
      %p146 = scmp.ne.s32.totalorder %s138, %s140
      %p147 = scmp.eq.s32.totalorder %s25, 1
      %p148 = por %p146, %p147
      %p149 = scmp.ne.s32.totalorder %s140, %s141
      %p150 = scmp.eq.s32.totalorder %s25, 0
      %p151 = por %p149, %p150
      %p152 = scmp.ne.s32.totalorder %s140, %s141
      %p153 = scmp.eq.s32.totalorder %s26, 1
      %p154 = por %p152, %p153
      %p156 = scmp.ne.s32.totalorder %s141, %s155
      %p157 = scmp.eq.s32.totalorder %s26, 0
      %p158 = por %p156, %p157
      %s160 = sadd.s32 %s159, 1
      %p163 = scmp.eq.s32.totalorder %s20, 1
      %p164 = scmp.ne.s32.totalorder %s159, %s161
      %p165 = scmp.eq.s32.totalorder %s20, 0
      %p166 = por %p164, %p165
      %p167 = scmp.ne.s32.totalorder %s159, %s161
      %p168 = scmp.eq.s32.totalorder %s25, 1
      %p169 = por %p167, %p168
      %p170 = scmp.ne.s32.totalorder %s161, %s162
      %p171 = scmp.eq.s32.totalorder %s25, 0
      %p172 = por %p170, %p171
      %p173 = scmp.ne.s32.totalorder %s161, %s162
      %p174 = scmp.eq.s32.totalorder %s26, 1
      %p175 = por %p173, %p174
      %p177 = scmp.ne.s32.totalorder %s162, %s176
      %p178 = scmp.eq.s32.totalorder %s26, 0
      %p179 = por %p177, %p178
      %s181 = sadd.s32 %s180, 1
      %p184 = scmp.eq.s32.totalorder %s20, 1
      %p185 = scmp.ne.s32.totalorder %s180, %s182
      %p186 = scmp.eq.s32.totalorder %s20, 0
      %p187 = por %p185, %p186
      %p188 = scmp.ne.s32.totalorder %s180, %s182
      %p189 = scmp.eq.s32.totalorder %s25, 1
      %p190 = por %p188, %p189
      %p191 = scmp.ne.s32.totalorder %s182, %s183
      %p192 = scmp.eq.s32.totalorder %s25, 0
      %p193 = por %p191, %p192
      %p194 = scmp.ne.s32.totalorder %s182, %s183
      %p195 = scmp.eq.s32.totalorder %s26, 1
      %p196 = por %p194, %p195
      %p198 = scmp.ne.s32.totalorder %s183, %s197
      %p199 = scmp.eq.s32.totalorder %s26, 0
      %p200 = por %p198, %p199
      %s202 = sadd.s32 %s201, 1
      %p205 = scmp.eq.s32.totalorder %s20, 1
      %p206 = scmp.ne.s32.totalorder %s201, %s203
      %p207 = scmp.eq.s32.totalorder %s20, 0
      %p208 = por %p206, %p207
      %p209 = scmp.ne.s32.totalorder %s201, %s203
      %p210 = scmp.eq.s32.totalorder %s25, 1
      %p211 = por %p209, %p210
      %p212 = scmp.ne.s32.totalorder %s203, %s204
      %p213 = scmp.eq.s32.totalorder %s25, 0
      %p214 = por %p212, %p213
      %p215 = scmp.ne.s32.totalorder %s203, %s204
      %p216 = scmp.eq.s32.totalorder %s26, 1
      %p217 = por %p215, %p216
      %p219 = scmp.ne.s32.totalorder %s204, %s218
      %p220 = scmp.eq.s32.totalorder %s26, 0
      %p221 = por %p219, %p220
      %s223 = sadd.s32 %s222, 1
      %p226 = scmp.eq.s32.totalorder %s20, 1
      %p227 = scmp.ne.s32.totalorder %s222, %s224
      %p228 = scmp.eq.s32.totalorder %s20, 0
      %p229 = por %p227, %p228
      %p230 = scmp.ne.s32.totalorder %s222, %s224
      %p231 = scmp.eq.s32.totalorder %s25, 1
      %p232 = por %p230, %p231
      %p233 = scmp.ne.s32.totalorder %s224, %s225
      %p234 = scmp.eq.s32.totalorder %s25, 0
      %p235 = por %p233, %p234
      %p236 = scmp.ne.s32.totalorder %s224, %s225
      %p237 = scmp.eq.s32.totalorder %s26, 1
      %p238 = por %p236, %p237
      %p240 = scmp.ne.s32.totalorder %s225, %s239
      %p241 = scmp.eq.s32.totalorder %s26, 0
      %p242 = por %p240, %p241
      %s244 = sadd.s32 %s243, 1
      %p247 = scmp.eq.s32.totalorder %s20, 1
      %p248 = scmp.ne.s32.totalorder %s243, %s245
      %p249 = scmp.eq.s32.totalorder %s20, 0
      %p250 = por %p248, %p249
      %p251 = scmp.ne.s32.totalorder %s243, %s245
      %p252 = scmp.eq.s32.totalorder %s25, 1
      %p253 = por %p251, %p252
      %p254 = scmp.ne.s32.totalorder %s245, %s246
      %p255 = scmp.eq.s32.totalorder %s25, 0
      %p256 = por %p254, %p255
      %p257 = scmp.ne.s32.totalorder %s245, %s246
      %p258 = scmp.eq.s32.totalorder %s26, 1
      %p259 = por %p257, %p258
      %p261 = scmp.ne.s32.totalorder %s246, %s260
      %p262 = scmp.eq.s32.totalorder %s26, 0
      %p263 = por %p261, %p262
      %s264 = ssub.s32 %s20, %s27
      %p265 = scmp.eq.s32.totalorder %s264, 0
      %s267 = sadd.s32 %s266, 1
      %s268 = scalar_select %p265, %s266, %s267
      %p271 = pneg %p265
      %p272 = scmp.eq.s32.totalorder %s20, 1
      %p273 = por %p271, %p272
      %p274 = scmp.ne.s32.totalorder %s266, %s269
      %p275 = scmp.eq.s32.totalorder %s20, 0
      %p276 = por %p274, %p275
      %p277 = scmp.ne.s32.totalorder %s266, %s269
      %p278 = scmp.eq.s32.totalorder %s25, 1
      %p279 = por %p277, %p278
      %p280 = scmp.ne.s32.totalorder %s269, %s270
      %p281 = scmp.eq.s32.totalorder %s25, 0
      %p282 = por %p280, %p281
      %p283 = scmp.ne.s32.totalorder %s269, %s270
      %p284 = scmp.eq.s32.totalorder %s26, 1
      %p285 = por %p283, %p284
      %p287 = scmp.ne.s32.totalorder %s270, %s286
      %p288 = scmp.eq.s32.totalorder %s26, 0
      %p289 = por %p287, %p288
      %p290 = scmp.le.s32.totalorder 1, %s20
      %p291 = scmp.lt.s32.totalorder %s20, 3
      %p292 = pnand %p290, %p291
      %p293 = pneg %p292
      // Predicated region
      $region9: #{dp2_forward.1} parent=5 // pred_check
        _
      $region10: #{dp2_forward.1} parent=5 // pred_check_branch
        %295 = sbr.rel (%p292) target = $region12
      $region11: #{dp2_forward.1} parent=5 // pred_region
        %s296 = ssub.s32 %s20, 1
        // Predicated region
        $region13: #{dp2_forward.1} parent=11 // pred_check
          %p297 = pneg %p67
        $region14: #{dp2_forward.1} parent=11 // pred_check_branch
          %299 = sbr.rel (%p297) target = $region16
        $region15: #{dp2_forward.1} parent=11 // pred_region
          _
        $region16: #{dp2_forward.1} parent=11 // pred_fallthru
          _
        // Predicated region
        $region17: #{dp2_forward.1} parent=11 // pred_check
          %p300 = pneg %p88
        $region18: #{dp2_forward.1} parent=11 // pred_check_branch
          %302 = sbr.rel (%p300) target = $region20
        $region19: #{dp2_forward.1} parent=11 // pred_region
          _
        $region20: #{dp2_forward.1} parent=11 // pred_fallthru
          _
        // Predicated region
        $region21: #{dp2_forward.1} parent=11 // pred_check
          %p303 = pneg %p109
        $region22: #{dp2_forward.1} parent=11 // pred_check_branch
          %305 = sbr.rel (%p303) target = $region24
        $region23: #{dp2_forward.1} parent=11 // pred_region
          _
        $region24: #{dp2_forward.1} parent=11 // pred_fallthru
          _
        // Predicated region
        $region25: #{dp2_forward.1} parent=11 // pred_check
          %p306 = pneg %p130
        $region26: #{dp2_forward.1} parent=11 // pred_check_branch
          %308 = sbr.rel (%p306) target = $region28
        $region27: #{dp2_forward.1} parent=11 // pred_region
          _
        $region28: #{dp2_forward.1} parent=11 // pred_fallthru
          _
        // Predicated region
        $region29: #{dp2_forward.1} parent=11 // pred_check
          %p309 = pneg %p151
        $region30: #{dp2_forward.1} parent=11 // pred_check_branch
          %311 = sbr.rel (%p309) target = $region32
        $region31: #{dp2_forward.1} parent=11 // pred_region
          _
        $region32: #{dp2_forward.1} parent=11 // pred_fallthru
          _
        // Predicated region
        $region33: #{dp2_forward.1} parent=11 // pred_check
          %p312 = pneg %p172
        $region34: #{dp2_forward.1} parent=11 // pred_check_branch
          %314 = sbr.rel (%p312) target = $region36
        $region35: #{dp2_forward.1} parent=11 // pred_region
          _
        $region36: #{dp2_forward.1} parent=11 // pred_fallthru
          _
        // Predicated region
        $region37: #{dp2_forward.1} parent=11 // pred_check
          %p315 = pneg %p193
        $region38: #{dp2_forward.1} parent=11 // pred_check_branch
          %317 = sbr.rel (%p315) target = $region40
        $region39: #{dp2_forward.1} parent=11 // pred_region
          _
        $region40: #{dp2_forward.1} parent=11 // pred_fallthru
          _
        // Predicated region
        $region41: #{dp2_forward.1} parent=11 // pred_check
          %p318 = pneg %p214
        $region42: #{dp2_forward.1} parent=11 // pred_check_branch
          %320 = sbr.rel (%p318) target = $region44
        $region43: #{dp2_forward.1} parent=11 // pred_region
          _
        $region44: #{dp2_forward.1} parent=11 // pred_fallthru
          _
        // Predicated region
        $region45: #{dp2_forward.1} parent=11 // pred_check
          %p321 = pneg %p235
        $region46: #{dp2_forward.1} parent=11 // pred_check_branch
          %323 = sbr.rel (%p321) target = $region48
        $region47: #{dp2_forward.1} parent=11 // pred_region
          _
        $region48: #{dp2_forward.1} parent=11 // pred_fallthru
          _
        // Predicated region
        $region49: #{dp2_forward.1} parent=11 // pred_check
          %p324 = pneg %p256
        $region50: #{dp2_forward.1} parent=11 // pred_check_branch
          %326 = sbr.rel (%p324) target = $region52
        $region51: #{dp2_forward.1} parent=11 // pred_region
          _
        $region52: #{dp2_forward.1} parent=11 // pred_fallthru
          _
      $region12: #{dp2_forward.1} parent=5 // pred_fallthru
        _
      %p327 = scmp.lt.s32.totalorder %s20, 2
      // Predicated region
      $region53: #{dp2_forward.1} parent=5 // pred_check
        %p328 = pneg %p327
      $region54: #{dp2_forward.1} parent=5 // pred_check_branch
        %330 = sbr.rel (%p328) target = $region56
      $region55: #{dp2_forward.1} parent=5 // pred_region
        // Predicated region
        $region57: #{dp2_forward.1} parent=55 // pred_check
          %p331 = pneg %p40
        $region58: #{dp2_forward.1} parent=55 // pred_check_branch
          %333 = sbr.rel (%p331) target = $region60
        $region59: #{dp2_forward.1} parent=55 // pred_region
          %s334 = smul.u32 82, %s20
          %p335 = scmp.lt.s32.totalorder %s334, 163
          %s336 = scalar_select %p335, %s334, 163
          %s337 = smul.addr %s336, 12
          %s338 = smul.addr %s337, 8
          %s339 = scalar_lea.vmem %s0, %s338
          %s340 = smul.u32 82, %s20
        $region60: #{dp2_forward.1} parent=55 // pred_fallthru
          _
      $region56: #{dp2_forward.1} parent=5 // pred_fallthru
        _
      %p341 = scmp.le.s32.totalorder 1, %s20
      %p342 = scmp.lt.s32.totalorder %s20, 3
      %p343 = pnand %p341, %p342
      %p344 = pneg %p343
      // Predicated region
      $region61: #{dp2_forward.1} parent=5 // pred_check
        _
      $region62: #{dp2_forward.1} parent=5 // pred_check_branch
        %346 = sbr.rel (%p343) target = $region64
      $region63: #{dp2_forward.1} parent=5 // pred_region
        %s347 = ssub.s32 %s20, 1
        %s348 = smul.u32 82, %s25
        %p349 = scmp.lt.s32.totalorder %s348, 163
        %s350 = scalar_select %p349, %s348, 163
        %s351 = smul.addr %s350, 12
        %s352 = smul.addr %s351, 8
        %s353 = scalar_lea.vmem %s0, %s352
        %p354 = pneg %p46
        %p355 = pneg %p43
        %p356 = pneg %p67
        %p357 = pneg %p64
        %p358 = pneg %p88
        %p359 = pneg %p85
        %p360 = pneg %p109
        %p361 = pneg %p106
        %p362 = pneg %p130
        %p363 = pneg %p127
        %p364 = pneg %p151
        %p365 = pneg %p148
        %p366 = pneg %p172
        %p367 = pneg %p169
        %p368 = pneg %p193
        %p369 = pneg %p190
        %p370 = pneg %p214
        %p371 = pneg %p211
        %p372 = pneg %p235
        %p373 = pneg %p232
        %p374 = pneg %p256
        %p375 = pneg %p253
        %p376 = pneg %p282
        %p377 = pneg %p279
        %s378 = sand.u32 %s269, 1
        %s379 = scalar_lea.sflag [#allocation6], %s378
        %s380 = sand.u32 %s269, 1
        %s381 = scalar_lea.vmem [#allocation5], %s380
        %s382 = smul.u32 82, %s25
        %p383 = scmp.lt.s32.totalorder %s382, 163
        %s384 = scalar_select %p383, %s382, 163
        %s385 = smul.addr %s384, 12
        %s386 = smul.addr %s385, 8
        %s387 = scalar_lea.vmem %s0, %s386
        %s388 = smul.u32 82, %s25
        %389 = vst [vmem:[#allocation2] sm:$0xff] 0.0
        %390 = vst [vmem:[#allocation2 + $0x8] sm:$0xff] 0.0
        %391 = vst [vmem:[#allocation2 + $0x10] sm:$0x1f] 0.0
        %392 = vst [vmem:[#allocation2 + $0x18] sm:$0xff] 0.0
        %393 = vst [vmem:[#allocation2 + $0x20] sm:$0xff] 0.0
        %394 = vst [vmem:[#allocation2 + $0x28] sm:$0x1f] 0.0
        %395 = vst [vmem:[#allocation2 + $0x30] sm:$0xff] 0.0
        %396 = vst [vmem:[#allocation2 + $0x38] sm:$0xff] 0.0
        %397 = vst [vmem:[#allocation2 + $0x40] sm:$0x1f] 0.0
        %398 = vst [vmem:[#allocation2 + $0x48] sm:$0xff] 0.0
        %399 = vst [vmem:[#allocation2 + $0x50] sm:$0xff] 0.0
        %400 = vst [vmem:[#allocation2 + $0x58] sm:$0x1f] 0.0
        %401 = vst [vmem:[#allocation2 + $0x60] sm:$0xff] 0.0
        %402 = vst [vmem:[#allocation2 + $0x68] sm:$0xff] 0.0
        %403 = vst [vmem:[#allocation2 + $0x70] sm:$0x1f] 0.0
        %404 = vst [vmem:[#allocation2 + $0x78] sm:$0xff] 0.0
        %405 = vst [vmem:[#allocation2 + $0x80] sm:$0xff] 0.0
        %406 = vst [vmem:[#allocation2 + $0x88] sm:$0x1f] 0.0
        %407 = vst [vmem:[#allocation2 + $0x90] sm:$0xff] 0.0
        %408 = vst [vmem:[#allocation2 + $0x98] sm:$0xff] 0.0
        %409 = vst [vmem:[#allocation2 + $0xa0] sm:$0x1f] 0.0
        %410 = vst [vmem:[#allocation2 + $0xa8] sm:$0xff] 0.0
        %411 = vst [vmem:[#allocation2 + $0xb0] sm:$0xff] 0.0
        %412 = vst [vmem:[#allocation2 + $0xb8] sm:$0x1f] 0.0
        %413 = vst [vmem:[#allocation2 + $0xc0] sm:$0xff] 0.0
        %414 = vst [vmem:[#allocation2 + $0xc8] sm:$0xff] 0.0
        %415 = vst [vmem:[#allocation2 + $0xd0] sm:$0x1f] 0.0
        %416 = vst [vmem:[#allocation2 + $0xd8] sm:$0xff] 0.0
        %417 = vst [vmem:[#allocation2 + $0xe0] sm:$0xff] 0.0
        %418 = vst [vmem:[#allocation2 + $0xe8] sm:$0x1f] 0.0
        %419 = vst [vmem:[#allocation2 + $0xf0] sm:$0xff] 0.0
        %420 = vst [vmem:[#allocation2 + $0xf8] sm:$0xff] 0.0
        %421 = vst [vmem:[#allocation2 + $0x100] sm:$0x1f] 0.0
        %422 = vst [vmem:[#allocation2 + $0x108] sm:$0xff] 0.0
        %423 = vst [vmem:[#allocation2 + $0x110] sm:$0xff] 0.0
        %424 = vst [vmem:[#allocation2 + $0x118] sm:$0x1f] 0.0
        %425 = vst [vmem:[#allocation2 + $0x120] sm:$0xff] 0.0
        %426 = vst [vmem:[#allocation2 + $0x128] sm:$0xff] 0.0
        %427 = vst [vmem:[#allocation2 + $0x130] sm:$0x1f] 0.0
        %428 = vst [vmem:[#allocation2 + $0x138] sm:$0xff] 0.0
        %429 = vst [vmem:[#allocation2 + $0x140] sm:$0xff] 0.0
        %430 = vst [vmem:[#allocation2 + $0x148] sm:$0x1f] 0.0
        %431 = vst [vmem:[#allocation2 + $0x150] sm:$0xff] 0.0
        %432 = vst [vmem:[#allocation2 + $0x158] sm:$0xff] 0.0
        %433 = vst [vmem:[#allocation2 + $0x160] sm:$0x1f] 0.0
        %434 = vst [vmem:[#allocation2 + $0x168] sm:$0xff] 0.0
        %435 = vst [vmem:[#allocation2 + $0x170] sm:$0xff] 0.0
        %436 = vst [vmem:[#allocation2 + $0x178] sm:$0x1f] 0.0
        %437 = vst [vmem:[#allocation2 + $0x180] sm:$0xff] 0.0
        %438 = vst [vmem:[#allocation2 + $0x188] sm:$0xff] 0.0
        %439 = vst [vmem:[#allocation2 + $0x190] sm:$0x1f] 0.0
        %440 = vst [vmem:[#allocation2 + $0x198] sm:$0xff] 0.0
        %441 = vst [vmem:[#allocation2 + $0x1a0] sm:$0xff] 0.0
        %442 = vst [vmem:[#allocation2 + $0x1a8] sm:$0x1f] 0.0
        %443 = vst [vmem:[#allocation2 + $0x1b0] sm:$0xff] 0.0
        %444 = vst [vmem:[#allocation2 + $0x1b8] sm:$0xff] 0.0
        %445 = vst [vmem:[#allocation2 + $0x1c0] sm:$0x1f] 0.0
        %446 = vst [vmem:[#allocation2 + $0x1c8] sm:$0xff] 0.0
        %447 = vst [vmem:[#allocation2 + $0x1d0] sm:$0xff] 0.0
        %448 = vst [vmem:[#allocation2 + $0x1d8] sm:$0x1f] 0.0
        %449 = vst [vmem:[#allocation2 + $0x1e0] sm:$0xff] 0.0
        %450 = vst [vmem:[#allocation2 + $0x1e8] sm:$0xff] 0.0
        %451 = vst [vmem:[#allocation2 + $0x1f0] sm:$0x1f] 0.0
        %452 = vst [vmem:[#allocation2 + $0x1f8] sm:$0xff] 0.0
        %453 = vst [vmem:[#allocation2 + $0x200] sm:$0xff] 0.0
        %454 = vst [vmem:[#allocation2 + $0x208] sm:$0x1f] 0.0
        %455 = vst [vmem:[#allocation2 + $0x210] sm:$0xff] 0.0
        %456 = vst [vmem:[#allocation2 + $0x218] sm:$0xff] 0.0
        %457 = vst [vmem:[#allocation2 + $0x220] sm:$0x1f] 0.0
        %458 = vst [vmem:[#allocation2 + $0x228] sm:$0xff] 0.0
        %459 = vst [vmem:[#allocation2 + $0x230] sm:$0xff] 0.0
        %460 = vst [vmem:[#allocation2 + $0x238] sm:$0x1f] 0.0
        %461 = vst [vmem:[#allocation2 + $0x240] sm:$0xff] 0.0
        %462 = vst [vmem:[#allocation2 + $0x248] sm:$0xff] 0.0
        %463 = vst [vmem:[#allocation2 + $0x250] sm:$0x1f] 0.0
        %464 = vst [vmem:[#allocation2 + $0x258] sm:$0xff] 0.0
        %465 = vst [vmem:[#allocation2 + $0x260] sm:$0xff] 0.0
        %466 = vst [vmem:[#allocation2 + $0x268] sm:$0x1f] 0.0
        %467 = vst [vmem:[#allocation2 + $0x270] sm:$0xff] 0.0
        %468 = vst [vmem:[#allocation2 + $0x278] sm:$0xff] 0.0
        %469 = vst [vmem:[#allocation2 + $0x280] sm:$0x1f] 0.0
        %470 = vst [vmem:[#allocation2 + $0x288] sm:$0xff] 0.0
        %471 = vst [vmem:[#allocation2 + $0x290] sm:$0xff] 0.0
        %472 = vst [vmem:[#allocation2 + $0x298] sm:$0x1f] 0.0
        %473 = vst [vmem:[#allocation2 + $0x2a0] sm:$0xff] 0.0
        %474 = vst [vmem:[#allocation2 + $0x2a8] sm:$0xff] 0.0
        %475 = vst [vmem:[#allocation2 + $0x2b0] sm:$0x1f] 0.0
        %476 = vst [vmem:[#allocation2 + $0x2b8] sm:$0xff] 0.0
        %477 = vst [vmem:[#allocation2 + $0x2c0] sm:$0xff] 0.0
        %478 = vst [vmem:[#allocation2 + $0x2c8] sm:$0x1f] 0.0
        %479 = vst [vmem:[#allocation2 + $0x2d0] sm:$0xff] 0.0
        %480 = vst [vmem:[#allocation2 + $0x2d8] sm:$0xff] 0.0
        %481 = vst [vmem:[#allocation2 + $0x2e0] sm:$0x1f] 0.0
        %482 = vst [vmem:[#allocation2 + $0x2e8] sm:$0xff] 0.0
        %483 = vst [vmem:[#allocation2 + $0x2f0] sm:$0xff] 0.0
        %484 = vst [vmem:[#allocation2 + $0x2f8] sm:$0x1f] 0.0
        %485 = vst [vmem:[#allocation2 + $0x300] sm:$0xff] 0.0
        %486 = vst [vmem:[#allocation2 + $0x308] sm:$0xff] 0.0
        %487 = vst [vmem:[#allocation2 + $0x310] sm:$0x1f] 0.0
        %488 = vst [vmem:[#allocation2 + $0x318] sm:$0xff] 0.0
        %489 = vst [vmem:[#allocation2 + $0x320] sm:$0xff] 0.0
        %490 = vst [vmem:[#allocation2 + $0x328] sm:$0x1f] 0.0
        %491 = vst [vmem:[#allocation2 + $0x330] sm:$0xff] 0.0
        %492 = vst [vmem:[#allocation2 + $0x338] sm:$0xff] 0.0
        %493 = vst [vmem:[#allocation2 + $0x340] sm:$0x1f] 0.0
        %494 = vst [vmem:[#allocation2 + $0x348] sm:$0xff] 0.0
        %495 = vst [vmem:[#allocation2 + $0x350] sm:$0xff] 0.0
        %496 = vst [vmem:[#allocation2 + $0x358] sm:$0x1f] 0.0
        %497 = vst [vmem:[#allocation2 + $0x360] sm:$0xff] 0.0
        %498 = vst [vmem:[#allocation2 + $0x368] sm:$0xff] 0.0
        %499 = vst [vmem:[#allocation2 + $0x370] sm:$0x1f] 0.0
        %500 = vst [vmem:[#allocation2 + $0x378] sm:$0xff] 0.0
        %501 = vst [vmem:[#allocation2 + $0x380] sm:$0xff] 0.0
        %502 = vst [vmem:[#allocation2 + $0x388] sm:$0x1f] 0.0
        %503 = vst [vmem:[#allocation2 + $0x390] sm:$0xff] 0.0
        %504 = vst [vmem:[#allocation2 + $0x398] sm:$0xff] 0.0
        %505 = vst [vmem:[#allocation2 + $0x3a0] sm:$0x1f] 0.0
        %506 = vst [vmem:[#allocation2 + $0x3a8] sm:$0xff] 0.0
        %507 = vst [vmem:[#allocation2 + $0x3b0] sm:$0xff] 0.0
        %508 = vst [vmem:[#allocation2 + $0x3b8] sm:$0x1f] 0.0
        %509 = vst [vmem:[#allocation2 + $0x3c0] sm:$0xff] 0.0
        %510 = vst [vmem:[#allocation2 + $0x3c8] sm:$0xff] 0.0
        %511 = vst [vmem:[#allocation2 + $0x3d0] sm:$0x1f] 0.0
        %512 = vst [vmem:[#allocation2 + $0x3d8] sm:$0xff] 0.0
        %513 = vst [vmem:[#allocation2 + $0x3e0] sm:$0xff] 0.0
        %514 = vst [vmem:[#allocation2 + $0x3e8] sm:$0x1f] 0.0
        %515 = vst [vmem:[#allocation2 + $0x3f0] sm:$0xff] 0.0
        %516 = vst [vmem:[#allocation2 + $0x3f8] sm:$0xff] 0.0
        %517 = vst [vmem:[#allocation2 + $0x400] sm:$0x1f] 0.0
        %518 = vst [vmem:[#allocation2 + $0x408] sm:$0xff] 0.0
        %519 = vst [vmem:[#allocation2 + $0x410] sm:$0xff] 0.0
        %520 = vst [vmem:[#allocation2 + $0x418] sm:$0x1f] 0.0
        %521 = vst [vmem:[#allocation2 + $0x420] sm:$0xff] 0.0
        %522 = vst [vmem:[#allocation2 + $0x428] sm:$0xff] 0.0
        %523 = vst [vmem:[#allocation2 + $0x430] sm:$0x1f] 0.0
        %524 = vst [vmem:[#allocation2 + $0x438] sm:$0xff] 0.0
        %525 = vst [vmem:[#allocation2 + $0x440] sm:$0xff] 0.0
        %526 = vst [vmem:[#allocation2 + $0x448] sm:$0x1f] 0.0
        %527 = vst [vmem:[#allocation2 + $0x450] sm:$0xff] 0.0
        %528 = vst [vmem:[#allocation2 + $0x458] sm:$0xff] 0.0
        %529 = vst [vmem:[#allocation2 + $0x460] sm:$0x1f] 0.0
        %530 = vst [vmem:[#allocation2 + $0x468] sm:$0xff] 0.0
        %531 = vst [vmem:[#allocation2 + $0x470] sm:$0xff] 0.0
        %532 = vst [vmem:[#allocation2 + $0x478] sm:$0x1f] 0.0
        %533 = vst [vmem:[#allocation2 + $0x480] sm:$0xff] 0.0
        %534 = vst [vmem:[#allocation2 + $0x488] sm:$0xff] 0.0
        %535 = vst [vmem:[#allocation2 + $0x490] sm:$0x1f] 0.0
        %536 = vst [vmem:[#allocation2 + $0x498] sm:$0xff] 0.0
        %537 = vst [vmem:[#allocation2 + $0x4a0] sm:$0xff] 0.0
        %538 = vst [vmem:[#allocation2 + $0x4a8] sm:$0x1f] 0.0
        %539 = vst [vmem:[#allocation2 + $0x4b0] sm:$0xff] 0.0
        %540 = vst [vmem:[#allocation2 + $0x4b8] sm:$0xff] 0.0
        %541 = vst [vmem:[#allocation2 + $0x4c0] sm:$0x1f] 0.0
        %542 = vst [vmem:[#allocation2 + $0x4c8] sm:$0xff] 0.0
        %543 = vst [vmem:[#allocation2 + $0x4d0] sm:$0xff] 0.0
        %544 = vst [vmem:[#allocation2 + $0x4d8] sm:$0x1f] 0.0
        %545 = vst [vmem:[#allocation2 + $0x4e0] sm:$0xff] 0.0
        %546 = vst [vmem:[#allocation2 + $0x4e8] sm:$0xff] 0.0
        %547 = vst [vmem:[#allocation2 + $0x4f0] sm:$0x1f] 0.0
        %548 = vst [vmem:[#allocation2 + $0x4f8] sm:$0xff] 0.0
        %549 = vst [vmem:[#allocation2 + $0x500] sm:$0xff] 0.0
        %550 = vst [vmem:[#allocation2 + $0x508] sm:$0x1f] 0.0
        %551 = vst [vmem:[#allocation2 + $0x510] sm:$0xff] 0.0
        %552 = vst [vmem:[#allocation2 + $0x518] sm:$0xff] 0.0
        %553 = vst [vmem:[#allocation2 + $0x520] sm:$0x1f] 0.0
        %554 = vst [vmem:[#allocation2 + $0x528] sm:$0xff] 0.0
        %555 = vst [vmem:[#allocation2 + $0x530] sm:$0xff] 0.0
        %556 = vst [vmem:[#allocation2 + $0x538] sm:$0x1f] 0.0
        %557 = vst [vmem:[#allocation2 + $0x540] sm:$0xff] 0.0
        %558 = vst [vmem:[#allocation2 + $0x548] sm:$0xff] 0.0
        %559 = vst [vmem:[#allocation2 + $0x550] sm:$0x1f] 0.0
        %560 = vst [vmem:[#allocation2 + $0x558] sm:$0xff] 0.0
        %561 = vst [vmem:[#allocation2 + $0x560] sm:$0xff] 0.0
        %562 = vst [vmem:[#allocation2 + $0x568] sm:$0x1f] 0.0
        %563 = vst [vmem:[#allocation2 + $0x570] sm:$0xff] 0.0
        %564 = vst [vmem:[#allocation2 + $0x578] sm:$0xff] 0.0
        %565 = vst [vmem:[#allocation2 + $0x580] sm:$0x1f] 0.0
        %566 = vst [vmem:[#allocation2 + $0x588] sm:$0xff] 0.0
        %567 = vst [vmem:[#allocation2 + $0x590] sm:$0xff] 0.0
        %568 = vst [vmem:[#allocation2 + $0x598] sm:$0x1f] 0.0
        %569 = vst [vmem:[#allocation2 + $0x5a0] sm:$0xff] 0.0
        %570 = vst [vmem:[#allocation2 + $0x5a8] sm:$0xff] 0.0
        %571 = vst [vmem:[#allocation2 + $0x5b0] sm:$0x1f] 0.0
        %572 = vst [vmem:[#allocation2 + $0x5b8] sm:$0xff] 0.0
        %573 = vst [vmem:[#allocation2 + $0x5c0] sm:$0xff] 0.0
        %574 = vst [vmem:[#allocation2 + $0x5c8] sm:$0x1f] 0.0
        %575 = vst [vmem:[#allocation2 + $0x5d0] sm:$0xff] 0.0
        %576 = vst [vmem:[#allocation2 + $0x5d8] sm:$0xff] 0.0
        %577 = vst [vmem:[#allocation2 + $0x5e0] sm:$0x1f] 0.0
        %578 = vst [vmem:[#allocation2 + $0x5e8] sm:$0xff] 0.0
        %579 = vst [vmem:[#allocation2 + $0x5f0] sm:$0xff] 0.0
        %580 = vst [vmem:[#allocation2 + $0x5f8] sm:$0x1f] 0.0
        %581 = vst [vmem:[#allocation2 + $0x600] sm:$0xff] 0.0
        %582 = vst [vmem:[#allocation2 + $0x608] sm:$0xff] 0.0
        %583 = vst [vmem:[#allocation2 + $0x610] sm:$0x1f] 0.0
        %584 = vst [vmem:[#allocation2 + $0x618] sm:$0xff] 0.0
        %585 = vst [vmem:[#allocation2 + $0x620] sm:$0xff] 0.0
        %586 = vst [vmem:[#allocation2 + $0x628] sm:$0x1f] 0.0
        %587 = vst [vmem:[#allocation2 + $0x630] sm:$0xff] 0.0
        %588 = vst [vmem:[#allocation2 + $0x638] sm:$0xff] 0.0
        %589 = vst [vmem:[#allocation2 + $0x640] sm:$0x1f] 0.0
        %590 = vst [vmem:[#allocation2 + $0x648] sm:$0xff] 0.0
        %591 = vst [vmem:[#allocation2 + $0x650] sm:$0xff] 0.0
        %592 = vst [vmem:[#allocation2 + $0x658] sm:$0x1f] 0.0
        %593 = vst [vmem:[#allocation2 + $0x660] sm:$0xff] 0.0
        %594 = vst [vmem:[#allocation2 + $0x668] sm:$0xff] 0.0
        %595 = vst [vmem:[#allocation2 + $0x670] sm:$0x1f] 0.0
        %596 = vst [vmem:[#allocation2 + $0x678] sm:$0xff] 0.0
        %597 = vst [vmem:[#allocation2 + $0x680] sm:$0xff] 0.0
        %598 = vst [vmem:[#allocation2 + $0x688] sm:$0x1f] 0.0
        %599 = vst [vmem:[#allocation2 + $0x690] sm:$0xff] 0.0
        %600 = vst [vmem:[#allocation2 + $0x698] sm:$0xff] 0.0
        %601 = vst [vmem:[#allocation2 + $0x6a0] sm:$0x1f] 0.0
        %602 = vst [vmem:[#allocation2 + $0x6a8] sm:$0xff] 0.0
        %603 = vst [vmem:[#allocation2 + $0x6b0] sm:$0xff] 0.0
        %604 = vst [vmem:[#allocation2 + $0x6b8] sm:$0x1f] 0.0
        %605 = vst [vmem:[#allocation2 + $0x6c0] sm:$0xff] 0.0
        %606 = vst [vmem:[#allocation2 + $0x6c8] sm:$0xff] 0.0
        %607 = vst [vmem:[#allocation2 + $0x6d0] sm:$0x1f] 0.0
        %608 = vst [vmem:[#allocation2 + $0x6d8] sm:$0xff] 0.0
        %609 = vst [vmem:[#allocation2 + $0x6e0] sm:$0xff] 0.0
        %610 = vst [vmem:[#allocation2 + $0x6e8] sm:$0x1f] 0.0
        %611 = vst [vmem:[#allocation2 + $0x6f0] sm:$0xff] 0.0
        %612 = vst [vmem:[#allocation2 + $0x6f8] sm:$0xff] 0.0
        %613 = vst [vmem:[#allocation2 + $0x700] sm:$0x1f] 0.0
        %614 = vst [vmem:[#allocation2 + $0x708] sm:$0xff] 0.0
        %615 = vst [vmem:[#allocation2 + $0x710] sm:$0xff] 0.0
        %616 = vst [vmem:[#allocation2 + $0x718] sm:$0x1f] 0.0
        %617 = vst [vmem:[#allocation2 + $0x720] sm:$0xff] 0.0
        %618 = vst [vmem:[#allocation2 + $0x728] sm:$0xff] 0.0
        %619 = vst [vmem:[#allocation2 + $0x730] sm:$0x1f] 0.0
        %620 = vst [vmem:[#allocation2 + $0x738] sm:$0xff] 0.0
        %621 = vst [vmem:[#allocation2 + $0x740] sm:$0xff] 0.0
        %622 = vst [vmem:[#allocation2 + $0x748] sm:$0x1f] 0.0
        %623 = vst [vmem:[#allocation2 + $0x750] sm:$0xff] 0.0
        %624 = vst [vmem:[#allocation2 + $0x758] sm:$0xff] 0.0
        %625 = vst [vmem:[#allocation2 + $0x760] sm:$0x1f] 0.0
        %626 = vst [vmem:[#allocation2 + $0x768] sm:$0xff] 0.0
        %627 = vst [vmem:[#allocation2 + $0x770] sm:$0xff] 0.0
        %628 = vst [vmem:[#allocation2 + $0x778] sm:$0x1f] 0.0
        %629 = vst [vmem:[#allocation2 + $0x780] sm:$0xff] 0.0
        %630 = vst [vmem:[#allocation2 + $0x788] sm:$0xff] 0.0
        %631 = vst [vmem:[#allocation2 + $0x790] sm:$0x1f] 0.0
        %632 = vst [vmem:[#allocation2 + $0x798] sm:$0xff] 0.0
        %633 = vst [vmem:[#allocation2 + $0x7a0] sm:$0xff] 0.0
        %634 = vst [vmem:[#allocation2 + $0x7a8] sm:$0x1f] 0.0
        %635 = vst [vmem:[#allocation2 + $0x7b0] sm:$0xff] 0.0
        %636 = vst [vmem:[#allocation2 + $0x7b8] sm:$0xff] 0.0
        %637 = vst [vmem:[#allocation2 + $0x7c0] sm:$0x1f] 0.0
        %638 = vst [vmem:[#allocation2 + $0x7c8] sm:$0xff] 0.0
        %639 = vst [vmem:[#allocation2 + $0x7d0] sm:$0xff] 0.0
        %640 = vst [vmem:[#allocation2 + $0x7d8] sm:$0x1f] 0.0
        %v641 = vlaneseq
        %v642 = vshrl.u32 %v641, 7
        %v643 = vadd.s32 %v642, 8
        %v644 = vadd.s32 %v642, 16
        %v645 = vlaneseq
        %v646 = vand.u32 %v645, 127
        %v647 = vmul.u32 %v642, 2
        %v648 = vmul.u32 %v643, 2
        %v649 = vmul.u32 %v644, 2
        %vm650 = vcmp.eq.s32.totalorder %v646, %v647
        %vm651 = vcmp.eq.s32.totalorder %v646, %v648
        %vm652 = vcmp.eq.s32.totalorder %v646, %v649
        %v653 = vsel %vm650, 1, 0
        %v654 = vsel %vm651, 1, 0
        %v655 = vsel %vm652, 1, 0
        %v656 = vcvt.s32.f32 %v653
        %v657 = vcvt.s32.f32 %v654
        %v658 = vcvt.s32.f32 %v655
        %v659 = vadd.s32 %v647, 1
        %v660 = vadd.s32 %v648, 1
        %v661 = vadd.s32 %v649, 1
        %vm662 = vcmp.eq.s32.totalorder %v646, %v659
        %vm663 = vcmp.eq.s32.totalorder %v646, %v660
        %vm664 = vcmp.eq.s32.totalorder %v646, %v661
        %v665 = vsel %vm662, 1, 0
        %v666 = vsel %vm663, 1, 0
        %v667 = vsel %vm664, 1, 0
        %v668 = vcvt.s32.f32 %v665
        %v669 = vcvt.s32.f32 %v666
        %v670 = vcvt.s32.f32 %v667
        %v671 = vld [vmem:[%s2] sm:$0x1]
        loop: start=0, step=1, limit=40
        $region65: #{dp2_forward.1} parent=63 // loop_pre_header
          _
        $region66: #{dp2_forward.1} parent=63 // loop_header
          %s673 = sphi 0, %s677
          %p674 = scmp.ge.s32.totalorder %s673, 40
        $region67: #{dp2_forward.1} parent=63 // loop_header_branch
          %676 = sbr.rel (%p674) target = $region71
        $region68: #{dp2_forward.1} parent=63 // loop_body
          %s678 = smul.u32 %s673, 2
          %s679 = smul.u32 %s678, 96
          %s680 = scalar_lea.vmem %s387, %s679
          %v681 = vld [vmem:[%s680] sm:$0xff]
          %v682 = vld [vmem:[%s680 + $0x8] sm:$0xff]
          %v683 = vld [vmem:[%s680 + $0x10] sm:$0xff]
          %v684 = vld [vmem:[%s680 + $0x18] sm:$0xff]
          %v685 = vld [vmem:[%s680 + $0x20] sm:$0xff]
          %v686 = vld [vmem:[%s1] sm:$0xf]
          %s687 = sadd.s32 48, %s679
          %s688 = scalar_lea.vmem %s387, %s687
          %v689 = vld [vmem:[%s688] sm:$0xff]
          %v690 = vld [vmem:[%s688 + $0x8] sm:$0xff]
          %v691 = vld [vmem:[%s688 + $0x10] sm:$0xff]
          %v692 = vld [vmem:[%s688 + $0x18] sm:$0xff]
          %v693 = vld [vmem:[%s688 + $0x20] sm:$0xff]
          %s694 = scalar_lea.vmem %s1, 4
          %v695 = vld [vmem:[%s694] sm:$0xf]
          %vm696 = vcmask 31744
          %v698 = vsel %vm696, %v689, 0
          %v701 = vsel %vm696, %v690, 0
          %v704 = vsel %vm696, %v691, 0
          %v707 = vsel %vm696, %v692, 0
          %v710 = vsel %vm696, %v693, 0
          %vm712 = vcmask 1043456
          %v714 = vsel %vm712, %v695, 0
          %716 = vmatpush.msra.mxu0 0.0
          %717 = vmatpush.msra.mxu0 0.0
          %718 = vmatpush.msra.mxu0 0.0
          %719 = vmatpush.msra.mxu0 0.0
          %720 = vmatpush.msra.mxu0 0.0
          %721 = vmatpush.msra.mxu0 0.0
          %722 = vmatpush.msra.mxu0 0.0
          %723 = vmatpush.msra.mxu0 0.0
          %724 = vmatpush.msra.mxu0 0.0
          %725 = vmatpush.msra.mxu0 0.0
          %726 = vmatpush.msra.mxu0 0.0
          %727 = vmatpush.msra.mxu0 0.0
          %728 = vmatpush.msra.mxu0 0.0
          %729 = vmatpush.msra.mxu0 0.0
          %730 = vmatpush.msra.mxu0 0.0
          %731 = vmatpush.msra.mxu0 %v714
          %732 = vmatmul.f32.gmra.mxu0 %v698
          %v733 = vpop.f32.mrf.mxu0
          %v734 = vadd.f32 0.0, %v733
          %735 = vmatmul.f32.gmra.mxu0 %v701
          %v736 = vpop.f32.mrf.mxu0
          %v737 = vadd.f32 0.0, %v736
          %738 = vmatmul.f32.gmra.mxu0 %v704
          %v739 = vpop.f32.mrf.mxu0
          %v740 = vadd.f32 0.0, %v739
          %741 = vmatmul.f32.gmra.mxu0 %v707
          %v742 = vpop.f32.mrf.mxu0
          %v743 = vadd.f32 0.0, %v742
          %744 = vmatmul.f32.gmra.mxu0 %v710
          %v745 = vpop.f32.mrf.mxu0
          %v746 = vadd.f32 0.0, %v745
          %747 = vdwg.mxu0
          %v749 = vsel %vm696, %v681, 0
          %v752 = vsel %vm696, %v682, 0
          %v755 = vsel %vm696, %v683, 0
          %v758 = vsel %vm696, %v684, 0
          %v761 = vsel %vm696, %v685, 0
          %v764 = vsel %vm712, %v686, 0
          %766 = vmatpush.msra.mxu0 0.0
          %767 = vmatpush.msra.mxu0 0.0
          %768 = vmatpush.msra.mxu0 0.0
          %769 = vmatpush.msra.mxu0 0.0
          %770 = vmatpush.msra.mxu0 0.0
          %771 = vmatpush.msra.mxu0 0.0
          %772 = vmatpush.msra.mxu0 0.0
          %773 = vmatpush.msra.mxu0 0.0
          %774 = vmatpush.msra.mxu0 0.0
          %775 = vmatpush.msra.mxu0 0.0
          %776 = vmatpush.msra.mxu0 0.0
          %777 = vmatpush.msra.mxu0 0.0
          %778 = vmatpush.msra.mxu0 0.0
          %779 = vmatpush.msra.mxu0 0.0
          %780 = vmatpush.msra.mxu0 0.0
          %781 = vmatpush.msra.mxu0 %v764
          %782 = vmatmul.f32.gmra.mxu0 %v749
          %v783 = vpop.f32.mrf.mxu0
          %v784 = vadd.f32 %v734, %v783
          %785 = vmatmul.f32.gmra.mxu0 %v752
          %v786 = vpop.f32.mrf.mxu0
          %v787 = vadd.f32 %v737, %v786
          %788 = vmatmul.f32.gmra.mxu0 %v755
          %v789 = vpop.f32.mrf.mxu0
          %v790 = vadd.f32 %v740, %v789
          %791 = vmatmul.f32.gmra.mxu0 %v758
          %v792 = vpop.f32.mrf.mxu0
          %v793 = vadd.f32 %v743, %v792
          %794 = vmatmul.f32.gmra.mxu0 %v761
          %v795 = vpop.f32.mrf.mxu0
          %v796 = vadd.f32 %v746, %v795
          %797 = vdwg.mxu0
          %v798 = vld [vmem:[%s680 + $0x1] sm:$0xff]
          %v799 = vld [vmem:[%s680 + $0x9] sm:$0xff]
          %v800 = vld [vmem:[%s680 + $0x11] sm:$0xff]
          %v801 = vld [vmem:[%s680 + $0x19] sm:$0xff]
          %v802 = vld [vmem:[%s680 + $0x21] sm:$0xff]
          %s803 = scalar_lea.vmem %s1, 8
          %v804 = vld [vmem:[%s803] sm:$0xf]
          %v806 = vsel %vm696, %v798, 0
          %v809 = vsel %vm696, %v799, 0
          %v812 = vsel %vm696, %v800, 0
          %v815 = vsel %vm696, %v801, 0
          %v818 = vsel %vm696, %v802, 0
          %v821 = vsel %vm712, %v804, 0
          %823 = vmatpush.msra.mxu0 0.0
          %824 = vmatpush.msra.mxu0 0.0
          %825 = vmatpush.msra.mxu0 0.0
          %826 = vmatpush.msra.mxu0 0.0
          %827 = vmatpush.msra.mxu0 0.0
          %828 = vmatpush.msra.mxu0 0.0
          %829 = vmatpush.msra.mxu0 0.0
          %830 = vmatpush.msra.mxu0 0.0
          %831 = vmatpush.msra.mxu0 0.0
          %832 = vmatpush.msra.mxu0 0.0
          %833 = vmatpush.msra.mxu0 0.0
          %834 = vmatpush.msra.mxu0 0.0
          %835 = vmatpush.msra.mxu0 0.0
          %836 = vmatpush.msra.mxu0 0.0
          %837 = vmatpush.msra.mxu0 0.0
          %838 = vmatpush.msra.mxu0 %v821
          %839 = vmatmul.f32.gmra.mxu0 %v806
          %v840 = vpop.f32.mrf.mxu0
          %v841 = vadd.f32 0.0, %v840
          %842 = vmatmul.f32.gmra.mxu0 %v809
          %v843 = vpop.f32.mrf.mxu0
          %v844 = vadd.f32 0.0, %v843
          %845 = vmatmul.f32.gmra.mxu0 %v812
          %v846 = vpop.f32.mrf.mxu0
          %v847 = vadd.f32 0.0, %v846
          %848 = vmatmul.f32.gmra.mxu0 %v815
          %v849 = vpop.f32.mrf.mxu0
          %v850 = vadd.f32 0.0, %v849
          %851 = vmatmul.f32.gmra.mxu0 %v818
          %v852 = vpop.f32.mrf.mxu0
          %v853 = vadd.f32 0.0, %v852
          %854 = vdwg.mxu0
          %v855 = vadd.f32 %v784, %v841
          %v856 = vadd.f32 %v787, %v844
          %v857 = vadd.f32 %v790, %v847
          %v858 = vadd.f32 %v793, %v850
          %v859 = vadd.f32 %v796, %v853
          %v860 = vld [vmem:[%s688 + $0x1] sm:$0xff]
          %v861 = vld [vmem:[%s688 + $0x9] sm:$0xff]
          %v862 = vld [vmem:[%s688 + $0x11] sm:$0xff]
          %v863 = vld [vmem:[%s688 + $0x19] sm:$0xff]
          %v864 = vld [vmem:[%s688 + $0x21] sm:$0xff]
          %s865 = scalar_lea.vmem %s1, 12
          %v866 = vld [vmem:[%s865] sm:$0xf]
          %v868 = vsel %vm696, %v860, 0
          %v871 = vsel %vm696, %v861, 0
          %v874 = vsel %vm696, %v862, 0
          %v877 = vsel %vm696, %v863, 0
          %v880 = vsel %vm696, %v864, 0
          %v883 = vsel %vm712, %v866, 0
          %885 = vmatpush.msra.mxu0 0.0
          %886 = vmatpush.msra.mxu0 0.0
          %887 = vmatpush.msra.mxu0 0.0
          %888 = vmatpush.msra.mxu0 0.0
          %889 = vmatpush.msra.mxu0 0.0
          %890 = vmatpush.msra.mxu0 0.0
          %891 = vmatpush.msra.mxu0 0.0
          %892 = vmatpush.msra.mxu0 0.0
          %893 = vmatpush.msra.mxu0 0.0
          %894 = vmatpush.msra.mxu0 0.0
          %895 = vmatpush.msra.mxu0 0.0
          %896 = vmatpush.msra.mxu0 0.0
          %897 = vmatpush.msra.mxu0 0.0
          %898 = vmatpush.msra.mxu0 0.0
          %899 = vmatpush.msra.mxu0 0.0
          %900 = vmatpush.msra.mxu0 %v883
          %901 = vmatmul.f32.gmra.mxu0 %v868
          %v902 = vpop.f32.mrf.mxu0
          %v903 = vadd.f32 0.0, %v902
          %904 = vmatmul.f32.gmra.mxu0 %v871
          %v905 = vpop.f32.mrf.mxu0
          %v906 = vadd.f32 0.0, %v905
          %907 = vmatmul.f32.gmra.mxu0 %v874
          %v908 = vpop.f32.mrf.mxu0
          %v909 = vadd.f32 0.0, %v908
          %910 = vmatmul.f32.gmra.mxu0 %v877
          %v911 = vpop.f32.mrf.mxu0
          %v912 = vadd.f32 0.0, %v911
          %913 = vmatmul.f32.gmra.mxu0 %v880
          %v914 = vpop.f32.mrf.mxu0
          %v915 = vadd.f32 0.0, %v914
          %916 = vdwg.mxu0
          %v917 = vadd.f32 %v855, %v903
          %v918 = vadd.f32 %v856, %v906
          %v919 = vadd.f32 %v857, %v909
          %v920 = vadd.f32 %v858, %v912
          %v921 = vadd.f32 %v859, %v915
          %s922 = sadd.s32 %s678, 1
          %s923 = smul.u32 %s922, 96
          %s924 = scalar_lea.vmem %s387, %s923
          %v925 = vld [vmem:[%s924] sm:$0xff]
          %v926 = vld [vmem:[%s924 + $0x8] sm:$0xff]
          %v927 = vld [vmem:[%s924 + $0x10] sm:$0xff]
          %v928 = vld [vmem:[%s924 + $0x18] sm:$0xff]
          %v929 = vld [vmem:[%s924 + $0x20] sm:$0xff]
          %s930 = scalar_lea.vmem %s1, 16
          %v931 = vld [vmem:[%s930] sm:$0xf]
          %v933 = vsel %vm696, %v925, 0
          %v936 = vsel %vm696, %v926, 0
          %v939 = vsel %vm696, %v927, 0
          %v942 = vsel %vm696, %v928, 0
          %v945 = vsel %vm696, %v929, 0
          %v948 = vsel %vm712, %v931, 0
          %950 = vmatpush.msra.mxu0 0.0
          %951 = vmatpush.msra.mxu0 0.0
          %952 = vmatpush.msra.mxu0 0.0
          %953 = vmatpush.msra.mxu0 0.0
          %954 = vmatpush.msra.mxu0 0.0
          %955 = vmatpush.msra.mxu0 0.0
          %956 = vmatpush.msra.mxu0 0.0
          %957 = vmatpush.msra.mxu0 0.0
          %958 = vmatpush.msra.mxu0 0.0
          %959 = vmatpush.msra.mxu0 0.0
          %960 = vmatpush.msra.mxu0 0.0
          %961 = vmatpush.msra.mxu0 0.0
          %962 = vmatpush.msra.mxu0 0.0
          %963 = vmatpush.msra.mxu0 0.0
          %964 = vmatpush.msra.mxu0 0.0
          %965 = vmatpush.msra.mxu0 %v948
          %966 = vmatmul.f32.gmra.mxu0 %v933
          %v967 = vpop.f32.mrf.mxu0
          %v968 = vadd.f32 0.0, %v967
          %969 = vmatmul.f32.gmra.mxu0 %v936
          %v970 = vpop.f32.mrf.mxu0
          %v971 = vadd.f32 0.0, %v970
          %972 = vmatmul.f32.gmra.mxu0 %v939
          %v973 = vpop.f32.mrf.mxu0
          %v974 = vadd.f32 0.0, %v973
          %975 = vmatmul.f32.gmra.mxu0 %v942
          %v976 = vpop.f32.mrf.mxu0
          %v977 = vadd.f32 0.0, %v976
          %978 = vmatmul.f32.gmra.mxu0 %v945
          %v979 = vpop.f32.mrf.mxu0
          %v980 = vadd.f32 0.0, %v979
          %981 = vdwg.mxu0
          %v982 = vadd.f32 %v917, %v968
          %v983 = vadd.f32 %v918, %v971
          %v984 = vadd.f32 %v919, %v974
          %v985 = vadd.f32 %v920, %v977
          %v986 = vadd.f32 %v921, %v980
          %s987 = sadd.s32 48, %s923
          %s988 = scalar_lea.vmem %s387, %s987
          %v989 = vld [vmem:[%s988] sm:$0xff]
          %v990 = vld [vmem:[%s988 + $0x8] sm:$0xff]
          %v991 = vld [vmem:[%s988 + $0x10] sm:$0xff]
          %v992 = vld [vmem:[%s988 + $0x18] sm:$0xff]
          %v993 = vld [vmem:[%s988 + $0x20] sm:$0xff]
          %s994 = scalar_lea.vmem %s1, 20
          %v995 = vld [vmem:[%s994] sm:$0xf]
          %v997 = vsel %vm696, %v989, 0
          %v1000 = vsel %vm696, %v990, 0
          %v1003 = vsel %vm696, %v991, 0
          %v1006 = vsel %vm696, %v992, 0
          %v1009 = vsel %vm696, %v993, 0
          %v1012 = vsel %vm712, %v995, 0
          %1014 = vmatpush.msra.mxu0 0.0
          %1015 = vmatpush.msra.mxu0 0.0
          %1016 = vmatpush.msra.mxu0 0.0
          %1017 = vmatpush.msra.mxu0 0.0
          %1018 = vmatpush.msra.mxu0 0.0
          %1019 = vmatpush.msra.mxu0 0.0
          %1020 = vmatpush.msra.mxu0 0.0
          %1021 = vmatpush.msra.mxu0 0.0
          %1022 = vmatpush.msra.mxu0 0.0
          %1023 = vmatpush.msra.mxu0 0.0
          %1024 = vmatpush.msra.mxu0 0.0
          %1025 = vmatpush.msra.mxu0 0.0
          %1026 = vmatpush.msra.mxu0 0.0
          %1027 = vmatpush.msra.mxu0 0.0
          %1028 = vmatpush.msra.mxu0 0.0
          %1029 = vmatpush.msra.mxu0 %v1012
          %1030 = vmatmul.f32.gmra.mxu0 %v997
          %v1031 = vpop.f32.mrf.mxu0
          %v1032 = vadd.f32 0.0, %v1031
          %1033 = vmatmul.f32.gmra.mxu0 %v1000
          %v1034 = vpop.f32.mrf.mxu0
          %v1035 = vadd.f32 0.0, %v1034
          %1036 = vmatmul.f32.gmra.mxu0 %v1003
          %v1037 = vpop.f32.mrf.mxu0
          %v1038 = vadd.f32 0.0, %v1037
          %1039 = vmatmul.f32.gmra.mxu0 %v1006
          %v1040 = vpop.f32.mrf.mxu0
          %v1041 = vadd.f32 0.0, %v1040
          %1042 = vmatmul.f32.gmra.mxu0 %v1009
          %v1043 = vpop.f32.mrf.mxu0
          %v1044 = vadd.f32 0.0, %v1043
          %1045 = vdwg.mxu0
          %v1046 = vadd.f32 %v982, %v1032
          %v1047 = vadd.f32 %v983, %v1035
          %v1048 = vadd.f32 %v984, %v1038
          %v1049 = vadd.f32 %v985, %v1041
          %v1050 = vadd.f32 %v986, %v1044
          %v1051 = vld [vmem:[%s924 + $0x1] sm:$0xff]
          %v1052 = vld [vmem:[%s924 + $0x9] sm:$0xff]
          %v1053 = vld [vmem:[%s924 + $0x11] sm:$0xff]
          %v1054 = vld [vmem:[%s924 + $0x19] sm:$0xff]
          %v1055 = vld [vmem:[%s924 + $0x21] sm:$0xff]
          %s1056 = scalar_lea.vmem %s1, 24
          %v1057 = vld [vmem:[%s1056] sm:$0xf]
          %v1059 = vsel %vm696, %v1051, 0
          %v1062 = vsel %vm696, %v1052, 0
          %v1065 = vsel %vm696, %v1053, 0
          %v1068 = vsel %vm696, %v1054, 0
          %v1071 = vsel %vm696, %v1055, 0
          %v1074 = vsel %vm712, %v1057, 0
          %1076 = vmatpush.msra.mxu0 0.0
          %1077 = vmatpush.msra.mxu0 0.0
          %1078 = vmatpush.msra.mxu0 0.0
          %1079 = vmatpush.msra.mxu0 0.0
          %1080 = vmatpush.msra.mxu0 0.0
          %1081 = vmatpush.msra.mxu0 0.0
          %1082 = vmatpush.msra.mxu0 0.0
          %1083 = vmatpush.msra.mxu0 0.0
          %1084 = vmatpush.msra.mxu0 0.0
          %1085 = vmatpush.msra.mxu0 0.0
          %1086 = vmatpush.msra.mxu0 0.0
          %1087 = vmatpush.msra.mxu0 0.0
          %1088 = vmatpush.msra.mxu0 0.0
          %1089 = vmatpush.msra.mxu0 0.0
          %1090 = vmatpush.msra.mxu0 0.0
          %1091 = vmatpush.msra.mxu0 %v1074
          %1092 = vmatmul.f32.gmra.mxu0 %v1059
          %v1093 = vpop.f32.mrf.mxu0
          %v1094 = vadd.f32 0.0, %v1093
          %1095 = vmatmul.f32.gmra.mxu0 %v1062
          %v1096 = vpop.f32.mrf.mxu0
          %v1097 = vadd.f32 0.0, %v1096
          %1098 = vmatmul.f32.gmra.mxu0 %v1065
          %v1099 = vpop.f32.mrf.mxu0
          %v1100 = vadd.f32 0.0, %v1099
          %1101 = vmatmul.f32.gmra.mxu0 %v1068
          %v1102 = vpop.f32.mrf.mxu0
          %v1103 = vadd.f32 0.0, %v1102
          %1104 = vmatmul.f32.gmra.mxu0 %v1071
          %v1105 = vpop.f32.mrf.mxu0
          %v1106 = vadd.f32 0.0, %v1105
          %1107 = vdwg.mxu0
          %v1108 = vadd.f32 %v1046, %v1094
          %v1109 = vadd.f32 %v1047, %v1097
          %v1110 = vadd.f32 %v1048, %v1100
          %v1111 = vadd.f32 %v1049, %v1103
          %v1112 = vadd.f32 %v1050, %v1106
          %v1113 = vld [vmem:[%s988 + $0x1] sm:$0xff]
          %v1114 = vld [vmem:[%s988 + $0x9] sm:$0xff]
          %v1115 = vld [vmem:[%s988 + $0x11] sm:$0xff]
          %v1116 = vld [vmem:[%s988 + $0x19] sm:$0xff]
          %v1117 = vld [vmem:[%s988 + $0x21] sm:$0xff]
          %s1118 = scalar_lea.vmem %s1, 28
          %v1119 = vld [vmem:[%s1118] sm:$0xf]
          %v1121 = vsel %vm696, %v1113, 0
          %v1124 = vsel %vm696, %v1114, 0
          %v1127 = vsel %vm696, %v1115, 0
          %v1130 = vsel %vm696, %v1116, 0
          %v1133 = vsel %vm696, %v1117, 0
          %v1136 = vsel %vm712, %v1119, 0
          %1138 = vmatpush.msra.mxu0 0.0
          %1139 = vmatpush.msra.mxu0 0.0
          %1140 = vmatpush.msra.mxu0 0.0
          %1141 = vmatpush.msra.mxu0 0.0
          %1142 = vmatpush.msra.mxu0 0.0
          %1143 = vmatpush.msra.mxu0 0.0
          %1144 = vmatpush.msra.mxu0 0.0
          %1145 = vmatpush.msra.mxu0 0.0
          %1146 = vmatpush.msra.mxu0 0.0
          %1147 = vmatpush.msra.mxu0 0.0
          %1148 = vmatpush.msra.mxu0 0.0
          %1149 = vmatpush.msra.mxu0 0.0
          %1150 = vmatpush.msra.mxu0 0.0
          %1151 = vmatpush.msra.mxu0 0.0
          %1152 = vmatpush.msra.mxu0 0.0
          %1153 = vmatpush.msra.mxu0 %v1136
          %1154 = vmatmul.f32.gmra.mxu0 %v1121
          %v1155 = vpop.f32.mrf.mxu0
          %v1156 = vadd.f32 0.0, %v1155
          %1157 = vmatmul.f32.gmra.mxu0 %v1124
          %v1158 = vpop.f32.mrf.mxu0
          %v1159 = vadd.f32 0.0, %v1158
          %1160 = vmatmul.f32.gmra.mxu0 %v1127
          %v1161 = vpop.f32.mrf.mxu0
          %v1162 = vadd.f32 0.0, %v1161
          %1163 = vmatmul.f32.gmra.mxu0 %v1130
          %v1164 = vpop.f32.mrf.mxu0
          %v1165 = vadd.f32 0.0, %v1164
          %1166 = vmatmul.f32.gmra.mxu0 %v1133
          %v1167 = vpop.f32.mrf.mxu0
          %v1168 = vadd.f32 0.0, %v1167
          %1169 = vdwg.mxu0
          %v1170 = vadd.f32 %v1108, %v1156
          %v1171 = vadd.f32 %v1109, %v1159
          %v1172 = vadd.f32 %v1110, %v1162
          %v1173 = vadd.f32 %v1111, %v1165
          %v1174 = vadd.f32 %v1112, %v1168
          %s1175 = sadd.s32 %s678, 2
          %s1176 = smul.u32 %s1175, 96
          %s1177 = scalar_lea.vmem %s387, %s1176
          %v1178 = vld [vmem:[%s1177] sm:$0xff]
          %v1179 = vld [vmem:[%s1177 + $0x8] sm:$0xff]
          %v1180 = vld [vmem:[%s1177 + $0x10] sm:$0xff]
          %v1181 = vld [vmem:[%s1177 + $0x18] sm:$0xff]
          %v1182 = vld [vmem:[%s1177 + $0x20] sm:$0xff]
          %s1183 = scalar_lea.vmem %s1, 32
          %v1184 = vld [vmem:[%s1183] sm:$0xf]
          %v1186 = vsel %vm696, %v1178, 0
          %v1189 = vsel %vm696, %v1179, 0
          %v1192 = vsel %vm696, %v1180, 0
          %v1195 = vsel %vm696, %v1181, 0
          %v1198 = vsel %vm696, %v1182, 0
          %v1201 = vsel %vm712, %v1184, 0
          %1203 = vmatpush.msra.mxu0 0.0
          %1204 = vmatpush.msra.mxu0 0.0
          %1205 = vmatpush.msra.mxu0 0.0
          %1206 = vmatpush.msra.mxu0 0.0
          %1207 = vmatpush.msra.mxu0 0.0
          %1208 = vmatpush.msra.mxu0 0.0
          %1209 = vmatpush.msra.mxu0 0.0
          %1210 = vmatpush.msra.mxu0 0.0
          %1211 = vmatpush.msra.mxu0 0.0
          %1212 = vmatpush.msra.mxu0 0.0
          %1213 = vmatpush.msra.mxu0 0.0
          %1214 = vmatpush.msra.mxu0 0.0
          %1215 = vmatpush.msra.mxu0 0.0
          %1216 = vmatpush.msra.mxu0 0.0
          %1217 = vmatpush.msra.mxu0 0.0
          %1218 = vmatpush.msra.mxu0 %v1201
          %1219 = vmatmul.f32.gmra.mxu0 %v1186
          %v1220 = vpop.f32.mrf.mxu0
          %v1221 = vadd.f32 0.0, %v1220
          %1222 = vmatmul.f32.gmra.mxu0 %v1189
          %v1223 = vpop.f32.mrf.mxu0
          %v1224 = vadd.f32 0.0, %v1223
          %1225 = vmatmul.f32.gmra.mxu0 %v1192
          %v1226 = vpop.f32.mrf.mxu0
          %v1227 = vadd.f32 0.0, %v1226
          %1228 = vmatmul.f32.gmra.mxu0 %v1195
          %v1229 = vpop.f32.mrf.mxu0
          %v1230 = vadd.f32 0.0, %v1229
          %1231 = vmatmul.f32.gmra.mxu0 %v1198
          %v1232 = vpop.f32.mrf.mxu0
          %v1233 = vadd.f32 0.0, %v1232
          %1234 = vdwg.mxu0
          %v1235 = vadd.f32 %v1170, %v1221
          %v1236 = vadd.f32 %v1171, %v1224
          %v1237 = vadd.f32 %v1172, %v1227
          %v1238 = vadd.f32 %v1173, %v1230
          %v1239 = vadd.f32 %v1174, %v1233
          %s1240 = sadd.s32 48, %s1176
          %s1241 = scalar_lea.vmem %s387, %s1240
          %v1242 = vld [vmem:[%s1241] sm:$0xff]
          %v1243 = vld [vmem:[%s1241 + $0x8] sm:$0xff]
          %v1244 = vld [vmem:[%s1241 + $0x10] sm:$0xff]
          %v1245 = vld [vmem:[%s1241 + $0x18] sm:$0xff]
          %v1246 = vld [vmem:[%s1241 + $0x20] sm:$0xff]
          %s1247 = scalar_lea.vmem %s1, 36
          %v1248 = vld [vmem:[%s1247] sm:$0xf]
          %v1250 = vsel %vm696, %v1242, 0
          %v1253 = vsel %vm696, %v1243, 0
          %v1256 = vsel %vm696, %v1244, 0
          %v1259 = vsel %vm696, %v1245, 0
          %v1262 = vsel %vm696, %v1246, 0
          %v1265 = vsel %vm712, %v1248, 0
          %1267 = vmatpush.msra.mxu0 0.0
          %1268 = vmatpush.msra.mxu0 0.0
          %1269 = vmatpush.msra.mxu0 0.0
          %1270 = vmatpush.msra.mxu0 0.0
          %1271 = vmatpush.msra.mxu0 0.0
          %1272 = vmatpush.msra.mxu0 0.0
          %1273 = vmatpush.msra.mxu0 0.0
          %1274 = vmatpush.msra.mxu0 0.0
          %1275 = vmatpush.msra.mxu0 0.0
          %1276 = vmatpush.msra.mxu0 0.0
          %1277 = vmatpush.msra.mxu0 0.0
          %1278 = vmatpush.msra.mxu0 0.0
          %1279 = vmatpush.msra.mxu0 0.0
          %1280 = vmatpush.msra.mxu0 0.0
          %1281 = vmatpush.msra.mxu0 0.0
          %1282 = vmatpush.msra.mxu0 %v1265
          %1283 = vmatmul.f32.gmra.mxu0 %v1250
          %v1284 = vpop.f32.mrf.mxu0
          %v1285 = vadd.f32 0.0, %v1284
          %1286 = vmatmul.f32.gmra.mxu0 %v1253
          %v1287 = vpop.f32.mrf.mxu0
          %v1288 = vadd.f32 0.0, %v1287
          %1289 = vmatmul.f32.gmra.mxu0 %v1256
          %v1290 = vpop.f32.mrf.mxu0
          %v1291 = vadd.f32 0.0, %v1290
          %1292 = vmatmul.f32.gmra.mxu0 %v1259
          %v1293 = vpop.f32.mrf.mxu0
          %v1294 = vadd.f32 0.0, %v1293
          %1295 = vmatmul.f32.gmra.mxu0 %v1262
          %v1296 = vpop.f32.mrf.mxu0
          %v1297 = vadd.f32 0.0, %v1296
          %1298 = vdwg.mxu0
          %v1299 = vadd.f32 %v1235, %v1285
          %v1300 = vadd.f32 %v1236, %v1288
          %v1301 = vadd.f32 %v1237, %v1291
          %v1302 = vadd.f32 %v1238, %v1294
          %v1303 = vadd.f32 %v1239, %v1297
          %v1304 = vld [vmem:[%s1177 + $0x1] sm:$0xff]
          %v1305 = vld [vmem:[%s1177 + $0x9] sm:$0xff]
          %v1306 = vld [vmem:[%s1177 + $0x11] sm:$0xff]
          %v1307 = vld [vmem:[%s1177 + $0x19] sm:$0xff]
          %v1308 = vld [vmem:[%s1177 + $0x21] sm:$0xff]
          %s1309 = scalar_lea.vmem %s1, 40
          %v1310 = vld [vmem:[%s1309] sm:$0xf]
          %v1312 = vsel %vm696, %v1304, 0
          %v1315 = vsel %vm696, %v1305, 0
          %v1318 = vsel %vm696, %v1306, 0
          %v1321 = vsel %vm696, %v1307, 0
          %v1324 = vsel %vm696, %v1308, 0
          %v1327 = vsel %vm712, %v1310, 0
          %1329 = vmatpush.msra.mxu0 0.0
          %1330 = vmatpush.msra.mxu0 0.0
          %1331 = vmatpush.msra.mxu0 0.0
          %1332 = vmatpush.msra.mxu0 0.0
          %1333 = vmatpush.msra.mxu0 0.0
          %1334 = vmatpush.msra.mxu0 0.0
          %1335 = vmatpush.msra.mxu0 0.0
          %1336 = vmatpush.msra.mxu0 0.0
          %1337 = vmatpush.msra.mxu0 0.0
          %1338 = vmatpush.msra.mxu0 0.0
          %1339 = vmatpush.msra.mxu0 0.0
          %1340 = vmatpush.msra.mxu0 0.0
          %1341 = vmatpush.msra.mxu0 0.0
          %1342 = vmatpush.msra.mxu0 0.0
          %1343 = vmatpush.msra.mxu0 0.0
          %1344 = vmatpush.msra.mxu0 %v1327
          %1345 = vmatmul.f32.gmra.mxu0 %v1312
          %v1346 = vpop.f32.mrf.mxu0
          %v1347 = vadd.f32 0.0, %v1346
          %1348 = vmatmul.f32.gmra.mxu0 %v1315
          %v1349 = vpop.f32.mrf.mxu0
          %v1350 = vadd.f32 0.0, %v1349
          %1351 = vmatmul.f32.gmra.mxu0 %v1318
          %v1352 = vpop.f32.mrf.mxu0
          %v1353 = vadd.f32 0.0, %v1352
          %1354 = vmatmul.f32.gmra.mxu0 %v1321
          %v1355 = vpop.f32.mrf.mxu0
          %v1356 = vadd.f32 0.0, %v1355
          %1357 = vmatmul.f32.gmra.mxu0 %v1324
          %v1358 = vpop.f32.mrf.mxu0
          %v1359 = vadd.f32 0.0, %v1358
          %1360 = vdwg.mxu0
          %v1361 = vadd.f32 %v1299, %v1347
          %v1362 = vadd.f32 %v1300, %v1350
          %v1363 = vadd.f32 %v1301, %v1353
          %v1364 = vadd.f32 %v1302, %v1356
          %v1365 = vadd.f32 %v1303, %v1359
          %v1366 = vld [vmem:[%s1241 + $0x1] sm:$0xff]
          %v1367 = vld [vmem:[%s1241 + $0x9] sm:$0xff]
          %v1368 = vld [vmem:[%s1241 + $0x11] sm:$0xff]
          %v1369 = vld [vmem:[%s1241 + $0x19] sm:$0xff]
          %v1370 = vld [vmem:[%s1241 + $0x21] sm:$0xff]
          %s1371 = scalar_lea.vmem %s1, 44
          %v1372 = vld [vmem:[%s1371] sm:$0xf]
          %v1374 = vsel %vm696, %v1366, 0
          %v1377 = vsel %vm696, %v1367, 0
          %v1380 = vsel %vm696, %v1368, 0
          %v1383 = vsel %vm696, %v1369, 0
          %v1386 = vsel %vm696, %v1370, 0
          %v1389 = vsel %vm712, %v1372, 0
          %1391 = vmatpush.msra.mxu0 0.0
          %1392 = vmatpush.msra.mxu0 0.0
          %1393 = vmatpush.msra.mxu0 0.0
          %1394 = vmatpush.msra.mxu0 0.0
          %1395 = vmatpush.msra.mxu0 0.0
          %1396 = vmatpush.msra.mxu0 0.0
          %1397 = vmatpush.msra.mxu0 0.0
          %1398 = vmatpush.msra.mxu0 0.0
          %1399 = vmatpush.msra.mxu0 0.0
          %1400 = vmatpush.msra.mxu0 0.0
          %1401 = vmatpush.msra.mxu0 0.0
          %1402 = vmatpush.msra.mxu0 0.0
          %1403 = vmatpush.msra.mxu0 0.0
          %1404 = vmatpush.msra.mxu0 0.0
          %1405 = vmatpush.msra.mxu0 0.0
          %1406 = vmatpush.msra.mxu0 %v1389
          %1407 = vmatmul.f32.gmra.mxu0 %v1374
          %v1408 = vpop.f32.mrf.mxu0
          %v1409 = vadd.f32 0.0, %v1408
          %1410 = vmatmul.f32.gmra.mxu0 %v1377
          %v1411 = vpop.f32.mrf.mxu0
          %v1412 = vadd.f32 0.0, %v1411
          %1413 = vmatmul.f32.gmra.mxu0 %v1380
          %v1414 = vpop.f32.mrf.mxu0
          %v1415 = vadd.f32 0.0, %v1414
          %1416 = vmatmul.f32.gmra.mxu0 %v1383
          %v1417 = vpop.f32.mrf.mxu0
          %v1418 = vadd.f32 0.0, %v1417
          %1419 = vmatmul.f32.gmra.mxu0 %v1386
          %v1420 = vpop.f32.mrf.mxu0
          %v1421 = vadd.f32 0.0, %v1420
          %1422 = vdwg.mxu0
          %v1423 = vadd.f32 %v1361, %v1409
          %v1424 = vadd.f32 %v1362, %v1412
          %v1425 = vadd.f32 %v1363, %v1415
          %v1426 = vadd.f32 %v1364, %v1418
          %v1427 = vadd.f32 %v1365, %v1421
          %s1428 = sadd.s32 %s678, 3
          %s1429 = smul.u32 %s1428, 96
          %s1430 = scalar_lea.vmem %s387, %s1429
          %v1431 = vld [vmem:[%s1430] sm:$0xff]
          %v1432 = vld [vmem:[%s1430 + $0x8] sm:$0xff]
          %v1433 = vld [vmem:[%s1430 + $0x10] sm:$0xff]
          %v1434 = vld [vmem:[%s1430 + $0x18] sm:$0xff]
          %v1435 = vld [vmem:[%s1430 + $0x20] sm:$0xff]
          %s1436 = scalar_lea.vmem %s1, 48
          %v1437 = vld [vmem:[%s1436] sm:$0xf]
          %v1439 = vsel %vm696, %v1431, 0
          %v1442 = vsel %vm696, %v1432, 0
          %v1445 = vsel %vm696, %v1433, 0
          %v1448 = vsel %vm696, %v1434, 0
          %v1451 = vsel %vm696, %v1435, 0
          %v1454 = vsel %vm712, %v1437, 0
          %1456 = vmatpush.msra.mxu0 0.0
          %1457 = vmatpush.msra.mxu0 0.0
          %1458 = vmatpush.msra.mxu0 0.0
          %1459 = vmatpush.msra.mxu0 0.0
          %1460 = vmatpush.msra.mxu0 0.0
          %1461 = vmatpush.msra.mxu0 0.0
          %1462 = vmatpush.msra.mxu0 0.0
          %1463 = vmatpush.msra.mxu0 0.0
          %1464 = vmatpush.msra.mxu0 0.0
          %1465 = vmatpush.msra.mxu0 0.0
          %1466 = vmatpush.msra.mxu0 0.0
          %1467 = vmatpush.msra.mxu0 0.0
          %1468 = vmatpush.msra.mxu0 0.0
          %1469 = vmatpush.msra.mxu0 0.0
          %1470 = vmatpush.msra.mxu0 0.0
          %1471 = vmatpush.msra.mxu0 %v1454
          %1472 = vmatmul.f32.gmra.mxu0 %v1439
          %v1473 = vpop.f32.mrf.mxu0
          %v1474 = vadd.f32 0.0, %v1473
          %1475 = vmatmul.f32.gmra.mxu0 %v1442
          %v1476 = vpop.f32.mrf.mxu0
          %v1477 = vadd.f32 0.0, %v1476
          %1478 = vmatmul.f32.gmra.mxu0 %v1445
          %v1479 = vpop.f32.mrf.mxu0
          %v1480 = vadd.f32 0.0, %v1479
          %1481 = vmatmul.f32.gmra.mxu0 %v1448
          %v1482 = vpop.f32.mrf.mxu0
          %v1483 = vadd.f32 0.0, %v1482
          %1484 = vmatmul.f32.gmra.mxu0 %v1451
          %v1485 = vpop.f32.mrf.mxu0
          %v1486 = vadd.f32 0.0, %v1485
          %1487 = vdwg.mxu0
          %v1488 = vadd.f32 %v1423, %v1474
          %v1489 = vadd.f32 %v1424, %v1477
          %v1490 = vadd.f32 %v1425, %v1480
          %v1491 = vadd.f32 %v1426, %v1483
          %v1492 = vadd.f32 %v1427, %v1486
          %s1493 = sadd.s32 48, %s1429
          %s1494 = scalar_lea.vmem %s387, %s1493
          %v1495 = vld [vmem:[%s1494] sm:$0xff]
          %v1496 = vld [vmem:[%s1494 + $0x8] sm:$0xff]
          %v1497 = vld [vmem:[%s1494 + $0x10] sm:$0xff]
          %v1498 = vld [vmem:[%s1494 + $0x18] sm:$0xff]
          %v1499 = vld [vmem:[%s1494 + $0x20] sm:$0xff]
          %s1500 = scalar_lea.vmem %s1, 52
          %v1501 = vld [vmem:[%s1500] sm:$0xf]
          %v1503 = vsel %vm696, %v1495, 0
          %v1506 = vsel %vm696, %v1496, 0
          %v1509 = vsel %vm696, %v1497, 0
          %v1512 = vsel %vm696, %v1498, 0
          %v1515 = vsel %vm696, %v1499, 0
          %v1518 = vsel %vm712, %v1501, 0
          %1520 = vmatpush.msra.mxu0 0.0
          %1521 = vmatpush.msra.mxu0 0.0
          %1522 = vmatpush.msra.mxu0 0.0
          %1523 = vmatpush.msra.mxu0 0.0
          %1524 = vmatpush.msra.mxu0 0.0
          %1525 = vmatpush.msra.mxu0 0.0
          %1526 = vmatpush.msra.mxu0 0.0
          %1527 = vmatpush.msra.mxu0 0.0
          %1528 = vmatpush.msra.mxu0 0.0
          %1529 = vmatpush.msra.mxu0 0.0
          %1530 = vmatpush.msra.mxu0 0.0
          %1531 = vmatpush.msra.mxu0 0.0
          %1532 = vmatpush.msra.mxu0 0.0
          %1533 = vmatpush.msra.mxu0 0.0
          %1534 = vmatpush.msra.mxu0 0.0
          %1535 = vmatpush.msra.mxu0 %v1518
          %1536 = vmatmul.f32.gmra.mxu0 %v1503
          %v1537 = vpop.f32.mrf.mxu0
          %v1538 = vadd.f32 0.0, %v1537
          %1539 = vmatmul.f32.gmra.mxu0 %v1506
          %v1540 = vpop.f32.mrf.mxu0
          %v1541 = vadd.f32 0.0, %v1540
          %1542 = vmatmul.f32.gmra.mxu0 %v1509
          %v1543 = vpop.f32.mrf.mxu0
          %v1544 = vadd.f32 0.0, %v1543
          %1545 = vmatmul.f32.gmra.mxu0 %v1512
          %v1546 = vpop.f32.mrf.mxu0
          %v1547 = vadd.f32 0.0, %v1546
          %1548 = vmatmul.f32.gmra.mxu0 %v1515
          %v1549 = vpop.f32.mrf.mxu0
          %v1550 = vadd.f32 0.0, %v1549
          %1551 = vdwg.mxu0
          %v1552 = vadd.f32 %v1488, %v1538
          %v1553 = vadd.f32 %v1489, %v1541
          %v1554 = vadd.f32 %v1490, %v1544
          %v1555 = vadd.f32 %v1491, %v1547
          %v1556 = vadd.f32 %v1492, %v1550
          %v1557 = vld [vmem:[%s1430 + $0x1] sm:$0xff]
          %v1558 = vld [vmem:[%s1430 + $0x9] sm:$0xff]
          %v1559 = vld [vmem:[%s1430 + $0x11] sm:$0xff]
          %v1560 = vld [vmem:[%s1430 + $0x19] sm:$0xff]
          %v1561 = vld [vmem:[%s1430 + $0x21] sm:$0xff]
          %s1562 = scalar_lea.vmem %s1, 56
          %v1563 = vld [vmem:[%s1562] sm:$0xf]
          %v1565 = vsel %vm696, %v1557, 0
          %v1568 = vsel %vm696, %v1558, 0
          %v1571 = vsel %vm696, %v1559, 0
          %v1574 = vsel %vm696, %v1560, 0
          %v1577 = vsel %vm696, %v1561, 0
          %v1580 = vsel %vm712, %v1563, 0
          %1582 = vmatpush.msra.mxu0 0.0
          %1583 = vmatpush.msra.mxu0 0.0
          %1584 = vmatpush.msra.mxu0 0.0
          %1585 = vmatpush.msra.mxu0 0.0
          %1586 = vmatpush.msra.mxu0 0.0
          %1587 = vmatpush.msra.mxu0 0.0
          %1588 = vmatpush.msra.mxu0 0.0
          %1589 = vmatpush.msra.mxu0 0.0
          %1590 = vmatpush.msra.mxu0 0.0
          %1591 = vmatpush.msra.mxu0 0.0
          %1592 = vmatpush.msra.mxu0 0.0
          %1593 = vmatpush.msra.mxu0 0.0
          %1594 = vmatpush.msra.mxu0 0.0
          %1595 = vmatpush.msra.mxu0 0.0
          %1596 = vmatpush.msra.mxu0 0.0
          %1597 = vmatpush.msra.mxu0 %v1580
          %1598 = vmatmul.f32.gmra.mxu0 %v1565
          %v1599 = vpop.f32.mrf.mxu0
          %v1600 = vadd.f32 0.0, %v1599
          %1601 = vmatmul.f32.gmra.mxu0 %v1568
          %v1602 = vpop.f32.mrf.mxu0
          %v1603 = vadd.f32 0.0, %v1602
          %1604 = vmatmul.f32.gmra.mxu0 %v1571
          %v1605 = vpop.f32.mrf.mxu0
          %v1606 = vadd.f32 0.0, %v1605
          %1607 = vmatmul.f32.gmra.mxu0 %v1574
          %v1608 = vpop.f32.mrf.mxu0
          %v1609 = vadd.f32 0.0, %v1608
          %1610 = vmatmul.f32.gmra.mxu0 %v1577
          %v1611 = vpop.f32.mrf.mxu0
          %v1612 = vadd.f32 0.0, %v1611
          %1613 = vdwg.mxu0
          %v1614 = vadd.f32 %v1552, %v1600
          %v1615 = vadd.f32 %v1553, %v1603
          %v1616 = vadd.f32 %v1554, %v1606
          %v1617 = vadd.f32 %v1555, %v1609
          %v1618 = vadd.f32 %v1556, %v1612
          %v1619 = vld [vmem:[%s1494 + $0x1] sm:$0xff]
          %v1620 = vld [vmem:[%s1494 + $0x9] sm:$0xff]
          %v1621 = vld [vmem:[%s1494 + $0x11] sm:$0xff]
          %v1622 = vld [vmem:[%s1494 + $0x19] sm:$0xff]
          %v1623 = vld [vmem:[%s1494 + $0x21] sm:$0xff]
          %s1624 = scalar_lea.vmem %s1, 60
          %v1625 = vld [vmem:[%s1624] sm:$0xf]
          %v1627 = vsel %vm696, %v1619, 0
          %v1630 = vsel %vm696, %v1620, 0
          %v1633 = vsel %vm696, %v1621, 0
          %v1636 = vsel %vm696, %v1622, 0
          %v1639 = vsel %vm696, %v1623, 0
          %v1642 = vsel %vm712, %v1625, 0
          %1644 = vmatpush.msra.mxu0 0.0
          %1645 = vmatpush.msra.mxu0 0.0
          %1646 = vmatpush.msra.mxu0 0.0
          %1647 = vmatpush.msra.mxu0 0.0
          %1648 = vmatpush.msra.mxu0 0.0
          %1649 = vmatpush.msra.mxu0 0.0
          %1650 = vmatpush.msra.mxu0 0.0
          %1651 = vmatpush.msra.mxu0 0.0
          %1652 = vmatpush.msra.mxu0 0.0
          %1653 = vmatpush.msra.mxu0 0.0
          %1654 = vmatpush.msra.mxu0 0.0
          %1655 = vmatpush.msra.mxu0 0.0
          %1656 = vmatpush.msra.mxu0 0.0
          %1657 = vmatpush.msra.mxu0 0.0
          %1658 = vmatpush.msra.mxu0 0.0
          %1659 = vmatpush.msra.mxu0 %v1642
          %1660 = vmatmul.f32.gmra.mxu0 %v1627
          %v1661 = vpop.f32.mrf.mxu0
          %v1662 = vadd.f32 0.0, %v1661
          %1663 = vmatmul.f32.gmra.mxu0 %v1630
          %v1664 = vpop.f32.mrf.mxu0
          %v1665 = vadd.f32 0.0, %v1664
          %1666 = vmatmul.f32.gmra.mxu0 %v1633
          %v1667 = vpop.f32.mrf.mxu0
          %v1668 = vadd.f32 0.0, %v1667
          %1669 = vmatmul.f32.gmra.mxu0 %v1636
          %v1670 = vpop.f32.mrf.mxu0
          %v1671 = vadd.f32 0.0, %v1670
          %1672 = vmatmul.f32.gmra.mxu0 %v1639
          %v1673 = vpop.f32.mrf.mxu0
          %v1674 = vadd.f32 0.0, %v1673
          %1675 = vdwg.mxu0
          %v1676 = vadd.f32 %v1614, %v1662
          %v1677 = vadd.f32 %v1615, %v1665
          %v1678 = vadd.f32 %v1616, %v1668
          %v1679 = vadd.f32 %v1617, %v1671
          %v1680 = vadd.f32 %v1618, %v1674
          %v1682 = vperm.slane %v671, 0
          %v1684 = vadd.f32 %v1676, %v1682
          %v1685 = vadd.f32 %v1677, %v1682
          %v1686 = vadd.f32 %v1678, %v1682
          %v1687 = vadd.f32 %v1679, %v1682
          %v1688 = vadd.f32 %v1680, %v1682
          %v1689 = vmax.f32 %v1684, 0.0
          %v1690 = vmax.f32 %v1685, 0.0
          %v1691 = vmax.f32 %v1686, 0.0
          %v1692 = vmax.f32 %v1687, 0.0
          %v1693 = vmax.f32 %v1688, 0.0
          %vm1694 = vcmask 326656
          %v1696 = vsel %vm1694, %v656, 0
          %v1699 = vsel %vm1694, %v657, 0
          %v1702 = vsel %vm1694, %v658, 0
          %1704 = vmatpush.msra.mxu0 0.0
          %1705 = vmatpush.msra.mxu0 0.0
          %1706 = vmatpush.msra.mxu0 0.0
          %1707 = vmatpush.msra.mxu0 0.0
          %1708 = vmatpush.msra.mxu0 0.0
          %1709 = vmatpush.msra.mxu0 0.0
          %1710 = vmatpush.msra.mxu0 0.0
          %1711 = vmatpush.msra.mxu0 0.0
          %1712 = vmatpush.msra.mxu0 0.0
          %1713 = vmatpush.msra.mxu0 0.0
          %1714 = vmatpush.msra.mxu0 0.0
          %1715 = vmatpush.msra.mxu0 %v1693
          %1716 = vmatpush.msra.mxu0 %v1692
          %1717 = vmatpush.msra.mxu0 %v1691
          %1718 = vmatpush.msra.mxu0 %v1690
          %1719 = vmatpush.msra.mxu0 %v1689
          %1720 = vmatmul.f32.gmra.mxu0 %v1696
          %v1721 = vpop.f32.mrf.mxu0
          %v1722 = vadd.f32 0.0, %v1721
          %1723 = vmatmul.f32.gmra.mxu0 %v1699
          %v1724 = vpop.f32.mrf.mxu0
          %v1725 = vadd.f32 0.0, %v1724
          %1726 = vmatmul.f32.gmra.mxu0 %v1702
          %v1727 = vpop.f32.mrf.mxu0
          %v1728 = vadd.f32 0.0, %v1727
          %1729 = vdwg.mxu0
          %v1731 = vsel %vm1694, %v668, 0
          %v1734 = vsel %vm1694, %v669, 0
          %v1737 = vsel %vm1694, %v670, 0
          %1739 = vmatpush.msra.mxu0 0.0
          %1740 = vmatpush.msra.mxu0 0.0
          %1741 = vmatpush.msra.mxu0 0.0
          %1742 = vmatpush.msra.mxu0 0.0
          %1743 = vmatpush.msra.mxu0 0.0
          %1744 = vmatpush.msra.mxu0 0.0
          %1745 = vmatpush.msra.mxu0 0.0
          %1746 = vmatpush.msra.mxu0 0.0
          %1747 = vmatpush.msra.mxu0 0.0
          %1748 = vmatpush.msra.mxu0 0.0
          %1749 = vmatpush.msra.mxu0 0.0
          %1750 = vmatpush.msra.mxu0 %v1693
          %1751 = vmatpush.msra.mxu0 %v1692
          %1752 = vmatpush.msra.mxu0 %v1691
          %1753 = vmatpush.msra.mxu0 %v1690
          %1754 = vmatpush.msra.mxu0 %v1689
          %1755 = vmatmul.f32.gmra.mxu0 %v1731
          %v1756 = vpop.f32.mrf.mxu0
          %v1757 = vadd.f32 0.0, %v1756
          %1758 = vmatmul.f32.gmra.mxu0 %v1734
          %v1759 = vpop.f32.mrf.mxu0
          %v1760 = vadd.f32 0.0, %v1759
          %1761 = vmatmul.f32.gmra.mxu0 %v1737
          %v1762 = vpop.f32.mrf.mxu0
          %v1763 = vadd.f32 0.0, %v1762
          %1764 = vdwg.mxu0
          %s1765 = sadd.s32 %s673, 1
          %s1766 = smul.u32 %s1765, 48
          %s1767 = sadd.s32 24, %s1766
          %s1768 = scalar_lea.vmem [#allocation2], %s1767
          %1769 = vst [vmem:[%s1768] sm:$0xff] %v1722
          %1770 = vst [vmem:[%s1768 + $0x8] sm:$0xff] %v1725
          %1771 = vst [vmem:[%s1768 + $0x10] sm:$0xf] %v1728
          %s1772 = scalar_lea.vmem [#allocation2], %s1766
          %1773 = vst [vmem:[%s1772 + $0x1] sm:$0xff] %v1757
          %1774 = vst [vmem:[%s1772 + $0x9] sm:$0xff] %v1760
          %1775 = vst [vmem:[%s1772 + $0x11] sm:$0xf] %v1763
        $region69: #{dp2_forward.1} parent=63 // loop_footer
          %s677 = sadd.s32 1, %s673
        $region70: #{dp2_forward.1} parent=63 // loop_footer_branch
          %672 = sbr.rel target = $region66
        $region71: #{dp2_forward.1} parent=63 // loop_exit
          _
        %1776 = vst [vmem:[#allocation3] sm:$0xff] 0.0
        %1777 = vst [vmem:[#allocation3 + $0x8] sm:$0x7] 0.0
        %1778 = vst [vmem:[#allocation3 + $0x10] sm:$0xff] 0.0
        %1779 = vst [vmem:[#allocation3 + $0x18] sm:$0x7] 0.0
        %1780 = vst [vmem:[#allocation3 + $0x20] sm:$0xff] 0.0
        %1781 = vst [vmem:[#allocation3 + $0x28] sm:$0x7] 0.0
        %1782 = vst [vmem:[#allocation3 + $0x30] sm:$0xff] 0.0
        %1783 = vst [vmem:[#allocation3 + $0x38] sm:$0x7] 0.0
        %1784 = vst [vmem:[#allocation3 + $0x40] sm:$0xff] 0.0
        %1785 = vst [vmem:[#allocation3 + $0x48] sm:$0x7] 0.0
        %1786 = vst [vmem:[#allocation3 + $0x50] sm:$0xff] 0.0
        %1787 = vst [vmem:[#allocation3 + $0x58] sm:$0x7] 0.0
        %1788 = vst [vmem:[#allocation3 + $0x60] sm:$0xff] 0.0
        %1789 = vst [vmem:[#allocation3 + $0x68] sm:$0x7] 0.0
        %1790 = vst [vmem:[#allocation3 + $0x70] sm:$0xff] 0.0
        %1791 = vst [vmem:[#allocation3 + $0x78] sm:$0x7] 0.0
        %1792 = vst [vmem:[#allocation3 + $0x80] sm:$0xff] 0.0
        %1793 = vst [vmem:[#allocation3 + $0x88] sm:$0x7] 0.0
        %1794 = vst [vmem:[#allocation3 + $0x90] sm:$0xff] 0.0
        %1795 = vst [vmem:[#allocation3 + $0x98] sm:$0x7] 0.0
        %1796 = vst [vmem:[#allocation3 + $0xa0] sm:$0xff] 0.0
        %1797 = vst [vmem:[#allocation3 + $0xa8] sm:$0x7] 0.0
        %1798 = vst [vmem:[#allocation3 + $0xb0] sm:$0xff] 0.0
        %1799 = vst [vmem:[#allocation3 + $0xb8] sm:$0x7] 0.0
        %1800 = vst [vmem:[#allocation3 + $0xc0] sm:$0xff] 0.0
        %1801 = vst [vmem:[#allocation3 + $0xc8] sm:$0x7] 0.0
        %1802 = vst [vmem:[#allocation3 + $0xd0] sm:$0xff] 0.0
        %1803 = vst [vmem:[#allocation3 + $0xd8] sm:$0x7] 0.0
        %1804 = vst [vmem:[#allocation3 + $0xe0] sm:$0xff] 0.0
        %1805 = vst [vmem:[#allocation3 + $0xe8] sm:$0x7] 0.0
        %1806 = vst [vmem:[#allocation3 + $0xf0] sm:$0xff] 0.0
        %1807 = vst [vmem:[#allocation3 + $0xf8] sm:$0x7] 0.0
        %1808 = vst [vmem:[#allocation3 + $0x100] sm:$0xff] 0.0
        %1809 = vst [vmem:[#allocation3 + $0x108] sm:$0x7] 0.0
        %1810 = vst [vmem:[#allocation3 + $0x110] sm:$0xff] 0.0
        %1811 = vst [vmem:[#allocation3 + $0x118] sm:$0x7] 0.0
        %1812 = vst [vmem:[#allocation3 + $0x120] sm:$0xff] 0.0
        %1813 = vst [vmem:[#allocation3 + $0x128] sm:$0x7] 0.0
        %1814 = vst [vmem:[#allocation3 + $0x130] sm:$0xff] 0.0
        %1815 = vst [vmem:[#allocation3 + $0x138] sm:$0x7] 0.0
        %1816 = vst [vmem:[#allocation3 + $0x140] sm:$0xff] 0.0
        %1817 = vst [vmem:[#allocation3 + $0x148] sm:$0x7] 0.0
        %1818 = vst [vmem:[#allocation3 + $0x150] sm:$0xff] 0.0
        %1819 = vst [vmem:[#allocation3 + $0x158] sm:$0x7] 0.0
        %1820 = vst [vmem:[#allocation3 + $0x160] sm:$0xff] 0.0
        %1821 = vst [vmem:[#allocation3 + $0x168] sm:$0x7] 0.0
        %1822 = vst [vmem:[#allocation3 + $0x170] sm:$0xff] 0.0
        %1823 = vst [vmem:[#allocation3 + $0x178] sm:$0x7] 0.0
        %1824 = vst [vmem:[#allocation3 + $0x180] sm:$0xff] 0.0
        %1825 = vst [vmem:[#allocation3 + $0x188] sm:$0x7] 0.0
        %1826 = vst [vmem:[#allocation3 + $0x190] sm:$0xff] 0.0
        %1827 = vst [vmem:[#allocation3 + $0x198] sm:$0x7] 0.0
        %1828 = vst [vmem:[#allocation3 + $0x1a0] sm:$0xff] 0.0
        %1829 = vst [vmem:[#allocation3 + $0x1a8] sm:$0x7] 0.0
        %1830 = vst [vmem:[#allocation3 + $0x1b0] sm:$0xff] 0.0
        %1831 = vst [vmem:[#allocation3 + $0x1b8] sm:$0x7] 0.0
        %1832 = vst [vmem:[#allocation3 + $0x1c0] sm:$0xff] 0.0
        %1833 = vst [vmem:[#allocation3 + $0x1c8] sm:$0x7] 0.0
        %1834 = vst [vmem:[#allocation3 + $0x1d0] sm:$0xff] 0.0
        %1835 = vst [vmem:[#allocation3 + $0x1d8] sm:$0x7] 0.0
        %1836 = vst [vmem:[#allocation3 + $0x1e0] sm:$0xff] 0.0
        %1837 = vst [vmem:[#allocation3 + $0x1e8] sm:$0x7] 0.0
        %1838 = vst [vmem:[#allocation3 + $0x1f0] sm:$0xff] 0.0
        %1839 = vst [vmem:[#allocation3 + $0x1f8] sm:$0x7] 0.0
        %1840 = vst [vmem:[#allocation3 + $0x200] sm:$0xff] 0.0
        %1841 = vst [vmem:[#allocation3 + $0x208] sm:$0x7] 0.0
        %1842 = vst [vmem:[#allocation3 + $0x210] sm:$0xff] 0.0
        %1843 = vst [vmem:[#allocation3 + $0x218] sm:$0x7] 0.0
        %1844 = vst [vmem:[#allocation3 + $0x220] sm:$0xff] 0.0
        %1845 = vst [vmem:[#allocation3 + $0x228] sm:$0x7] 0.0
        %1846 = vst [vmem:[#allocation3 + $0x230] sm:$0xff] 0.0
        %1847 = vst [vmem:[#allocation3 + $0x238] sm:$0x7] 0.0
        %1848 = vst [vmem:[#allocation3 + $0x240] sm:$0xff] 0.0
        %1849 = vst [vmem:[#allocation3 + $0x248] sm:$0x7] 0.0
        %1850 = vst [vmem:[#allocation3 + $0x250] sm:$0xff] 0.0
        %1851 = vst [vmem:[#allocation3 + $0x258] sm:$0x7] 0.0
        %1852 = vst [vmem:[#allocation3 + $0x260] sm:$0xff] 0.0
        %1853 = vst [vmem:[#allocation3 + $0x268] sm:$0x7] 0.0
        %1854 = vst [vmem:[#allocation3 + $0x270] sm:$0xff] 0.0
        %1855 = vst [vmem:[#allocation3 + $0x278] sm:$0x7] 0.0
        %1856 = vst [vmem:[#allocation3 + $0x280] sm:$0xff] 0.0
        %1857 = vst [vmem:[#allocation3 + $0x288] sm:$0x7] 0.0
        %1858 = vst [vmem:[#allocation3 + $0x290] sm:$0xff] 0.0
        %1859 = vst [vmem:[#allocation3 + $0x298] sm:$0x7] 0.0
        %1860 = vst [vmem:[#allocation3 + $0x2a0] sm:$0xff] 0.0
        %1861 = vst [vmem:[#allocation3 + $0x2a8] sm:$0x7] 0.0
        %1862 = vst [vmem:[#allocation3 + $0x2b0] sm:$0xff] 0.0
        %1863 = vst [vmem:[#allocation3 + $0x2b8] sm:$0x7] 0.0
        %v1864 = vld [vmem:[%s4] sm:$0x1]
        loop: start=0, step=1, limit=20
        $region72: #{dp2_forward.1} parent=63 // loop_pre_header
          _
        $region73: #{dp2_forward.1} parent=63 // loop_header
          %s1866 = sphi 0, %s1870
          %p1867 = scmp.ge.s32.totalorder %s1866, 20
        $region74: #{dp2_forward.1} parent=63 // loop_header_branch
          %1869 = sbr.rel (%p1867) target = $region78
        $region75: #{dp2_forward.1} parent=63 // loop_body
          %s1871 = smul.u32 %s1866, 2
          %s1872 = smul.u32 %s1871, 48
          %s1873 = scalar_lea.vmem [#allocation2], %s1872
          %v1874 = vld [vmem:[%s1873] sm:$0xff]
          %v1875 = vld [vmem:[%s1873 + $0x8] sm:$0xff]
          %v1876 = vld [vmem:[%s1873 + $0x10] sm:$0xf]
          %v1877 = vld [vmem:[%s3] sm:$0xff]
          %v1878 = vld [vmem:[%s3 + $0x8] sm:$0xff]
          %v1879 = vld [vmem:[%s3 + $0x10] sm:$0xff]
          %v1880 = vld [vmem:[%s3 + $0x18] sm:$0xff]
          %v1881 = vld [vmem:[%s3 + $0x20] sm:$0xff]
          %v1882 = vld [vmem:[%s3 + $0x28] sm:$0xff]
          %v1883 = vld [vmem:[%s3 + $0x30] sm:$0xff]
          %v1884 = vld [vmem:[%s3 + $0x38] sm:$0xff]
          %v1885 = vld [vmem:[%s3 + $0x40] sm:$0xff]
          %v1886 = vld [vmem:[%s3 + $0x48] sm:$0xff]
          %v1887 = vld [vmem:[%s3 + $0x50] sm:$0xff]
          %v1888 = vld [vmem:[%s3 + $0x58] sm:$0xff]
          %v1889 = vld [vmem:[%s3 + $0x60] sm:$0xff]
          %v1890 = vld [vmem:[%s3 + $0x68] sm:$0xff]
          %v1891 = vld [vmem:[%s3 + $0x70] sm:$0xff]
          %v1892 = vld [vmem:[%s3 + $0x78] sm:$0xff]
          %s1893 = sadd.s32 24, %s1872
          %s1894 = scalar_lea.vmem [#allocation2], %s1893
          %v1895 = vld [vmem:[%s1894] sm:$0xff]
          %v1896 = vld [vmem:[%s1894 + $0x8] sm:$0xff]
          %v1897 = vld [vmem:[%s1894 + $0x10] sm:$0xf]
          %s1898 = scalar_lea.vmem %s3, 128
          %v1899 = vld [vmem:[%s1898] sm:$0xff]
          %v1900 = vld [vmem:[%s1898 + $0x8] sm:$0xff]
          %v1901 = vld [vmem:[%s1898 + $0x10] sm:$0xff]
          %v1902 = vld [vmem:[%s1898 + $0x18] sm:$0xff]
          %v1903 = vld [vmem:[%s1898 + $0x20] sm:$0xff]
          %v1904 = vld [vmem:[%s1898 + $0x28] sm:$0xff]
          %v1905 = vld [vmem:[%s1898 + $0x30] sm:$0xff]
          %v1906 = vld [vmem:[%s1898 + $0x38] sm:$0xff]
          %v1907 = vld [vmem:[%s1898 + $0x40] sm:$0xff]
          %v1908 = vld [vmem:[%s1898 + $0x48] sm:$0xff]
          %v1909 = vld [vmem:[%s1898 + $0x50] sm:$0xff]
          %v1910 = vld [vmem:[%s1898 + $0x58] sm:$0xff]
          %v1911 = vld [vmem:[%s1898 + $0x60] sm:$0xff]
          %v1912 = vld [vmem:[%s1898 + $0x68] sm:$0xff]
          %v1913 = vld [vmem:[%s1898 + $0x70] sm:$0xff]
          %v1914 = vld [vmem:[%s1898 + $0x78] sm:$0xff]
          %1915 = vmatpush.msra.mxu0 %v1914
          %1916 = vmatpush.msra.mxu0 %v1913
          %1917 = vmatpush.msra.mxu0 %v1912
          %1918 = vmatpush.msra.mxu0 %v1911
          %1919 = vmatpush.msra.mxu0 %v1910
          %1920 = vmatpush.msra.mxu0 %v1909
          %1921 = vmatpush.msra.mxu0 %v1908
          %1922 = vmatpush.msra.mxu0 %v1907
          %1923 = vmatpush.msra.mxu0 %v1906
          %1924 = vmatpush.msra.mxu0 %v1905
          %1925 = vmatpush.msra.mxu0 %v1904
          %1926 = vmatpush.msra.mxu0 %v1903
          %1927 = vmatpush.msra.mxu0 %v1902
          %1928 = vmatpush.msra.mxu0 %v1901
          %1929 = vmatpush.msra.mxu0 %v1900
          %1930 = vmatpush.msra.mxu0 %v1899
          %1931 = vmatmul.f32.gmra.mxu0 %v1895
          %v1932 = vpop.f32.mrf.mxu0
          %v1933 = vadd.f32 0.0, %v1932
          %1934 = vmatmul.f32.gmra.mxu0 %v1896
          %v1935 = vpop.f32.mrf.mxu0
          %v1936 = vadd.f32 0.0, %v1935
          %1937 = vmatmul.f32.gmra.mxu0 %v1897
          %v1938 = vpop.f32.mrf.mxu0
          %v1939 = vadd.f32 0.0, %v1938
          %1940 = vdwg.mxu0
          %1941 = vmatpush.msra.mxu0 %v1892
          %1942 = vmatpush.msra.mxu0 %v1891
          %1943 = vmatpush.msra.mxu0 %v1890
          %1944 = vmatpush.msra.mxu0 %v1889
          %1945 = vmatpush.msra.mxu0 %v1888
          %1946 = vmatpush.msra.mxu0 %v1887
          %1947 = vmatpush.msra.mxu0 %v1886
          %1948 = vmatpush.msra.mxu0 %v1885
          %1949 = vmatpush.msra.mxu0 %v1884
          %1950 = vmatpush.msra.mxu0 %v1883
          %1951 = vmatpush.msra.mxu0 %v1882
          %1952 = vmatpush.msra.mxu0 %v1881
          %1953 = vmatpush.msra.mxu0 %v1880
          %1954 = vmatpush.msra.mxu0 %v1879
          %1955 = vmatpush.msra.mxu0 %v1878
          %1956 = vmatpush.msra.mxu0 %v1877
          %1957 = vmatmul.f32.gmra.mxu0 %v1874
          %v1958 = vpop.f32.mrf.mxu0
          %v1959 = vadd.f32 %v1933, %v1958
          %1960 = vmatmul.f32.gmra.mxu0 %v1875
          %v1961 = vpop.f32.mrf.mxu0
          %v1962 = vadd.f32 %v1936, %v1961
          %1963 = vmatmul.f32.gmra.mxu0 %v1876
          %v1964 = vpop.f32.mrf.mxu0
          %v1965 = vadd.f32 %v1939, %v1964
          %1966 = vdwg.mxu0
          %v1967 = vld [vmem:[%s1873 + $0x1] sm:$0xff]
          %v1968 = vld [vmem:[%s1873 + $0x9] sm:$0xff]
          %v1969 = vld [vmem:[%s1873 + $0x11] sm:$0xf]
          %s1970 = scalar_lea.vmem %s3, 256
          %v1971 = vld [vmem:[%s1970] sm:$0xff]
          %v1972 = vld [vmem:[%s1970 + $0x8] sm:$0xff]
          %v1973 = vld [vmem:[%s1970 + $0x10] sm:$0xff]
          %v1974 = vld [vmem:[%s1970 + $0x18] sm:$0xff]
          %v1975 = vld [vmem:[%s1970 + $0x20] sm:$0xff]
          %v1976 = vld [vmem:[%s1970 + $0x28] sm:$0xff]
          %v1977 = vld [vmem:[%s1970 + $0x30] sm:$0xff]
          %v1978 = vld [vmem:[%s1970 + $0x38] sm:$0xff]
          %v1979 = vld [vmem:[%s1970 + $0x40] sm:$0xff]
          %v1980 = vld [vmem:[%s1970 + $0x48] sm:$0xff]
          %v1981 = vld [vmem:[%s1970 + $0x50] sm:$0xff]
          %v1982 = vld [vmem:[%s1970 + $0x58] sm:$0xff]
          %v1983 = vld [vmem:[%s1970 + $0x60] sm:$0xff]
          %v1984 = vld [vmem:[%s1970 + $0x68] sm:$0xff]
          %v1985 = vld [vmem:[%s1970 + $0x70] sm:$0xff]
          %v1986 = vld [vmem:[%s1970 + $0x78] sm:$0xff]
          %1987 = vmatpush.msra.mxu0 %v1986
          %1988 = vmatpush.msra.mxu0 %v1985
          %1989 = vmatpush.msra.mxu0 %v1984
          %1990 = vmatpush.msra.mxu0 %v1983
          %1991 = vmatpush.msra.mxu0 %v1982
          %1992 = vmatpush.msra.mxu0 %v1981
          %1993 = vmatpush.msra.mxu0 %v1980
          %1994 = vmatpush.msra.mxu0 %v1979
          %1995 = vmatpush.msra.mxu0 %v1978
          %1996 = vmatpush.msra.mxu0 %v1977
          %1997 = vmatpush.msra.mxu0 %v1976
          %1998 = vmatpush.msra.mxu0 %v1975
          %1999 = vmatpush.msra.mxu0 %v1974
          %2000 = vmatpush.msra.mxu0 %v1973
          %2001 = vmatpush.msra.mxu0 %v1972
          %2002 = vmatpush.msra.mxu0 %v1971
          %2003 = vmatmul.f32.gmra.mxu0 %v1967
          %v2004 = vpop.f32.mrf.mxu0
          %v2005 = vadd.f32 0.0, %v2004
          %2006 = vmatmul.f32.gmra.mxu0 %v1968
          %v2007 = vpop.f32.mrf.mxu0
          %v2008 = vadd.f32 0.0, %v2007
          %2009 = vmatmul.f32.gmra.mxu0 %v1969
          %v2010 = vpop.f32.mrf.mxu0
          %v2011 = vadd.f32 0.0, %v2010
          %2012 = vdwg.mxu0
          %v2013 = vadd.f32 %v1959, %v2005
          %v2014 = vadd.f32 %v1962, %v2008
          %v2015 = vadd.f32 %v1965, %v2011
          %v2016 = vld [vmem:[%s1894 + $0x1] sm:$0xff]
          %v2017 = vld [vmem:[%s1894 + $0x9] sm:$0xff]
          %v2018 = vld [vmem:[%s1894 + $0x11] sm:$0xf]
          %s2019 = scalar_lea.vmem %s3, 384
          %v2020 = vld [vmem:[%s2019] sm:$0xff]
          %v2021 = vld [vmem:[%s2019 + $0x8] sm:$0xff]
          %v2022 = vld [vmem:[%s2019 + $0x10] sm:$0xff]
          %v2023 = vld [vmem:[%s2019 + $0x18] sm:$0xff]
          %v2024 = vld [vmem:[%s2019 + $0x20] sm:$0xff]
          %v2025 = vld [vmem:[%s2019 + $0x28] sm:$0xff]
          %v2026 = vld [vmem:[%s2019 + $0x30] sm:$0xff]
          %v2027 = vld [vmem:[%s2019 + $0x38] sm:$0xff]
          %v2028 = vld [vmem:[%s2019 + $0x40] sm:$0xff]
          %v2029 = vld [vmem:[%s2019 + $0x48] sm:$0xff]
          %v2030 = vld [vmem:[%s2019 + $0x50] sm:$0xff]
          %v2031 = vld [vmem:[%s2019 + $0x58] sm:$0xff]
          %v2032 = vld [vmem:[%s2019 + $0x60] sm:$0xff]
          %v2033 = vld [vmem:[%s2019 + $0x68] sm:$0xff]
          %v2034 = vld [vmem:[%s2019 + $0x70] sm:$0xff]
          %v2035 = vld [vmem:[%s2019 + $0x78] sm:$0xff]
          %2036 = vmatpush.msra.mxu0 %v2035
          %2037 = vmatpush.msra.mxu0 %v2034
          %2038 = vmatpush.msra.mxu0 %v2033
          %2039 = vmatpush.msra.mxu0 %v2032
          %2040 = vmatpush.msra.mxu0 %v2031
          %2041 = vmatpush.msra.mxu0 %v2030
          %2042 = vmatpush.msra.mxu0 %v2029
          %2043 = vmatpush.msra.mxu0 %v2028
          %2044 = vmatpush.msra.mxu0 %v2027
          %2045 = vmatpush.msra.mxu0 %v2026
          %2046 = vmatpush.msra.mxu0 %v2025
          %2047 = vmatpush.msra.mxu0 %v2024
          %2048 = vmatpush.msra.mxu0 %v2023
          %2049 = vmatpush.msra.mxu0 %v2022
          %2050 = vmatpush.msra.mxu0 %v2021
          %2051 = vmatpush.msra.mxu0 %v2020
          %2052 = vmatmul.f32.gmra.mxu0 %v2016
          %v2053 = vpop.f32.mrf.mxu0
          %v2054 = vadd.f32 0.0, %v2053
          %2055 = vmatmul.f32.gmra.mxu0 %v2017
          %v2056 = vpop.f32.mrf.mxu0
          %v2057 = vadd.f32 0.0, %v2056
          %2058 = vmatmul.f32.gmra.mxu0 %v2018
          %v2059 = vpop.f32.mrf.mxu0
          %v2060 = vadd.f32 0.0, %v2059
          %2061 = vdwg.mxu0
          %v2062 = vadd.f32 %v2013, %v2054
          %v2063 = vadd.f32 %v2014, %v2057
          %v2064 = vadd.f32 %v2015, %v2060
          %s2065 = sadd.s32 %s1871, 1
          %s2066 = smul.u32 %s2065, 48
          %s2067 = scalar_lea.vmem [#allocation2], %s2066
          %v2068 = vld [vmem:[%s2067] sm:$0xff]
          %v2069 = vld [vmem:[%s2067 + $0x8] sm:$0xff]
          %v2070 = vld [vmem:[%s2067 + $0x10] sm:$0xf]
          %s2071 = scalar_lea.vmem %s3, 512
          %v2072 = vld [vmem:[%s2071] sm:$0xff]
          %v2073 = vld [vmem:[%s2071 + $0x8] sm:$0xff]
          %v2074 = vld [vmem:[%s2071 + $0x10] sm:$0xff]
          %v2075 = vld [vmem:[%s2071 + $0x18] sm:$0xff]
          %v2076 = vld [vmem:[%s2071 + $0x20] sm:$0xff]
          %v2077 = vld [vmem:[%s2071 + $0x28] sm:$0xff]
          %v2078 = vld [vmem:[%s2071 + $0x30] sm:$0xff]
          %v2079 = vld [vmem:[%s2071 + $0x38] sm:$0xff]
          %v2080 = vld [vmem:[%s2071 + $0x40] sm:$0xff]
          %v2081 = vld [vmem:[%s2071 + $0x48] sm:$0xff]
          %v2082 = vld [vmem:[%s2071 + $0x50] sm:$0xff]
          %v2083 = vld [vmem:[%s2071 + $0x58] sm:$0xff]
          %v2084 = vld [vmem:[%s2071 + $0x60] sm:$0xff]
          %v2085 = vld [vmem:[%s2071 + $0x68] sm:$0xff]
          %v2086 = vld [vmem:[%s2071 + $0x70] sm:$0xff]
          %v2087 = vld [vmem:[%s2071 + $0x78] sm:$0xff]
          %2088 = vmatpush.msra.mxu0 %v2087
          %2089 = vmatpush.msra.mxu0 %v2086
          %2090 = vmatpush.msra.mxu0 %v2085
          %2091 = vmatpush.msra.mxu0 %v2084
          %2092 = vmatpush.msra.mxu0 %v2083
          %2093 = vmatpush.msra.mxu0 %v2082
          %2094 = vmatpush.msra.mxu0 %v2081
          %2095 = vmatpush.msra.mxu0 %v2080
          %2096 = vmatpush.msra.mxu0 %v2079
          %2097 = vmatpush.msra.mxu0 %v2078
          %2098 = vmatpush.msra.mxu0 %v2077
          %2099 = vmatpush.msra.mxu0 %v2076
          %2100 = vmatpush.msra.mxu0 %v2075
          %2101 = vmatpush.msra.mxu0 %v2074
          %2102 = vmatpush.msra.mxu0 %v2073
          %2103 = vmatpush.msra.mxu0 %v2072
          %2104 = vmatmul.f32.gmra.mxu0 %v2068
          %v2105 = vpop.f32.mrf.mxu0
          %v2106 = vadd.f32 0.0, %v2105
          %2107 = vmatmul.f32.gmra.mxu0 %v2069
          %v2108 = vpop.f32.mrf.mxu0
          %v2109 = vadd.f32 0.0, %v2108
          %2110 = vmatmul.f32.gmra.mxu0 %v2070
          %v2111 = vpop.f32.mrf.mxu0
          %v2112 = vadd.f32 0.0, %v2111
          %2113 = vdwg.mxu0
          %v2114 = vadd.f32 %v2062, %v2106
          %v2115 = vadd.f32 %v2063, %v2109
          %v2116 = vadd.f32 %v2064, %v2112
          %s2117 = sadd.s32 24, %s2066
          %s2118 = scalar_lea.vmem [#allocation2], %s2117
          %v2119 = vld [vmem:[%s2118] sm:$0xff]
          %v2120 = vld [vmem:[%s2118 + $0x8] sm:$0xff]
          %v2121 = vld [vmem:[%s2118 + $0x10] sm:$0xf]
          %s2122 = scalar_lea.vmem %s3, 640
          %v2123 = vld [vmem:[%s2122] sm:$0xff]
          %v2124 = vld [vmem:[%s2122 + $0x8] sm:$0xff]
          %v2125 = vld [vmem:[%s2122 + $0x10] sm:$0xff]
          %v2126 = vld [vmem:[%s2122 + $0x18] sm:$0xff]
          %v2127 = vld [vmem:[%s2122 + $0x20] sm:$0xff]
          %v2128 = vld [vmem:[%s2122 + $0x28] sm:$0xff]
          %v2129 = vld [vmem:[%s2122 + $0x30] sm:$0xff]
          %v2130 = vld [vmem:[%s2122 + $0x38] sm:$0xff]
          %v2131 = vld [vmem:[%s2122 + $0x40] sm:$0xff]
          %v2132 = vld [vmem:[%s2122 + $0x48] sm:$0xff]
          %v2133 = vld [vmem:[%s2122 + $0x50] sm:$0xff]
          %v2134 = vld [vmem:[%s2122 + $0x58] sm:$0xff]
          %v2135 = vld [vmem:[%s2122 + $0x60] sm:$0xff]
          %v2136 = vld [vmem:[%s2122 + $0x68] sm:$0xff]
          %v2137 = vld [vmem:[%s2122 + $0x70] sm:$0xff]
          %v2138 = vld [vmem:[%s2122 + $0x78] sm:$0xff]
          %2139 = vmatpush.msra.mxu0 %v2138
          %2140 = vmatpush.msra.mxu0 %v2137
          %2141 = vmatpush.msra.mxu0 %v2136
          %2142 = vmatpush.msra.mxu0 %v2135
          %2143 = vmatpush.msra.mxu0 %v2134
          %2144 = vmatpush.msra.mxu0 %v2133
          %2145 = vmatpush.msra.mxu0 %v2132
          %2146 = vmatpush.msra.mxu0 %v2131
          %2147 = vmatpush.msra.mxu0 %v2130
          %2148 = vmatpush.msra.mxu0 %v2129
          %2149 = vmatpush.msra.mxu0 %v2128
          %2150 = vmatpush.msra.mxu0 %v2127
          %2151 = vmatpush.msra.mxu0 %v2126
          %2152 = vmatpush.msra.mxu0 %v2125
          %2153 = vmatpush.msra.mxu0 %v2124
          %2154 = vmatpush.msra.mxu0 %v2123
          %2155 = vmatmul.f32.gmra.mxu0 %v2119
          %v2156 = vpop.f32.mrf.mxu0
          %v2157 = vadd.f32 0.0, %v2156
          %2158 = vmatmul.f32.gmra.mxu0 %v2120
          %v2159 = vpop.f32.mrf.mxu0
          %v2160 = vadd.f32 0.0, %v2159
          %2161 = vmatmul.f32.gmra.mxu0 %v2121
          %v2162 = vpop.f32.mrf.mxu0
          %v2163 = vadd.f32 0.0, %v2162
          %2164 = vdwg.mxu0
          %v2165 = vadd.f32 %v2114, %v2157
          %v2166 = vadd.f32 %v2115, %v2160
          %v2167 = vadd.f32 %v2116, %v2163
          %v2168 = vld [vmem:[%s2067 + $0x1] sm:$0xff]
          %v2169 = vld [vmem:[%s2067 + $0x9] sm:$0xff]
          %v2170 = vld [vmem:[%s2067 + $0x11] sm:$0xf]
          %s2171 = scalar_lea.vmem %s3, 768
          %v2172 = vld [vmem:[%s2171] sm:$0xff]
          %v2173 = vld [vmem:[%s2171 + $0x8] sm:$0xff]
          %v2174 = vld [vmem:[%s2171 + $0x10] sm:$0xff]
          %v2175 = vld [vmem:[%s2171 + $0x18] sm:$0xff]
          %v2176 = vld [vmem:[%s2171 + $0x20] sm:$0xff]
          %v2177 = vld [vmem:[%s2171 + $0x28] sm:$0xff]
          %v2178 = vld [vmem:[%s2171 + $0x30] sm:$0xff]
          %v2179 = vld [vmem:[%s2171 + $0x38] sm:$0xff]
          %v2180 = vld [vmem:[%s2171 + $0x40] sm:$0xff]
          %v2181 = vld [vmem:[%s2171 + $0x48] sm:$0xff]
          %v2182 = vld [vmem:[%s2171 + $0x50] sm:$0xff]
          %v2183 = vld [vmem:[%s2171 + $0x58] sm:$0xff]
          %v2184 = vld [vmem:[%s2171 + $0x60] sm:$0xff]
          %v2185 = vld [vmem:[%s2171 + $0x68] sm:$0xff]
          %v2186 = vld [vmem:[%s2171 + $0x70] sm:$0xff]
          %v2187 = vld [vmem:[%s2171 + $0x78] sm:$0xff]
          %2188 = vmatpush.msra.mxu0 %v2187
          %2189 = vmatpush.msra.mxu0 %v2186
          %2190 = vmatpush.msra.mxu0 %v2185
          %2191 = vmatpush.msra.mxu0 %v2184
          %2192 = vmatpush.msra.mxu0 %v2183
          %2193 = vmatpush.msra.mxu0 %v2182
          %2194 = vmatpush.msra.mxu0 %v2181
          %2195 = vmatpush.msra.mxu0 %v2180
          %2196 = vmatpush.msra.mxu0 %v2179
          %2197 = vmatpush.msra.mxu0 %v2178
          %2198 = vmatpush.msra.mxu0 %v2177
          %2199 = vmatpush.msra.mxu0 %v2176
          %2200 = vmatpush.msra.mxu0 %v2175
          %2201 = vmatpush.msra.mxu0 %v2174
          %2202 = vmatpush.msra.mxu0 %v2173
          %2203 = vmatpush.msra.mxu0 %v2172
          %2204 = vmatmul.f32.gmra.mxu0 %v2168
          %v2205 = vpop.f32.mrf.mxu0
          %v2206 = vadd.f32 0.0, %v2205
          %2207 = vmatmul.f32.gmra.mxu0 %v2169
          %v2208 = vpop.f32.mrf.mxu0
          %v2209 = vadd.f32 0.0, %v2208
          %2210 = vmatmul.f32.gmra.mxu0 %v2170
          %v2211 = vpop.f32.mrf.mxu0
          %v2212 = vadd.f32 0.0, %v2211
          %2213 = vdwg.mxu0
          %v2214 = vadd.f32 %v2165, %v2206
          %v2215 = vadd.f32 %v2166, %v2209
          %v2216 = vadd.f32 %v2167, %v2212
          %v2217 = vld [vmem:[%s2118 + $0x1] sm:$0xff]
          %v2218 = vld [vmem:[%s2118 + $0x9] sm:$0xff]
          %v2219 = vld [vmem:[%s2118 + $0x11] sm:$0xf]
          %s2220 = scalar_lea.vmem %s3, 896
          %v2221 = vld [vmem:[%s2220] sm:$0xff]
          %v2222 = vld [vmem:[%s2220 + $0x8] sm:$0xff]
          %v2223 = vld [vmem:[%s2220 + $0x10] sm:$0xff]
          %v2224 = vld [vmem:[%s2220 + $0x18] sm:$0xff]
          %v2225 = vld [vmem:[%s2220 + $0x20] sm:$0xff]
          %v2226 = vld [vmem:[%s2220 + $0x28] sm:$0xff]
          %v2227 = vld [vmem:[%s2220 + $0x30] sm:$0xff]
          %v2228 = vld [vmem:[%s2220 + $0x38] sm:$0xff]
          %v2229 = vld [vmem:[%s2220 + $0x40] sm:$0xff]
          %v2230 = vld [vmem:[%s2220 + $0x48] sm:$0xff]
          %v2231 = vld [vmem:[%s2220 + $0x50] sm:$0xff]
          %v2232 = vld [vmem:[%s2220 + $0x58] sm:$0xff]
          %v2233 = vld [vmem:[%s2220 + $0x60] sm:$0xff]
          %v2234 = vld [vmem:[%s2220 + $0x68] sm:$0xff]
          %v2235 = vld [vmem:[%s2220 + $0x70] sm:$0xff]
          %v2236 = vld [vmem:[%s2220 + $0x78] sm:$0xff]
          %2237 = vmatpush.msra.mxu0 %v2236
          %2238 = vmatpush.msra.mxu0 %v2235
          %2239 = vmatpush.msra.mxu0 %v2234
          %2240 = vmatpush.msra.mxu0 %v2233
          %2241 = vmatpush.msra.mxu0 %v2232
          %2242 = vmatpush.msra.mxu0 %v2231
          %2243 = vmatpush.msra.mxu0 %v2230
          %2244 = vmatpush.msra.mxu0 %v2229
          %2245 = vmatpush.msra.mxu0 %v2228
          %2246 = vmatpush.msra.mxu0 %v2227
          %2247 = vmatpush.msra.mxu0 %v2226
          %2248 = vmatpush.msra.mxu0 %v2225
          %2249 = vmatpush.msra.mxu0 %v2224
          %2250 = vmatpush.msra.mxu0 %v2223
          %2251 = vmatpush.msra.mxu0 %v2222
          %2252 = vmatpush.msra.mxu0 %v2221
          %2253 = vmatmul.f32.gmra.mxu0 %v2217
          %v2254 = vpop.f32.mrf.mxu0
          %v2255 = vadd.f32 0.0, %v2254
          %2256 = vmatmul.f32.gmra.mxu0 %v2218
          %v2257 = vpop.f32.mrf.mxu0
          %v2258 = vadd.f32 0.0, %v2257
          %2259 = vmatmul.f32.gmra.mxu0 %v2219
          %v2260 = vpop.f32.mrf.mxu0
          %v2261 = vadd.f32 0.0, %v2260
          %2262 = vdwg.mxu0
          %v2263 = vadd.f32 %v2214, %v2255
          %v2264 = vadd.f32 %v2215, %v2258
          %v2265 = vadd.f32 %v2216, %v2261
          %s2266 = sadd.s32 %s1871, 2
          %s2267 = smul.u32 %s2266, 48
          %s2268 = scalar_lea.vmem [#allocation2], %s2267
          %v2269 = vld [vmem:[%s2268] sm:$0xff]
          %v2270 = vld [vmem:[%s2268 + $0x8] sm:$0xff]
          %v2271 = vld [vmem:[%s2268 + $0x10] sm:$0xf]
          %s2272 = scalar_lea.vmem %s3, 1024
          %v2273 = vld [vmem:[%s2272] sm:$0xff]
          %v2274 = vld [vmem:[%s2272 + $0x8] sm:$0xff]
          %v2275 = vld [vmem:[%s2272 + $0x10] sm:$0xff]
          %v2276 = vld [vmem:[%s2272 + $0x18] sm:$0xff]
          %v2277 = vld [vmem:[%s2272 + $0x20] sm:$0xff]
          %v2278 = vld [vmem:[%s2272 + $0x28] sm:$0xff]
          %v2279 = vld [vmem:[%s2272 + $0x30] sm:$0xff]
          %v2280 = vld [vmem:[%s2272 + $0x38] sm:$0xff]
          %v2281 = vld [vmem:[%s2272 + $0x40] sm:$0xff]
          %v2282 = vld [vmem:[%s2272 + $0x48] sm:$0xff]
          %v2283 = vld [vmem:[%s2272 + $0x50] sm:$0xff]
          %v2284 = vld [vmem:[%s2272 + $0x58] sm:$0xff]
          %v2285 = vld [vmem:[%s2272 + $0x60] sm:$0xff]
          %v2286 = vld [vmem:[%s2272 + $0x68] sm:$0xff]
          %v2287 = vld [vmem:[%s2272 + $0x70] sm:$0xff]
          %v2288 = vld [vmem:[%s2272 + $0x78] sm:$0xff]
          %2289 = vmatpush.msra.mxu0 %v2288
          %2290 = vmatpush.msra.mxu0 %v2287
          %2291 = vmatpush.msra.mxu0 %v2286
          %2292 = vmatpush.msra.mxu0 %v2285
          %2293 = vmatpush.msra.mxu0 %v2284
          %2294 = vmatpush.msra.mxu0 %v2283
          %2295 = vmatpush.msra.mxu0 %v2282
          %2296 = vmatpush.msra.mxu0 %v2281
          %2297 = vmatpush.msra.mxu0 %v2280
          %2298 = vmatpush.msra.mxu0 %v2279
          %2299 = vmatpush.msra.mxu0 %v2278
          %2300 = vmatpush.msra.mxu0 %v2277
          %2301 = vmatpush.msra.mxu0 %v2276
          %2302 = vmatpush.msra.mxu0 %v2275
          %2303 = vmatpush.msra.mxu0 %v2274
          %2304 = vmatpush.msra.mxu0 %v2273
          %2305 = vmatmul.f32.gmra.mxu0 %v2269
          %v2306 = vpop.f32.mrf.mxu0
          %v2307 = vadd.f32 0.0, %v2306
          %2308 = vmatmul.f32.gmra.mxu0 %v2270
          %v2309 = vpop.f32.mrf.mxu0
          %v2310 = vadd.f32 0.0, %v2309
          %2311 = vmatmul.f32.gmra.mxu0 %v2271
          %v2312 = vpop.f32.mrf.mxu0
          %v2313 = vadd.f32 0.0, %v2312
          %2314 = vdwg.mxu0
          %v2315 = vadd.f32 %v2263, %v2307
          %v2316 = vadd.f32 %v2264, %v2310
          %v2317 = vadd.f32 %v2265, %v2313
          %s2318 = sadd.s32 24, %s2267
          %s2319 = scalar_lea.vmem [#allocation2], %s2318
          %v2320 = vld [vmem:[%s2319] sm:$0xff]
          %v2321 = vld [vmem:[%s2319 + $0x8] sm:$0xff]
          %v2322 = vld [vmem:[%s2319 + $0x10] sm:$0xf]
          %s2323 = scalar_lea.vmem %s3, 1152
          %v2324 = vld [vmem:[%s2323] sm:$0xff]
          %v2325 = vld [vmem:[%s2323 + $0x8] sm:$0xff]
          %v2326 = vld [vmem:[%s2323 + $0x10] sm:$0xff]
          %v2327 = vld [vmem:[%s2323 + $0x18] sm:$0xff]
          %v2328 = vld [vmem:[%s2323 + $0x20] sm:$0xff]
          %v2329 = vld [vmem:[%s2323 + $0x28] sm:$0xff]
          %v2330 = vld [vmem:[%s2323 + $0x30] sm:$0xff]
          %v2331 = vld [vmem:[%s2323 + $0x38] sm:$0xff]
          %v2332 = vld [vmem:[%s2323 + $0x40] sm:$0xff]
          %v2333 = vld [vmem:[%s2323 + $0x48] sm:$0xff]
          %v2334 = vld [vmem:[%s2323 + $0x50] sm:$0xff]
          %v2335 = vld [vmem:[%s2323 + $0x58] sm:$0xff]
          %v2336 = vld [vmem:[%s2323 + $0x60] sm:$0xff]
          %v2337 = vld [vmem:[%s2323 + $0x68] sm:$0xff]
          %v2338 = vld [vmem:[%s2323 + $0x70] sm:$0xff]
          %v2339 = vld [vmem:[%s2323 + $0x78] sm:$0xff]
          %2340 = vmatpush.msra.mxu0 %v2339
          %2341 = vmatpush.msra.mxu0 %v2338
          %2342 = vmatpush.msra.mxu0 %v2337
          %2343 = vmatpush.msra.mxu0 %v2336
          %2344 = vmatpush.msra.mxu0 %v2335
          %2345 = vmatpush.msra.mxu0 %v2334
          %2346 = vmatpush.msra.mxu0 %v2333
          %2347 = vmatpush.msra.mxu0 %v2332
          %2348 = vmatpush.msra.mxu0 %v2331
          %2349 = vmatpush.msra.mxu0 %v2330
          %2350 = vmatpush.msra.mxu0 %v2329
          %2351 = vmatpush.msra.mxu0 %v2328
          %2352 = vmatpush.msra.mxu0 %v2327
          %2353 = vmatpush.msra.mxu0 %v2326
          %2354 = vmatpush.msra.mxu0 %v2325
          %2355 = vmatpush.msra.mxu0 %v2324
          %2356 = vmatmul.f32.gmra.mxu0 %v2320
          %v2357 = vpop.f32.mrf.mxu0
          %v2358 = vadd.f32 0.0, %v2357
          %2359 = vmatmul.f32.gmra.mxu0 %v2321
          %v2360 = vpop.f32.mrf.mxu0
          %v2361 = vadd.f32 0.0, %v2360
          %2362 = vmatmul.f32.gmra.mxu0 %v2322
          %v2363 = vpop.f32.mrf.mxu0
          %v2364 = vadd.f32 0.0, %v2363
          %2365 = vdwg.mxu0
          %v2366 = vadd.f32 %v2315, %v2358
          %v2367 = vadd.f32 %v2316, %v2361
          %v2368 = vadd.f32 %v2317, %v2364
          %v2369 = vld [vmem:[%s2268 + $0x1] sm:$0xff]
          %v2370 = vld [vmem:[%s2268 + $0x9] sm:$0xff]
          %v2371 = vld [vmem:[%s2268 + $0x11] sm:$0xf]
          %s2372 = scalar_lea.vmem %s3, 1280
          %v2373 = vld [vmem:[%s2372] sm:$0xff]
          %v2374 = vld [vmem:[%s2372 + $0x8] sm:$0xff]
          %v2375 = vld [vmem:[%s2372 + $0x10] sm:$0xff]
          %v2376 = vld [vmem:[%s2372 + $0x18] sm:$0xff]
          %v2377 = vld [vmem:[%s2372 + $0x20] sm:$0xff]
          %v2378 = vld [vmem:[%s2372 + $0x28] sm:$0xff]
          %v2379 = vld [vmem:[%s2372 + $0x30] sm:$0xff]
          %v2380 = vld [vmem:[%s2372 + $0x38] sm:$0xff]
          %v2381 = vld [vmem:[%s2372 + $0x40] sm:$0xff]
          %v2382 = vld [vmem:[%s2372 + $0x48] sm:$0xff]
          %v2383 = vld [vmem:[%s2372 + $0x50] sm:$0xff]
          %v2384 = vld [vmem:[%s2372 + $0x58] sm:$0xff]
          %v2385 = vld [vmem:[%s2372 + $0x60] sm:$0xff]
          %v2386 = vld [vmem:[%s2372 + $0x68] sm:$0xff]
          %v2387 = vld [vmem:[%s2372 + $0x70] sm:$0xff]
          %v2388 = vld [vmem:[%s2372 + $0x78] sm:$0xff]
          %2389 = vmatpush.msra.mxu0 %v2388
          %2390 = vmatpush.msra.mxu0 %v2387
          %2391 = vmatpush.msra.mxu0 %v2386
          %2392 = vmatpush.msra.mxu0 %v2385
          %2393 = vmatpush.msra.mxu0 %v2384
          %2394 = vmatpush.msra.mxu0 %v2383
          %2395 = vmatpush.msra.mxu0 %v2382
          %2396 = vmatpush.msra.mxu0 %v2381
          %2397 = vmatpush.msra.mxu0 %v2380
          %2398 = vmatpush.msra.mxu0 %v2379
          %2399 = vmatpush.msra.mxu0 %v2378
          %2400 = vmatpush.msra.mxu0 %v2377
          %2401 = vmatpush.msra.mxu0 %v2376
          %2402 = vmatpush.msra.mxu0 %v2375
          %2403 = vmatpush.msra.mxu0 %v2374
          %2404 = vmatpush.msra.mxu0 %v2373
          %2405 = vmatmul.f32.gmra.mxu0 %v2369
          %v2406 = vpop.f32.mrf.mxu0
          %v2407 = vadd.f32 0.0, %v2406
          %2408 = vmatmul.f32.gmra.mxu0 %v2370
          %v2409 = vpop.f32.mrf.mxu0
          %v2410 = vadd.f32 0.0, %v2409
          %2411 = vmatmul.f32.gmra.mxu0 %v2371
          %v2412 = vpop.f32.mrf.mxu0
          %v2413 = vadd.f32 0.0, %v2412
          %2414 = vdwg.mxu0
          %v2415 = vadd.f32 %v2366, %v2407
          %v2416 = vadd.f32 %v2367, %v2410
          %v2417 = vadd.f32 %v2368, %v2413
          %v2418 = vld [vmem:[%s2319 + $0x1] sm:$0xff]
          %v2419 = vld [vmem:[%s2319 + $0x9] sm:$0xff]
          %v2420 = vld [vmem:[%s2319 + $0x11] sm:$0xf]
          %s2421 = scalar_lea.vmem %s3, 1408
          %v2422 = vld [vmem:[%s2421] sm:$0xff]
          %v2423 = vld [vmem:[%s2421 + $0x8] sm:$0xff]
          %v2424 = vld [vmem:[%s2421 + $0x10] sm:$0xff]
          %v2425 = vld [vmem:[%s2421 + $0x18] sm:$0xff]
          %v2426 = vld [vmem:[%s2421 + $0x20] sm:$0xff]
          %v2427 = vld [vmem:[%s2421 + $0x28] sm:$0xff]
          %v2428 = vld [vmem:[%s2421 + $0x30] sm:$0xff]
          %v2429 = vld [vmem:[%s2421 + $0x38] sm:$0xff]
          %v2430 = vld [vmem:[%s2421 + $0x40] sm:$0xff]
          %v2431 = vld [vmem:[%s2421 + $0x48] sm:$0xff]
          %v2432 = vld [vmem:[%s2421 + $0x50] sm:$0xff]
          %v2433 = vld [vmem:[%s2421 + $0x58] sm:$0xff]
          %v2434 = vld [vmem:[%s2421 + $0x60] sm:$0xff]
          %v2435 = vld [vmem:[%s2421 + $0x68] sm:$0xff]
          %v2436 = vld [vmem:[%s2421 + $0x70] sm:$0xff]
          %v2437 = vld [vmem:[%s2421 + $0x78] sm:$0xff]
          %2438 = vmatpush.msra.mxu0 %v2437
          %2439 = vmatpush.msra.mxu0 %v2436
          %2440 = vmatpush.msra.mxu0 %v2435
          %2441 = vmatpush.msra.mxu0 %v2434
          %2442 = vmatpush.msra.mxu0 %v2433
          %2443 = vmatpush.msra.mxu0 %v2432
          %2444 = vmatpush.msra.mxu0 %v2431
          %2445 = vmatpush.msra.mxu0 %v2430
          %2446 = vmatpush.msra.mxu0 %v2429
          %2447 = vmatpush.msra.mxu0 %v2428
          %2448 = vmatpush.msra.mxu0 %v2427
          %2449 = vmatpush.msra.mxu0 %v2426
          %2450 = vmatpush.msra.mxu0 %v2425
          %2451 = vmatpush.msra.mxu0 %v2424
          %2452 = vmatpush.msra.mxu0 %v2423
          %2453 = vmatpush.msra.mxu0 %v2422
          %2454 = vmatmul.f32.gmra.mxu0 %v2418
          %v2455 = vpop.f32.mrf.mxu0
          %v2456 = vadd.f32 0.0, %v2455
          %2457 = vmatmul.f32.gmra.mxu0 %v2419
          %v2458 = vpop.f32.mrf.mxu0
          %v2459 = vadd.f32 0.0, %v2458
          %2460 = vmatmul.f32.gmra.mxu0 %v2420
          %v2461 = vpop.f32.mrf.mxu0
          %v2462 = vadd.f32 0.0, %v2461
          %2463 = vdwg.mxu0
          %v2464 = vadd.f32 %v2415, %v2456
          %v2465 = vadd.f32 %v2416, %v2459
          %v2466 = vadd.f32 %v2417, %v2462
          %s2467 = sadd.s32 %s1871, 3
          %s2468 = smul.u32 %s2467, 48
          %s2469 = scalar_lea.vmem [#allocation2], %s2468
          %v2470 = vld [vmem:[%s2469] sm:$0xff]
          %v2471 = vld [vmem:[%s2469 + $0x8] sm:$0xff]
          %v2472 = vld [vmem:[%s2469 + $0x10] sm:$0xf]
          %s2473 = scalar_lea.vmem %s3, 1536
          %v2474 = vld [vmem:[%s2473] sm:$0xff]
          %v2475 = vld [vmem:[%s2473 + $0x8] sm:$0xff]
          %v2476 = vld [vmem:[%s2473 + $0x10] sm:$0xff]
          %v2477 = vld [vmem:[%s2473 + $0x18] sm:$0xff]
          %v2478 = vld [vmem:[%s2473 + $0x20] sm:$0xff]
          %v2479 = vld [vmem:[%s2473 + $0x28] sm:$0xff]
          %v2480 = vld [vmem:[%s2473 + $0x30] sm:$0xff]
          %v2481 = vld [vmem:[%s2473 + $0x38] sm:$0xff]
          %v2482 = vld [vmem:[%s2473 + $0x40] sm:$0xff]
          %v2483 = vld [vmem:[%s2473 + $0x48] sm:$0xff]
          %v2484 = vld [vmem:[%s2473 + $0x50] sm:$0xff]
          %v2485 = vld [vmem:[%s2473 + $0x58] sm:$0xff]
          %v2486 = vld [vmem:[%s2473 + $0x60] sm:$0xff]
          %v2487 = vld [vmem:[%s2473 + $0x68] sm:$0xff]
          %v2488 = vld [vmem:[%s2473 + $0x70] sm:$0xff]
          %v2489 = vld [vmem:[%s2473 + $0x78] sm:$0xff]
          %2490 = vmatpush.msra.mxu0 %v2489
          %2491 = vmatpush.msra.mxu0 %v2488
          %2492 = vmatpush.msra.mxu0 %v2487
          %2493 = vmatpush.msra.mxu0 %v2486
          %2494 = vmatpush.msra.mxu0 %v2485
          %2495 = vmatpush.msra.mxu0 %v2484
          %2496 = vmatpush.msra.mxu0 %v2483
          %2497 = vmatpush.msra.mxu0 %v2482
          %2498 = vmatpush.msra.mxu0 %v2481
          %2499 = vmatpush.msra.mxu0 %v2480
          %2500 = vmatpush.msra.mxu0 %v2479
          %2501 = vmatpush.msra.mxu0 %v2478
          %2502 = vmatpush.msra.mxu0 %v2477
          %2503 = vmatpush.msra.mxu0 %v2476
          %2504 = vmatpush.msra.mxu0 %v2475
          %2505 = vmatpush.msra.mxu0 %v2474
          %2506 = vmatmul.f32.gmra.mxu0 %v2470
          %v2507 = vpop.f32.mrf.mxu0
          %v2508 = vadd.f32 0.0, %v2507
          %2509 = vmatmul.f32.gmra.mxu0 %v2471
          %v2510 = vpop.f32.mrf.mxu0
          %v2511 = vadd.f32 0.0, %v2510
          %2512 = vmatmul.f32.gmra.mxu0 %v2472
          %v2513 = vpop.f32.mrf.mxu0
          %v2514 = vadd.f32 0.0, %v2513
          %2515 = vdwg.mxu0
          %v2516 = vadd.f32 %v2464, %v2508
          %v2517 = vadd.f32 %v2465, %v2511
          %v2518 = vadd.f32 %v2466, %v2514
          %s2519 = sadd.s32 24, %s2468
          %s2520 = scalar_lea.vmem [#allocation2], %s2519
          %v2521 = vld [vmem:[%s2520] sm:$0xff]
          %v2522 = vld [vmem:[%s2520 + $0x8] sm:$0xff]
          %v2523 = vld [vmem:[%s2520 + $0x10] sm:$0xf]
          %s2524 = scalar_lea.vmem %s3, 1664
          %v2525 = vld [vmem:[%s2524] sm:$0xff]
          %v2526 = vld [vmem:[%s2524 + $0x8] sm:$0xff]
          %v2527 = vld [vmem:[%s2524 + $0x10] sm:$0xff]
          %v2528 = vld [vmem:[%s2524 + $0x18] sm:$0xff]
          %v2529 = vld [vmem:[%s2524 + $0x20] sm:$0xff]
          %v2530 = vld [vmem:[%s2524 + $0x28] sm:$0xff]
          %v2531 = vld [vmem:[%s2524 + $0x30] sm:$0xff]
          %v2532 = vld [vmem:[%s2524 + $0x38] sm:$0xff]
          %v2533 = vld [vmem:[%s2524 + $0x40] sm:$0xff]
          %v2534 = vld [vmem:[%s2524 + $0x48] sm:$0xff]
          %v2535 = vld [vmem:[%s2524 + $0x50] sm:$0xff]
          %v2536 = vld [vmem:[%s2524 + $0x58] sm:$0xff]
          %v2537 = vld [vmem:[%s2524 + $0x60] sm:$0xff]
          %v2538 = vld [vmem:[%s2524 + $0x68] sm:$0xff]
          %v2539 = vld [vmem:[%s2524 + $0x70] sm:$0xff]
          %v2540 = vld [vmem:[%s2524 + $0x78] sm:$0xff]
          %2541 = vmatpush.msra.mxu0 %v2540
          %2542 = vmatpush.msra.mxu0 %v2539
          %2543 = vmatpush.msra.mxu0 %v2538
          %2544 = vmatpush.msra.mxu0 %v2537
          %2545 = vmatpush.msra.mxu0 %v2536
          %2546 = vmatpush.msra.mxu0 %v2535
          %2547 = vmatpush.msra.mxu0 %v2534
          %2548 = vmatpush.msra.mxu0 %v2533
          %2549 = vmatpush.msra.mxu0 %v2532
          %2550 = vmatpush.msra.mxu0 %v2531
          %2551 = vmatpush.msra.mxu0 %v2530
          %2552 = vmatpush.msra.mxu0 %v2529
          %2553 = vmatpush.msra.mxu0 %v2528
          %2554 = vmatpush.msra.mxu0 %v2527
          %2555 = vmatpush.msra.mxu0 %v2526
          %2556 = vmatpush.msra.mxu0 %v2525
          %2557 = vmatmul.f32.gmra.mxu0 %v2521
          %v2558 = vpop.f32.mrf.mxu0
          %v2559 = vadd.f32 0.0, %v2558
          %2560 = vmatmul.f32.gmra.mxu0 %v2522
          %v2561 = vpop.f32.mrf.mxu0
          %v2562 = vadd.f32 0.0, %v2561
          %2563 = vmatmul.f32.gmra.mxu0 %v2523
          %v2564 = vpop.f32.mrf.mxu0
          %v2565 = vadd.f32 0.0, %v2564
          %2566 = vdwg.mxu0
          %v2567 = vadd.f32 %v2516, %v2559
          %v2568 = vadd.f32 %v2517, %v2562
          %v2569 = vadd.f32 %v2518, %v2565
          %v2570 = vld [vmem:[%s2469 + $0x1] sm:$0xff]
          %v2571 = vld [vmem:[%s2469 + $0x9] sm:$0xff]
          %v2572 = vld [vmem:[%s2469 + $0x11] sm:$0xf]
          %s2573 = scalar_lea.vmem %s3, 1792
          %v2574 = vld [vmem:[%s2573] sm:$0xff]
          %v2575 = vld [vmem:[%s2573 + $0x8] sm:$0xff]
          %v2576 = vld [vmem:[%s2573 + $0x10] sm:$0xff]
          %v2577 = vld [vmem:[%s2573 + $0x18] sm:$0xff]
          %v2578 = vld [vmem:[%s2573 + $0x20] sm:$0xff]
          %v2579 = vld [vmem:[%s2573 + $0x28] sm:$0xff]
          %v2580 = vld [vmem:[%s2573 + $0x30] sm:$0xff]
          %v2581 = vld [vmem:[%s2573 + $0x38] sm:$0xff]
          %v2582 = vld [vmem:[%s2573 + $0x40] sm:$0xff]
          %v2583 = vld [vmem:[%s2573 + $0x48] sm:$0xff]
          %v2584 = vld [vmem:[%s2573 + $0x50] sm:$0xff]
          %v2585 = vld [vmem:[%s2573 + $0x58] sm:$0xff]
          %v2586 = vld [vmem:[%s2573 + $0x60] sm:$0xff]
          %v2587 = vld [vmem:[%s2573 + $0x68] sm:$0xff]
          %v2588 = vld [vmem:[%s2573 + $0x70] sm:$0xff]
          %v2589 = vld [vmem:[%s2573 + $0x78] sm:$0xff]
          %2590 = vmatpush.msra.mxu0 %v2589
          %2591 = vmatpush.msra.mxu0 %v2588
          %2592 = vmatpush.msra.mxu0 %v2587
          %2593 = vmatpush.msra.mxu0 %v2586
          %2594 = vmatpush.msra.mxu0 %v2585
          %2595 = vmatpush.msra.mxu0 %v2584
          %2596 = vmatpush.msra.mxu0 %v2583
          %2597 = vmatpush.msra.mxu0 %v2582
          %2598 = vmatpush.msra.mxu0 %v2581
          %2599 = vmatpush.msra.mxu0 %v2580
          %2600 = vmatpush.msra.mxu0 %v2579
          %2601 = vmatpush.msra.mxu0 %v2578
          %2602 = vmatpush.msra.mxu0 %v2577
          %2603 = vmatpush.msra.mxu0 %v2576
          %2604 = vmatpush.msra.mxu0 %v2575
          %2605 = vmatpush.msra.mxu0 %v2574
          %2606 = vmatmul.f32.gmra.mxu0 %v2570
          %v2607 = vpop.f32.mrf.mxu0
          %v2608 = vadd.f32 0.0, %v2607
          %2609 = vmatmul.f32.gmra.mxu0 %v2571
          %v2610 = vpop.f32.mrf.mxu0
          %v2611 = vadd.f32 0.0, %v2610
          %2612 = vmatmul.f32.gmra.mxu0 %v2572
          %v2613 = vpop.f32.mrf.mxu0
          %v2614 = vadd.f32 0.0, %v2613
          %2615 = vdwg.mxu0
          %v2616 = vadd.f32 %v2567, %v2608
          %v2617 = vadd.f32 %v2568, %v2611
          %v2618 = vadd.f32 %v2569, %v2614
          %v2619 = vld [vmem:[%s2520 + $0x1] sm:$0xff]
          %v2620 = vld [vmem:[%s2520 + $0x9] sm:$0xff]
          %v2621 = vld [vmem:[%s2520 + $0x11] sm:$0xf]
          %s2622 = scalar_lea.vmem %s3, 1920
          %v2623 = vld [vmem:[%s2622] sm:$0xff]
          %v2624 = vld [vmem:[%s2622 + $0x8] sm:$0xff]
          %v2625 = vld [vmem:[%s2622 + $0x10] sm:$0xff]
          %v2626 = vld [vmem:[%s2622 + $0x18] sm:$0xff]
          %v2627 = vld [vmem:[%s2622 + $0x20] sm:$0xff]
          %v2628 = vld [vmem:[%s2622 + $0x28] sm:$0xff]
          %v2629 = vld [vmem:[%s2622 + $0x30] sm:$0xff]
          %v2630 = vld [vmem:[%s2622 + $0x38] sm:$0xff]
          %v2631 = vld [vmem:[%s2622 + $0x40] sm:$0xff]
          %v2632 = vld [vmem:[%s2622 + $0x48] sm:$0xff]
          %v2633 = vld [vmem:[%s2622 + $0x50] sm:$0xff]
          %v2634 = vld [vmem:[%s2622 + $0x58] sm:$0xff]
          %v2635 = vld [vmem:[%s2622 + $0x60] sm:$0xff]
          %v2636 = vld [vmem:[%s2622 + $0x68] sm:$0xff]
          %v2637 = vld [vmem:[%s2622 + $0x70] sm:$0xff]
          %v2638 = vld [vmem:[%s2622 + $0x78] sm:$0xff]
          %2639 = vmatpush.msra.mxu0 %v2638
          %2640 = vmatpush.msra.mxu0 %v2637
          %2641 = vmatpush.msra.mxu0 %v2636
          %2642 = vmatpush.msra.mxu0 %v2635
          %2643 = vmatpush.msra.mxu0 %v2634
          %2644 = vmatpush.msra.mxu0 %v2633
          %2645 = vmatpush.msra.mxu0 %v2632
          %2646 = vmatpush.msra.mxu0 %v2631
          %2647 = vmatpush.msra.mxu0 %v2630
          %2648 = vmatpush.msra.mxu0 %v2629
          %2649 = vmatpush.msra.mxu0 %v2628
          %2650 = vmatpush.msra.mxu0 %v2627
          %2651 = vmatpush.msra.mxu0 %v2626
          %2652 = vmatpush.msra.mxu0 %v2625
          %2653 = vmatpush.msra.mxu0 %v2624
          %2654 = vmatpush.msra.mxu0 %v2623
          %2655 = vmatmul.f32.gmra.mxu0 %v2619
          %v2656 = vpop.f32.mrf.mxu0
          %v2657 = vadd.f32 0.0, %v2656
          %2658 = vmatmul.f32.gmra.mxu0 %v2620
          %v2659 = vpop.f32.mrf.mxu0
          %v2660 = vadd.f32 0.0, %v2659
          %2661 = vmatmul.f32.gmra.mxu0 %v2621
          %v2662 = vpop.f32.mrf.mxu0
          %v2663 = vadd.f32 0.0, %v2662
          %2664 = vdwg.mxu0
          %v2665 = vadd.f32 %v2616, %v2657
          %v2666 = vadd.f32 %v2617, %v2660
          %v2667 = vadd.f32 %v2618, %v2663
          %v2669 = vperm.slane %v1864, 0
          %v2671 = vadd.f32 %v2665, %v2669
          %v2672 = vadd.f32 %v2666, %v2669
          %v2673 = vadd.f32 %v2667, %v2669
          %v2674 = vmax.f32 %v2671, 0.0
          %v2675 = vmax.f32 %v2672, 0.0
          %v2676 = vmax.f32 %v2673, 0.0
          %vm2677 = vcmask 162816
          %v2679 = vsel %vm2677, %v656, 0
          %v2682 = vsel %vm2677, %v657, 0
          %vm2684 = vcmask 1043456
          %v2686 = vsel %vm2684, %v2676, 0
          %2688 = vmatpush.msra.mxu0 0.0
          %2689 = vmatpush.msra.mxu0 0.0
          %2690 = vmatpush.msra.mxu0 0.0
          %2691 = vmatpush.msra.mxu0 0.0
          %2692 = vmatpush.msra.mxu0 0.0
          %2693 = vmatpush.msra.mxu0 0.0
          %2694 = vmatpush.msra.mxu0 0.0
          %2695 = vmatpush.msra.mxu0 0.0
          %2696 = vmatpush.msra.mxu0 0.0
          %2697 = vmatpush.msra.mxu0 0.0
          %2698 = vmatpush.msra.mxu0 0.0
          %2699 = vmatpush.msra.mxu0 0.0
          %2700 = vmatpush.msra.mxu0 0.0
          %2701 = vmatpush.msra.mxu0 %v2686
          %2702 = vmatpush.msra.mxu0 %v2675
          %2703 = vmatpush.msra.mxu0 %v2674
          %2704 = vmatmul.f32.gmra.mxu0 %v2679
          %v2705 = vpop.f32.mrf.mxu0
          %v2706 = vadd.f32 0.0, %v2705
          %2707 = vmatmul.f32.gmra.mxu0 %v2682
          %v2708 = vpop.f32.mrf.mxu0
          %v2709 = vadd.f32 0.0, %v2708
          %2710 = vdwg.mxu0
          %v2712 = vsel %vm2677, %v668, 0
          %v2715 = vsel %vm2677, %v669, 0
          %2717 = vmatpush.msra.mxu0 0.0
          %2718 = vmatpush.msra.mxu0 0.0
          %2719 = vmatpush.msra.mxu0 0.0
          %2720 = vmatpush.msra.mxu0 0.0
          %2721 = vmatpush.msra.mxu0 0.0
          %2722 = vmatpush.msra.mxu0 0.0
          %2723 = vmatpush.msra.mxu0 0.0
          %2724 = vmatpush.msra.mxu0 0.0
          %2725 = vmatpush.msra.mxu0 0.0
          %2726 = vmatpush.msra.mxu0 0.0
          %2727 = vmatpush.msra.mxu0 0.0
          %2728 = vmatpush.msra.mxu0 0.0
          %2729 = vmatpush.msra.mxu0 0.0
          %2730 = vmatpush.msra.mxu0 %v2686
          %2731 = vmatpush.msra.mxu0 %v2675
          %2732 = vmatpush.msra.mxu0 %v2674
          %2733 = vmatmul.f32.gmra.mxu0 %v2712
          %v2734 = vpop.f32.mrf.mxu0
          %v2735 = vadd.f32 0.0, %v2734
          %2736 = vmatmul.f32.gmra.mxu0 %v2715
          %v2737 = vpop.f32.mrf.mxu0
          %v2738 = vadd.f32 0.0, %v2737
          %2739 = vdwg.mxu0
          %s2740 = sadd.s32 %s1866, 1
          %s2741 = smul.u32 %s2740, 32
          %s2742 = sadd.s32 16, %s2741
          %s2743 = scalar_lea.vmem [#allocation3], %s2742
          %2744 = vst [vmem:[%s2743] sm:$0xff] %v2706
          %2745 = vst [vmem:[%s2743 + $0x8] sm:$0x3] %v2709
          %s2746 = scalar_lea.vmem [#allocation3], %s2741
          %2747 = vst [vmem:[%s2746 + $0x1] sm:$0xff] %v2735
          %2748 = vst [vmem:[%s2746 + $0x9] sm:$0x3] %v2738
        $region76: #{dp2_forward.1} parent=63 // loop_footer
          %s1870 = sadd.s32 1, %s1866
        $region77: #{dp2_forward.1} parent=63 // loop_footer_branch
          %1865 = sbr.rel target = $region73
        $region78: #{dp2_forward.1} parent=63 // loop_exit
          _
        %2749 = vst [vmem:[#allocation4] sm:$0x3f] 0.0
        %2750 = vst [vmem:[#allocation4 + $0x8] sm:$0x3f] 0.0
        %2751 = vst [vmem:[#allocation4 + $0x10] sm:$0x3f] 0.0
        %2752 = vst [vmem:[#allocation4 + $0x18] sm:$0x3f] 0.0
        %2753 = vst [vmem:[#allocation4 + $0x20] sm:$0x3f] 0.0
        %2754 = vst [vmem:[#allocation4 + $0x28] sm:$0x3f] 0.0
        %2755 = vst [vmem:[#allocation4 + $0x30] sm:$0x3f] 0.0
        %2756 = vst [vmem:[#allocation4 + $0x38] sm:$0x3f] 0.0
        %2757 = vst [vmem:[#allocation4 + $0x40] sm:$0x3f] 0.0
        %2758 = vst [vmem:[#allocation4 + $0x48] sm:$0x3f] 0.0
        %2759 = vst [vmem:[#allocation4 + $0x50] sm:$0x3f] 0.0
        %2760 = vst [vmem:[#allocation4 + $0x58] sm:$0x3f] 0.0
        %2761 = vst [vmem:[#allocation4 + $0x60] sm:$0x3f] 0.0
        %2762 = vst [vmem:[#allocation4 + $0x68] sm:$0x3f] 0.0
        %2763 = vst [vmem:[#allocation4 + $0x70] sm:$0x3f] 0.0
        %2764 = vst [vmem:[#allocation4 + $0x78] sm:$0x3f] 0.0
        %2765 = vst [vmem:[#allocation4 + $0x80] sm:$0x3f] 0.0
        %2766 = vst [vmem:[#allocation4 + $0x88] sm:$0x3f] 0.0
        %2767 = vst [vmem:[#allocation4 + $0x90] sm:$0x3f] 0.0
        %2768 = vst [vmem:[#allocation4 + $0x98] sm:$0x3f] 0.0
        %2769 = vst [vmem:[#allocation4 + $0xa0] sm:$0x3f] 0.0
        %2770 = vst [vmem:[#allocation4 + $0xa8] sm:$0x3f] 0.0
        %2771 = vst [vmem:[#allocation4 + $0xb0] sm:$0x3f] 0.0
        %2772 = vst [vmem:[#allocation4 + $0xb8] sm:$0x3f] 0.0
        %v2773 = vld [vmem:[%s6] sm:$0x1]
        loop: start=0, step=1, limit=10
        $region79: #{dp2_forward.1} parent=63 // loop_pre_header
          _
        $region80: #{dp2_forward.1} parent=63 // loop_header
          %s2775 = sphi 0, %s2779
          %p2776 = scmp.ge.s32.totalorder %s2775, 10
        $region81: #{dp2_forward.1} parent=63 // loop_header_branch
          %2778 = sbr.rel (%p2776) target = $region85
        $region82: #{dp2_forward.1} parent=63 // loop_body
          %s2780 = smul.u32 %s2775, 2
          %s2781 = smul.u32 %s2780, 32
          %s2782 = scalar_lea.vmem [#allocation3], %s2781
          %v2783 = vld [vmem:[%s2782] sm:$0xff]
          %v2784 = vld [vmem:[%s2782 + $0x8] sm:$0x3]
          %v2785 = vld [vmem:[%s5] sm:$0xff]
          %v2786 = vld [vmem:[%s5 + $0x8] sm:$0xff]
          %v2787 = vld [vmem:[%s5 + $0x10] sm:$0xff]
          %v2788 = vld [vmem:[%s5 + $0x18] sm:$0xff]
          %v2789 = vld [vmem:[%s5 + $0x20] sm:$0xff]
          %v2790 = vld [vmem:[%s5 + $0x28] sm:$0xff]
          %v2791 = vld [vmem:[%s5 + $0x30] sm:$0xff]
          %v2792 = vld [vmem:[%s5 + $0x38] sm:$0xff]
          %v2793 = vld [vmem:[%s5 + $0x40] sm:$0xff]
          %v2794 = vld [vmem:[%s5 + $0x48] sm:$0xff]
          %v2795 = vld [vmem:[%s5 + $0x50] sm:$0xff]
          %v2796 = vld [vmem:[%s5 + $0x58] sm:$0xff]
          %v2797 = vld [vmem:[%s5 + $0x60] sm:$0xff]
          %v2798 = vld [vmem:[%s5 + $0x68] sm:$0xff]
          %v2799 = vld [vmem:[%s5 + $0x70] sm:$0xff]
          %v2800 = vld [vmem:[%s5 + $0x78] sm:$0xff]
          %s2801 = sadd.s32 16, %s2781
          %s2802 = scalar_lea.vmem [#allocation3], %s2801
          %v2803 = vld [vmem:[%s2802] sm:$0xff]
          %v2804 = vld [vmem:[%s2802 + $0x8] sm:$0x3]
          %s2805 = scalar_lea.vmem %s5, 128
          %v2806 = vld [vmem:[%s2805] sm:$0xff]
          %v2807 = vld [vmem:[%s2805 + $0x8] sm:$0xff]
          %v2808 = vld [vmem:[%s2805 + $0x10] sm:$0xff]
          %v2809 = vld [vmem:[%s2805 + $0x18] sm:$0xff]
          %v2810 = vld [vmem:[%s2805 + $0x20] sm:$0xff]
          %v2811 = vld [vmem:[%s2805 + $0x28] sm:$0xff]
          %v2812 = vld [vmem:[%s2805 + $0x30] sm:$0xff]
          %v2813 = vld [vmem:[%s2805 + $0x38] sm:$0xff]
          %v2814 = vld [vmem:[%s2805 + $0x40] sm:$0xff]
          %v2815 = vld [vmem:[%s2805 + $0x48] sm:$0xff]
          %v2816 = vld [vmem:[%s2805 + $0x50] sm:$0xff]
          %v2817 = vld [vmem:[%s2805 + $0x58] sm:$0xff]
          %v2818 = vld [vmem:[%s2805 + $0x60] sm:$0xff]
          %v2819 = vld [vmem:[%s2805 + $0x68] sm:$0xff]
          %v2820 = vld [vmem:[%s2805 + $0x70] sm:$0xff]
          %v2821 = vld [vmem:[%s2805 + $0x78] sm:$0xff]
          %2822 = vmatpush.msra.mxu0 %v2821
          %2823 = vmatpush.msra.mxu0 %v2820
          %2824 = vmatpush.msra.mxu0 %v2819
          %2825 = vmatpush.msra.mxu0 %v2818
          %2826 = vmatpush.msra.mxu0 %v2817
          %2827 = vmatpush.msra.mxu0 %v2816
          %2828 = vmatpush.msra.mxu0 %v2815
          %2829 = vmatpush.msra.mxu0 %v2814
          %2830 = vmatpush.msra.mxu0 %v2813
          %2831 = vmatpush.msra.mxu0 %v2812
          %2832 = vmatpush.msra.mxu0 %v2811
          %2833 = vmatpush.msra.mxu0 %v2810
          %2834 = vmatpush.msra.mxu0 %v2809
          %2835 = vmatpush.msra.mxu0 %v2808
          %2836 = vmatpush.msra.mxu0 %v2807
          %2837 = vmatpush.msra.mxu0 %v2806
          %2838 = vmatmul.f32.gmra.mxu0 %v2803
          %v2839 = vpop.f32.mrf.mxu0
          %v2840 = vadd.f32 0.0, %v2839
          %2841 = vmatmul.f32.gmra.mxu0 %v2804
          %v2842 = vpop.f32.mrf.mxu0
          %v2843 = vadd.f32 0.0, %v2842
          %2844 = vdwg.mxu0
          %2845 = vmatpush.msra.mxu0 %v2800
          %2846 = vmatpush.msra.mxu0 %v2799
          %2847 = vmatpush.msra.mxu0 %v2798
          %2848 = vmatpush.msra.mxu0 %v2797
          %2849 = vmatpush.msra.mxu0 %v2796
          %2850 = vmatpush.msra.mxu0 %v2795
          %2851 = vmatpush.msra.mxu0 %v2794
          %2852 = vmatpush.msra.mxu0 %v2793
          %2853 = vmatpush.msra.mxu0 %v2792
          %2854 = vmatpush.msra.mxu0 %v2791
          %2855 = vmatpush.msra.mxu0 %v2790
          %2856 = vmatpush.msra.mxu0 %v2789
          %2857 = vmatpush.msra.mxu0 %v2788
          %2858 = vmatpush.msra.mxu0 %v2787
          %2859 = vmatpush.msra.mxu0 %v2786
          %2860 = vmatpush.msra.mxu0 %v2785
          %2861 = vmatmul.f32.gmra.mxu0 %v2783
          %v2862 = vpop.f32.mrf.mxu0
          %v2863 = vadd.f32 %v2840, %v2862
          %2864 = vmatmul.f32.gmra.mxu0 %v2784
          %v2865 = vpop.f32.mrf.mxu0
          %v2866 = vadd.f32 %v2843, %v2865
          %2867 = vdwg.mxu0
          %v2868 = vld [vmem:[%s2782 + $0x1] sm:$0xff]
          %v2869 = vld [vmem:[%s2782 + $0x9] sm:$0x3]
          %s2870 = scalar_lea.vmem %s5, 256
          %v2871 = vld [vmem:[%s2870] sm:$0xff]
          %v2872 = vld [vmem:[%s2870 + $0x8] sm:$0xff]
          %v2873 = vld [vmem:[%s2870 + $0x10] sm:$0xff]
          %v2874 = vld [vmem:[%s2870 + $0x18] sm:$0xff]
          %v2875 = vld [vmem:[%s2870 + $0x20] sm:$0xff]
          %v2876 = vld [vmem:[%s2870 + $0x28] sm:$0xff]
          %v2877 = vld [vmem:[%s2870 + $0x30] sm:$0xff]
          %v2878 = vld [vmem:[%s2870 + $0x38] sm:$0xff]
          %v2879 = vld [vmem:[%s2870 + $0x40] sm:$0xff]
          %v2880 = vld [vmem:[%s2870 + $0x48] sm:$0xff]
          %v2881 = vld [vmem:[%s2870 + $0x50] sm:$0xff]
          %v2882 = vld [vmem:[%s2870 + $0x58] sm:$0xff]
          %v2883 = vld [vmem:[%s2870 + $0x60] sm:$0xff]
          %v2884 = vld [vmem:[%s2870 + $0x68] sm:$0xff]
          %v2885 = vld [vmem:[%s2870 + $0x70] sm:$0xff]
          %v2886 = vld [vmem:[%s2870 + $0x78] sm:$0xff]
          %2887 = vmatpush.msra.mxu0 %v2886
          %2888 = vmatpush.msra.mxu0 %v2885
          %2889 = vmatpush.msra.mxu0 %v2884
          %2890 = vmatpush.msra.mxu0 %v2883
          %2891 = vmatpush.msra.mxu0 %v2882
          %2892 = vmatpush.msra.mxu0 %v2881
          %2893 = vmatpush.msra.mxu0 %v2880
          %2894 = vmatpush.msra.mxu0 %v2879
          %2895 = vmatpush.msra.mxu0 %v2878
          %2896 = vmatpush.msra.mxu0 %v2877
          %2897 = vmatpush.msra.mxu0 %v2876
          %2898 = vmatpush.msra.mxu0 %v2875
          %2899 = vmatpush.msra.mxu0 %v2874
          %2900 = vmatpush.msra.mxu0 %v2873
          %2901 = vmatpush.msra.mxu0 %v2872
          %2902 = vmatpush.msra.mxu0 %v2871
          %2903 = vmatmul.f32.gmra.mxu0 %v2868
          %v2904 = vpop.f32.mrf.mxu0
          %v2905 = vadd.f32 0.0, %v2904
          %2906 = vmatmul.f32.gmra.mxu0 %v2869
          %v2907 = vpop.f32.mrf.mxu0
          %v2908 = vadd.f32 0.0, %v2907
          %2909 = vdwg.mxu0
          %v2910 = vadd.f32 %v2863, %v2905
          %v2911 = vadd.f32 %v2866, %v2908
          %v2912 = vld [vmem:[%s2802 + $0x1] sm:$0xff]
          %v2913 = vld [vmem:[%s2802 + $0x9] sm:$0x3]
          %s2914 = scalar_lea.vmem %s5, 384
          %v2915 = vld [vmem:[%s2914] sm:$0xff]
          %v2916 = vld [vmem:[%s2914 + $0x8] sm:$0xff]
          %v2917 = vld [vmem:[%s2914 + $0x10] sm:$0xff]
          %v2918 = vld [vmem:[%s2914 + $0x18] sm:$0xff]
          %v2919 = vld [vmem:[%s2914 + $0x20] sm:$0xff]
          %v2920 = vld [vmem:[%s2914 + $0x28] sm:$0xff]
          %v2921 = vld [vmem:[%s2914 + $0x30] sm:$0xff]
          %v2922 = vld [vmem:[%s2914 + $0x38] sm:$0xff]
          %v2923 = vld [vmem:[%s2914 + $0x40] sm:$0xff]
          %v2924 = vld [vmem:[%s2914 + $0x48] sm:$0xff]
          %v2925 = vld [vmem:[%s2914 + $0x50] sm:$0xff]
          %v2926 = vld [vmem:[%s2914 + $0x58] sm:$0xff]
          %v2927 = vld [vmem:[%s2914 + $0x60] sm:$0xff]
          %v2928 = vld [vmem:[%s2914 + $0x68] sm:$0xff]
          %v2929 = vld [vmem:[%s2914 + $0x70] sm:$0xff]
          %v2930 = vld [vmem:[%s2914 + $0x78] sm:$0xff]
          %2931 = vmatpush.msra.mxu0 %v2930
          %2932 = vmatpush.msra.mxu0 %v2929
          %2933 = vmatpush.msra.mxu0 %v2928
          %2934 = vmatpush.msra.mxu0 %v2927
          %2935 = vmatpush.msra.mxu0 %v2926
          %2936 = vmatpush.msra.mxu0 %v2925
          %2937 = vmatpush.msra.mxu0 %v2924
          %2938 = vmatpush.msra.mxu0 %v2923
          %2939 = vmatpush.msra.mxu0 %v2922
          %2940 = vmatpush.msra.mxu0 %v2921
          %2941 = vmatpush.msra.mxu0 %v2920
          %2942 = vmatpush.msra.mxu0 %v2919
          %2943 = vmatpush.msra.mxu0 %v2918
          %2944 = vmatpush.msra.mxu0 %v2917
          %2945 = vmatpush.msra.mxu0 %v2916
          %2946 = vmatpush.msra.mxu0 %v2915
          %2947 = vmatmul.f32.gmra.mxu0 %v2912
          %v2948 = vpop.f32.mrf.mxu0
          %v2949 = vadd.f32 0.0, %v2948
          %2950 = vmatmul.f32.gmra.mxu0 %v2913
          %v2951 = vpop.f32.mrf.mxu0
          %v2952 = vadd.f32 0.0, %v2951
          %2953 = vdwg.mxu0
          %v2954 = vadd.f32 %v2910, %v2949
          %v2955 = vadd.f32 %v2911, %v2952
          %s2956 = sadd.s32 %s2780, 1
          %s2957 = smul.u32 %s2956, 32
          %s2958 = scalar_lea.vmem [#allocation3], %s2957
          %v2959 = vld [vmem:[%s2958] sm:$0xff]
          %v2960 = vld [vmem:[%s2958 + $0x8] sm:$0x3]
          %s2961 = scalar_lea.vmem %s5, 512
          %v2962 = vld [vmem:[%s2961] sm:$0xff]
          %v2963 = vld [vmem:[%s2961 + $0x8] sm:$0xff]
          %v2964 = vld [vmem:[%s2961 + $0x10] sm:$0xff]
          %v2965 = vld [vmem:[%s2961 + $0x18] sm:$0xff]
          %v2966 = vld [vmem:[%s2961 + $0x20] sm:$0xff]
          %v2967 = vld [vmem:[%s2961 + $0x28] sm:$0xff]
          %v2968 = vld [vmem:[%s2961 + $0x30] sm:$0xff]
          %v2969 = vld [vmem:[%s2961 + $0x38] sm:$0xff]
          %v2970 = vld [vmem:[%s2961 + $0x40] sm:$0xff]
          %v2971 = vld [vmem:[%s2961 + $0x48] sm:$0xff]
          %v2972 = vld [vmem:[%s2961 + $0x50] sm:$0xff]
          %v2973 = vld [vmem:[%s2961 + $0x58] sm:$0xff]
          %v2974 = vld [vmem:[%s2961 + $0x60] sm:$0xff]
          %v2975 = vld [vmem:[%s2961 + $0x68] sm:$0xff]
          %v2976 = vld [vmem:[%s2961 + $0x70] sm:$0xff]
          %v2977 = vld [vmem:[%s2961 + $0x78] sm:$0xff]
          %2978 = vmatpush.msra.mxu0 %v2977
          %2979 = vmatpush.msra.mxu0 %v2976
          %2980 = vmatpush.msra.mxu0 %v2975
          %2981 = vmatpush.msra.mxu0 %v2974
          %2982 = vmatpush.msra.mxu0 %v2973
          %2983 = vmatpush.msra.mxu0 %v2972
          %2984 = vmatpush.msra.mxu0 %v2971
          %2985 = vmatpush.msra.mxu0 %v2970
          %2986 = vmatpush.msra.mxu0 %v2969
          %2987 = vmatpush.msra.mxu0 %v2968
          %2988 = vmatpush.msra.mxu0 %v2967
          %2989 = vmatpush.msra.mxu0 %v2966
          %2990 = vmatpush.msra.mxu0 %v2965
          %2991 = vmatpush.msra.mxu0 %v2964
          %2992 = vmatpush.msra.mxu0 %v2963
          %2993 = vmatpush.msra.mxu0 %v2962
          %2994 = vmatmul.f32.gmra.mxu0 %v2959
          %v2995 = vpop.f32.mrf.mxu0
          %v2996 = vadd.f32 0.0, %v2995
          %2997 = vmatmul.f32.gmra.mxu0 %v2960
          %v2998 = vpop.f32.mrf.mxu0
          %v2999 = vadd.f32 0.0, %v2998
          %3000 = vdwg.mxu0
          %v3001 = vadd.f32 %v2954, %v2996
          %v3002 = vadd.f32 %v2955, %v2999
          %s3003 = sadd.s32 16, %s2957
          %s3004 = scalar_lea.vmem [#allocation3], %s3003
          %v3005 = vld [vmem:[%s3004] sm:$0xff]
          %v3006 = vld [vmem:[%s3004 + $0x8] sm:$0x3]
          %s3007 = scalar_lea.vmem %s5, 640
          %v3008 = vld [vmem:[%s3007] sm:$0xff]
          %v3009 = vld [vmem:[%s3007 + $0x8] sm:$0xff]
          %v3010 = vld [vmem:[%s3007 + $0x10] sm:$0xff]
          %v3011 = vld [vmem:[%s3007 + $0x18] sm:$0xff]
          %v3012 = vld [vmem:[%s3007 + $0x20] sm:$0xff]
          %v3013 = vld [vmem:[%s3007 + $0x28] sm:$0xff]
          %v3014 = vld [vmem:[%s3007 + $0x30] sm:$0xff]
          %v3015 = vld [vmem:[%s3007 + $0x38] sm:$0xff]
          %v3016 = vld [vmem:[%s3007 + $0x40] sm:$0xff]
          %v3017 = vld [vmem:[%s3007 + $0x48] sm:$0xff]
          %v3018 = vld [vmem:[%s3007 + $0x50] sm:$0xff]
          %v3019 = vld [vmem:[%s3007 + $0x58] sm:$0xff]
          %v3020 = vld [vmem:[%s3007 + $0x60] sm:$0xff]
          %v3021 = vld [vmem:[%s3007 + $0x68] sm:$0xff]
          %v3022 = vld [vmem:[%s3007 + $0x70] sm:$0xff]
          %v3023 = vld [vmem:[%s3007 + $0x78] sm:$0xff]
          %3024 = vmatpush.msra.mxu0 %v3023
          %3025 = vmatpush.msra.mxu0 %v3022
          %3026 = vmatpush.msra.mxu0 %v3021
          %3027 = vmatpush.msra.mxu0 %v3020
          %3028 = vmatpush.msra.mxu0 %v3019
          %3029 = vmatpush.msra.mxu0 %v3018
          %3030 = vmatpush.msra.mxu0 %v3017
          %3031 = vmatpush.msra.mxu0 %v3016
          %3032 = vmatpush.msra.mxu0 %v3015
          %3033 = vmatpush.msra.mxu0 %v3014
          %3034 = vmatpush.msra.mxu0 %v3013
          %3035 = vmatpush.msra.mxu0 %v3012
          %3036 = vmatpush.msra.mxu0 %v3011
          %3037 = vmatpush.msra.mxu0 %v3010
          %3038 = vmatpush.msra.mxu0 %v3009
          %3039 = vmatpush.msra.mxu0 %v3008
          %3040 = vmatmul.f32.gmra.mxu0 %v3005
          %v3041 = vpop.f32.mrf.mxu0
          %v3042 = vadd.f32 0.0, %v3041
          %3043 = vmatmul.f32.gmra.mxu0 %v3006
          %v3044 = vpop.f32.mrf.mxu0
          %v3045 = vadd.f32 0.0, %v3044
          %3046 = vdwg.mxu0
          %v3047 = vadd.f32 %v3001, %v3042
          %v3048 = vadd.f32 %v3002, %v3045
          %v3049 = vld [vmem:[%s2958 + $0x1] sm:$0xff]
          %v3050 = vld [vmem:[%s2958 + $0x9] sm:$0x3]
          %s3051 = scalar_lea.vmem %s5, 768
          %v3052 = vld [vmem:[%s3051] sm:$0xff]
          %v3053 = vld [vmem:[%s3051 + $0x8] sm:$0xff]
          %v3054 = vld [vmem:[%s3051 + $0x10] sm:$0xff]
          %v3055 = vld [vmem:[%s3051 + $0x18] sm:$0xff]
          %v3056 = vld [vmem:[%s3051 + $0x20] sm:$0xff]
          %v3057 = vld [vmem:[%s3051 + $0x28] sm:$0xff]
          %v3058 = vld [vmem:[%s3051 + $0x30] sm:$0xff]
          %v3059 = vld [vmem:[%s3051 + $0x38] sm:$0xff]
          %v3060 = vld [vmem:[%s3051 + $0x40] sm:$0xff]
          %v3061 = vld [vmem:[%s3051 + $0x48] sm:$0xff]
          %v3062 = vld [vmem:[%s3051 + $0x50] sm:$0xff]
          %v3063 = vld [vmem:[%s3051 + $0x58] sm:$0xff]
          %v3064 = vld [vmem:[%s3051 + $0x60] sm:$0xff]
          %v3065 = vld [vmem:[%s3051 + $0x68] sm:$0xff]
          %v3066 = vld [vmem:[%s3051 + $0x70] sm:$0xff]
          %v3067 = vld [vmem:[%s3051 + $0x78] sm:$0xff]
          %3068 = vmatpush.msra.mxu0 %v3067
          %3069 = vmatpush.msra.mxu0 %v3066
          %3070 = vmatpush.msra.mxu0 %v3065
          %3071 = vmatpush.msra.mxu0 %v3064
          %3072 = vmatpush.msra.mxu0 %v3063
          %3073 = vmatpush.msra.mxu0 %v3062
          %3074 = vmatpush.msra.mxu0 %v3061
          %3075 = vmatpush.msra.mxu0 %v3060
          %3076 = vmatpush.msra.mxu0 %v3059
          %3077 = vmatpush.msra.mxu0 %v3058
          %3078 = vmatpush.msra.mxu0 %v3057
          %3079 = vmatpush.msra.mxu0 %v3056
          %3080 = vmatpush.msra.mxu0 %v3055
          %3081 = vmatpush.msra.mxu0 %v3054
          %3082 = vmatpush.msra.mxu0 %v3053
          %3083 = vmatpush.msra.mxu0 %v3052
          %3084 = vmatmul.f32.gmra.mxu0 %v3049
          %v3085 = vpop.f32.mrf.mxu0
          %v3086 = vadd.f32 0.0, %v3085
          %3087 = vmatmul.f32.gmra.mxu0 %v3050
          %v3088 = vpop.f32.mrf.mxu0
          %v3089 = vadd.f32 0.0, %v3088
          %3090 = vdwg.mxu0
          %v3091 = vadd.f32 %v3047, %v3086
          %v3092 = vadd.f32 %v3048, %v3089
          %v3093 = vld [vmem:[%s3004 + $0x1] sm:$0xff]
          %v3094 = vld [vmem:[%s3004 + $0x9] sm:$0x3]
          %s3095 = scalar_lea.vmem %s5, 896
          %v3096 = vld [vmem:[%s3095] sm:$0xff]
          %v3097 = vld [vmem:[%s3095 + $0x8] sm:$0xff]
          %v3098 = vld [vmem:[%s3095 + $0x10] sm:$0xff]
          %v3099 = vld [vmem:[%s3095 + $0x18] sm:$0xff]
          %v3100 = vld [vmem:[%s3095 + $0x20] sm:$0xff]
          %v3101 = vld [vmem:[%s3095 + $0x28] sm:$0xff]
          %v3102 = vld [vmem:[%s3095 + $0x30] sm:$0xff]
          %v3103 = vld [vmem:[%s3095 + $0x38] sm:$0xff]
          %v3104 = vld [vmem:[%s3095 + $0x40] sm:$0xff]
          %v3105 = vld [vmem:[%s3095 + $0x48] sm:$0xff]
          %v3106 = vld [vmem:[%s3095 + $0x50] sm:$0xff]
          %v3107 = vld [vmem:[%s3095 + $0x58] sm:$0xff]
          %v3108 = vld [vmem:[%s3095 + $0x60] sm:$0xff]
          %v3109 = vld [vmem:[%s3095 + $0x68] sm:$0xff]
          %v3110 = vld [vmem:[%s3095 + $0x70] sm:$0xff]
          %v3111 = vld [vmem:[%s3095 + $0x78] sm:$0xff]
          %3112 = vmatpush.msra.mxu0 %v3111
          %3113 = vmatpush.msra.mxu0 %v3110
          %3114 = vmatpush.msra.mxu0 %v3109
          %3115 = vmatpush.msra.mxu0 %v3108
          %3116 = vmatpush.msra.mxu0 %v3107
          %3117 = vmatpush.msra.mxu0 %v3106
          %3118 = vmatpush.msra.mxu0 %v3105
          %3119 = vmatpush.msra.mxu0 %v3104
          %3120 = vmatpush.msra.mxu0 %v3103
          %3121 = vmatpush.msra.mxu0 %v3102
          %3122 = vmatpush.msra.mxu0 %v3101
          %3123 = vmatpush.msra.mxu0 %v3100
          %3124 = vmatpush.msra.mxu0 %v3099
          %3125 = vmatpush.msra.mxu0 %v3098
          %3126 = vmatpush.msra.mxu0 %v3097
          %3127 = vmatpush.msra.mxu0 %v3096
          %3128 = vmatmul.f32.gmra.mxu0 %v3093
          %v3129 = vpop.f32.mrf.mxu0
          %v3130 = vadd.f32 0.0, %v3129
          %3131 = vmatmul.f32.gmra.mxu0 %v3094
          %v3132 = vpop.f32.mrf.mxu0
          %v3133 = vadd.f32 0.0, %v3132
          %3134 = vdwg.mxu0
          %v3135 = vadd.f32 %v3091, %v3130
          %v3136 = vadd.f32 %v3092, %v3133
          %s3137 = sadd.s32 %s2780, 2
          %s3138 = smul.u32 %s3137, 32
          %s3139 = scalar_lea.vmem [#allocation3], %s3138
          %v3140 = vld [vmem:[%s3139] sm:$0xff]
          %v3141 = vld [vmem:[%s3139 + $0x8] sm:$0x3]
          %s3142 = scalar_lea.vmem %s5, 1024
          %v3143 = vld [vmem:[%s3142] sm:$0xff]
          %v3144 = vld [vmem:[%s3142 + $0x8] sm:$0xff]
          %v3145 = vld [vmem:[%s3142 + $0x10] sm:$0xff]
          %v3146 = vld [vmem:[%s3142 + $0x18] sm:$0xff]
          %v3147 = vld [vmem:[%s3142 + $0x20] sm:$0xff]
          %v3148 = vld [vmem:[%s3142 + $0x28] sm:$0xff]
          %v3149 = vld [vmem:[%s3142 + $0x30] sm:$0xff]
          %v3150 = vld [vmem:[%s3142 + $0x38] sm:$0xff]
          %v3151 = vld [vmem:[%s3142 + $0x40] sm:$0xff]
          %v3152 = vld [vmem:[%s3142 + $0x48] sm:$0xff]
          %v3153 = vld [vmem:[%s3142 + $0x50] sm:$0xff]
          %v3154 = vld [vmem:[%s3142 + $0x58] sm:$0xff]
          %v3155 = vld [vmem:[%s3142 + $0x60] sm:$0xff]
          %v3156 = vld [vmem:[%s3142 + $0x68] sm:$0xff]
          %v3157 = vld [vmem:[%s3142 + $0x70] sm:$0xff]
          %v3158 = vld [vmem:[%s3142 + $0x78] sm:$0xff]
          %3159 = vmatpush.msra.mxu0 %v3158
          %3160 = vmatpush.msra.mxu0 %v3157
          %3161 = vmatpush.msra.mxu0 %v3156
          %3162 = vmatpush.msra.mxu0 %v3155
          %3163 = vmatpush.msra.mxu0 %v3154
          %3164 = vmatpush.msra.mxu0 %v3153
          %3165 = vmatpush.msra.mxu0 %v3152
          %3166 = vmatpush.msra.mxu0 %v3151
          %3167 = vmatpush.msra.mxu0 %v3150
          %3168 = vmatpush.msra.mxu0 %v3149
          %3169 = vmatpush.msra.mxu0 %v3148
          %3170 = vmatpush.msra.mxu0 %v3147
          %3171 = vmatpush.msra.mxu0 %v3146
          %3172 = vmatpush.msra.mxu0 %v3145
          %3173 = vmatpush.msra.mxu0 %v3144
          %3174 = vmatpush.msra.mxu0 %v3143
          %3175 = vmatmul.f32.gmra.mxu0 %v3140
          %v3176 = vpop.f32.mrf.mxu0
          %v3177 = vadd.f32 0.0, %v3176
          %3178 = vmatmul.f32.gmra.mxu0 %v3141
          %v3179 = vpop.f32.mrf.mxu0
          %v3180 = vadd.f32 0.0, %v3179
          %3181 = vdwg.mxu0
          %v3182 = vadd.f32 %v3135, %v3177
          %v3183 = vadd.f32 %v3136, %v3180
          %s3184 = sadd.s32 16, %s3138
          %s3185 = scalar_lea.vmem [#allocation3], %s3184
          %v3186 = vld [vmem:[%s3185] sm:$0xff]
          %v3187 = vld [vmem:[%s3185 + $0x8] sm:$0x3]
          %s3188 = scalar_lea.vmem %s5, 1152
          %v3189 = vld [vmem:[%s3188] sm:$0xff]
          %v3190 = vld [vmem:[%s3188 + $0x8] sm:$0xff]
          %v3191 = vld [vmem:[%s3188 + $0x10] sm:$0xff]
          %v3192 = vld [vmem:[%s3188 + $0x18] sm:$0xff]
          %v3193 = vld [vmem:[%s3188 + $0x20] sm:$0xff]
          %v3194 = vld [vmem:[%s3188 + $0x28] sm:$0xff]
          %v3195 = vld [vmem:[%s3188 + $0x30] sm:$0xff]
          %v3196 = vld [vmem:[%s3188 + $0x38] sm:$0xff]
          %v3197 = vld [vmem:[%s3188 + $0x40] sm:$0xff]
          %v3198 = vld [vmem:[%s3188 + $0x48] sm:$0xff]
          %v3199 = vld [vmem:[%s3188 + $0x50] sm:$0xff]
          %v3200 = vld [vmem:[%s3188 + $0x58] sm:$0xff]
          %v3201 = vld [vmem:[%s3188 + $0x60] sm:$0xff]
          %v3202 = vld [vmem:[%s3188 + $0x68] sm:$0xff]
          %v3203 = vld [vmem:[%s3188 + $0x70] sm:$0xff]
          %v3204 = vld [vmem:[%s3188 + $0x78] sm:$0xff]
          %3205 = vmatpush.msra.mxu0 %v3204
          %3206 = vmatpush.msra.mxu0 %v3203
          %3207 = vmatpush.msra.mxu0 %v3202
          %3208 = vmatpush.msra.mxu0 %v3201
          %3209 = vmatpush.msra.mxu0 %v3200
          %3210 = vmatpush.msra.mxu0 %v3199
          %3211 = vmatpush.msra.mxu0 %v3198
          %3212 = vmatpush.msra.mxu0 %v3197
          %3213 = vmatpush.msra.mxu0 %v3196
          %3214 = vmatpush.msra.mxu0 %v3195
          %3215 = vmatpush.msra.mxu0 %v3194
          %3216 = vmatpush.msra.mxu0 %v3193
          %3217 = vmatpush.msra.mxu0 %v3192
          %3218 = vmatpush.msra.mxu0 %v3191
          %3219 = vmatpush.msra.mxu0 %v3190
          %3220 = vmatpush.msra.mxu0 %v3189
          %3221 = vmatmul.f32.gmra.mxu0 %v3186
          %v3222 = vpop.f32.mrf.mxu0
          %v3223 = vadd.f32 0.0, %v3222
          %3224 = vmatmul.f32.gmra.mxu0 %v3187
          %v3225 = vpop.f32.mrf.mxu0
          %v3226 = vadd.f32 0.0, %v3225
          %3227 = vdwg.mxu0
          %v3228 = vadd.f32 %v3182, %v3223
          %v3229 = vadd.f32 %v3183, %v3226
          %v3230 = vld [vmem:[%s3139 + $0x1] sm:$0xff]
          %v3231 = vld [vmem:[%s3139 + $0x9] sm:$0x3]
          %s3232 = scalar_lea.vmem %s5, 1280
          %v3233 = vld [vmem:[%s3232] sm:$0xff]
          %v3234 = vld [vmem:[%s3232 + $0x8] sm:$0xff]
          %v3235 = vld [vmem:[%s3232 + $0x10] sm:$0xff]
          %v3236 = vld [vmem:[%s3232 + $0x18] sm:$0xff]
          %v3237 = vld [vmem:[%s3232 + $0x20] sm:$0xff]
          %v3238 = vld [vmem:[%s3232 + $0x28] sm:$0xff]
          %v3239 = vld [vmem:[%s3232 + $0x30] sm:$0xff]
          %v3240 = vld [vmem:[%s3232 + $0x38] sm:$0xff]
          %v3241 = vld [vmem:[%s3232 + $0x40] sm:$0xff]
          %v3242 = vld [vmem:[%s3232 + $0x48] sm:$0xff]
          %v3243 = vld [vmem:[%s3232 + $0x50] sm:$0xff]
          %v3244 = vld [vmem:[%s3232 + $0x58] sm:$0xff]
          %v3245 = vld [vmem:[%s3232 + $0x60] sm:$0xff]
          %v3246 = vld [vmem:[%s3232 + $0x68] sm:$0xff]
          %v3247 = vld [vmem:[%s3232 + $0x70] sm:$0xff]
          %v3248 = vld [vmem:[%s3232 + $0x78] sm:$0xff]
          %3249 = vmatpush.msra.mxu0 %v3248
          %3250 = vmatpush.msra.mxu0 %v3247
          %3251 = vmatpush.msra.mxu0 %v3246
          %3252 = vmatpush.msra.mxu0 %v3245
          %3253 = vmatpush.msra.mxu0 %v3244
          %3254 = vmatpush.msra.mxu0 %v3243
          %3255 = vmatpush.msra.mxu0 %v3242
          %3256 = vmatpush.msra.mxu0 %v3241
          %3257 = vmatpush.msra.mxu0 %v3240
          %3258 = vmatpush.msra.mxu0 %v3239
          %3259 = vmatpush.msra.mxu0 %v3238
          %3260 = vmatpush.msra.mxu0 %v3237
          %3261 = vmatpush.msra.mxu0 %v3236
          %3262 = vmatpush.msra.mxu0 %v3235
          %3263 = vmatpush.msra.mxu0 %v3234
          %3264 = vmatpush.msra.mxu0 %v3233
          %3265 = vmatmul.f32.gmra.mxu0 %v3230
          %v3266 = vpop.f32.mrf.mxu0
          %v3267 = vadd.f32 0.0, %v3266
          %3268 = vmatmul.f32.gmra.mxu0 %v3231
          %v3269 = vpop.f32.mrf.mxu0
          %v3270 = vadd.f32 0.0, %v3269
          %3271 = vdwg.mxu0
          %v3272 = vadd.f32 %v3228, %v3267
          %v3273 = vadd.f32 %v3229, %v3270
          %v3274 = vld [vmem:[%s3185 + $0x1] sm:$0xff]
          %v3275 = vld [vmem:[%s3185 + $0x9] sm:$0x3]
          %s3276 = scalar_lea.vmem %s5, 1408
          %v3277 = vld [vmem:[%s3276] sm:$0xff]
          %v3278 = vld [vmem:[%s3276 + $0x8] sm:$0xff]
          %v3279 = vld [vmem:[%s3276 + $0x10] sm:$0xff]
          %v3280 = vld [vmem:[%s3276 + $0x18] sm:$0xff]
          %v3281 = vld [vmem:[%s3276 + $0x20] sm:$0xff]
          %v3282 = vld [vmem:[%s3276 + $0x28] sm:$0xff]
          %v3283 = vld [vmem:[%s3276 + $0x30] sm:$0xff]
          %v3284 = vld [vmem:[%s3276 + $0x38] sm:$0xff]
          %v3285 = vld [vmem:[%s3276 + $0x40] sm:$0xff]
          %v3286 = vld [vmem:[%s3276 + $0x48] sm:$0xff]
          %v3287 = vld [vmem:[%s3276 + $0x50] sm:$0xff]
          %v3288 = vld [vmem:[%s3276 + $0x58] sm:$0xff]
          %v3289 = vld [vmem:[%s3276 + $0x60] sm:$0xff]
          %v3290 = vld [vmem:[%s3276 + $0x68] sm:$0xff]
          %v3291 = vld [vmem:[%s3276 + $0x70] sm:$0xff]
          %v3292 = vld [vmem:[%s3276 + $0x78] sm:$0xff]
          %3293 = vmatpush.msra.mxu0 %v3292
          %3294 = vmatpush.msra.mxu0 %v3291
          %3295 = vmatpush.msra.mxu0 %v3290
          %3296 = vmatpush.msra.mxu0 %v3289
          %3297 = vmatpush.msra.mxu0 %v3288
          %3298 = vmatpush.msra.mxu0 %v3287
          %3299 = vmatpush.msra.mxu0 %v3286
          %3300 = vmatpush.msra.mxu0 %v3285
          %3301 = vmatpush.msra.mxu0 %v3284
          %3302 = vmatpush.msra.mxu0 %v3283
          %3303 = vmatpush.msra.mxu0 %v3282
          %3304 = vmatpush.msra.mxu0 %v3281
          %3305 = vmatpush.msra.mxu0 %v3280
          %3306 = vmatpush.msra.mxu0 %v3279
          %3307 = vmatpush.msra.mxu0 %v3278
          %3308 = vmatpush.msra.mxu0 %v3277
          %3309 = vmatmul.f32.gmra.mxu0 %v3274
          %v3310 = vpop.f32.mrf.mxu0
          %v3311 = vadd.f32 0.0, %v3310
          %3312 = vmatmul.f32.gmra.mxu0 %v3275
          %v3313 = vpop.f32.mrf.mxu0
          %v3314 = vadd.f32 0.0, %v3313
          %3315 = vdwg.mxu0
          %v3316 = vadd.f32 %v3272, %v3311
          %v3317 = vadd.f32 %v3273, %v3314
          %s3318 = sadd.s32 %s2780, 3
          %s3319 = smul.u32 %s3318, 32
          %s3320 = scalar_lea.vmem [#allocation3], %s3319
          %v3321 = vld [vmem:[%s3320] sm:$0xff]
          %v3322 = vld [vmem:[%s3320 + $0x8] sm:$0x3]
          %s3323 = scalar_lea.vmem %s5, 1536
          %v3324 = vld [vmem:[%s3323] sm:$0xff]
          %v3325 = vld [vmem:[%s3323 + $0x8] sm:$0xff]
          %v3326 = vld [vmem:[%s3323 + $0x10] sm:$0xff]
          %v3327 = vld [vmem:[%s3323 + $0x18] sm:$0xff]
          %v3328 = vld [vmem:[%s3323 + $0x20] sm:$0xff]
          %v3329 = vld [vmem:[%s3323 + $0x28] sm:$0xff]
          %v3330 = vld [vmem:[%s3323 + $0x30] sm:$0xff]
          %v3331 = vld [vmem:[%s3323 + $0x38] sm:$0xff]
          %v3332 = vld [vmem:[%s3323 + $0x40] sm:$0xff]
          %v3333 = vld [vmem:[%s3323 + $0x48] sm:$0xff]
          %v3334 = vld [vmem:[%s3323 + $0x50] sm:$0xff]
          %v3335 = vld [vmem:[%s3323 + $0x58] sm:$0xff]
          %v3336 = vld [vmem:[%s3323 + $0x60] sm:$0xff]
          %v3337 = vld [vmem:[%s3323 + $0x68] sm:$0xff]
          %v3338 = vld [vmem:[%s3323 + $0x70] sm:$0xff]
          %v3339 = vld [vmem:[%s3323 + $0x78] sm:$0xff]
          %3340 = vmatpush.msra.mxu0 %v3339
          %3341 = vmatpush.msra.mxu0 %v3338
          %3342 = vmatpush.msra.mxu0 %v3337
          %3343 = vmatpush.msra.mxu0 %v3336
          %3344 = vmatpush.msra.mxu0 %v3335
          %3345 = vmatpush.msra.mxu0 %v3334
          %3346 = vmatpush.msra.mxu0 %v3333
          %3347 = vmatpush.msra.mxu0 %v3332
          %3348 = vmatpush.msra.mxu0 %v3331
          %3349 = vmatpush.msra.mxu0 %v3330
          %3350 = vmatpush.msra.mxu0 %v3329
          %3351 = vmatpush.msra.mxu0 %v3328
          %3352 = vmatpush.msra.mxu0 %v3327
          %3353 = vmatpush.msra.mxu0 %v3326
          %3354 = vmatpush.msra.mxu0 %v3325
          %3355 = vmatpush.msra.mxu0 %v3324
          %3356 = vmatmul.f32.gmra.mxu0 %v3321
          %v3357 = vpop.f32.mrf.mxu0
          %v3358 = vadd.f32 0.0, %v3357
          %3359 = vmatmul.f32.gmra.mxu0 %v3322
          %v3360 = vpop.f32.mrf.mxu0
          %v3361 = vadd.f32 0.0, %v3360
          %3362 = vdwg.mxu0
          %v3363 = vadd.f32 %v3316, %v3358
          %v3364 = vadd.f32 %v3317, %v3361
          %s3365 = sadd.s32 16, %s3319
          %s3366 = scalar_lea.vmem [#allocation3], %s3365
          %v3367 = vld [vmem:[%s3366] sm:$0xff]
          %v3368 = vld [vmem:[%s3366 + $0x8] sm:$0x3]
          %s3369 = scalar_lea.vmem %s5, 1664
          %v3370 = vld [vmem:[%s3369] sm:$0xff]
          %v3371 = vld [vmem:[%s3369 + $0x8] sm:$0xff]
          %v3372 = vld [vmem:[%s3369 + $0x10] sm:$0xff]
          %v3373 = vld [vmem:[%s3369 + $0x18] sm:$0xff]
          %v3374 = vld [vmem:[%s3369 + $0x20] sm:$0xff]
          %v3375 = vld [vmem:[%s3369 + $0x28] sm:$0xff]
          %v3376 = vld [vmem:[%s3369 + $0x30] sm:$0xff]
          %v3377 = vld [vmem:[%s3369 + $0x38] sm:$0xff]
          %v3378 = vld [vmem:[%s3369 + $0x40] sm:$0xff]
          %v3379 = vld [vmem:[%s3369 + $0x48] sm:$0xff]
          %v3380 = vld [vmem:[%s3369 + $0x50] sm:$0xff]
          %v3381 = vld [vmem:[%s3369 + $0x58] sm:$0xff]
          %v3382 = vld [vmem:[%s3369 + $0x60] sm:$0xff]
          %v3383 = vld [vmem:[%s3369 + $0x68] sm:$0xff]
          %v3384 = vld [vmem:[%s3369 + $0x70] sm:$0xff]
          %v3385 = vld [vmem:[%s3369 + $0x78] sm:$0xff]
          %3386 = vmatpush.msra.mxu0 %v3385
          %3387 = vmatpush.msra.mxu0 %v3384
          %3388 = vmatpush.msra.mxu0 %v3383
          %3389 = vmatpush.msra.mxu0 %v3382
          %3390 = vmatpush.msra.mxu0 %v3381
          %3391 = vmatpush.msra.mxu0 %v3380
          %3392 = vmatpush.msra.mxu0 %v3379
          %3393 = vmatpush.msra.mxu0 %v3378
          %3394 = vmatpush.msra.mxu0 %v3377
          %3395 = vmatpush.msra.mxu0 %v3376
          %3396 = vmatpush.msra.mxu0 %v3375
          %3397 = vmatpush.msra.mxu0 %v3374
          %3398 = vmatpush.msra.mxu0 %v3373
          %3399 = vmatpush.msra.mxu0 %v3372
          %3400 = vmatpush.msra.mxu0 %v3371
          %3401 = vmatpush.msra.mxu0 %v3370
          %3402 = vmatmul.f32.gmra.mxu0 %v3367
          %v3403 = vpop.f32.mrf.mxu0
          %v3404 = vadd.f32 0.0, %v3403
          %3405 = vmatmul.f32.gmra.mxu0 %v3368
          %v3406 = vpop.f32.mrf.mxu0
          %v3407 = vadd.f32 0.0, %v3406
          %3408 = vdwg.mxu0
          %v3409 = vadd.f32 %v3363, %v3404
          %v3410 = vadd.f32 %v3364, %v3407
          %v3411 = vld [vmem:[%s3320 + $0x1] sm:$0xff]
          %v3412 = vld [vmem:[%s3320 + $0x9] sm:$0x3]
          %s3413 = scalar_lea.vmem %s5, 1792
          %v3414 = vld [vmem:[%s3413] sm:$0xff]
          %v3415 = vld [vmem:[%s3413 + $0x8] sm:$0xff]
          %v3416 = vld [vmem:[%s3413 + $0x10] sm:$0xff]
          %v3417 = vld [vmem:[%s3413 + $0x18] sm:$0xff]
          %v3418 = vld [vmem:[%s3413 + $0x20] sm:$0xff]
          %v3419 = vld [vmem:[%s3413 + $0x28] sm:$0xff]
          %v3420 = vld [vmem:[%s3413 + $0x30] sm:$0xff]
          %v3421 = vld [vmem:[%s3413 + $0x38] sm:$0xff]
          %v3422 = vld [vmem:[%s3413 + $0x40] sm:$0xff]
          %v3423 = vld [vmem:[%s3413 + $0x48] sm:$0xff]
          %v3424 = vld [vmem:[%s3413 + $0x50] sm:$0xff]
          %v3425 = vld [vmem:[%s3413 + $0x58] sm:$0xff]
          %v3426 = vld [vmem:[%s3413 + $0x60] sm:$0xff]
          %v3427 = vld [vmem:[%s3413 + $0x68] sm:$0xff]
          %v3428 = vld [vmem:[%s3413 + $0x70] sm:$0xff]
          %v3429 = vld [vmem:[%s3413 + $0x78] sm:$0xff]
          %3430 = vmatpush.msra.mxu0 %v3429
          %3431 = vmatpush.msra.mxu0 %v3428
          %3432 = vmatpush.msra.mxu0 %v3427
          %3433 = vmatpush.msra.mxu0 %v3426
          %3434 = vmatpush.msra.mxu0 %v3425
          %3435 = vmatpush.msra.mxu0 %v3424
          %3436 = vmatpush.msra.mxu0 %v3423
          %3437 = vmatpush.msra.mxu0 %v3422
          %3438 = vmatpush.msra.mxu0 %v3421
          %3439 = vmatpush.msra.mxu0 %v3420
          %3440 = vmatpush.msra.mxu0 %v3419
          %3441 = vmatpush.msra.mxu0 %v3418
          %3442 = vmatpush.msra.mxu0 %v3417
          %3443 = vmatpush.msra.mxu0 %v3416
          %3444 = vmatpush.msra.mxu0 %v3415
          %3445 = vmatpush.msra.mxu0 %v3414
          %3446 = vmatmul.f32.gmra.mxu0 %v3411
          %v3447 = vpop.f32.mrf.mxu0
          %v3448 = vadd.f32 0.0, %v3447
          %3449 = vmatmul.f32.gmra.mxu0 %v3412
          %v3450 = vpop.f32.mrf.mxu0
          %v3451 = vadd.f32 0.0, %v3450
          %3452 = vdwg.mxu0
          %v3453 = vadd.f32 %v3409, %v3448
          %v3454 = vadd.f32 %v3410, %v3451
          %v3455 = vld [vmem:[%s3366 + $0x1] sm:$0xff]
          %v3456 = vld [vmem:[%s3366 + $0x9] sm:$0x3]
          %s3457 = scalar_lea.vmem %s5, 1920
          %v3458 = vld [vmem:[%s3457] sm:$0xff]
          %v3459 = vld [vmem:[%s3457 + $0x8] sm:$0xff]
          %v3460 = vld [vmem:[%s3457 + $0x10] sm:$0xff]
          %v3461 = vld [vmem:[%s3457 + $0x18] sm:$0xff]
          %v3462 = vld [vmem:[%s3457 + $0x20] sm:$0xff]
          %v3463 = vld [vmem:[%s3457 + $0x28] sm:$0xff]
          %v3464 = vld [vmem:[%s3457 + $0x30] sm:$0xff]
          %v3465 = vld [vmem:[%s3457 + $0x38] sm:$0xff]
          %v3466 = vld [vmem:[%s3457 + $0x40] sm:$0xff]
          %v3467 = vld [vmem:[%s3457 + $0x48] sm:$0xff]
          %v3468 = vld [vmem:[%s3457 + $0x50] sm:$0xff]
          %v3469 = vld [vmem:[%s3457 + $0x58] sm:$0xff]
          %v3470 = vld [vmem:[%s3457 + $0x60] sm:$0xff]
          %v3471 = vld [vmem:[%s3457 + $0x68] sm:$0xff]
          %v3472 = vld [vmem:[%s3457 + $0x70] sm:$0xff]
          %v3473 = vld [vmem:[%s3457 + $0x78] sm:$0xff]
          %3474 = vmatpush.msra.mxu0 %v3473
          %3475 = vmatpush.msra.mxu0 %v3472
          %3476 = vmatpush.msra.mxu0 %v3471
          %3477 = vmatpush.msra.mxu0 %v3470
          %3478 = vmatpush.msra.mxu0 %v3469
          %3479 = vmatpush.msra.mxu0 %v3468
          %3480 = vmatpush.msra.mxu0 %v3467
          %3481 = vmatpush.msra.mxu0 %v3466
          %3482 = vmatpush.msra.mxu0 %v3465
          %3483 = vmatpush.msra.mxu0 %v3464
          %3484 = vmatpush.msra.mxu0 %v3463
          %3485 = vmatpush.msra.mxu0 %v3462
          %3486 = vmatpush.msra.mxu0 %v3461
          %3487 = vmatpush.msra.mxu0 %v3460
          %3488 = vmatpush.msra.mxu0 %v3459
          %3489 = vmatpush.msra.mxu0 %v3458
          %3490 = vmatmul.f32.gmra.mxu0 %v3455
          %v3491 = vpop.f32.mrf.mxu0
          %v3492 = vadd.f32 0.0, %v3491
          %3493 = vmatmul.f32.gmra.mxu0 %v3456
          %v3494 = vpop.f32.mrf.mxu0
          %v3495 = vadd.f32 0.0, %v3494
          %3496 = vdwg.mxu0
          %v3497 = vadd.f32 %v3453, %v3492
          %v3498 = vadd.f32 %v3454, %v3495
          %v3500 = vperm.slane %v2773, 0
          %v3502 = vadd.f32 %v3497, %v3500
          %v3503 = vadd.f32 %v3498, %v3500
          %v3504 = vmax.f32 %v3502, 0.0
          %v3505 = vmax.f32 %v3503, 0.0
          %vm3506 = vcmask 80896
          %v3508 = vsel %vm3506, %v656, 0
          %vm3510 = vcmask 1041408
          %v3512 = vsel %vm3510, %v3505, 0
          %3514 = vmatpush.msra.mxu0 0.0
          %3515 = vmatpush.msra.mxu0 0.0
          %3516 = vmatpush.msra.mxu0 0.0
          %3517 = vmatpush.msra.mxu0 0.0
          %3518 = vmatpush.msra.mxu0 0.0
          %3519 = vmatpush.msra.mxu0 0.0
          %3520 = vmatpush.msra.mxu0 0.0
          %3521 = vmatpush.msra.mxu0 0.0
          %3522 = vmatpush.msra.mxu0 0.0
          %3523 = vmatpush.msra.mxu0 0.0
          %3524 = vmatpush.msra.mxu0 0.0
          %3525 = vmatpush.msra.mxu0 0.0
          %3526 = vmatpush.msra.mxu0 0.0
          %3527 = vmatpush.msra.mxu0 0.0
          %3528 = vmatpush.msra.mxu0 %v3512
          %3529 = vmatpush.msra.mxu0 %v3504
          %3530 = vmatmul.f32.gmra.mxu0 %v3508
          %v3531 = vpop.f32.mrf.mxu0
          %v3532 = vadd.f32 0.0, %v3531
          %3533 = vdwg.mxu0
          %v3535 = vsel %vm3506, %v668, 0
          %3537 = vmatpush.msra.mxu0 0.0
          %3538 = vmatpush.msra.mxu0 0.0
          %3539 = vmatpush.msra.mxu0 0.0
          %3540 = vmatpush.msra.mxu0 0.0
          %3541 = vmatpush.msra.mxu0 0.0
          %3542 = vmatpush.msra.mxu0 0.0
          %3543 = vmatpush.msra.mxu0 0.0
          %3544 = vmatpush.msra.mxu0 0.0
          %3545 = vmatpush.msra.mxu0 0.0
          %3546 = vmatpush.msra.mxu0 0.0
          %3547 = vmatpush.msra.mxu0 0.0
          %3548 = vmatpush.msra.mxu0 0.0
          %3549 = vmatpush.msra.mxu0 0.0
          %3550 = vmatpush.msra.mxu0 0.0
          %3551 = vmatpush.msra.mxu0 %v3512
          %3552 = vmatpush.msra.mxu0 %v3504
          %3553 = vmatmul.f32.gmra.mxu0 %v3535
          %v3554 = vpop.f32.mrf.mxu0
          %v3555 = vadd.f32 0.0, %v3554
          %3556 = vdwg.mxu0
          %s3557 = sadd.s32 %s2775, 1
          %s3558 = smul.u32 %s3557, 16
          %s3559 = sadd.s32 8, %s3558
          %s3560 = scalar_lea.vmem [#allocation4], %s3559
          %3561 = vst [vmem:[%s3560] sm:$0x1f] %v3532
          %s3562 = scalar_lea.vmem [#allocation4], %s3558
          %3563 = vst [vmem:[%s3562 + $0x1] sm:$0x1f] %v3555
        $region83: #{dp2_forward.1} parent=63 // loop_footer
          %s2779 = sadd.s32 1, %s2775
        $region84: #{dp2_forward.1} parent=63 // loop_footer_branch
          %2774 = sbr.rel target = $region80
        $region85: #{dp2_forward.1} parent=63 // loop_exit
          _
        %v3564 = vld [vmem:[%s8] sm:$0x3]
        loop: start=0, step=1, limit=5
        $region86: #{dp2_forward.1} parent=63 // loop_pre_header
          _
        $region87: #{dp2_forward.1} parent=63 // loop_header
          %s3566 = sphi 0, %s3570
          %p3567 = scmp.ge.s32.totalorder %s3566, 5
          %s3571 = sphi 0.0, %s4832
          %s3572 = sphi 0.0, %s4852
        $region88: #{dp2_forward.1} parent=63 // loop_header_branch
          %3569 = sbr.rel (%p3567) target = $region92
        $region89: #{dp2_forward.1} parent=63 // loop_body
          %s3573 = smul.u32 %s3566, 2
          %s3574 = smul.u32 %s3573, 16
          %s3575 = scalar_lea.vmem [#allocation4], %s3574
          %v3576 = vld [vmem:[%s3575] sm:$0x1f]
          %v3577 = vld [vmem:[%s7] sm:$0xff]
          %v3578 = vld [vmem:[%s7 + $0x8] sm:$0xff]
          %v3579 = vld [vmem:[%s7 + $0x10] sm:$0xff]
          %v3580 = vld [vmem:[%s7 + $0x18] sm:$0xff]
          %v3581 = vld [vmem:[%s7 + $0x20] sm:$0xff]
          %v3582 = vld [vmem:[%s7 + $0x28] sm:$0xff]
          %v3583 = vld [vmem:[%s7 + $0x30] sm:$0xff]
          %v3584 = vld [vmem:[%s7 + $0x38] sm:$0xff]
          %v3585 = vld [vmem:[%s7 + $0x40] sm:$0xff]
          %v3586 = vld [vmem:[%s7 + $0x48] sm:$0xff]
          %v3587 = vld [vmem:[%s7 + $0x50] sm:$0xff]
          %v3588 = vld [vmem:[%s7 + $0x58] sm:$0xff]
          %v3589 = vld [vmem:[%s7 + $0x60] sm:$0xff]
          %v3590 = vld [vmem:[%s7 + $0x68] sm:$0xff]
          %v3591 = vld [vmem:[%s7 + $0x70] sm:$0xff]
          %v3592 = vld [vmem:[%s7 + $0x78] sm:$0xff]
          %v3593 = vld [vmem:[%s7 + $0x80] sm:$0xff]
          %v3594 = vld [vmem:[%s7 + $0x88] sm:$0xff]
          %v3595 = vld [vmem:[%s7 + $0x90] sm:$0xff]
          %v3596 = vld [vmem:[%s7 + $0x98] sm:$0xff]
          %v3597 = vld [vmem:[%s7 + $0xa0] sm:$0xff]
          %v3598 = vld [vmem:[%s7 + $0xa8] sm:$0xff]
          %v3599 = vld [vmem:[%s7 + $0xb0] sm:$0xff]
          %v3600 = vld [vmem:[%s7 + $0xb8] sm:$0xff]
          %v3601 = vld [vmem:[%s7 + $0xc0] sm:$0xff]
          %v3602 = vld [vmem:[%s7 + $0xc8] sm:$0xff]
          %v3603 = vld [vmem:[%s7 + $0xd0] sm:$0xff]
          %v3604 = vld [vmem:[%s7 + $0xd8] sm:$0xff]
          %v3605 = vld [vmem:[%s7 + $0xe0] sm:$0xff]
          %v3606 = vld [vmem:[%s7 + $0xe8] sm:$0xff]
          %v3607 = vld [vmem:[%s7 + $0xf0] sm:$0xff]
          %v3608 = vld [vmem:[%s7 + $0xf8] sm:$0xff]
          %s3609 = sadd.s32 8, %s3574
          %s3610 = scalar_lea.vmem [#allocation4], %s3609
          %v3611 = vld [vmem:[%s3610] sm:$0x1f]
          %s3612 = scalar_lea.vmem %s7, 256
          %v3613 = vld [vmem:[%s3612] sm:$0xff]
          %v3614 = vld [vmem:[%s3612 + $0x8] sm:$0xff]
          %v3615 = vld [vmem:[%s3612 + $0x10] sm:$0xff]
          %v3616 = vld [vmem:[%s3612 + $0x18] sm:$0xff]
          %v3617 = vld [vmem:[%s3612 + $0x20] sm:$0xff]
          %v3618 = vld [vmem:[%s3612 + $0x28] sm:$0xff]
          %v3619 = vld [vmem:[%s3612 + $0x30] sm:$0xff]
          %v3620 = vld [vmem:[%s3612 + $0x38] sm:$0xff]
          %v3621 = vld [vmem:[%s3612 + $0x40] sm:$0xff]
          %v3622 = vld [vmem:[%s3612 + $0x48] sm:$0xff]
          %v3623 = vld [vmem:[%s3612 + $0x50] sm:$0xff]
          %v3624 = vld [vmem:[%s3612 + $0x58] sm:$0xff]
          %v3625 = vld [vmem:[%s3612 + $0x60] sm:$0xff]
          %v3626 = vld [vmem:[%s3612 + $0x68] sm:$0xff]
          %v3627 = vld [vmem:[%s3612 + $0x70] sm:$0xff]
          %v3628 = vld [vmem:[%s3612 + $0x78] sm:$0xff]
          %v3629 = vld [vmem:[%s3612 + $0x80] sm:$0xff]
          %v3630 = vld [vmem:[%s3612 + $0x88] sm:$0xff]
          %v3631 = vld [vmem:[%s3612 + $0x90] sm:$0xff]
          %v3632 = vld [vmem:[%s3612 + $0x98] sm:$0xff]
          %v3633 = vld [vmem:[%s3612 + $0xa0] sm:$0xff]
          %v3634 = vld [vmem:[%s3612 + $0xa8] sm:$0xff]
          %v3635 = vld [vmem:[%s3612 + $0xb0] sm:$0xff]
          %v3636 = vld [vmem:[%s3612 + $0xb8] sm:$0xff]
          %v3637 = vld [vmem:[%s3612 + $0xc0] sm:$0xff]
          %v3638 = vld [vmem:[%s3612 + $0xc8] sm:$0xff]
          %v3639 = vld [vmem:[%s3612 + $0xd0] sm:$0xff]
          %v3640 = vld [vmem:[%s3612 + $0xd8] sm:$0xff]
          %v3641 = vld [vmem:[%s3612 + $0xe0] sm:$0xff]
          %v3642 = vld [vmem:[%s3612 + $0xe8] sm:$0xff]
          %v3643 = vld [vmem:[%s3612 + $0xf0] sm:$0xff]
          %v3644 = vld [vmem:[%s3612 + $0xf8] sm:$0xff]
          %3645 = vmatpush.msra.mxu0 %v3643
          %3646 = vmatpush.msra.mxu0 %v3641
          %3647 = vmatpush.msra.mxu0 %v3639
          %3648 = vmatpush.msra.mxu0 %v3637
          %3649 = vmatpush.msra.mxu0 %v3635
          %3650 = vmatpush.msra.mxu0 %v3633
          %3651 = vmatpush.msra.mxu0 %v3631
          %3652 = vmatpush.msra.mxu0 %v3629
          %3653 = vmatpush.msra.mxu0 %v3627
          %3654 = vmatpush.msra.mxu0 %v3625
          %3655 = vmatpush.msra.mxu0 %v3623
          %3656 = vmatpush.msra.mxu0 %v3621
          %3657 = vmatpush.msra.mxu0 %v3619
          %3658 = vmatpush.msra.mxu0 %v3617
          %3659 = vmatpush.msra.mxu0 %v3615
          %3660 = vmatpush.msra.mxu0 %v3613
          %3661 = vmatmul.f32.gmra.mxu0 %v3611
          %v3662 = vpop.f32.mrf.mxu0
          %v3663 = vadd.f32 0.0, %v3662
          %3664 = vdwg.mxu0
          %3665 = vmatpush.msra.mxu0 %v3644
          %3666 = vmatpush.msra.mxu0 %v3642
          %3667 = vmatpush.msra.mxu0 %v3640
          %3668 = vmatpush.msra.mxu0 %v3638
          %3669 = vmatpush.msra.mxu0 %v3636
          %3670 = vmatpush.msra.mxu0 %v3634
          %3671 = vmatpush.msra.mxu0 %v3632
          %3672 = vmatpush.msra.mxu0 %v3630
          %3673 = vmatpush.msra.mxu0 %v3628
          %3674 = vmatpush.msra.mxu0 %v3626
          %3675 = vmatpush.msra.mxu0 %v3624
          %3676 = vmatpush.msra.mxu0 %v3622
          %3677 = vmatpush.msra.mxu0 %v3620
          %3678 = vmatpush.msra.mxu0 %v3618
          %3679 = vmatpush.msra.mxu0 %v3616
          %3680 = vmatpush.msra.mxu0 %v3614
          %3681 = vmatmul.f32.gmra.mxu0 %v3611
          %v3682 = vpop.f32.mrf.mxu0
          %v3683 = vadd.f32 0.0, %v3682
          %3684 = vdwg.mxu0
          %3685 = vmatpush.msra.mxu0 %v3607
          %3686 = vmatpush.msra.mxu0 %v3605
          %3687 = vmatpush.msra.mxu0 %v3603
          %3688 = vmatpush.msra.mxu0 %v3601
          %3689 = vmatpush.msra.mxu0 %v3599
          %3690 = vmatpush.msra.mxu0 %v3597
          %3691 = vmatpush.msra.mxu0 %v3595
          %3692 = vmatpush.msra.mxu0 %v3593
          %3693 = vmatpush.msra.mxu0 %v3591
          %3694 = vmatpush.msra.mxu0 %v3589
          %3695 = vmatpush.msra.mxu0 %v3587
          %3696 = vmatpush.msra.mxu0 %v3585
          %3697 = vmatpush.msra.mxu0 %v3583
          %3698 = vmatpush.msra.mxu0 %v3581
          %3699 = vmatpush.msra.mxu0 %v3579
          %3700 = vmatpush.msra.mxu0 %v3577
          %3701 = vmatmul.f32.gmra.mxu0 %v3576
          %v3702 = vpop.f32.mrf.mxu0
          %v3703 = vadd.f32 %v3663, %v3702
          %3704 = vdwg.mxu0
          %3705 = vmatpush.msra.mxu0 %v3608
          %3706 = vmatpush.msra.mxu0 %v3606
          %3707 = vmatpush.msra.mxu0 %v3604
          %3708 = vmatpush.msra.mxu0 %v3602
          %3709 = vmatpush.msra.mxu0 %v3600
          %3710 = vmatpush.msra.mxu0 %v3598
          %3711 = vmatpush.msra.mxu0 %v3596
          %3712 = vmatpush.msra.mxu0 %v3594
          %3713 = vmatpush.msra.mxu0 %v3592
          %3714 = vmatpush.msra.mxu0 %v3590
          %3715 = vmatpush.msra.mxu0 %v3588
          %3716 = vmatpush.msra.mxu0 %v3586
          %3717 = vmatpush.msra.mxu0 %v3584
          %3718 = vmatpush.msra.mxu0 %v3582
          %3719 = vmatpush.msra.mxu0 %v3580
          %3720 = vmatpush.msra.mxu0 %v3578
          %3721 = vmatmul.f32.gmra.mxu0 %v3576
          %v3722 = vpop.f32.mrf.mxu0
          %v3723 = vadd.f32 %v3683, %v3722
          %3724 = vdwg.mxu0
          %v3725 = vld [vmem:[%s3575 + $0x1] sm:$0x1f]
          %s3726 = scalar_lea.vmem %s7, 512
          %v3727 = vld [vmem:[%s3726] sm:$0xff]
          %v3728 = vld [vmem:[%s3726 + $0x8] sm:$0xff]
          %v3729 = vld [vmem:[%s3726 + $0x10] sm:$0xff]
          %v3730 = vld [vmem:[%s3726 + $0x18] sm:$0xff]
          %v3731 = vld [vmem:[%s3726 + $0x20] sm:$0xff]
          %v3732 = vld [vmem:[%s3726 + $0x28] sm:$0xff]
          %v3733 = vld [vmem:[%s3726 + $0x30] sm:$0xff]
          %v3734 = vld [vmem:[%s3726 + $0x38] sm:$0xff]
          %v3735 = vld [vmem:[%s3726 + $0x40] sm:$0xff]
          %v3736 = vld [vmem:[%s3726 + $0x48] sm:$0xff]
          %v3737 = vld [vmem:[%s3726 + $0x50] sm:$0xff]
          %v3738 = vld [vmem:[%s3726 + $0x58] sm:$0xff]
          %v3739 = vld [vmem:[%s3726 + $0x60] sm:$0xff]
          %v3740 = vld [vmem:[%s3726 + $0x68] sm:$0xff]
          %v3741 = vld [vmem:[%s3726 + $0x70] sm:$0xff]
          %v3742 = vld [vmem:[%s3726 + $0x78] sm:$0xff]
          %v3743 = vld [vmem:[%s3726 + $0x80] sm:$0xff]
          %v3744 = vld [vmem:[%s3726 + $0x88] sm:$0xff]
          %v3745 = vld [vmem:[%s3726 + $0x90] sm:$0xff]
          %v3746 = vld [vmem:[%s3726 + $0x98] sm:$0xff]
          %v3747 = vld [vmem:[%s3726 + $0xa0] sm:$0xff]
          %v3748 = vld [vmem:[%s3726 + $0xa8] sm:$0xff]
          %v3749 = vld [vmem:[%s3726 + $0xb0] sm:$0xff]
          %v3750 = vld [vmem:[%s3726 + $0xb8] sm:$0xff]
          %v3751 = vld [vmem:[%s3726 + $0xc0] sm:$0xff]
          %v3752 = vld [vmem:[%s3726 + $0xc8] sm:$0xff]
          %v3753 = vld [vmem:[%s3726 + $0xd0] sm:$0xff]
          %v3754 = vld [vmem:[%s3726 + $0xd8] sm:$0xff]
          %v3755 = vld [vmem:[%s3726 + $0xe0] sm:$0xff]
          %v3756 = vld [vmem:[%s3726 + $0xe8] sm:$0xff]
          %v3757 = vld [vmem:[%s3726 + $0xf0] sm:$0xff]
          %v3758 = vld [vmem:[%s3726 + $0xf8] sm:$0xff]
          %3759 = vmatpush.msra.mxu0 %v3757
          %3760 = vmatpush.msra.mxu0 %v3755
          %3761 = vmatpush.msra.mxu0 %v3753
          %3762 = vmatpush.msra.mxu0 %v3751
          %3763 = vmatpush.msra.mxu0 %v3749
          %3764 = vmatpush.msra.mxu0 %v3747
          %3765 = vmatpush.msra.mxu0 %v3745
          %3766 = vmatpush.msra.mxu0 %v3743
          %3767 = vmatpush.msra.mxu0 %v3741
          %3768 = vmatpush.msra.mxu0 %v3739
          %3769 = vmatpush.msra.mxu0 %v3737
          %3770 = vmatpush.msra.mxu0 %v3735
          %3771 = vmatpush.msra.mxu0 %v3733
          %3772 = vmatpush.msra.mxu0 %v3731
          %3773 = vmatpush.msra.mxu0 %v3729
          %3774 = vmatpush.msra.mxu0 %v3727
          %3775 = vmatmul.f32.gmra.mxu0 %v3725
          %v3776 = vpop.f32.mrf.mxu0
          %v3777 = vadd.f32 0.0, %v3776
          %3778 = vdwg.mxu0
          %3779 = vmatpush.msra.mxu0 %v3758
          %3780 = vmatpush.msra.mxu0 %v3756
          %3781 = vmatpush.msra.mxu0 %v3754
          %3782 = vmatpush.msra.mxu0 %v3752
          %3783 = vmatpush.msra.mxu0 %v3750
          %3784 = vmatpush.msra.mxu0 %v3748
          %3785 = vmatpush.msra.mxu0 %v3746
          %3786 = vmatpush.msra.mxu0 %v3744
          %3787 = vmatpush.msra.mxu0 %v3742
          %3788 = vmatpush.msra.mxu0 %v3740
          %3789 = vmatpush.msra.mxu0 %v3738
          %3790 = vmatpush.msra.mxu0 %v3736
          %3791 = vmatpush.msra.mxu0 %v3734
          %3792 = vmatpush.msra.mxu0 %v3732
          %3793 = vmatpush.msra.mxu0 %v3730
          %3794 = vmatpush.msra.mxu0 %v3728
          %3795 = vmatmul.f32.gmra.mxu0 %v3725
          %v3796 = vpop.f32.mrf.mxu0
          %v3797 = vadd.f32 0.0, %v3796
          %3798 = vdwg.mxu0
          %v3799 = vadd.f32 %v3703, %v3777
          %v3800 = vadd.f32 %v3723, %v3797
          %v3801 = vld [vmem:[%s3610 + $0x1] sm:$0x1f]
          %s3802 = scalar_lea.vmem %s7, 768
          %v3803 = vld [vmem:[%s3802] sm:$0xff]
          %v3804 = vld [vmem:[%s3802 + $0x8] sm:$0xff]
          %v3805 = vld [vmem:[%s3802 + $0x10] sm:$0xff]
          %v3806 = vld [vmem:[%s3802 + $0x18] sm:$0xff]
          %v3807 = vld [vmem:[%s3802 + $0x20] sm:$0xff]
          %v3808 = vld [vmem:[%s3802 + $0x28] sm:$0xff]
          %v3809 = vld [vmem:[%s3802 + $0x30] sm:$0xff]
          %v3810 = vld [vmem:[%s3802 + $0x38] sm:$0xff]
          %v3811 = vld [vmem:[%s3802 + $0x40] sm:$0xff]
          %v3812 = vld [vmem:[%s3802 + $0x48] sm:$0xff]
          %v3813 = vld [vmem:[%s3802 + $0x50] sm:$0xff]
          %v3814 = vld [vmem:[%s3802 + $0x58] sm:$0xff]
          %v3815 = vld [vmem:[%s3802 + $0x60] sm:$0xff]
          %v3816 = vld [vmem:[%s3802 + $0x68] sm:$0xff]
          %v3817 = vld [vmem:[%s3802 + $0x70] sm:$0xff]
          %v3818 = vld [vmem:[%s3802 + $0x78] sm:$0xff]
          %v3819 = vld [vmem:[%s3802 + $0x80] sm:$0xff]
          %v3820 = vld [vmem:[%s3802 + $0x88] sm:$0xff]
          %v3821 = vld [vmem:[%s3802 + $0x90] sm:$0xff]
          %v3822 = vld [vmem:[%s3802 + $0x98] sm:$0xff]
          %v3823 = vld [vmem:[%s3802 + $0xa0] sm:$0xff]
          %v3824 = vld [vmem:[%s3802 + $0xa8] sm:$0xff]
          %v3825 = vld [vmem:[%s3802 + $0xb0] sm:$0xff]
          %v3826 = vld [vmem:[%s3802 + $0xb8] sm:$0xff]
          %v3827 = vld [vmem:[%s3802 + $0xc0] sm:$0xff]
          %v3828 = vld [vmem:[%s3802 + $0xc8] sm:$0xff]
          %v3829 = vld [vmem:[%s3802 + $0xd0] sm:$0xff]
          %v3830 = vld [vmem:[%s3802 + $0xd8] sm:$0xff]
          %v3831 = vld [vmem:[%s3802 + $0xe0] sm:$0xff]
          %v3832 = vld [vmem:[%s3802 + $0xe8] sm:$0xff]
          %v3833 = vld [vmem:[%s3802 + $0xf0] sm:$0xff]
          %v3834 = vld [vmem:[%s3802 + $0xf8] sm:$0xff]
          %3835 = vmatpush.msra.mxu0 %v3833
          %3836 = vmatpush.msra.mxu0 %v3831
          %3837 = vmatpush.msra.mxu0 %v3829
          %3838 = vmatpush.msra.mxu0 %v3827
          %3839 = vmatpush.msra.mxu0 %v3825
          %3840 = vmatpush.msra.mxu0 %v3823
          %3841 = vmatpush.msra.mxu0 %v3821
          %3842 = vmatpush.msra.mxu0 %v3819
          %3843 = vmatpush.msra.mxu0 %v3817
          %3844 = vmatpush.msra.mxu0 %v3815
          %3845 = vmatpush.msra.mxu0 %v3813
          %3846 = vmatpush.msra.mxu0 %v3811
          %3847 = vmatpush.msra.mxu0 %v3809
          %3848 = vmatpush.msra.mxu0 %v3807
          %3849 = vmatpush.msra.mxu0 %v3805
          %3850 = vmatpush.msra.mxu0 %v3803
          %3851 = vmatmul.f32.gmra.mxu0 %v3801
          %v3852 = vpop.f32.mrf.mxu0
          %v3853 = vadd.f32 0.0, %v3852
          %3854 = vdwg.mxu0
          %3855 = vmatpush.msra.mxu0 %v3834
          %3856 = vmatpush.msra.mxu0 %v3832
          %3857 = vmatpush.msra.mxu0 %v3830
          %3858 = vmatpush.msra.mxu0 %v3828
          %3859 = vmatpush.msra.mxu0 %v3826
          %3860 = vmatpush.msra.mxu0 %v3824
          %3861 = vmatpush.msra.mxu0 %v3822
          %3862 = vmatpush.msra.mxu0 %v3820
          %3863 = vmatpush.msra.mxu0 %v3818
          %3864 = vmatpush.msra.mxu0 %v3816
          %3865 = vmatpush.msra.mxu0 %v3814
          %3866 = vmatpush.msra.mxu0 %v3812
          %3867 = vmatpush.msra.mxu0 %v3810
          %3868 = vmatpush.msra.mxu0 %v3808
          %3869 = vmatpush.msra.mxu0 %v3806
          %3870 = vmatpush.msra.mxu0 %v3804
          %3871 = vmatmul.f32.gmra.mxu0 %v3801
          %v3872 = vpop.f32.mrf.mxu0
          %v3873 = vadd.f32 0.0, %v3872
          %3874 = vdwg.mxu0
          %v3875 = vadd.f32 %v3799, %v3853
          %v3876 = vadd.f32 %v3800, %v3873
          %s3877 = sadd.s32 %s3573, 1
          %s3878 = smul.u32 %s3877, 16
          %s3879 = scalar_lea.vmem [#allocation4], %s3878
          %v3880 = vld [vmem:[%s3879] sm:$0x1f]
          %s3881 = scalar_lea.vmem %s7, 1024
          %v3882 = vld [vmem:[%s3881] sm:$0xff]
          %v3883 = vld [vmem:[%s3881 + $0x8] sm:$0xff]
          %v3884 = vld [vmem:[%s3881 + $0x10] sm:$0xff]
          %v3885 = vld [vmem:[%s3881 + $0x18] sm:$0xff]
          %v3886 = vld [vmem:[%s3881 + $0x20] sm:$0xff]
          %v3887 = vld [vmem:[%s3881 + $0x28] sm:$0xff]
          %v3888 = vld [vmem:[%s3881 + $0x30] sm:$0xff]
          %v3889 = vld [vmem:[%s3881 + $0x38] sm:$0xff]
          %v3890 = vld [vmem:[%s3881 + $0x40] sm:$0xff]
          %v3891 = vld [vmem:[%s3881 + $0x48] sm:$0xff]
          %v3892 = vld [vmem:[%s3881 + $0x50] sm:$0xff]
          %v3893 = vld [vmem:[%s3881 + $0x58] sm:$0xff]
          %v3894 = vld [vmem:[%s3881 + $0x60] sm:$0xff]
          %v3895 = vld [vmem:[%s3881 + $0x68] sm:$0xff]
          %v3896 = vld [vmem:[%s3881 + $0x70] sm:$0xff]
          %v3897 = vld [vmem:[%s3881 + $0x78] sm:$0xff]
          %v3898 = vld [vmem:[%s3881 + $0x80] sm:$0xff]
          %v3899 = vld [vmem:[%s3881 + $0x88] sm:$0xff]
          %v3900 = vld [vmem:[%s3881 + $0x90] sm:$0xff]
          %v3901 = vld [vmem:[%s3881 + $0x98] sm:$0xff]
          %v3902 = vld [vmem:[%s3881 + $0xa0] sm:$0xff]
          %v3903 = vld [vmem:[%s3881 + $0xa8] sm:$0xff]
          %v3904 = vld [vmem:[%s3881 + $0xb0] sm:$0xff]
          %v3905 = vld [vmem:[%s3881 + $0xb8] sm:$0xff]
          %v3906 = vld [vmem:[%s3881 + $0xc0] sm:$0xff]
          %v3907 = vld [vmem:[%s3881 + $0xc8] sm:$0xff]
          %v3908 = vld [vmem:[%s3881 + $0xd0] sm:$0xff]
          %v3909 = vld [vmem:[%s3881 + $0xd8] sm:$0xff]
          %v3910 = vld [vmem:[%s3881 + $0xe0] sm:$0xff]
          %v3911 = vld [vmem:[%s3881 + $0xe8] sm:$0xff]
          %v3912 = vld [vmem:[%s3881 + $0xf0] sm:$0xff]
          %v3913 = vld [vmem:[%s3881 + $0xf8] sm:$0xff]
          %3914 = vmatpush.msra.mxu0 %v3912
          %3915 = vmatpush.msra.mxu0 %v3910
          %3916 = vmatpush.msra.mxu0 %v3908
          %3917 = vmatpush.msra.mxu0 %v3906
          %3918 = vmatpush.msra.mxu0 %v3904
          %3919 = vmatpush.msra.mxu0 %v3902
          %3920 = vmatpush.msra.mxu0 %v3900
          %3921 = vmatpush.msra.mxu0 %v3898
          %3922 = vmatpush.msra.mxu0 %v3896
          %3923 = vmatpush.msra.mxu0 %v3894
          %3924 = vmatpush.msra.mxu0 %v3892
          %3925 = vmatpush.msra.mxu0 %v3890
          %3926 = vmatpush.msra.mxu0 %v3888
          %3927 = vmatpush.msra.mxu0 %v3886
          %3928 = vmatpush.msra.mxu0 %v3884
          %3929 = vmatpush.msra.mxu0 %v3882
          %3930 = vmatmul.f32.gmra.mxu0 %v3880
          %v3931 = vpop.f32.mrf.mxu0
          %v3932 = vadd.f32 0.0, %v3931
          %3933 = vdwg.mxu0
          %3934 = vmatpush.msra.mxu0 %v3913
          %3935 = vmatpush.msra.mxu0 %v3911
          %3936 = vmatpush.msra.mxu0 %v3909
          %3937 = vmatpush.msra.mxu0 %v3907
          %3938 = vmatpush.msra.mxu0 %v3905
          %3939 = vmatpush.msra.mxu0 %v3903
          %3940 = vmatpush.msra.mxu0 %v3901
          %3941 = vmatpush.msra.mxu0 %v3899
          %3942 = vmatpush.msra.mxu0 %v3897
          %3943 = vmatpush.msra.mxu0 %v3895
          %3944 = vmatpush.msra.mxu0 %v3893
          %3945 = vmatpush.msra.mxu0 %v3891
          %3946 = vmatpush.msra.mxu0 %v3889
          %3947 = vmatpush.msra.mxu0 %v3887
          %3948 = vmatpush.msra.mxu0 %v3885
          %3949 = vmatpush.msra.mxu0 %v3883
          %3950 = vmatmul.f32.gmra.mxu0 %v3880
          %v3951 = vpop.f32.mrf.mxu0
          %v3952 = vadd.f32 0.0, %v3951
          %3953 = vdwg.mxu0
          %v3954 = vadd.f32 %v3875, %v3932
          %v3955 = vadd.f32 %v3876, %v3952
          %s3956 = sadd.s32 8, %s3878
          %s3957 = scalar_lea.vmem [#allocation4], %s3956
          %v3958 = vld [vmem:[%s3957] sm:$0x1f]
          %s3959 = scalar_lea.vmem %s7, 1280
          %v3960 = vld [vmem:[%s3959] sm:$0xff]
          %v3961 = vld [vmem:[%s3959 + $0x8] sm:$0xff]
          %v3962 = vld [vmem:[%s3959 + $0x10] sm:$0xff]
          %v3963 = vld [vmem:[%s3959 + $0x18] sm:$0xff]
          %v3964 = vld [vmem:[%s3959 + $0x20] sm:$0xff]
          %v3965 = vld [vmem:[%s3959 + $0x28] sm:$0xff]
          %v3966 = vld [vmem:[%s3959 + $0x30] sm:$0xff]
          %v3967 = vld [vmem:[%s3959 + $0x38] sm:$0xff]
          %v3968 = vld [vmem:[%s3959 + $0x40] sm:$0xff]
          %v3969 = vld [vmem:[%s3959 + $0x48] sm:$0xff]
          %v3970 = vld [vmem:[%s3959 + $0x50] sm:$0xff]
          %v3971 = vld [vmem:[%s3959 + $0x58] sm:$0xff]
          %v3972 = vld [vmem:[%s3959 + $0x60] sm:$0xff]
          %v3973 = vld [vmem:[%s3959 + $0x68] sm:$0xff]
          %v3974 = vld [vmem:[%s3959 + $0x70] sm:$0xff]
          %v3975 = vld [vmem:[%s3959 + $0x78] sm:$0xff]
          %v3976 = vld [vmem:[%s3959 + $0x80] sm:$0xff]
          %v3977 = vld [vmem:[%s3959 + $0x88] sm:$0xff]
          %v3978 = vld [vmem:[%s3959 + $0x90] sm:$0xff]
          %v3979 = vld [vmem:[%s3959 + $0x98] sm:$0xff]
          %v3980 = vld [vmem:[%s3959 + $0xa0] sm:$0xff]
          %v3981 = vld [vmem:[%s3959 + $0xa8] sm:$0xff]
          %v3982 = vld [vmem:[%s3959 + $0xb0] sm:$0xff]
          %v3983 = vld [vmem:[%s3959 + $0xb8] sm:$0xff]
          %v3984 = vld [vmem:[%s3959 + $0xc0] sm:$0xff]
          %v3985 = vld [vmem:[%s3959 + $0xc8] sm:$0xff]
          %v3986 = vld [vmem:[%s3959 + $0xd0] sm:$0xff]
          %v3987 = vld [vmem:[%s3959 + $0xd8] sm:$0xff]
          %v3988 = vld [vmem:[%s3959 + $0xe0] sm:$0xff]
          %v3989 = vld [vmem:[%s3959 + $0xe8] sm:$0xff]
          %v3990 = vld [vmem:[%s3959 + $0xf0] sm:$0xff]
          %v3991 = vld [vmem:[%s3959 + $0xf8] sm:$0xff]
          %3992 = vmatpush.msra.mxu0 %v3990
          %3993 = vmatpush.msra.mxu0 %v3988
          %3994 = vmatpush.msra.mxu0 %v3986
          %3995 = vmatpush.msra.mxu0 %v3984
          %3996 = vmatpush.msra.mxu0 %v3982
          %3997 = vmatpush.msra.mxu0 %v3980
          %3998 = vmatpush.msra.mxu0 %v3978
          %3999 = vmatpush.msra.mxu0 %v3976
          %4000 = vmatpush.msra.mxu0 %v3974
          %4001 = vmatpush.msra.mxu0 %v3972
          %4002 = vmatpush.msra.mxu0 %v3970
          %4003 = vmatpush.msra.mxu0 %v3968
          %4004 = vmatpush.msra.mxu0 %v3966
          %4005 = vmatpush.msra.mxu0 %v3964
          %4006 = vmatpush.msra.mxu0 %v3962
          %4007 = vmatpush.msra.mxu0 %v3960
          %4008 = vmatmul.f32.gmra.mxu0 %v3958
          %v4009 = vpop.f32.mrf.mxu0
          %v4010 = vadd.f32 0.0, %v4009
          %4011 = vdwg.mxu0
          %4012 = vmatpush.msra.mxu0 %v3991
          %4013 = vmatpush.msra.mxu0 %v3989
          %4014 = vmatpush.msra.mxu0 %v3987
          %4015 = vmatpush.msra.mxu0 %v3985
          %4016 = vmatpush.msra.mxu0 %v3983
          %4017 = vmatpush.msra.mxu0 %v3981
          %4018 = vmatpush.msra.mxu0 %v3979
          %4019 = vmatpush.msra.mxu0 %v3977
          %4020 = vmatpush.msra.mxu0 %v3975
          %4021 = vmatpush.msra.mxu0 %v3973
          %4022 = vmatpush.msra.mxu0 %v3971
          %4023 = vmatpush.msra.mxu0 %v3969
          %4024 = vmatpush.msra.mxu0 %v3967
          %4025 = vmatpush.msra.mxu0 %v3965
          %4026 = vmatpush.msra.mxu0 %v3963
          %4027 = vmatpush.msra.mxu0 %v3961
          %4028 = vmatmul.f32.gmra.mxu0 %v3958
          %v4029 = vpop.f32.mrf.mxu0
          %v4030 = vadd.f32 0.0, %v4029
          %4031 = vdwg.mxu0
          %v4032 = vadd.f32 %v3954, %v4010
          %v4033 = vadd.f32 %v3955, %v4030
          %v4034 = vld [vmem:[%s3879 + $0x1] sm:$0x1f]
          %s4035 = scalar_lea.vmem %s7, 1536
          %v4036 = vld [vmem:[%s4035] sm:$0xff]
          %v4037 = vld [vmem:[%s4035 + $0x8] sm:$0xff]
          %v4038 = vld [vmem:[%s4035 + $0x10] sm:$0xff]
          %v4039 = vld [vmem:[%s4035 + $0x18] sm:$0xff]
          %v4040 = vld [vmem:[%s4035 + $0x20] sm:$0xff]
          %v4041 = vld [vmem:[%s4035 + $0x28] sm:$0xff]
          %v4042 = vld [vmem:[%s4035 + $0x30] sm:$0xff]
          %v4043 = vld [vmem:[%s4035 + $0x38] sm:$0xff]
          %v4044 = vld [vmem:[%s4035 + $0x40] sm:$0xff]
          %v4045 = vld [vmem:[%s4035 + $0x48] sm:$0xff]
          %v4046 = vld [vmem:[%s4035 + $0x50] sm:$0xff]
          %v4047 = vld [vmem:[%s4035 + $0x58] sm:$0xff]
          %v4048 = vld [vmem:[%s4035 + $0x60] sm:$0xff]
          %v4049 = vld [vmem:[%s4035 + $0x68] sm:$0xff]
          %v4050 = vld [vmem:[%s4035 + $0x70] sm:$0xff]
          %v4051 = vld [vmem:[%s4035 + $0x78] sm:$0xff]
          %v4052 = vld [vmem:[%s4035 + $0x80] sm:$0xff]
          %v4053 = vld [vmem:[%s4035 + $0x88] sm:$0xff]
          %v4054 = vld [vmem:[%s4035 + $0x90] sm:$0xff]
          %v4055 = vld [vmem:[%s4035 + $0x98] sm:$0xff]
          %v4056 = vld [vmem:[%s4035 + $0xa0] sm:$0xff]
          %v4057 = vld [vmem:[%s4035 + $0xa8] sm:$0xff]
          %v4058 = vld [vmem:[%s4035 + $0xb0] sm:$0xff]
          %v4059 = vld [vmem:[%s4035 + $0xb8] sm:$0xff]
          %v4060 = vld [vmem:[%s4035 + $0xc0] sm:$0xff]
          %v4061 = vld [vmem:[%s4035 + $0xc8] sm:$0xff]
          %v4062 = vld [vmem:[%s4035 + $0xd0] sm:$0xff]
          %v4063 = vld [vmem:[%s4035 + $0xd8] sm:$0xff]
          %v4064 = vld [vmem:[%s4035 + $0xe0] sm:$0xff]
          %v4065 = vld [vmem:[%s4035 + $0xe8] sm:$0xff]
          %v4066 = vld [vmem:[%s4035 + $0xf0] sm:$0xff]
          %v4067 = vld [vmem:[%s4035 + $0xf8] sm:$0xff]
          %4068 = vmatpush.msra.mxu0 %v4066
          %4069 = vmatpush.msra.mxu0 %v4064
          %4070 = vmatpush.msra.mxu0 %v4062
          %4071 = vmatpush.msra.mxu0 %v4060
          %4072 = vmatpush.msra.mxu0 %v4058
          %4073 = vmatpush.msra.mxu0 %v4056
          %4074 = vmatpush.msra.mxu0 %v4054
          %4075 = vmatpush.msra.mxu0 %v4052
          %4076 = vmatpush.msra.mxu0 %v4050
          %4077 = vmatpush.msra.mxu0 %v4048
          %4078 = vmatpush.msra.mxu0 %v4046
          %4079 = vmatpush.msra.mxu0 %v4044
          %4080 = vmatpush.msra.mxu0 %v4042
          %4081 = vmatpush.msra.mxu0 %v4040
          %4082 = vmatpush.msra.mxu0 %v4038
          %4083 = vmatpush.msra.mxu0 %v4036
          %4084 = vmatmul.f32.gmra.mxu0 %v4034
          %v4085 = vpop.f32.mrf.mxu0
          %v4086 = vadd.f32 0.0, %v4085
          %4087 = vdwg.mxu0
          %4088 = vmatpush.msra.mxu0 %v4067
          %4089 = vmatpush.msra.mxu0 %v4065
          %4090 = vmatpush.msra.mxu0 %v4063
          %4091 = vmatpush.msra.mxu0 %v4061
          %4092 = vmatpush.msra.mxu0 %v4059
          %4093 = vmatpush.msra.mxu0 %v4057
          %4094 = vmatpush.msra.mxu0 %v4055
          %4095 = vmatpush.msra.mxu0 %v4053
          %4096 = vmatpush.msra.mxu0 %v4051
          %4097 = vmatpush.msra.mxu0 %v4049
          %4098 = vmatpush.msra.mxu0 %v4047
          %4099 = vmatpush.msra.mxu0 %v4045
          %4100 = vmatpush.msra.mxu0 %v4043
          %4101 = vmatpush.msra.mxu0 %v4041
          %4102 = vmatpush.msra.mxu0 %v4039
          %4103 = vmatpush.msra.mxu0 %v4037
          %4104 = vmatmul.f32.gmra.mxu0 %v4034
          %v4105 = vpop.f32.mrf.mxu0
          %v4106 = vadd.f32 0.0, %v4105
          %4107 = vdwg.mxu0
          %v4108 = vadd.f32 %v4032, %v4086
          %v4109 = vadd.f32 %v4033, %v4106
          %v4110 = vld [vmem:[%s3957 + $0x1] sm:$0x1f]
          %s4111 = scalar_lea.vmem %s7, 1792
          %v4112 = vld [vmem:[%s4111] sm:$0xff]
          %v4113 = vld [vmem:[%s4111 + $0x8] sm:$0xff]
          %v4114 = vld [vmem:[%s4111 + $0x10] sm:$0xff]
          %v4115 = vld [vmem:[%s4111 + $0x18] sm:$0xff]
          %v4116 = vld [vmem:[%s4111 + $0x20] sm:$0xff]
          %v4117 = vld [vmem:[%s4111 + $0x28] sm:$0xff]
          %v4118 = vld [vmem:[%s4111 + $0x30] sm:$0xff]
          %v4119 = vld [vmem:[%s4111 + $0x38] sm:$0xff]
          %v4120 = vld [vmem:[%s4111 + $0x40] sm:$0xff]
          %v4121 = vld [vmem:[%s4111 + $0x48] sm:$0xff]
          %v4122 = vld [vmem:[%s4111 + $0x50] sm:$0xff]
          %v4123 = vld [vmem:[%s4111 + $0x58] sm:$0xff]
          %v4124 = vld [vmem:[%s4111 + $0x60] sm:$0xff]
          %v4125 = vld [vmem:[%s4111 + $0x68] sm:$0xff]
          %v4126 = vld [vmem:[%s4111 + $0x70] sm:$0xff]
          %v4127 = vld [vmem:[%s4111 + $0x78] sm:$0xff]
          %v4128 = vld [vmem:[%s4111 + $0x80] sm:$0xff]
          %v4129 = vld [vmem:[%s4111 + $0x88] sm:$0xff]
          %v4130 = vld [vmem:[%s4111 + $0x90] sm:$0xff]
          %v4131 = vld [vmem:[%s4111 + $0x98] sm:$0xff]
          %v4132 = vld [vmem:[%s4111 + $0xa0] sm:$0xff]
          %v4133 = vld [vmem:[%s4111 + $0xa8] sm:$0xff]
          %v4134 = vld [vmem:[%s4111 + $0xb0] sm:$0xff]
          %v4135 = vld [vmem:[%s4111 + $0xb8] sm:$0xff]
          %v4136 = vld [vmem:[%s4111 + $0xc0] sm:$0xff]
          %v4137 = vld [vmem:[%s4111 + $0xc8] sm:$0xff]
          %v4138 = vld [vmem:[%s4111 + $0xd0] sm:$0xff]
          %v4139 = vld [vmem:[%s4111 + $0xd8] sm:$0xff]
          %v4140 = vld [vmem:[%s4111 + $0xe0] sm:$0xff]
          %v4141 = vld [vmem:[%s4111 + $0xe8] sm:$0xff]
          %v4142 = vld [vmem:[%s4111 + $0xf0] sm:$0xff]
          %v4143 = vld [vmem:[%s4111 + $0xf8] sm:$0xff]
          %4144 = vmatpush.msra.mxu0 %v4142
          %4145 = vmatpush.msra.mxu0 %v4140
          %4146 = vmatpush.msra.mxu0 %v4138
          %4147 = vmatpush.msra.mxu0 %v4136
          %4148 = vmatpush.msra.mxu0 %v4134
          %4149 = vmatpush.msra.mxu0 %v4132
          %4150 = vmatpush.msra.mxu0 %v4130
          %4151 = vmatpush.msra.mxu0 %v4128
          %4152 = vmatpush.msra.mxu0 %v4126
          %4153 = vmatpush.msra.mxu0 %v4124
          %4154 = vmatpush.msra.mxu0 %v4122
          %4155 = vmatpush.msra.mxu0 %v4120
          %4156 = vmatpush.msra.mxu0 %v4118
          %4157 = vmatpush.msra.mxu0 %v4116
          %4158 = vmatpush.msra.mxu0 %v4114
          %4159 = vmatpush.msra.mxu0 %v4112
          %4160 = vmatmul.f32.gmra.mxu0 %v4110
          %v4161 = vpop.f32.mrf.mxu0
          %v4162 = vadd.f32 0.0, %v4161
          %4163 = vdwg.mxu0
          %4164 = vmatpush.msra.mxu0 %v4143
          %4165 = vmatpush.msra.mxu0 %v4141
          %4166 = vmatpush.msra.mxu0 %v4139
          %4167 = vmatpush.msra.mxu0 %v4137
          %4168 = vmatpush.msra.mxu0 %v4135
          %4169 = vmatpush.msra.mxu0 %v4133
          %4170 = vmatpush.msra.mxu0 %v4131
          %4171 = vmatpush.msra.mxu0 %v4129
          %4172 = vmatpush.msra.mxu0 %v4127
          %4173 = vmatpush.msra.mxu0 %v4125
          %4174 = vmatpush.msra.mxu0 %v4123
          %4175 = vmatpush.msra.mxu0 %v4121
          %4176 = vmatpush.msra.mxu0 %v4119
          %4177 = vmatpush.msra.mxu0 %v4117
          %4178 = vmatpush.msra.mxu0 %v4115
          %4179 = vmatpush.msra.mxu0 %v4113
          %4180 = vmatmul.f32.gmra.mxu0 %v4110
          %v4181 = vpop.f32.mrf.mxu0
          %v4182 = vadd.f32 0.0, %v4181
          %4183 = vdwg.mxu0
          %v4184 = vadd.f32 %v4108, %v4162
          %v4185 = vadd.f32 %v4109, %v4182
          %s4186 = sadd.s32 %s3573, 2
          %s4187 = smul.u32 %s4186, 16
          %s4188 = scalar_lea.vmem [#allocation4], %s4187
          %v4189 = vld [vmem:[%s4188] sm:$0x1f]
          %s4190 = scalar_lea.vmem %s7, 2048
          %v4191 = vld [vmem:[%s4190] sm:$0xff]
          %v4192 = vld [vmem:[%s4190 + $0x8] sm:$0xff]
          %v4193 = vld [vmem:[%s4190 + $0x10] sm:$0xff]
          %v4194 = vld [vmem:[%s4190 + $0x18] sm:$0xff]
          %v4195 = vld [vmem:[%s4190 + $0x20] sm:$0xff]
          %v4196 = vld [vmem:[%s4190 + $0x28] sm:$0xff]
          %v4197 = vld [vmem:[%s4190 + $0x30] sm:$0xff]
          %v4198 = vld [vmem:[%s4190 + $0x38] sm:$0xff]
          %v4199 = vld [vmem:[%s4190 + $0x40] sm:$0xff]
          %v4200 = vld [vmem:[%s4190 + $0x48] sm:$0xff]
          %v4201 = vld [vmem:[%s4190 + $0x50] sm:$0xff]
          %v4202 = vld [vmem:[%s4190 + $0x58] sm:$0xff]
          %v4203 = vld [vmem:[%s4190 + $0x60] sm:$0xff]
          %v4204 = vld [vmem:[%s4190 + $0x68] sm:$0xff]
          %v4205 = vld [vmem:[%s4190 + $0x70] sm:$0xff]
          %v4206 = vld [vmem:[%s4190 + $0x78] sm:$0xff]
          %v4207 = vld [vmem:[%s4190 + $0x80] sm:$0xff]
          %v4208 = vld [vmem:[%s4190 + $0x88] sm:$0xff]
          %v4209 = vld [vmem:[%s4190 + $0x90] sm:$0xff]
          %v4210 = vld [vmem:[%s4190 + $0x98] sm:$0xff]
          %v4211 = vld [vmem:[%s4190 + $0xa0] sm:$0xff]
          %v4212 = vld [vmem:[%s4190 + $0xa8] sm:$0xff]
          %v4213 = vld [vmem:[%s4190 + $0xb0] sm:$0xff]
          %v4214 = vld [vmem:[%s4190 + $0xb8] sm:$0xff]
          %v4215 = vld [vmem:[%s4190 + $0xc0] sm:$0xff]
          %v4216 = vld [vmem:[%s4190 + $0xc8] sm:$0xff]
          %v4217 = vld [vmem:[%s4190 + $0xd0] sm:$0xff]
          %v4218 = vld [vmem:[%s4190 + $0xd8] sm:$0xff]
          %v4219 = vld [vmem:[%s4190 + $0xe0] sm:$0xff]
          %v4220 = vld [vmem:[%s4190 + $0xe8] sm:$0xff]
          %v4221 = vld [vmem:[%s4190 + $0xf0] sm:$0xff]
          %v4222 = vld [vmem:[%s4190 + $0xf8] sm:$0xff]
          %4223 = vmatpush.msra.mxu0 %v4221
          %4224 = vmatpush.msra.mxu0 %v4219
          %4225 = vmatpush.msra.mxu0 %v4217
          %4226 = vmatpush.msra.mxu0 %v4215
          %4227 = vmatpush.msra.mxu0 %v4213
          %4228 = vmatpush.msra.mxu0 %v4211
          %4229 = vmatpush.msra.mxu0 %v4209
          %4230 = vmatpush.msra.mxu0 %v4207
          %4231 = vmatpush.msra.mxu0 %v4205
          %4232 = vmatpush.msra.mxu0 %v4203
          %4233 = vmatpush.msra.mxu0 %v4201
          %4234 = vmatpush.msra.mxu0 %v4199
          %4235 = vmatpush.msra.mxu0 %v4197
          %4236 = vmatpush.msra.mxu0 %v4195
          %4237 = vmatpush.msra.mxu0 %v4193
          %4238 = vmatpush.msra.mxu0 %v4191
          %4239 = vmatmul.f32.gmra.mxu0 %v4189
          %v4240 = vpop.f32.mrf.mxu0
          %v4241 = vadd.f32 0.0, %v4240
          %4242 = vdwg.mxu0
          %4243 = vmatpush.msra.mxu0 %v4222
          %4244 = vmatpush.msra.mxu0 %v4220
          %4245 = vmatpush.msra.mxu0 %v4218
          %4246 = vmatpush.msra.mxu0 %v4216
          %4247 = vmatpush.msra.mxu0 %v4214
          %4248 = vmatpush.msra.mxu0 %v4212
          %4249 = vmatpush.msra.mxu0 %v4210
          %4250 = vmatpush.msra.mxu0 %v4208
          %4251 = vmatpush.msra.mxu0 %v4206
          %4252 = vmatpush.msra.mxu0 %v4204
          %4253 = vmatpush.msra.mxu0 %v4202
          %4254 = vmatpush.msra.mxu0 %v4200
          %4255 = vmatpush.msra.mxu0 %v4198
          %4256 = vmatpush.msra.mxu0 %v4196
          %4257 = vmatpush.msra.mxu0 %v4194
          %4258 = vmatpush.msra.mxu0 %v4192
          %4259 = vmatmul.f32.gmra.mxu0 %v4189
          %v4260 = vpop.f32.mrf.mxu0
          %v4261 = vadd.f32 0.0, %v4260
          %4262 = vdwg.mxu0
          %v4263 = vadd.f32 %v4184, %v4241
          %v4264 = vadd.f32 %v4185, %v4261
          %s4265 = sadd.s32 8, %s4187
          %s4266 = scalar_lea.vmem [#allocation4], %s4265
          %v4267 = vld [vmem:[%s4266] sm:$0x1f]
          %s4268 = scalar_lea.vmem %s7, 2304
          %v4269 = vld [vmem:[%s4268] sm:$0xff]
          %v4270 = vld [vmem:[%s4268 + $0x8] sm:$0xff]
          %v4271 = vld [vmem:[%s4268 + $0x10] sm:$0xff]
          %v4272 = vld [vmem:[%s4268 + $0x18] sm:$0xff]
          %v4273 = vld [vmem:[%s4268 + $0x20] sm:$0xff]
          %v4274 = vld [vmem:[%s4268 + $0x28] sm:$0xff]
          %v4275 = vld [vmem:[%s4268 + $0x30] sm:$0xff]
          %v4276 = vld [vmem:[%s4268 + $0x38] sm:$0xff]
          %v4277 = vld [vmem:[%s4268 + $0x40] sm:$0xff]
          %v4278 = vld [vmem:[%s4268 + $0x48] sm:$0xff]
          %v4279 = vld [vmem:[%s4268 + $0x50] sm:$0xff]
          %v4280 = vld [vmem:[%s4268 + $0x58] sm:$0xff]
          %v4281 = vld [vmem:[%s4268 + $0x60] sm:$0xff]
          %v4282 = vld [vmem:[%s4268 + $0x68] sm:$0xff]
          %v4283 = vld [vmem:[%s4268 + $0x70] sm:$0xff]
          %v4284 = vld [vmem:[%s4268 + $0x78] sm:$0xff]
          %v4285 = vld [vmem:[%s4268 + $0x80] sm:$0xff]
          %v4286 = vld [vmem:[%s4268 + $0x88] sm:$0xff]
          %v4287 = vld [vmem:[%s4268 + $0x90] sm:$0xff]
          %v4288 = vld [vmem:[%s4268 + $0x98] sm:$0xff]
          %v4289 = vld [vmem:[%s4268 + $0xa0] sm:$0xff]
          %v4290 = vld [vmem:[%s4268 + $0xa8] sm:$0xff]
          %v4291 = vld [vmem:[%s4268 + $0xb0] sm:$0xff]
          %v4292 = vld [vmem:[%s4268 + $0xb8] sm:$0xff]
          %v4293 = vld [vmem:[%s4268 + $0xc0] sm:$0xff]
          %v4294 = vld [vmem:[%s4268 + $0xc8] sm:$0xff]
          %v4295 = vld [vmem:[%s4268 + $0xd0] sm:$0xff]
          %v4296 = vld [vmem:[%s4268 + $0xd8] sm:$0xff]
          %v4297 = vld [vmem:[%s4268 + $0xe0] sm:$0xff]
          %v4298 = vld [vmem:[%s4268 + $0xe8] sm:$0xff]
          %v4299 = vld [vmem:[%s4268 + $0xf0] sm:$0xff]
          %v4300 = vld [vmem:[%s4268 + $0xf8] sm:$0xff]
          %4301 = vmatpush.msra.mxu0 %v4299
          %4302 = vmatpush.msra.mxu0 %v4297
          %4303 = vmatpush.msra.mxu0 %v4295
          %4304 = vmatpush.msra.mxu0 %v4293
          %4305 = vmatpush.msra.mxu0 %v4291
          %4306 = vmatpush.msra.mxu0 %v4289
          %4307 = vmatpush.msra.mxu0 %v4287
          %4308 = vmatpush.msra.mxu0 %v4285
          %4309 = vmatpush.msra.mxu0 %v4283
          %4310 = vmatpush.msra.mxu0 %v4281
          %4311 = vmatpush.msra.mxu0 %v4279
          %4312 = vmatpush.msra.mxu0 %v4277
          %4313 = vmatpush.msra.mxu0 %v4275
          %4314 = vmatpush.msra.mxu0 %v4273
          %4315 = vmatpush.msra.mxu0 %v4271
          %4316 = vmatpush.msra.mxu0 %v4269
          %4317 = vmatmul.f32.gmra.mxu0 %v4267
          %v4318 = vpop.f32.mrf.mxu0
          %v4319 = vadd.f32 0.0, %v4318
          %4320 = vdwg.mxu0
          %4321 = vmatpush.msra.mxu0 %v4300
          %4322 = vmatpush.msra.mxu0 %v4298
          %4323 = vmatpush.msra.mxu0 %v4296
          %4324 = vmatpush.msra.mxu0 %v4294
          %4325 = vmatpush.msra.mxu0 %v4292
          %4326 = vmatpush.msra.mxu0 %v4290
          %4327 = vmatpush.msra.mxu0 %v4288
          %4328 = vmatpush.msra.mxu0 %v4286
          %4329 = vmatpush.msra.mxu0 %v4284
          %4330 = vmatpush.msra.mxu0 %v4282
          %4331 = vmatpush.msra.mxu0 %v4280
          %4332 = vmatpush.msra.mxu0 %v4278
          %4333 = vmatpush.msra.mxu0 %v4276
          %4334 = vmatpush.msra.mxu0 %v4274
          %4335 = vmatpush.msra.mxu0 %v4272
          %4336 = vmatpush.msra.mxu0 %v4270
          %4337 = vmatmul.f32.gmra.mxu0 %v4267
          %v4338 = vpop.f32.mrf.mxu0
          %v4339 = vadd.f32 0.0, %v4338
          %4340 = vdwg.mxu0
          %v4341 = vadd.f32 %v4263, %v4319
          %v4342 = vadd.f32 %v4264, %v4339
          %v4343 = vld [vmem:[%s4188 + $0x1] sm:$0x1f]
          %s4344 = scalar_lea.vmem %s7, 2560
          %v4345 = vld [vmem:[%s4344] sm:$0xff]
          %v4346 = vld [vmem:[%s4344 + $0x8] sm:$0xff]
          %v4347 = vld [vmem:[%s4344 + $0x10] sm:$0xff]
          %v4348 = vld [vmem:[%s4344 + $0x18] sm:$0xff]
          %v4349 = vld [vmem:[%s4344 + $0x20] sm:$0xff]
          %v4350 = vld [vmem:[%s4344 + $0x28] sm:$0xff]
          %v4351 = vld [vmem:[%s4344 + $0x30] sm:$0xff]
          %v4352 = vld [vmem:[%s4344 + $0x38] sm:$0xff]
          %v4353 = vld [vmem:[%s4344 + $0x40] sm:$0xff]
          %v4354 = vld [vmem:[%s4344 + $0x48] sm:$0xff]
          %v4355 = vld [vmem:[%s4344 + $0x50] sm:$0xff]
          %v4356 = vld [vmem:[%s4344 + $0x58] sm:$0xff]
          %v4357 = vld [vmem:[%s4344 + $0x60] sm:$0xff]
          %v4358 = vld [vmem:[%s4344 + $0x68] sm:$0xff]
          %v4359 = vld [vmem:[%s4344 + $0x70] sm:$0xff]
          %v4360 = vld [vmem:[%s4344 + $0x78] sm:$0xff]
          %v4361 = vld [vmem:[%s4344 + $0x80] sm:$0xff]
          %v4362 = vld [vmem:[%s4344 + $0x88] sm:$0xff]
          %v4363 = vld [vmem:[%s4344 + $0x90] sm:$0xff]
          %v4364 = vld [vmem:[%s4344 + $0x98] sm:$0xff]
          %v4365 = vld [vmem:[%s4344 + $0xa0] sm:$0xff]
          %v4366 = vld [vmem:[%s4344 + $0xa8] sm:$0xff]
          %v4367 = vld [vmem:[%s4344 + $0xb0] sm:$0xff]
          %v4368 = vld [vmem:[%s4344 + $0xb8] sm:$0xff]
          %v4369 = vld [vmem:[%s4344 + $0xc0] sm:$0xff]
          %v4370 = vld [vmem:[%s4344 + $0xc8] sm:$0xff]
          %v4371 = vld [vmem:[%s4344 + $0xd0] sm:$0xff]
          %v4372 = vld [vmem:[%s4344 + $0xd8] sm:$0xff]
          %v4373 = vld [vmem:[%s4344 + $0xe0] sm:$0xff]
          %v4374 = vld [vmem:[%s4344 + $0xe8] sm:$0xff]
          %v4375 = vld [vmem:[%s4344 + $0xf0] sm:$0xff]
          %v4376 = vld [vmem:[%s4344 + $0xf8] sm:$0xff]
          %4377 = vmatpush.msra.mxu0 %v4375
          %4378 = vmatpush.msra.mxu0 %v4373
          %4379 = vmatpush.msra.mxu0 %v4371
          %4380 = vmatpush.msra.mxu0 %v4369
          %4381 = vmatpush.msra.mxu0 %v4367
          %4382 = vmatpush.msra.mxu0 %v4365
          %4383 = vmatpush.msra.mxu0 %v4363
          %4384 = vmatpush.msra.mxu0 %v4361
          %4385 = vmatpush.msra.mxu0 %v4359
          %4386 = vmatpush.msra.mxu0 %v4357
          %4387 = vmatpush.msra.mxu0 %v4355
          %4388 = vmatpush.msra.mxu0 %v4353
          %4389 = vmatpush.msra.mxu0 %v4351
          %4390 = vmatpush.msra.mxu0 %v4349
          %4391 = vmatpush.msra.mxu0 %v4347
          %4392 = vmatpush.msra.mxu0 %v4345
          %4393 = vmatmul.f32.gmra.mxu0 %v4343
          %v4394 = vpop.f32.mrf.mxu0
          %v4395 = vadd.f32 0.0, %v4394
          %4396 = vdwg.mxu0
          %4397 = vmatpush.msra.mxu0 %v4376
          %4398 = vmatpush.msra.mxu0 %v4374
          %4399 = vmatpush.msra.mxu0 %v4372
          %4400 = vmatpush.msra.mxu0 %v4370
          %4401 = vmatpush.msra.mxu0 %v4368
          %4402 = vmatpush.msra.mxu0 %v4366
          %4403 = vmatpush.msra.mxu0 %v4364
          %4404 = vmatpush.msra.mxu0 %v4362
          %4405 = vmatpush.msra.mxu0 %v4360
          %4406 = vmatpush.msra.mxu0 %v4358
          %4407 = vmatpush.msra.mxu0 %v4356
          %4408 = vmatpush.msra.mxu0 %v4354
          %4409 = vmatpush.msra.mxu0 %v4352
          %4410 = vmatpush.msra.mxu0 %v4350
          %4411 = vmatpush.msra.mxu0 %v4348
          %4412 = vmatpush.msra.mxu0 %v4346
          %4413 = vmatmul.f32.gmra.mxu0 %v4343
          %v4414 = vpop.f32.mrf.mxu0
          %v4415 = vadd.f32 0.0, %v4414
          %4416 = vdwg.mxu0
          %v4417 = vadd.f32 %v4341, %v4395
          %v4418 = vadd.f32 %v4342, %v4415
          %v4419 = vld [vmem:[%s4266 + $0x1] sm:$0x1f]
          %s4420 = scalar_lea.vmem %s7, 2816
          %v4421 = vld [vmem:[%s4420] sm:$0xff]
          %v4422 = vld [vmem:[%s4420 + $0x8] sm:$0xff]
          %v4423 = vld [vmem:[%s4420 + $0x10] sm:$0xff]
          %v4424 = vld [vmem:[%s4420 + $0x18] sm:$0xff]
          %v4425 = vld [vmem:[%s4420 + $0x20] sm:$0xff]
          %v4426 = vld [vmem:[%s4420 + $0x28] sm:$0xff]
          %v4427 = vld [vmem:[%s4420 + $0x30] sm:$0xff]
          %v4428 = vld [vmem:[%s4420 + $0x38] sm:$0xff]
          %v4429 = vld [vmem:[%s4420 + $0x40] sm:$0xff]
          %v4430 = vld [vmem:[%s4420 + $0x48] sm:$0xff]
          %v4431 = vld [vmem:[%s4420 + $0x50] sm:$0xff]
          %v4432 = vld [vmem:[%s4420 + $0x58] sm:$0xff]
          %v4433 = vld [vmem:[%s4420 + $0x60] sm:$0xff]
          %v4434 = vld [vmem:[%s4420 + $0x68] sm:$0xff]
          %v4435 = vld [vmem:[%s4420 + $0x70] sm:$0xff]
          %v4436 = vld [vmem:[%s4420 + $0x78] sm:$0xff]
          %v4437 = vld [vmem:[%s4420 + $0x80] sm:$0xff]
          %v4438 = vld [vmem:[%s4420 + $0x88] sm:$0xff]
          %v4439 = vld [vmem:[%s4420 + $0x90] sm:$0xff]
          %v4440 = vld [vmem:[%s4420 + $0x98] sm:$0xff]
          %v4441 = vld [vmem:[%s4420 + $0xa0] sm:$0xff]
          %v4442 = vld [vmem:[%s4420 + $0xa8] sm:$0xff]
          %v4443 = vld [vmem:[%s4420 + $0xb0] sm:$0xff]
          %v4444 = vld [vmem:[%s4420 + $0xb8] sm:$0xff]
          %v4445 = vld [vmem:[%s4420 + $0xc0] sm:$0xff]
          %v4446 = vld [vmem:[%s4420 + $0xc8] sm:$0xff]
          %v4447 = vld [vmem:[%s4420 + $0xd0] sm:$0xff]
          %v4448 = vld [vmem:[%s4420 + $0xd8] sm:$0xff]
          %v4449 = vld [vmem:[%s4420 + $0xe0] sm:$0xff]
          %v4450 = vld [vmem:[%s4420 + $0xe8] sm:$0xff]
          %v4451 = vld [vmem:[%s4420 + $0xf0] sm:$0xff]
          %v4452 = vld [vmem:[%s4420 + $0xf8] sm:$0xff]
          %4453 = vmatpush.msra.mxu0 %v4451
          %4454 = vmatpush.msra.mxu0 %v4449
          %4455 = vmatpush.msra.mxu0 %v4447
          %4456 = vmatpush.msra.mxu0 %v4445
          %4457 = vmatpush.msra.mxu0 %v4443
          %4458 = vmatpush.msra.mxu0 %v4441
          %4459 = vmatpush.msra.mxu0 %v4439
          %4460 = vmatpush.msra.mxu0 %v4437
          %4461 = vmatpush.msra.mxu0 %v4435
          %4462 = vmatpush.msra.mxu0 %v4433
          %4463 = vmatpush.msra.mxu0 %v4431
          %4464 = vmatpush.msra.mxu0 %v4429
          %4465 = vmatpush.msra.mxu0 %v4427
          %4466 = vmatpush.msra.mxu0 %v4425
          %4467 = vmatpush.msra.mxu0 %v4423
          %4468 = vmatpush.msra.mxu0 %v4421
          %4469 = vmatmul.f32.gmra.mxu0 %v4419
          %v4470 = vpop.f32.mrf.mxu0
          %v4471 = vadd.f32 0.0, %v4470
          %4472 = vdwg.mxu0
          %4473 = vmatpush.msra.mxu0 %v4452
          %4474 = vmatpush.msra.mxu0 %v4450
          %4475 = vmatpush.msra.mxu0 %v4448
          %4476 = vmatpush.msra.mxu0 %v4446
          %4477 = vmatpush.msra.mxu0 %v4444
          %4478 = vmatpush.msra.mxu0 %v4442
          %4479 = vmatpush.msra.mxu0 %v4440
          %4480 = vmatpush.msra.mxu0 %v4438
          %4481 = vmatpush.msra.mxu0 %v4436
          %4482 = vmatpush.msra.mxu0 %v4434
          %4483 = vmatpush.msra.mxu0 %v4432
          %4484 = vmatpush.msra.mxu0 %v4430
          %4485 = vmatpush.msra.mxu0 %v4428
          %4486 = vmatpush.msra.mxu0 %v4426
          %4487 = vmatpush.msra.mxu0 %v4424
          %4488 = vmatpush.msra.mxu0 %v4422
          %4489 = vmatmul.f32.gmra.mxu0 %v4419
          %v4490 = vpop.f32.mrf.mxu0
          %v4491 = vadd.f32 0.0, %v4490
          %4492 = vdwg.mxu0
          %v4493 = vadd.f32 %v4417, %v4471
          %v4494 = vadd.f32 %v4418, %v4491
          %s4495 = sadd.s32 %s3573, 3
          %s4496 = smul.u32 %s4495, 16
          %s4497 = scalar_lea.vmem [#allocation4], %s4496
          %v4498 = vld [vmem:[%s4497] sm:$0x1f]
          %s4499 = scalar_lea.vmem %s7, 3072
          %v4500 = vld [vmem:[%s4499] sm:$0xff]
          %v4501 = vld [vmem:[%s4499 + $0x8] sm:$0xff]
          %v4502 = vld [vmem:[%s4499 + $0x10] sm:$0xff]
          %v4503 = vld [vmem:[%s4499 + $0x18] sm:$0xff]
          %v4504 = vld [vmem:[%s4499 + $0x20] sm:$0xff]
          %v4505 = vld [vmem:[%s4499 + $0x28] sm:$0xff]
          %v4506 = vld [vmem:[%s4499 + $0x30] sm:$0xff]
          %v4507 = vld [vmem:[%s4499 + $0x38] sm:$0xff]
          %v4508 = vld [vmem:[%s4499 + $0x40] sm:$0xff]
          %v4509 = vld [vmem:[%s4499 + $0x48] sm:$0xff]
          %v4510 = vld [vmem:[%s4499 + $0x50] sm:$0xff]
          %v4511 = vld [vmem:[%s4499 + $0x58] sm:$0xff]
          %v4512 = vld [vmem:[%s4499 + $0x60] sm:$0xff]
          %v4513 = vld [vmem:[%s4499 + $0x68] sm:$0xff]
          %v4514 = vld [vmem:[%s4499 + $0x70] sm:$0xff]
          %v4515 = vld [vmem:[%s4499 + $0x78] sm:$0xff]
          %v4516 = vld [vmem:[%s4499 + $0x80] sm:$0xff]
          %v4517 = vld [vmem:[%s4499 + $0x88] sm:$0xff]
          %v4518 = vld [vmem:[%s4499 + $0x90] sm:$0xff]
          %v4519 = vld [vmem:[%s4499 + $0x98] sm:$0xff]
          %v4520 = vld [vmem:[%s4499 + $0xa0] sm:$0xff]
          %v4521 = vld [vmem:[%s4499 + $0xa8] sm:$0xff]
          %v4522 = vld [vmem:[%s4499 + $0xb0] sm:$0xff]
          %v4523 = vld [vmem:[%s4499 + $0xb8] sm:$0xff]
          %v4524 = vld [vmem:[%s4499 + $0xc0] sm:$0xff]
          %v4525 = vld [vmem:[%s4499 + $0xc8] sm:$0xff]
          %v4526 = vld [vmem:[%s4499 + $0xd0] sm:$0xff]
          %v4527 = vld [vmem:[%s4499 + $0xd8] sm:$0xff]
          %v4528 = vld [vmem:[%s4499 + $0xe0] sm:$0xff]
          %v4529 = vld [vmem:[%s4499 + $0xe8] sm:$0xff]
          %v4530 = vld [vmem:[%s4499 + $0xf0] sm:$0xff]
          %v4531 = vld [vmem:[%s4499 + $0xf8] sm:$0xff]
          %4532 = vmatpush.msra.mxu0 %v4530
          %4533 = vmatpush.msra.mxu0 %v4528
          %4534 = vmatpush.msra.mxu0 %v4526
          %4535 = vmatpush.msra.mxu0 %v4524
          %4536 = vmatpush.msra.mxu0 %v4522
          %4537 = vmatpush.msra.mxu0 %v4520
          %4538 = vmatpush.msra.mxu0 %v4518
          %4539 = vmatpush.msra.mxu0 %v4516
          %4540 = vmatpush.msra.mxu0 %v4514
          %4541 = vmatpush.msra.mxu0 %v4512
          %4542 = vmatpush.msra.mxu0 %v4510
          %4543 = vmatpush.msra.mxu0 %v4508
          %4544 = vmatpush.msra.mxu0 %v4506
          %4545 = vmatpush.msra.mxu0 %v4504
          %4546 = vmatpush.msra.mxu0 %v4502
          %4547 = vmatpush.msra.mxu0 %v4500
          %4548 = vmatmul.f32.gmra.mxu0 %v4498
          %v4549 = vpop.f32.mrf.mxu0
          %v4550 = vadd.f32 0.0, %v4549
          %4551 = vdwg.mxu0
          %4552 = vmatpush.msra.mxu0 %v4531
          %4553 = vmatpush.msra.mxu0 %v4529
          %4554 = vmatpush.msra.mxu0 %v4527
          %4555 = vmatpush.msra.mxu0 %v4525
          %4556 = vmatpush.msra.mxu0 %v4523
          %4557 = vmatpush.msra.mxu0 %v4521
          %4558 = vmatpush.msra.mxu0 %v4519
          %4559 = vmatpush.msra.mxu0 %v4517
          %4560 = vmatpush.msra.mxu0 %v4515
          %4561 = vmatpush.msra.mxu0 %v4513
          %4562 = vmatpush.msra.mxu0 %v4511
          %4563 = vmatpush.msra.mxu0 %v4509
          %4564 = vmatpush.msra.mxu0 %v4507
          %4565 = vmatpush.msra.mxu0 %v4505
          %4566 = vmatpush.msra.mxu0 %v4503
          %4567 = vmatpush.msra.mxu0 %v4501
          %4568 = vmatmul.f32.gmra.mxu0 %v4498
          %v4569 = vpop.f32.mrf.mxu0
          %v4570 = vadd.f32 0.0, %v4569
          %4571 = vdwg.mxu0
          %v4572 = vadd.f32 %v4493, %v4550
          %v4573 = vadd.f32 %v4494, %v4570
          %s4574 = sadd.s32 8, %s4496
          %s4575 = scalar_lea.vmem [#allocation4], %s4574
          %v4576 = vld [vmem:[%s4575] sm:$0x1f]
          %s4577 = scalar_lea.vmem %s7, 3328
          %v4578 = vld [vmem:[%s4577] sm:$0xff]
          %v4579 = vld [vmem:[%s4577 + $0x8] sm:$0xff]
          %v4580 = vld [vmem:[%s4577 + $0x10] sm:$0xff]
          %v4581 = vld [vmem:[%s4577 + $0x18] sm:$0xff]
          %v4582 = vld [vmem:[%s4577 + $0x20] sm:$0xff]
          %v4583 = vld [vmem:[%s4577 + $0x28] sm:$0xff]
          %v4584 = vld [vmem:[%s4577 + $0x30] sm:$0xff]
          %v4585 = vld [vmem:[%s4577 + $0x38] sm:$0xff]
          %v4586 = vld [vmem:[%s4577 + $0x40] sm:$0xff]
          %v4587 = vld [vmem:[%s4577 + $0x48] sm:$0xff]
          %v4588 = vld [vmem:[%s4577 + $0x50] sm:$0xff]
          %v4589 = vld [vmem:[%s4577 + $0x58] sm:$0xff]
          %v4590 = vld [vmem:[%s4577 + $0x60] sm:$0xff]
          %v4591 = vld [vmem:[%s4577 + $0x68] sm:$0xff]
          %v4592 = vld [vmem:[%s4577 + $0x70] sm:$0xff]
          %v4593 = vld [vmem:[%s4577 + $0x78] sm:$0xff]
          %v4594 = vld [vmem:[%s4577 + $0x80] sm:$0xff]
          %v4595 = vld [vmem:[%s4577 + $0x88] sm:$0xff]
          %v4596 = vld [vmem:[%s4577 + $0x90] sm:$0xff]
          %v4597 = vld [vmem:[%s4577 + $0x98] sm:$0xff]
          %v4598 = vld [vmem:[%s4577 + $0xa0] sm:$0xff]
          %v4599 = vld [vmem:[%s4577 + $0xa8] sm:$0xff]
          %v4600 = vld [vmem:[%s4577 + $0xb0] sm:$0xff]
          %v4601 = vld [vmem:[%s4577 + $0xb8] sm:$0xff]
          %v4602 = vld [vmem:[%s4577 + $0xc0] sm:$0xff]
          %v4603 = vld [vmem:[%s4577 + $0xc8] sm:$0xff]
          %v4604 = vld [vmem:[%s4577 + $0xd0] sm:$0xff]
          %v4605 = vld [vmem:[%s4577 + $0xd8] sm:$0xff]
          %v4606 = vld [vmem:[%s4577 + $0xe0] sm:$0xff]
          %v4607 = vld [vmem:[%s4577 + $0xe8] sm:$0xff]
          %v4608 = vld [vmem:[%s4577 + $0xf0] sm:$0xff]
          %v4609 = vld [vmem:[%s4577 + $0xf8] sm:$0xff]
          %4610 = vmatpush.msra.mxu0 %v4608
          %4611 = vmatpush.msra.mxu0 %v4606
          %4612 = vmatpush.msra.mxu0 %v4604
          %4613 = vmatpush.msra.mxu0 %v4602
          %4614 = vmatpush.msra.mxu0 %v4600
          %4615 = vmatpush.msra.mxu0 %v4598
          %4616 = vmatpush.msra.mxu0 %v4596
          %4617 = vmatpush.msra.mxu0 %v4594
          %4618 = vmatpush.msra.mxu0 %v4592
          %4619 = vmatpush.msra.mxu0 %v4590
          %4620 = vmatpush.msra.mxu0 %v4588
          %4621 = vmatpush.msra.mxu0 %v4586
          %4622 = vmatpush.msra.mxu0 %v4584
          %4623 = vmatpush.msra.mxu0 %v4582
          %4624 = vmatpush.msra.mxu0 %v4580
          %4625 = vmatpush.msra.mxu0 %v4578
          %4626 = vmatmul.f32.gmra.mxu0 %v4576
          %v4627 = vpop.f32.mrf.mxu0
          %v4628 = vadd.f32 0.0, %v4627
          %4629 = vdwg.mxu0
          %4630 = vmatpush.msra.mxu0 %v4609
          %4631 = vmatpush.msra.mxu0 %v4607
          %4632 = vmatpush.msra.mxu0 %v4605
          %4633 = vmatpush.msra.mxu0 %v4603
          %4634 = vmatpush.msra.mxu0 %v4601
          %4635 = vmatpush.msra.mxu0 %v4599
          %4636 = vmatpush.msra.mxu0 %v4597
          %4637 = vmatpush.msra.mxu0 %v4595
          %4638 = vmatpush.msra.mxu0 %v4593
          %4639 = vmatpush.msra.mxu0 %v4591
          %4640 = vmatpush.msra.mxu0 %v4589
          %4641 = vmatpush.msra.mxu0 %v4587
          %4642 = vmatpush.msra.mxu0 %v4585
          %4643 = vmatpush.msra.mxu0 %v4583
          %4644 = vmatpush.msra.mxu0 %v4581
          %4645 = vmatpush.msra.mxu0 %v4579
          %4646 = vmatmul.f32.gmra.mxu0 %v4576
          %v4647 = vpop.f32.mrf.mxu0
          %v4648 = vadd.f32 0.0, %v4647
          %4649 = vdwg.mxu0
          %v4650 = vadd.f32 %v4572, %v4628
          %v4651 = vadd.f32 %v4573, %v4648
          %v4652 = vld [vmem:[%s4497 + $0x1] sm:$0x1f]
          %s4653 = scalar_lea.vmem %s7, 3584
          %v4654 = vld [vmem:[%s4653] sm:$0xff]
          %v4655 = vld [vmem:[%s4653 + $0x8] sm:$0xff]
          %v4656 = vld [vmem:[%s4653 + $0x10] sm:$0xff]
          %v4657 = vld [vmem:[%s4653 + $0x18] sm:$0xff]
          %v4658 = vld [vmem:[%s4653 + $0x20] sm:$0xff]
          %v4659 = vld [vmem:[%s4653 + $0x28] sm:$0xff]
          %v4660 = vld [vmem:[%s4653 + $0x30] sm:$0xff]
          %v4661 = vld [vmem:[%s4653 + $0x38] sm:$0xff]
          %v4662 = vld [vmem:[%s4653 + $0x40] sm:$0xff]
          %v4663 = vld [vmem:[%s4653 + $0x48] sm:$0xff]
          %v4664 = vld [vmem:[%s4653 + $0x50] sm:$0xff]
          %v4665 = vld [vmem:[%s4653 + $0x58] sm:$0xff]
          %v4666 = vld [vmem:[%s4653 + $0x60] sm:$0xff]
          %v4667 = vld [vmem:[%s4653 + $0x68] sm:$0xff]
          %v4668 = vld [vmem:[%s4653 + $0x70] sm:$0xff]
          %v4669 = vld [vmem:[%s4653 + $0x78] sm:$0xff]
          %v4670 = vld [vmem:[%s4653 + $0x80] sm:$0xff]
          %v4671 = vld [vmem:[%s4653 + $0x88] sm:$0xff]
          %v4672 = vld [vmem:[%s4653 + $0x90] sm:$0xff]
          %v4673 = vld [vmem:[%s4653 + $0x98] sm:$0xff]
          %v4674 = vld [vmem:[%s4653 + $0xa0] sm:$0xff]
          %v4675 = vld [vmem:[%s4653 + $0xa8] sm:$0xff]
          %v4676 = vld [vmem:[%s4653 + $0xb0] sm:$0xff]
          %v4677 = vld [vmem:[%s4653 + $0xb8] sm:$0xff]
          %v4678 = vld [vmem:[%s4653 + $0xc0] sm:$0xff]
          %v4679 = vld [vmem:[%s4653 + $0xc8] sm:$0xff]
          %v4680 = vld [vmem:[%s4653 + $0xd0] sm:$0xff]
          %v4681 = vld [vmem:[%s4653 + $0xd8] sm:$0xff]
          %v4682 = vld [vmem:[%s4653 + $0xe0] sm:$0xff]
          %v4683 = vld [vmem:[%s4653 + $0xe8] sm:$0xff]
          %v4684 = vld [vmem:[%s4653 + $0xf0] sm:$0xff]
          %v4685 = vld [vmem:[%s4653 + $0xf8] sm:$0xff]
          %4686 = vmatpush.msra.mxu0 %v4684
          %4687 = vmatpush.msra.mxu0 %v4682
          %4688 = vmatpush.msra.mxu0 %v4680
          %4689 = vmatpush.msra.mxu0 %v4678
          %4690 = vmatpush.msra.mxu0 %v4676
          %4691 = vmatpush.msra.mxu0 %v4674
          %4692 = vmatpush.msra.mxu0 %v4672
          %4693 = vmatpush.msra.mxu0 %v4670
          %4694 = vmatpush.msra.mxu0 %v4668
          %4695 = vmatpush.msra.mxu0 %v4666
          %4696 = vmatpush.msra.mxu0 %v4664
          %4697 = vmatpush.msra.mxu0 %v4662
          %4698 = vmatpush.msra.mxu0 %v4660
          %4699 = vmatpush.msra.mxu0 %v4658
          %4700 = vmatpush.msra.mxu0 %v4656
          %4701 = vmatpush.msra.mxu0 %v4654
          %4702 = vmatmul.f32.gmra.mxu0 %v4652
          %v4703 = vpop.f32.mrf.mxu0
          %v4704 = vadd.f32 0.0, %v4703
          %4705 = vdwg.mxu0
          %4706 = vmatpush.msra.mxu0 %v4685
          %4707 = vmatpush.msra.mxu0 %v4683
          %4708 = vmatpush.msra.mxu0 %v4681
          %4709 = vmatpush.msra.mxu0 %v4679
          %4710 = vmatpush.msra.mxu0 %v4677
          %4711 = vmatpush.msra.mxu0 %v4675
          %4712 = vmatpush.msra.mxu0 %v4673
          %4713 = vmatpush.msra.mxu0 %v4671
          %4714 = vmatpush.msra.mxu0 %v4669
          %4715 = vmatpush.msra.mxu0 %v4667
          %4716 = vmatpush.msra.mxu0 %v4665
          %4717 = vmatpush.msra.mxu0 %v4663
          %4718 = vmatpush.msra.mxu0 %v4661
          %4719 = vmatpush.msra.mxu0 %v4659
          %4720 = vmatpush.msra.mxu0 %v4657
          %4721 = vmatpush.msra.mxu0 %v4655
          %4722 = vmatmul.f32.gmra.mxu0 %v4652
          %v4723 = vpop.f32.mrf.mxu0
          %v4724 = vadd.f32 0.0, %v4723
          %4725 = vdwg.mxu0
          %v4726 = vadd.f32 %v4650, %v4704
          %v4727 = vadd.f32 %v4651, %v4724
          %v4728 = vld [vmem:[%s4575 + $0x1] sm:$0x1f]
          %s4729 = scalar_lea.vmem %s7, 3840
          %v4730 = vld [vmem:[%s4729] sm:$0xff]
          %v4731 = vld [vmem:[%s4729 + $0x8] sm:$0xff]
          %v4732 = vld [vmem:[%s4729 + $0x10] sm:$0xff]
          %v4733 = vld [vmem:[%s4729 + $0x18] sm:$0xff]
          %v4734 = vld [vmem:[%s4729 + $0x20] sm:$0xff]
          %v4735 = vld [vmem:[%s4729 + $0x28] sm:$0xff]
          %v4736 = vld [vmem:[%s4729 + $0x30] sm:$0xff]
          %v4737 = vld [vmem:[%s4729 + $0x38] sm:$0xff]
          %v4738 = vld [vmem:[%s4729 + $0x40] sm:$0xff]
          %v4739 = vld [vmem:[%s4729 + $0x48] sm:$0xff]
          %v4740 = vld [vmem:[%s4729 + $0x50] sm:$0xff]
          %v4741 = vld [vmem:[%s4729 + $0x58] sm:$0xff]
          %v4742 = vld [vmem:[%s4729 + $0x60] sm:$0xff]
          %v4743 = vld [vmem:[%s4729 + $0x68] sm:$0xff]
          %v4744 = vld [vmem:[%s4729 + $0x70] sm:$0xff]
          %v4745 = vld [vmem:[%s4729 + $0x78] sm:$0xff]
          %v4746 = vld [vmem:[%s4729 + $0x80] sm:$0xff]
          %v4747 = vld [vmem:[%s4729 + $0x88] sm:$0xff]
          %v4748 = vld [vmem:[%s4729 + $0x90] sm:$0xff]
          %v4749 = vld [vmem:[%s4729 + $0x98] sm:$0xff]
          %v4750 = vld [vmem:[%s4729 + $0xa0] sm:$0xff]
          %v4751 = vld [vmem:[%s4729 + $0xa8] sm:$0xff]
          %v4752 = vld [vmem:[%s4729 + $0xb0] sm:$0xff]
          %v4753 = vld [vmem:[%s4729 + $0xb8] sm:$0xff]
          %v4754 = vld [vmem:[%s4729 + $0xc0] sm:$0xff]
          %v4755 = vld [vmem:[%s4729 + $0xc8] sm:$0xff]
          %v4756 = vld [vmem:[%s4729 + $0xd0] sm:$0xff]
          %v4757 = vld [vmem:[%s4729 + $0xd8] sm:$0xff]
          %v4758 = vld [vmem:[%s4729 + $0xe0] sm:$0xff]
          %v4759 = vld [vmem:[%s4729 + $0xe8] sm:$0xff]
          %v4760 = vld [vmem:[%s4729 + $0xf0] sm:$0xff]
          %v4761 = vld [vmem:[%s4729 + $0xf8] sm:$0xff]
          %4762 = vmatpush.msra.mxu0 %v4760
          %4763 = vmatpush.msra.mxu0 %v4758
          %4764 = vmatpush.msra.mxu0 %v4756
          %4765 = vmatpush.msra.mxu0 %v4754
          %4766 = vmatpush.msra.mxu0 %v4752
          %4767 = vmatpush.msra.mxu0 %v4750
          %4768 = vmatpush.msra.mxu0 %v4748
          %4769 = vmatpush.msra.mxu0 %v4746
          %4770 = vmatpush.msra.mxu0 %v4744
          %4771 = vmatpush.msra.mxu0 %v4742
          %4772 = vmatpush.msra.mxu0 %v4740
          %4773 = vmatpush.msra.mxu0 %v4738
          %4774 = vmatpush.msra.mxu0 %v4736
          %4775 = vmatpush.msra.mxu0 %v4734
          %4776 = vmatpush.msra.mxu0 %v4732
          %4777 = vmatpush.msra.mxu0 %v4730
          %4778 = vmatmul.f32.gmra.mxu0 %v4728
          %v4779 = vpop.f32.mrf.mxu0
          %v4780 = vadd.f32 0.0, %v4779
          %4781 = vdwg.mxu0
          %4782 = vmatpush.msra.mxu0 %v4761
          %4783 = vmatpush.msra.mxu0 %v4759
          %4784 = vmatpush.msra.mxu0 %v4757
          %4785 = vmatpush.msra.mxu0 %v4755
          %4786 = vmatpush.msra.mxu0 %v4753
          %4787 = vmatpush.msra.mxu0 %v4751
          %4788 = vmatpush.msra.mxu0 %v4749
          %4789 = vmatpush.msra.mxu0 %v4747
          %4790 = vmatpush.msra.mxu0 %v4745
          %4791 = vmatpush.msra.mxu0 %v4743
          %4792 = vmatpush.msra.mxu0 %v4741
          %4793 = vmatpush.msra.mxu0 %v4739
          %4794 = vmatpush.msra.mxu0 %v4737
          %4795 = vmatpush.msra.mxu0 %v4735
          %4796 = vmatpush.msra.mxu0 %v4733
          %4797 = vmatpush.msra.mxu0 %v4731
          %4798 = vmatmul.f32.gmra.mxu0 %v4728
          %v4799 = vpop.f32.mrf.mxu0
          %v4800 = vadd.f32 0.0, %v4799
          %4801 = vdwg.mxu0
          %v4802 = vadd.f32 %v4726, %v4780
          %v4803 = vadd.f32 %v4727, %v4800
          %v4805 = vperm.slane %v3564, 0
          %v4806 = vperm.slane %v3564, 1
          %v4809 = vadd.f32 %v4802, %v4805
          %v4810 = vadd.f32 %v4803, %v4806
          %v4811 = vmax.f32 %v4809, 0.0
          %v4812 = vmax.f32 %v4810, 0.0
          %s4813 = smul.addr %s3573, 8
          %s4814 = scalar_lea.vmem %s9, %s4813
          %v4815 = vld [vmem:[%s4814] sm:$0x1f]
          %v4816 = vld [vmem:[%s4814 + $0x8] sm:$0x1f]
          %v4817 = vmul.f32 %v4811, %v4815
          %v4818 = vmul.f32 %v4812, %v4816
          %vm4819 = vcmask 1044480
          %v4820 = vsel %vm4819, %v4817, 0.0
          %v4821 = vsel %vm4819, %v4818, 0.0
          %v4822 = vadd.f32 %v4820, %v4821
          %4823 = vadd.xlane.f32.xlu0 %v4822
          %v4824 = vpop.xlane.xlu0 %4823
          %v4825 = vrot.slane %v4824, 4
          %v4826 = vadd.f32 %v4824, %v4825
          %v4827 = vrot.slane %v4826, 2
          %v4828 = vadd.f32 %v4826, %v4827
          %v4829 = vrot.slane %v4828, 1
          %v4830 = vadd.f32 %v4828, %v4829
          %s4831 = vtos %v4830
          %s4832 = sadd.f32 %s3571, %s4831
          %s4833 = sadd.s32 %s3573, 10
          %s4834 = smul.addr %s4833, 8
          %s4835 = scalar_lea.vmem %s9, %s4834
          %v4836 = vld [vmem:[%s4835] sm:$0x1f]
          %v4837 = vld [vmem:[%s4835 + $0x8] sm:$0x1f]
          %v4838 = vmul.f32 %v4811, %v4836
          %v4839 = vmul.f32 %v4812, %v4837
          %v4840 = vsel %vm4819, %v4838, 0.0
          %v4841 = vsel %vm4819, %v4839, 0.0
          %v4842 = vadd.f32 %v4840, %v4841
          %4843 = vadd.xlane.f32.xlu0 %v4842
          %v4844 = vpop.xlane.xlu0 %4843
          %v4845 = vrot.slane %v4844, 4
          %v4846 = vadd.f32 %v4844, %v4845
          %v4847 = vrot.slane %v4846, 2
          %v4848 = vadd.f32 %v4846, %v4847
          %v4849 = vrot.slane %v4848, 1
          %v4850 = vadd.f32 %v4848, %v4849
          %s4851 = vtos %v4850
          %s4852 = sadd.f32 %s3572, %s4851
        $region90: #{dp2_forward.1} parent=63 // loop_footer
          %s3570 = sadd.s32 1, %s3566
        $region91: #{dp2_forward.1} parent=63 // loop_footer_branch
          %3565 = sbr.rel target = $region87
        $region92: #{dp2_forward.1} parent=63 // loop_exit
          _
        %vm4853 = vcmp.eq.s32.totalorder %v646, 0
        %v4854 = vstv %s3571
        %v4855 = vsel %vm4853, %v4854, 0.0
        %vm4856 = vcmp.eq.s32.totalorder %v646, 1
        %v4857 = vstv %s3572
        %v4858 = vsel %vm4856, %v4857, 0.0
        %v4859 = vadd.f32 %v4855, %v4858
        %v4860 = vld [vmem:[%s10] sm:$0x1]
        %v4861 = vadd.f32 %v4859, %v4860
        %4862 = vst [vmem:[%s381] sm:$0x1] %v4861
        %s4863 = sand.u32 %s269, 1
        %s4864 = scalar_lea.sflag [#allocation6], %s4863
        %s4865 = sand.u32 %s269, 1
        %s4866 = scalar_lea.vmem [#allocation5], %s4865
        // Predicated region
        $region93: #{dp2_forward.1} parent=63 // pred_check
          %p4867 = pneg %p279
        $region94: #{dp2_forward.1} parent=63 // pred_check_branch
          %4869 = sbr.rel (%p4867) target = $region96
        $region95: #{dp2_forward.1} parent=63 // pred_region
          %4871 = vsyncadd %s4864, 0
          %s4872 = scalar_lea.hbm %s11, %s25
          %s4874 = sshll.u32 %s4866, 4
          %s4875 = int_to_ptr.vmem [resolvable:$true] %s4874
          %s4876 = sshll.u32 %s4872, 4
          %s4877 = int_to_ptr.hbm [resolvable:$true] %s4876
          %4879 = dma.vmem_to_hbm [thread:$0]  %s4875, 16, %s4877, %s4864
        $region96: #{dp2_forward.1} parent=63 // pred_fallthru
          _
      $region64: #{dp2_forward.1} parent=5 // pred_fallthru
        _
      %p4880 = scmp.le.s32.totalorder 2, %s20
      // Predicated region
      $region97: #{dp2_forward.1} parent=5 // pred_check
        %p4881 = pneg %p4880
      $region98: #{dp2_forward.1} parent=5 // pred_check_branch
        %4883 = sbr.rel (%p4881) target = $region100
      $region99: #{dp2_forward.1} parent=5 // pred_region
        %s4884 = ssub.s32 %s20, 2
        // Predicated region
        $region101: #{dp2_forward.1} parent=99 // pred_check
          %p4885 = pneg %p285
        $region102: #{dp2_forward.1} parent=99 // pred_check_branch
          %4887 = sbr.rel (%p4885) target = $region104
        $region103: #{dp2_forward.1} parent=99 // pred_region
          %s4888 = sand.u32 %s270, 1
          %s4889 = scalar_lea.sflag [#allocation6], %s4888
          %s4890 = sand.u32 %s270, 1
          %s4891 = scalar_lea.vmem [#allocation5], %s4890
          %4893 = dma.done %s4889, 16
        $region104: #{dp2_forward.1} parent=99 // pred_fallthru
          _
      $region100: #{dp2_forward.1} parent=5 // pred_fallthru
        _
    $region6: #{dp2_forward.1} parent=1 // loop_footer
      %s24 = sadd.s32 1, %s20
    $region7: #{dp2_forward.1} parent=1 // loop_footer_branch
      %19 = sbr.rel target = $region3
    $region8: #{dp2_forward.1} parent=1 // loop_exit
      _
    %4894 = vsyncpa [#allocation6], 1
    %s4895 = scalar_lea.sflag [#allocation6], 1
    %4896 = vsyncpa %s4895, 1

</llo_original>
